<compile_context>
chip_gen: v7x
topology: tpu7x:2x2x1
jax: 0.10.0
libtpu: 0.0.40
codegen_flags: <defaults>
</compile_context>

<pallas_src>
import functools

import jax
import jax.numpy as jnp
from jax.experimental import pallas as pl
from jax.experimental.pallas import tpu as pltpu

OUT = 78  # every sub-network emits 78 features


def _round_up(n, m):
    return ((n + m - 1) // m) * m


# ----------------------------------------------------------------------------
# Fused kernel: CharNet + WordNet + ParaNet + MajorNet
# ----------------------------------------------------------------------------
def _sherlock_kernel(
    xc_ref, xw_ref, xp_ref, xe_ref,
    # CharNet
    c_w1, c_b1, c_w2, c_b2, c_w3, c_b3,
    # WordNet
    w_w1, w_b1, w_w2, w_b2, w_w3, w_b3,
    # ParaNet
    p_w1, p_b1, p_w2, p_b2, p_w3, p_b3,
    # MajorNet (w1 pre-split along the concat segments [78|78|78|27])
    m_w1c, m_w1w, m_w1p, m_w1e, m_b1, m_w2, m_b2, m_w3, m_b3,
    o_ref,
):
    f32 = jnp.float32

    def mm(a, w_ref):
        # bf16 weights are upcast in VMEM; MXU accumulates in f32.
        return jnp.dot(a, w_ref[...].astype(f32), preferred_element_type=f32)

    def leaf(x, w1, b1, w2, b2, w3, b3):
        # Linear1 (+ folded BatchNorm) + ReLU   [Dropout(0.3) == identity in eval]
        h = jnp.maximum(mm(x, w1) + b1[...], 0.0)
        # Linear2 + ReLU
        h = jnp.maximum(mm(h, w2) + b2[...], 0.0)
        # Linear3
        return mm(h, w3) + b3[...]

    xc = xc_ref[...]
    xw = xw_ref[...]
    xp = xp_ref[...]
    xe = xe_ref[...]

    yc = leaf(xc, c_w1, c_b1, c_w2, c_b2, c_w3, c_b3)   # (TB, 78)
    yw = leaf(xw, w_w1, w_b1, w_w2, w_b2, w_w3, w_b3)   # (TB, 78)
    yp = leaf(xp, p_w1, p_b1, p_w2, p_b2, p_w3, p_b3)   # (TB, 78)

    # MajorNet Linear1 on the implicit concat [yc, yw, yp, xe]:
    #   concat(...) @ W == yc@W[:78] + yw@W[78:156] + yp@W[156:234] + xe@W[234:]
    h = (mm(yc, m_w1c) + mm(yw, m_w1w) + mm(yp, m_w1p) + mm(xe, m_w1e)
         + m_b1[...])
    h = jnp.maximum(h, 0.0)                               # (+ folded BN) + ReLU
    h = jnp.maximum(mm(h, m_w2) + m_b2[...], 0.0)         # Linear2 + ReLU
    o_ref[...] = mm(h, m_w3) + m_b3[...]                  # Linear3


# ----------------------------------------------------------------------------
# Parameter construction: deterministic init, BN folded, bf16 weights
# ----------------------------------------------------------------------------
def make_subnet_params(key, n_in, n_out, n_hid, *, weight_dtype=jnp.bfloat16):
    ks = jax.random.split(key, 6)

    def lin(k, fan_in, shape):
        bound = 1.0 / jnp.sqrt(jnp.float32(fan_in))
        return jax.random.uniform(k, shape, jnp.float32, -bound, bound)

    w1 = lin(ks[0], n_in, (n_in, n_hid))
    b1 = lin(ks[1], n_in, (1, n_hid))
    w2 = lin(ks[2], n_hid, (n_hid, n_hid))
    b2 = lin(ks[3], n_hid, (1, n_hid))
    w3 = lin(ks[4], n_hid, (n_hid, n_out))
    b3 = lin(ks[5], n_hid, (1, n_out))

    # BatchNorm1d eval mode with fresh-init running stats
    # (gamma=1, beta=0, mean=0, var=1, eps=1e-5) folded into Linear1.
    gamma = jnp.ones((1, n_hid), jnp.float32)
    beta = jnp.zeros((1, n_hid), jnp.float32)
    mean = jnp.zeros((1, n_hid), jnp.float32)
    var = jnp.ones((1, n_hid), jnp.float32)
    eps = 1e-5
    scale = gamma / jnp.sqrt(var + eps)
    shift = beta - mean * scale
    w1 = w1 * scale                 # column-wise fold
    b1 = b1 * scale + shift

    cast = lambda w: w.astype(weight_dtype)
    return {"w1": cast(w1), "b1": b1, "w2": cast(w2), "b2": b2,
            "w3": cast(w3), "b3": b3}


def make_sherlock_params(key, *, weight_dtype=jnp.bfloat16):
    kc, kw, kp, km = jax.random.split(key, 4)
    char = make_subnet_params(kc, 960, OUT, 300, weight_dtype=weight_dtype)
    word = make_subnet_params(kw, 201, OUT, 200, weight_dtype=weight_dtype)
    para = make_subnet_params(kp, 400, OUT, 400, weight_dtype=weight_dtype)
    major = make_subnet_params(km, 261, OUT, 500, weight_dtype=weight_dtype)
    # Split MajorNet's first weight along the concat segments so the kernel
    # never builds the lane-unaligned (B, 261) concat.
    mw1 = major.pop("w1")
    major["w1_char"] = mw1[:78]
    major["w1_word"] = mw1[78:156]
    major["w1_para"] = mw1[156:234]
    major["w1_extra"] = mw1[234:261]
    return {"char": char, "word": word, "para": para, "major": major}


# ----------------------------------------------------------------------------
# Forward wrapper: one pallas_call, batch-row grid
# ----------------------------------------------------------------------------
@functools.partial(jax.jit, static_argnames=("block_b",))
def sherlock_ori_forward(x, params, block_b=128):
    assert x.shape[1] == 1588
    x = x.astype(jnp.float32)
    B = x.shape[0]

    # Segment the input once in the wrapper (cheap XLA slices; the kernel then
    # only sees lane-dense operands).
    xc = x[:, :960]          # CharNet input
    xw = x[:, 960:1161]      # WordNet input
    xe = x[:, 1161:1188]     # 27 raw features forwarded to MajorNet
    xp = x[:, 1188:1588]     # ParaNet input (== x[:, -400:])

    tb = min(block_b, _round_up(B, 8))
    Bp = _round_up(B, tb)
    if Bp != B:
        pad = ((0, Bp - B), (0, 0))
        xc, xw, xp, xe = (jnp.pad(a, pad) for a in (xc, xw, xp, xe))

    c, w, p, m = params["char"], params["word"], params["para"], params["major"]
    weight_args = [
        c["w1"], c["b1"], c["w2"], c["b2"], c["w3"], c["b3"],
        w["w1"], w["b1"], w["w2"], w["b2"], w["w3"], w["b3"],
        p["w1"], p["b1"], p["w2"], p["b2"], p["w3"], p["b3"],
        m["w1_char"], m["w1_word"], m["w1_para"], m["w1_extra"],
        m["b1"], m["w2"], m["b2"], m["w3"], m["b3"],
    ]

    def row_spec(d):
        return pl.BlockSpec((tb, d), lambda i: (i, 0))

    def full_spec(shape):
        return pl.BlockSpec(shape, lambda i: (0,) * len(shape))

    in_specs = ([row_spec(960), row_spec(201), row_spec(400), row_spec(27)]
                + [full_spec(a.shape) for a in weight_args])
    out_spec = row_spec(OUT)

    flops = 2 * Bp * (960 * 300 + 300 * 300 + 300 * OUT
                      + 201 * 200 + 200 * 200 + 200 * OUT
                      + 400 * 400 + 400 * 400 + 400 * OUT
                      + 261 * 500 + 500 * 500 + 500 * OUT)
    bytes_accessed = (sum(a.size * a.dtype.itemsize for a in weight_args)
                      + 4 * Bp * (1588 + OUT))
    cost = pl.CostEstimate(flops=flops, transcendentals=0,
                           bytes_accessed=bytes_accessed)

    out = pl.pallas_call(
        _sherlock_kernel,
        out_shape=jax.ShapeDtypeStruct((Bp, OUT), jnp.float32),
        grid=(Bp // tb,),
        in_specs=in_specs,
        out_specs=out_spec,
        compiler_params=pltpu.CompilerParams(
            dimension_semantics=("parallel",)),
        cost_estimate=cost,
    )(xc, xw, xp, xe, *weight_args)

    return out[:B]


# ----------------------------------------------------------------------------
# Pure-JAX reference (same bf16-rounded weights, f32 math)
# ----------------------------------------------------------------------------
def _subnet_ref(x, p):
    f32 = jnp.float32
    h = jnp.maximum(x @ p["w1"].astype(f32) + p["b1"], 0.0)
    h = jnp.maximum(h @ p["w2"].astype(f32) + p["b2"], 0.0)
    return h @ p["w3"].astype(f32) + p["b3"]


def _sherlock_ref(x, params):
    x = x.astype(jnp.float32)
    yc = _subnet_ref(x[:, :960], params["char"])
    yw = _subnet_ref(x[:, 960:1161], params["word"])
    yp = _subnet_ref(x[:, -400:], params["para"])
    xm = jnp.concatenate([yc, yw, yp, x[:, 1161:-400]], axis=1)
    m = params["major"]
    mw1 = jnp.concatenate(
        [m["w1_char"], m["w1_word"], m["w1_para"], m["w1_extra"]], axis=0)
    mfull = {"w1": mw1, "b1": m["b1"], "w2": m["w2"], "b2": m["b2"],
             "w3": m["w3"], "b3": m["b3"]}
    return _subnet_ref(xm, mfull)


if __name__ == "__main__":
    key = jax.random.PRNGKey(0)
    k_x, k_p = jax.random.split(key)

    B = 8  # feature dim is fixed by the model (1588)
    x = jax.random.normal(k_x, (B, 1588), jnp.float32)
    params = make_sherlock_params(k_p)

    out = jax.block_until_ready(sherlock_ori_forward(x, params))
    assert out.shape == (B, OUT), out.shape

    ref = jax.block_until_ready(_sherlock_ref(x, params))
    max_err = float(jnp.max(jnp.abs(out - ref)))
    assert jnp.allclose(out, ref, atol=2e-3, rtol=2e-3), max_err

    print("KERNEL_OK")
</pallas_src>

<mosaic_0001>
module attributes {stable_mosaic.version = 11 : i64} {
  func.func @_sherlock_kernel(%arg0: i32, %arg1: memref<8x960xf32, #tpu.memory_space<vmem>>, %arg2: memref<8x201xf32, #tpu.memory_space<vmem>>, %arg3: memref<8x400xf32, #tpu.memory_space<vmem>>, %arg4: memref<8x27xf32, #tpu.memory_space<vmem>>, %arg5: memref<960x300xbf16, #tpu.memory_space<vmem>>, %arg6: memref<1x300xf32, #tpu.memory_space<vmem>>, %arg7: memref<300x300xbf16, #tpu.memory_space<vmem>>, %arg8: memref<1x300xf32, #tpu.memory_space<vmem>>, %arg9: memref<300x78xbf16, #tpu.memory_space<vmem>>, %arg10: memref<1x78xf32, #tpu.memory_space<vmem>>, %arg11: memref<201x200xbf16, #tpu.memory_space<vmem>>, %arg12: memref<1x200xf32, #tpu.memory_space<vmem>>, %arg13: memref<200x200xbf16, #tpu.memory_space<vmem>>, %arg14: memref<1x200xf32, #tpu.memory_space<vmem>>, %arg15: memref<200x78xbf16, #tpu.memory_space<vmem>>, %arg16: memref<1x78xf32, #tpu.memory_space<vmem>>, %arg17: memref<400x400xbf16, #tpu.memory_space<vmem>>, %arg18: memref<1x400xf32, #tpu.memory_space<vmem>>, %arg19: memref<400x400xbf16, #tpu.memory_space<vmem>>, %arg20: memref<1x400xf32, #tpu.memory_space<vmem>>, %arg21: memref<400x78xbf16, #tpu.memory_space<vmem>>, %arg22: memref<1x78xf32, #tpu.memory_space<vmem>>, %arg23: memref<78x500xbf16, #tpu.memory_space<vmem>>, %arg24: memref<78x500xbf16, #tpu.memory_space<vmem>>, %arg25: memref<78x500xbf16, #tpu.memory_space<vmem>>, %arg26: memref<27x500xbf16, #tpu.memory_space<vmem>>, %arg27: memref<1x500xf32, #tpu.memory_space<vmem>>, %arg28: memref<500x500xbf16, #tpu.memory_space<vmem>>, %arg29: memref<1x500xf32, #tpu.memory_space<vmem>>, %arg30: memref<500x78xbf16, #tpu.memory_space<vmem>>, %arg31: memref<1x78xf32, #tpu.memory_space<vmem>>, %arg32: memref<8x78xf32, #tpu.memory_space<vmem>>) attributes {dimension_semantics = [#tpu.dimension_semantics<parallel>], iteration_bounds = array<i64: 1>, scalar_prefetch = 0 : i64, scratch_operands = 0 : i64, tpu.core_type = #tpu.core_type<tc>, window_params = [{transform_indices = @transform_0, window_bounds = array<i64: 8, 960>}, {transform_indices = @transform_1, window_bounds = array<i64: 8, 201>}, {transform_indices = @transform_2, window_bounds = array<i64: 8, 400>}, {transform_indices = @transform_3, window_bounds = array<i64: 8, 27>}, {pipeline_mode = #tpu.pipeline_mode<synchronous>, transform_indices = @transform_4, window_bounds = array<i64: 960, 300>}, {pipeline_mode = #tpu.pipeline_mode<synchronous>, transform_indices = @transform_5, window_bounds = array<i64: 1, 300>}, {pipeline_mode = #tpu.pipeline_mode<synchronous>, transform_indices = @transform_6, window_bounds = array<i64: 300, 300>}, {pipeline_mode = #tpu.pipeline_mode<synchronous>, transform_indices = @transform_7, window_bounds = array<i64: 1, 300>}, {pipeline_mode = #tpu.pipeline_mode<synchronous>, transform_indices = @transform_8, window_bounds = array<i64: 300, 78>}, {pipeline_mode = #tpu.pipeline_mode<synchronous>, transform_indices = @transform_9, window_bounds = array<i64: 1, 78>}, {pipeline_mode = #tpu.pipeline_mode<synchronous>, transform_indices = @transform_10, window_bounds = array<i64: 201, 200>}, {pipeline_mode = #tpu.pipeline_mode<synchronous>, transform_indices = @transform_11, window_bounds = array<i64: 1, 200>}, {pipeline_mode = #tpu.pipeline_mode<synchronous>, transform_indices = @transform_12, window_bounds = array<i64: 200, 200>}, {pipeline_mode = #tpu.pipeline_mode<synchronous>, transform_indices = @transform_13, window_bounds = array<i64: 1, 200>}, {pipeline_mode = #tpu.pipeline_mode<synchronous>, transform_indices = @transform_14, window_bounds = array<i64: 200, 78>}, {pipeline_mode = #tpu.pipeline_mode<synchronous>, transform_indices = @transform_15, window_bounds = array<i64: 1, 78>}, {pipeline_mode = #tpu.pipeline_mode<synchronous>, transform_indices = @transform_16, window_bounds = array<i64: 400, 400>}, {pipeline_mode = #tpu.pipeline_mode<synchronous>, transform_indices = @transform_17, window_bounds = array<i64: 1, 400>}, {pipeline_mode = #tpu.pipeline_mode<synchronous>, transform_indices = @transform_18, window_bounds = array<i64: 400, 400>}, {pipeline_mode = #tpu.pipeline_mode<synchronous>, transform_indices = @transform_19, window_bounds = array<i64: 1, 400>}, {pipeline_mode = #tpu.pipeline_mode<synchronous>, transform_indices = @transform_20, window_bounds = array<i64: 400, 78>}, {pipeline_mode = #tpu.pipeline_mode<synchronous>, transform_indices = @transform_21, window_bounds = array<i64: 1, 78>}, {pipeline_mode = #tpu.pipeline_mode<synchronous>, transform_indices = @transform_22, window_bounds = array<i64: 78, 500>}, {pipeline_mode = #tpu.pipeline_mode<synchronous>, transform_indices = @transform_23, window_bounds = array<i64: 78, 500>}, {pipeline_mode = #tpu.pipeline_mode<synchronous>, transform_indices = @transform_24, window_bounds = array<i64: 78, 500>}, {pipeline_mode = #tpu.pipeline_mode<synchronous>, transform_indices = @transform_25, window_bounds = array<i64: 27, 500>}, {pipeline_mode = #tpu.pipeline_mode<synchronous>, transform_indices = @transform_26, window_bounds = array<i64: 1, 500>}, {pipeline_mode = #tpu.pipeline_mode<synchronous>, transform_indices = @transform_27, window_bounds = array<i64: 500, 500>}, {pipeline_mode = #tpu.pipeline_mode<synchronous>, transform_indices = @transform_28, window_bounds = array<i64: 1, 500>}, {pipeline_mode = #tpu.pipeline_mode<synchronous>, transform_indices = @transform_29, window_bounds = array<i64: 500, 78>}, {pipeline_mode = #tpu.pipeline_mode<synchronous>, transform_indices = @transform_30, window_bounds = array<i64: 1, 78>}, {transform_indices = @transform_31, window_bounds = array<i64: 8, 78>}]} {
    %c0 = arith.constant 0 : index
    %c0_0 = arith.constant 0 : index
    %0 = vector.load %arg1[%c0, %c0_0] : memref<8x960xf32, #tpu.memory_space<vmem>>, vector<8x960xf32>
    %c0_1 = arith.constant 0 : index
    %c0_2 = arith.constant 0 : index
    %1 = vector.load %arg2[%c0_1, %c0_2] : memref<8x201xf32, #tpu.memory_space<vmem>>, vector<8x201xf32>
    %c0_3 = arith.constant 0 : index
    %c0_4 = arith.constant 0 : index
    %2 = vector.load %arg3[%c0_3, %c0_4] : memref<8x400xf32, #tpu.memory_space<vmem>>, vector<8x400xf32>
    %c0_5 = arith.constant 0 : index
    %c0_6 = arith.constant 0 : index
    %3 = vector.load %arg4[%c0_5, %c0_6] : memref<8x27xf32, #tpu.memory_space<vmem>>, vector<8x27xf32>
    %c0_7 = arith.constant 0 : index
    %c0_8 = arith.constant 0 : index
    %4 = vector.load %arg5[%c0_7, %c0_8] : memref<960x300xbf16, #tpu.memory_space<vmem>>, vector<960x300xbf16>
    %5 = arith.extf %4 : vector<960x300xbf16> to vector<960x300xf32>
    %cst = arith.constant dense<0.000000e+00> : vector<8x300xf32>
    %6 = tpu.matmul %0, %5, %cst {dimension_numbers = #tpu.dot_dimension_numbers<[1], [0], [0], [1], [0, 0, 1, 1], [], []>} : vector<8x960xf32>, vector<960x300xf32>, vector<8x300xf32> -> vector<8x300xf32>
    %c0_9 = arith.constant 0 : index
    %c0_10 = arith.constant 0 : index
    %7 = vector.load %arg6[%c0_9, %c0_10] : memref<1x300xf32, #tpu.memory_space<vmem>>, vector<1x300xf32>
    %8 = vector.broadcast %7 : vector<1x300xf32> to vector<8x300xf32>
    %9 = arith.addf %6, %8 : vector<8x300xf32>
    %cst_11 = arith.constant 0.000000e+00 : f32
    %10 = vector.broadcast %cst_11 : f32 to vector<8x300xf32>
    %11 = arith.maximumf %9, %10 : vector<8x300xf32>
    %c0_12 = arith.constant 0 : index
    %c0_13 = arith.constant 0 : index
    %12 = vector.load %arg7[%c0_12, %c0_13] : memref<300x300xbf16, #tpu.memory_space<vmem>>, vector<300x300xbf16>
    %13 = arith.extf %12 : vector<300x300xbf16> to vector<300x300xf32>
    %cst_14 = arith.constant dense<0.000000e+00> : vector<8x300xf32>
    %14 = tpu.matmul %11, %13, %cst_14 {dimension_numbers = #tpu.dot_dimension_numbers<[1], [0], [0], [1], [0, 0, 1, 1], [], []>} : vector<8x300xf32>, vector<300x300xf32>, vector<8x300xf32> -> vector<8x300xf32>
    %c0_15 = arith.constant 0 : index
    %c0_16 = arith.constant 0 : index
    %15 = vector.load %arg8[%c0_15, %c0_16] : memref<1x300xf32, #tpu.memory_space<vmem>>, vector<1x300xf32>
    %16 = vector.broadcast %15 : vector<1x300xf32> to vector<8x300xf32>
    %17 = arith.addf %14, %16 : vector<8x300xf32>
    %cst_17 = arith.constant 0.000000e+00 : f32
    %18 = vector.broadcast %cst_17 : f32 to vector<8x300xf32>
    %19 = arith.maximumf %17, %18 : vector<8x300xf32>
    %c0_18 = arith.constant 0 : index
    %c0_19 = arith.constant 0 : index
    %20 = vector.load %arg9[%c0_18, %c0_19] : memref<300x78xbf16, #tpu.memory_space<vmem>>, vector<300x78xbf16>
    %21 = arith.extf %20 : vector<300x78xbf16> to vector<300x78xf32>
    %cst_20 = arith.constant dense<0.000000e+00> : vector<8x78xf32>
    %22 = tpu.matmul %19, %21, %cst_20 {dimension_numbers = #tpu.dot_dimension_numbers<[1], [0], [0], [1], [0, 0, 1, 1], [], []>} : vector<8x300xf32>, vector<300x78xf32>, vector<8x78xf32> -> vector<8x78xf32>
    %c0_21 = arith.constant 0 : index
    %c0_22 = arith.constant 0 : index
    %23 = vector.load %arg10[%c0_21, %c0_22] : memref<1x78xf32, #tpu.memory_space<vmem>>, vector<1x78xf32>
    %24 = vector.broadcast %23 : vector<1x78xf32> to vector<8x78xf32>
    %25 = arith.addf %22, %24 : vector<8x78xf32>
    %c0_23 = arith.constant 0 : index
    %c0_24 = arith.constant 0 : index
    %26 = vector.load %arg11[%c0_23, %c0_24] : memref<201x200xbf16, #tpu.memory_space<vmem>>, vector<201x200xbf16>
    %27 = arith.extf %26 : vector<201x200xbf16> to vector<201x200xf32>
    %cst_25 = arith.constant dense<0.000000e+00> : vector<8x200xf32>
    %28 = tpu.matmul %1, %27, %cst_25 {dimension_numbers = #tpu.dot_dimension_numbers<[1], [0], [0], [1], [0, 0, 1, 1], [], []>} : vector<8x201xf32>, vector<201x200xf32>, vector<8x200xf32> -> vector<8x200xf32>
    %c0_26 = arith.constant 0 : index
    %c0_27 = arith.constant 0 : index
    %29 = vector.load %arg12[%c0_26, %c0_27] : memref<1x200xf32, #tpu.memory_space<vmem>>, vector<1x200xf32>
    %30 = vector.broadcast %29 : vector<1x200xf32> to vector<8x200xf32>
    %31 = arith.addf %28, %30 : vector<8x200xf32>
    %cst_28 = arith.constant 0.000000e+00 : f32
    %32 = vector.broadcast %cst_28 : f32 to vector<8x200xf32>
    %33 = arith.maximumf %31, %32 : vector<8x200xf32>
    %c0_29 = arith.constant 0 : index
    %c0_30 = arith.constant 0 : index
    %34 = vector.load %arg13[%c0_29, %c0_30] : memref<200x200xbf16, #tpu.memory_space<vmem>>, vector<200x200xbf16>
    %35 = arith.extf %34 : vector<200x200xbf16> to vector<200x200xf32>
    %cst_31 = arith.constant dense<0.000000e+00> : vector<8x200xf32>
    %36 = tpu.matmul %33, %35, %cst_31 {dimension_numbers = #tpu.dot_dimension_numbers<[1], [0], [0], [1], [0, 0, 1, 1], [], []>} : vector<8x200xf32>, vector<200x200xf32>, vector<8x200xf32> -> vector<8x200xf32>
    %c0_32 = arith.constant 0 : index
    %c0_33 = arith.constant 0 : index
    %37 = vector.load %arg14[%c0_32, %c0_33] : memref<1x200xf32, #tpu.memory_space<vmem>>, vector<1x200xf32>
    %38 = vector.broadcast %37 : vector<1x200xf32> to vector<8x200xf32>
    %39 = arith.addf %36, %38 : vector<8x200xf32>
    %cst_34 = arith.constant 0.000000e+00 : f32
    %40 = vector.broadcast %cst_34 : f32 to vector<8x200xf32>
    %41 = arith.maximumf %39, %40 : vector<8x200xf32>
    %c0_35 = arith.constant 0 : index
    %c0_36 = arith.constant 0 : index
    %42 = vector.load %arg15[%c0_35, %c0_36] : memref<200x78xbf16, #tpu.memory_space<vmem>>, vector<200x78xbf16>
    %43 = arith.extf %42 : vector<200x78xbf16> to vector<200x78xf32>
    %cst_37 = arith.constant dense<0.000000e+00> : vector<8x78xf32>
    %44 = tpu.matmul %41, %43, %cst_37 {dimension_numbers = #tpu.dot_dimension_numbers<[1], [0], [0], [1], [0, 0, 1, 1], [], []>} : vector<8x200xf32>, vector<200x78xf32>, vector<8x78xf32> -> vector<8x78xf32>
    %c0_38 = arith.constant 0 : index
    %c0_39 = arith.constant 0 : index
    %45 = vector.load %arg16[%c0_38, %c0_39] : memref<1x78xf32, #tpu.memory_space<vmem>>, vector<1x78xf32>
    %46 = vector.broadcast %45 : vector<1x78xf32> to vector<8x78xf32>
    %47 = arith.addf %44, %46 : vector<8x78xf32>
    %c0_40 = arith.constant 0 : index
    %c0_41 = arith.constant 0 : index
    %48 = vector.load %arg17[%c0_40, %c0_41] : memref<400x400xbf16, #tpu.memory_space<vmem>>, vector<400x400xbf16>
    %49 = arith.extf %48 : vector<400x400xbf16> to vector<400x400xf32>
    %cst_42 = arith.constant dense<0.000000e+00> : vector<8x400xf32>
    %50 = tpu.matmul %2, %49, %cst_42 {dimension_numbers = #tpu.dot_dimension_numbers<[1], [0], [0], [1], [0, 0, 1, 1], [], []>} : vector<8x400xf32>, vector<400x400xf32>, vector<8x400xf32> -> vector<8x400xf32>
    %c0_43 = arith.constant 0 : index
    %c0_44 = arith.constant 0 : index
    %51 = vector.load %arg18[%c0_43, %c0_44] : memref<1x400xf32, #tpu.memory_space<vmem>>, vector<1x400xf32>
    %52 = vector.broadcast %51 : vector<1x400xf32> to vector<8x400xf32>
    %53 = arith.addf %50, %52 : vector<8x400xf32>
    %cst_45 = arith.constant 0.000000e+00 : f32
    %54 = vector.broadcast %cst_45 : f32 to vector<8x400xf32>
    %55 = arith.maximumf %53, %54 : vector<8x400xf32>
    %c0_46 = arith.constant 0 : index
    %c0_47 = arith.constant 0 : index
    %56 = vector.load %arg19[%c0_46, %c0_47] : memref<400x400xbf16, #tpu.memory_space<vmem>>, vector<400x400xbf16>
    %57 = arith.extf %56 : vector<400x400xbf16> to vector<400x400xf32>
    %cst_48 = arith.constant dense<0.000000e+00> : vector<8x400xf32>
    %58 = tpu.matmul %55, %57, %cst_48 {dimension_numbers = #tpu.dot_dimension_numbers<[1], [0], [0], [1], [0, 0, 1, 1], [], []>} : vector<8x400xf32>, vector<400x400xf32>, vector<8x400xf32> -> vector<8x400xf32>
    %c0_49 = arith.constant 0 : index
    %c0_50 = arith.constant 0 : index
    %59 = vector.load %arg20[%c0_49, %c0_50] : memref<1x400xf32, #tpu.memory_space<vmem>>, vector<1x400xf32>
    %60 = vector.broadcast %59 : vector<1x400xf32> to vector<8x400xf32>
    %61 = arith.addf %58, %60 : vector<8x400xf32>
    %cst_51 = arith.constant 0.000000e+00 : f32
    %62 = vector.broadcast %cst_51 : f32 to vector<8x400xf32>
    %63 = arith.maximumf %61, %62 : vector<8x400xf32>
    %c0_52 = arith.constant 0 : index
    %c0_53 = arith.constant 0 : index
    %64 = vector.load %arg21[%c0_52, %c0_53] : memref<400x78xbf16, #tpu.memory_space<vmem>>, vector<400x78xbf16>
    %65 = arith.extf %64 : vector<400x78xbf16> to vector<400x78xf32>
    %cst_54 = arith.constant dense<0.000000e+00> : vector<8x78xf32>
    %66 = tpu.matmul %63, %65, %cst_54 {dimension_numbers = #tpu.dot_dimension_numbers<[1], [0], [0], [1], [0, 0, 1, 1], [], []>} : vector<8x400xf32>, vector<400x78xf32>, vector<8x78xf32> -> vector<8x78xf32>
    %c0_55 = arith.constant 0 : index
    %c0_56 = arith.constant 0 : index
    %67 = vector.load %arg22[%c0_55, %c0_56] : memref<1x78xf32, #tpu.memory_space<vmem>>, vector<1x78xf32>
    %68 = vector.broadcast %67 : vector<1x78xf32> to vector<8x78xf32>
    %69 = arith.addf %66, %68 : vector<8x78xf32>
    %c0_57 = arith.constant 0 : index
    %c0_58 = arith.constant 0 : index
    %70 = vector.load %arg23[%c0_57, %c0_58] : memref<78x500xbf16, #tpu.memory_space<vmem>>, vector<78x500xbf16>
    %71 = arith.extf %70 : vector<78x500xbf16> to vector<78x500xf32>
    %cst_59 = arith.constant dense<0.000000e+00> : vector<8x500xf32>
    %72 = tpu.matmul %25, %71, %cst_59 {dimension_numbers = #tpu.dot_dimension_numbers<[1], [0], [0], [1], [0, 0, 1, 1], [], []>} : vector<8x78xf32>, vector<78x500xf32>, vector<8x500xf32> -> vector<8x500xf32>
    %c0_60 = arith.constant 0 : index
    %c0_61 = arith.constant 0 : index
    %73 = vector.load %arg24[%c0_60, %c0_61] : memref<78x500xbf16, #tpu.memory_space<vmem>>, vector<78x500xbf16>
    %74 = arith.extf %73 : vector<78x500xbf16> to vector<78x500xf32>
    %cst_62 = arith.constant dense<0.000000e+00> : vector<8x500xf32>
    %75 = tpu.matmul %47, %74, %cst_62 {dimension_numbers = #tpu.dot_dimension_numbers<[1], [0], [0], [1], [0, 0, 1, 1], [], []>} : vector<8x78xf32>, vector<78x500xf32>, vector<8x500xf32> -> vector<8x500xf32>
    %76 = arith.addf %72, %75 : vector<8x500xf32>
    %c0_63 = arith.constant 0 : index
    %c0_64 = arith.constant 0 : index
    %77 = vector.load %arg25[%c0_63, %c0_64] : memref<78x500xbf16, #tpu.memory_space<vmem>>, vector<78x500xbf16>
    %78 = arith.extf %77 : vector<78x500xbf16> to vector<78x500xf32>
    %cst_65 = arith.constant dense<0.000000e+00> : vector<8x500xf32>
    %79 = tpu.matmul %69, %78, %cst_65 {dimension_numbers = #tpu.dot_dimension_numbers<[1], [0], [0], [1], [0, 0, 1, 1], [], []>} : vector<8x78xf32>, vector<78x500xf32>, vector<8x500xf32> -> vector<8x500xf32>
    %80 = arith.addf %76, %79 : vector<8x500xf32>
    %c0_66 = arith.constant 0 : index
    %c0_67 = arith.constant 0 : index
    %81 = vector.load %arg26[%c0_66, %c0_67] : memref<27x500xbf16, #tpu.memory_space<vmem>>, vector<27x500xbf16>
    %82 = arith.extf %81 : vector<27x500xbf16> to vector<27x500xf32>
    %cst_68 = arith.constant dense<0.000000e+00> : vector<8x500xf32>
    %83 = tpu.matmul %3, %82, %cst_68 {dimension_numbers = #tpu.dot_dimension_numbers<[1], [0], [0], [1], [0, 0, 1, 1], [], []>} : vector<8x27xf32>, vector<27x500xf32>, vector<8x500xf32> -> vector<8x500xf32>
    %84 = arith.addf %80, %83 : vector<8x500xf32>
    %c0_69 = arith.constant 0 : index
    %c0_70 = arith.constant 0 : index
    %85 = vector.load %arg27[%c0_69, %c0_70] : memref<1x500xf32, #tpu.memory_space<vmem>>, vector<1x500xf32>
    %86 = vector.broadcast %85 : vector<1x500xf32> to vector<8x500xf32>
    %87 = arith.addf %84, %86 : vector<8x500xf32>
    %cst_71 = arith.constant 0.000000e+00 : f32
    %88 = vector.broadcast %cst_71 : f32 to vector<8x500xf32>
    %89 = arith.maximumf %87, %88 : vector<8x500xf32>
    %c0_72 = arith.constant 0 : index
    %c0_73 = arith.constant 0 : index
    %90 = vector.load %arg28[%c0_72, %c0_73] : memref<500x500xbf16, #tpu.memory_space<vmem>>, vector<500x500xbf16>
    %91 = arith.extf %90 : vector<500x500xbf16> to vector<500x500xf32>
    %cst_74 = arith.constant dense<0.000000e+00> : vector<8x500xf32>
    %92 = tpu.matmul %89, %91, %cst_74 {dimension_numbers = #tpu.dot_dimension_numbers<[1], [0], [0], [1], [0, 0, 1, 1], [], []>} : vector<8x500xf32>, vector<500x500xf32>, vector<8x500xf32> -> vector<8x500xf32>
    %c0_75 = arith.constant 0 : index
    %c0_76 = arith.constant 0 : index
    %93 = vector.load %arg29[%c0_75, %c0_76] : memref<1x500xf32, #tpu.memory_space<vmem>>, vector<1x500xf32>
    %94 = vector.broadcast %93 : vector<1x500xf32> to vector<8x500xf32>
    %95 = arith.addf %92, %94 : vector<8x500xf32>
    %cst_77 = arith.constant 0.000000e+00 : f32
    %96 = vector.broadcast %cst_77 : f32 to vector<8x500xf32>
    %97 = arith.maximumf %95, %96 : vector<8x500xf32>
    %c0_78 = arith.constant 0 : index
    %c0_79 = arith.constant 0 : index
    %98 = vector.load %arg30[%c0_78, %c0_79] : memref<500x78xbf16, #tpu.memory_space<vmem>>, vector<500x78xbf16>
    %99 = arith.extf %98 : vector<500x78xbf16> to vector<500x78xf32>
    %cst_80 = arith.constant dense<0.000000e+00> : vector<8x78xf32>
    %100 = tpu.matmul %97, %99, %cst_80 {dimension_numbers = #tpu.dot_dimension_numbers<[1], [0], [0], [1], [0, 0, 1, 1], [], []>} : vector<8x500xf32>, vector<500x78xf32>, vector<8x78xf32> -> vector<8x78xf32>
    %c0_81 = arith.constant 0 : index
    %c0_82 = arith.constant 0 : index
    %101 = vector.load %arg31[%c0_81, %c0_82] : memref<1x78xf32, #tpu.memory_space<vmem>>, vector<1x78xf32>
    %102 = vector.broadcast %101 : vector<1x78xf32> to vector<8x78xf32>
    %103 = arith.addf %100, %102 : vector<8x78xf32>
    %c0_83 = arith.constant 0 : index
    %c0_84 = arith.constant 0 : index
    %104 = vector.load %arg32[%c0_83, %c0_84] : memref<8x78xf32, #tpu.memory_space<vmem>>, vector<8x78xf32>
    tpu.vector_store %arg32[%c0_83, %c0_84], %103 {strides = array<i32>} : memref<8x78xf32, #tpu.memory_space<vmem>>, vector<8x78xf32>,
    return
  }
  func.func @transform_0(%arg0: i32) -> (i32, i32) {
    %c0_i32 = arith.constant 0 : i32
    %c0_i32_0 = arith.constant 0 : i32
    return %arg0, %c0_i32 : i32, i32
  }
  func.func @transform_1(%arg0: i32) -> (i32, i32) {
    %c0_i32 = arith.constant 0 : i32
    %c0_i32_0 = arith.constant 0 : i32
    return %arg0, %c0_i32 : i32, i32
  }
  func.func @transform_2(%arg0: i32) -> (i32, i32) {
    %c0_i32 = arith.constant 0 : i32
    %c0_i32_0 = arith.constant 0 : i32
    return %arg0, %c0_i32 : i32, i32
  }
  func.func @transform_3(%arg0: i32) -> (i32, i32) {
    %c0_i32 = arith.constant 0 : i32
    %c0_i32_0 = arith.constant 0 : i32
    return %arg0, %c0_i32 : i32, i32
  }
  func.func @transform_4(%arg0: i32) -> (i32, i32) {
    %c0_i32 = arith.constant 0 : i32
    %c0_i32_0 = arith.constant 0 : i32
    %c0_i32_1 = arith.constant 0 : i32
    return %c0_i32, %c0_i32_0 : i32, i32
  }
  func.func @transform_5(%arg0: i32) -> (i32, i32) {
    %c0_i32 = arith.constant 0 : i32
    %c0_i32_0 = arith.constant 0 : i32
    %c0_i32_1 = arith.constant 0 : i32
    return %c0_i32, %c0_i32_0 : i32, i32
  }
  func.func @transform_6(%arg0: i32) -> (i32, i32) {
    %c0_i32 = arith.constant 0 : i32
    %c0_i32_0 = arith.constant 0 : i32
    %c0_i32_1 = arith.constant 0 : i32
    return %c0_i32, %c0_i32_0 : i32, i32
  }
  func.func @transform_7(%arg0: i32) -> (i32, i32) {
    %c0_i32 = arith.constant 0 : i32
    %c0_i32_0 = arith.constant 0 : i32
    %c0_i32_1 = arith.constant 0 : i32
    return %c0_i32, %c0_i32_0 : i32, i32
  }
  func.func @transform_8(%arg0: i32) -> (i32, i32) {
    %c0_i32 = arith.constant 0 : i32
    %c0_i32_0 = arith.constant 0 : i32
    %c0_i32_1 = arith.constant 0 : i32
    return %c0_i32, %c0_i32_0 : i32, i32
  }
  func.func @transform_9(%arg0: i32) -> (i32, i32) {
    %c0_i32 = arith.constant 0 : i32
    %c0_i32_0 = arith.constant 0 : i32
    %c0_i32_1 = arith.constant 0 : i32
    return %c0_i32, %c0_i32_0 : i32, i32
  }
  func.func @transform_10(%arg0: i32) -> (i32, i32) {
    %c0_i32 = arith.constant 0 : i32
    %c0_i32_0 = arith.constant 0 : i32
    %c0_i32_1 = arith.constant 0 : i32
    return %c0_i32, %c0_i32_0 : i32, i32
  }
  func.func @transform_11(%arg0: i32) -> (i32, i32) {
    %c0_i32 = arith.constant 0 : i32
    %c0_i32_0 = arith.constant 0 : i32
    %c0_i32_1 = arith.constant 0 : i32
    return %c0_i32, %c0_i32_0 : i32, i32
  }
  func.func @transform_12(%arg0: i32) -> (i32, i32) {
    %c0_i32 = arith.constant 0 : i32
    %c0_i32_0 = arith.constant 0 : i32
    %c0_i32_1 = arith.constant 0 : i32
    return %c0_i32, %c0_i32_0 : i32, i32
  }
  func.func @transform_13(%arg0: i32) -> (i32, i32) {
    %c0_i32 = arith.constant 0 : i32
    %c0_i32_0 = arith.constant 0 : i32
    %c0_i32_1 = arith.constant 0 : i32
    return %c0_i32, %c0_i32_0 : i32, i32
  }
  func.func @transform_14(%arg0: i32) -> (i32, i32) {
    %c0_i32 = arith.constant 0 : i32
    %c0_i32_0 = arith.constant 0 : i32
    %c0_i32_1 = arith.constant 0 : i32
    return %c0_i32, %c0_i32_0 : i32, i32
  }
  func.func @transform_15(%arg0: i32) -> (i32, i32) {
    %c0_i32 = arith.constant 0 : i32
    %c0_i32_0 = arith.constant 0 : i32
    %c0_i32_1 = arith.constant 0 : i32
    return %c0_i32, %c0_i32_0 : i32, i32
  }
  func.func @transform_16(%arg0: i32) -> (i32, i32) {
    %c0_i32 = arith.constant 0 : i32
    %c0_i32_0 = arith.constant 0 : i32
    %c0_i32_1 = arith.constant 0 : i32
    return %c0_i32, %c0_i32_0 : i32, i32
  }
  func.func @transform_17(%arg0: i32) -> (i32, i32) {
    %c0_i32 = arith.constant 0 : i32
    %c0_i32_0 = arith.constant 0 : i32
    %c0_i32_1 = arith.constant 0 : i32
    return %c0_i32, %c0_i32_0 : i32, i32
  }
  func.func @transform_18(%arg0: i32) -> (i32, i32) {
    %c0_i32 = arith.constant 0 : i32
    %c0_i32_0 = arith.constant 0 : i32
    %c0_i32_1 = arith.constant 0 : i32
    return %c0_i32, %c0_i32_0 : i32, i32
  }
  func.func @transform_19(%arg0: i32) -> (i32, i32) {
    %c0_i32 = arith.constant 0 : i32
    %c0_i32_0 = arith.constant 0 : i32
    %c0_i32_1 = arith.constant 0 : i32
    return %c0_i32, %c0_i32_0 : i32, i32
  }
  func.func @transform_20(%arg0: i32) -> (i32, i32) {
    %c0_i32 = arith.constant 0 : i32
    %c0_i32_0 = arith.constant 0 : i32
    %c0_i32_1 = arith.constant 0 : i32
    return %c0_i32, %c0_i32_0 : i32, i32
  }
  func.func @transform_21(%arg0: i32) -> (i32, i32) {
    %c0_i32 = arith.constant 0 : i32
    %c0_i32_0 = arith.constant 0 : i32
    %c0_i32_1 = arith.constant 0 : i32
    return %c0_i32, %c0_i32_0 : i32, i32
  }
  func.func @transform_22(%arg0: i32) -> (i32, i32) {
    %c0_i32 = arith.constant 0 : i32
    %c0_i32_0 = arith.constant 0 : i32
    %c0_i32_1 = arith.constant 0 : i32
    return %c0_i32, %c0_i32_0 : i32, i32
  }
  func.func @transform_23(%arg0: i32) -> (i32, i32) {
    %c0_i32 = arith.constant 0 : i32
    %c0_i32_0 = arith.constant 0 : i32
    %c0_i32_1 = arith.constant 0 : i32
    return %c0_i32, %c0_i32_0 : i32, i32
  }
  func.func @transform_24(%arg0: i32) -> (i32, i32) {
    %c0_i32 = arith.constant 0 : i32
    %c0_i32_0 = arith.constant 0 : i32
    %c0_i32_1 = arith.constant 0 : i32
    return %c0_i32, %c0_i32_0 : i32, i32
  }
  func.func @transform_25(%arg0: i32) -> (i32, i32) {
    %c0_i32 = arith.constant 0 : i32
    %c0_i32_0 = arith.constant 0 : i32
    %c0_i32_1 = arith.constant 0 : i32
    return %c0_i32, %c0_i32_0 : i32, i32
  }
  func.func @transform_26(%arg0: i32) -> (i32, i32) {
    %c0_i32 = arith.constant 0 : i32
    %c0_i32_0 = arith.constant 0 : i32
    %c0_i32_1 = arith.constant 0 : i32
    return %c0_i32, %c0_i32_0 : i32, i32
  }
  func.func @transform_27(%arg0: i32) -> (i32, i32) {
    %c0_i32 = arith.constant 0 : i32
    %c0_i32_0 = arith.constant 0 : i32
    %c0_i32_1 = arith.constant 0 : i32
    return %c0_i32, %c0_i32_0 : i32, i32
  }
  func.func @transform_28(%arg0: i32) -> (i32, i32) {
    %c0_i32 = arith.constant 0 : i32
    %c0_i32_0 = arith.constant 0 : i32
    %c0_i32_1 = arith.constant 0 : i32
    return %c0_i32, %c0_i32_0 : i32, i32
  }
  func.func @transform_29(%arg0: i32) -> (i32, i32) {
    %c0_i32 = arith.constant 0 : i32
    %c0_i32_0 = arith.constant 0 : i32
    %c0_i32_1 = arith.constant 0 : i32
    return %c0_i32, %c0_i32_0 : i32, i32
  }
  func.func @transform_30(%arg0: i32) -> (i32, i32) {
    %c0_i32 = arith.constant 0 : i32
    %c0_i32_0 = arith.constant 0 : i32
    %c0_i32_1 = arith.constant 0 : i32
    return %c0_i32, %c0_i32_0 : i32, i32
  }
  func.func @transform_31(%arg0: i32) -> (i32, i32) {
    %c0_i32 = arith.constant 0 : i32
    %c0_i32_0 = arith.constant 0 : i32
    return %arg0, %c0_i32 : i32, i32
  }
}

</mosaic_0001>

<llo_original>
// kernel: sherlock_ori_forward.1
$region0: #{sherlock_ori_forward.1}
  #allocation0 [shape = 'u32[]', space=smem, size = 0x4, offset = 0x4, fixed_abs, tag = 'smem constant byte address 0x4 - core index']
  #allocation1 [shape = 'u32[144,128]{1,0:T(1,128)}', space=vmem, size = 0x12000, scoped, tag = 'internal scratch']
  %s0 = inlined_call_operand.smem [shape: u32[32], index: -1, kind: input, shape index: {}]
  %s1 = sld [smem:[%s0]]
  %s2 = scalar_lea.smem %s0, 1
  %s3 = sld [smem:[%s2]]
  %s4 = scalar_lea.smem %s0, 2
  %s5 = sld [smem:[%s4]]
  %s6 = scalar_lea.smem %s0, 3
  %s7 = sld [smem:[%s6]]
  %s8 = scalar_lea.smem %s0, 4
  %s9 = sld [smem:[%s8]]
  %s10 = scalar_lea.smem %s0, 5
  %s11 = sld [smem:[%s10]]
  %s12 = scalar_lea.smem %s0, 6
  %s13 = sld [smem:[%s12]]
  %s14 = scalar_lea.smem %s0, 7
  %s15 = sld [smem:[%s14]]
  %s16 = scalar_lea.smem %s0, 8
  %s17 = sld [smem:[%s16]]
  %s18 = scalar_lea.smem %s0, 9
  %s19 = sld [smem:[%s18]]
  %s20 = scalar_lea.smem %s0, 10
  %s21 = sld [smem:[%s20]]
  %s22 = scalar_lea.smem %s0, 11
  %s23 = sld [smem:[%s22]]
  %s24 = scalar_lea.smem %s0, 12
  %s25 = sld [smem:[%s24]]
  %s26 = scalar_lea.smem %s0, 13
  %s27 = sld [smem:[%s26]]
  %s28 = scalar_lea.smem %s0, 14
  %s29 = sld [smem:[%s28]]
  %s30 = scalar_lea.smem %s0, 15
  %s31 = sld [smem:[%s30]]
  %s32 = scalar_lea.smem %s0, 16
  %s33 = sld [smem:[%s32]]
  %s34 = scalar_lea.smem %s0, 17
  %s35 = sld [smem:[%s34]]
  %s36 = scalar_lea.smem %s0, 18
  %s37 = sld [smem:[%s36]]
  %s38 = scalar_lea.smem %s0, 19
  %s39 = sld [smem:[%s38]]
  %s40 = scalar_lea.smem %s0, 20
  %s41 = sld [smem:[%s40]]
  %s42 = scalar_lea.smem %s0, 21
  %s43 = sld [smem:[%s42]]
  %s44 = scalar_lea.smem %s0, 22
  %s45 = sld [smem:[%s44]]
  %s46 = scalar_lea.smem %s0, 23
  %s47 = sld [smem:[%s46]]
  %s48 = scalar_lea.smem %s0, 24
  %s49 = sld [smem:[%s48]]
  %s50 = scalar_lea.smem %s0, 25
  %s51 = sld [smem:[%s50]]
  %s52 = scalar_lea.smem %s0, 26
  %s53 = sld [smem:[%s52]]
  %s54 = scalar_lea.smem %s0, 27
  %s55 = sld [smem:[%s54]]
  %s56 = scalar_lea.smem %s0, 28
  %s57 = sld [smem:[%s56]]
  %s58 = scalar_lea.smem %s0, 29
  %s59 = sld [smem:[%s58]]
  %s60 = scalar_lea.smem %s0, 30
  %s61 = sld [smem:[%s60]]
  %s62 = scalar_lea.smem %s0, 31
  %s63 = sld [smem:[%s62]]
  %s64 = sld [smem:[#allocation0]]
  $region178: #{sherlock_ori_forward.1} parent=0
    _
  %s66 = ssub.s32 1, %s64
  %s67 = scalar_select 0, %s66, %s64
  $region1: #{sherlock_ori_forward.1} parent=0
    #allocation2 [shape = 'u8[512]{0}', space=vmem, size = 0x400, scoped, tag = 'input window, operand 9, single buffered']
    #allocation3 [shape = 's32[1]{0}', space=sflag, size = 0x4, scoped, tag = 'scoped memory for sherlock_ori_forward.1']
    #allocation4 [shape = 's32[1]{0}', space=sflag, size = 0x4, scoped, tag = 'scoped memory for sherlock_ori_forward.1']
    #allocation5 [shape = 'u8[1024]{0}', space=vmem, size = 0x400, scoped, tag = 'input window, operand 11, single buffered']
    #allocation6 [shape = 's32[1]{0}', space=sflag, size = 0x4, scoped, tag = 'scoped memory for sherlock_ori_forward.1']
    #allocation7 [shape = 'u8[102400]{0}', space=vmem, size = 0x19000, scoped, tag = 'input window, operand 12, single buffered']
    #allocation8 [shape = 'u8[1024]{0}', space=vmem, size = 0x400, scoped, tag = 'input window, operand 13, single buffered']
    #allocation9 [shape = 's32[1]{0}', space=sflag, size = 0x4, scoped, tag = 'scoped memory for sherlock_ori_forward.1']
    #allocation10 [shape = 'u8[512]{0}', space=vmem, size = 0x400, scoped, tag = 'input window, operand 15, single buffered']
    #allocation11 [shape = 'u8[512]{0}', space=vmem, size = 0x400, scoped, tag = 'input window, operand 21, single buffered']
    #allocation12 [shape = 's32[1]{0}', space=sflag, size = 0x4, scoped, tag = 'scoped memory for sherlock_ori_forward.1']
    #allocation13 [shape = 'u8[81920]{0}', space=vmem, size = 0x14000, scoped, tag = 'input window, operand 22, single buffered']
    #allocation14 [shape = 'u8[81920]{0}', space=vmem, size = 0x14000, scoped, tag = 'input window, operand 23, single buffered']
    #allocation15 [shape = 's32[1]{0}', space=sflag, size = 0x4, scoped, tag = 'scoped memory for sherlock_ori_forward.1']
    #allocation16 [shape = 'u8[81920]{0}', space=vmem, size = 0x14000, scoped, tag = 'input window, operand 24, single buffered']
    #allocation17 [shape = 'u8[32768]{0}', space=vmem, size = 0x8000, scoped, tag = 'input window, operand 25, single buffered']
    #allocation18 [shape = 's32[1]{0}', space=sflag, size = 0x4, scoped, tag = 'scoped memory for sherlock_ori_forward.1']
    #allocation19 [shape = 'u8[512]{0}', space=vmem, size = 0x400, scoped, tag = 'input window, operand 30, single buffered']
    #allocation20 [shape = 'u8[4096]{0}', space=vmem, size = 0x1000, scoped, tag = 'output window, operand 0, single buffered']
    %68 = vsyncpa [#allocation3], 0
    %69 = vsyncpa [#allocation6], 0
    %70 = vsyncpa [#allocation9], 0
    %71 = vsyncpa [#allocation12], 0
    %72 = vsyncpa [#allocation15], 0
    %73 = vsyncpa [#allocation18], 0
    %74 = vsyncpa [#allocation4], 0
    // Predicated region
    $region2: #{sherlock_ori_forward.1} parent=1 // pred_check
      _
    $region3: #{sherlock_ori_forward.1} parent=1 // pred_check_branch
      %76 = sbr.rel (0) target = $region5
    $region4: #{sherlock_ori_forward.1} parent=1 // pred_region
      _
    $region5: #{sherlock_ori_forward.1} parent=1 // pred_fallthru
      _
    // Predicated region
    $region6: #{sherlock_ori_forward.1} parent=1 // pred_check
      _
    $region7: #{sherlock_ori_forward.1} parent=1 // pred_check_branch
      %78 = sbr.rel (0) target = $region9
    $region8: #{sherlock_ori_forward.1} parent=1 // pred_region
      _
    $region9: #{sherlock_ori_forward.1} parent=1 // pred_fallthru
      _
    // Predicated region
    $region10: #{sherlock_ori_forward.1} parent=1 // pred_check
      _
    $region11: #{sherlock_ori_forward.1} parent=1 // pred_check_branch
      %80 = sbr.rel (0) target = $region13
    $region12: #{sherlock_ori_forward.1} parent=1 // pred_region
      _
    $region13: #{sherlock_ori_forward.1} parent=1 // pred_fallthru
      _
    // Predicated region
    $region14: #{sherlock_ori_forward.1} parent=1 // pred_check
      _
    $region15: #{sherlock_ori_forward.1} parent=1 // pred_check_branch
      %82 = sbr.rel (0) target = $region17
    $region16: #{sherlock_ori_forward.1} parent=1 // pred_region
      _
    $region17: #{sherlock_ori_forward.1} parent=1 // pred_fallthru
      _
    // Predicated region
    $region18: #{sherlock_ori_forward.1} parent=1 // pred_check
      _
    $region19: #{sherlock_ori_forward.1} parent=1 // pred_check_branch
      %84 = sbr.rel (0) target = $region21
    $region20: #{sherlock_ori_forward.1} parent=1 // pred_region
      _
    $region21: #{sherlock_ori_forward.1} parent=1 // pred_fallthru
      _
    // Predicated region
    $region22: #{sherlock_ori_forward.1} parent=1 // pred_check
      _
    $region23: #{sherlock_ori_forward.1} parent=1 // pred_check_branch
      %86 = sbr.rel (0) target = $region25
    $region24: #{sherlock_ori_forward.1} parent=1 // pred_region
      _
    $region25: #{sherlock_ori_forward.1} parent=1 // pred_fallthru
      _
    // Predicated region
    $region26: #{sherlock_ori_forward.1} parent=1 // pred_check
      _
    $region27: #{sherlock_ori_forward.1} parent=1 // pred_check_branch
      %88 = sbr.rel (0) target = $region29
    $region28: #{sherlock_ori_forward.1} parent=1 // pred_region
      _
    $region29: #{sherlock_ori_forward.1} parent=1 // pred_fallthru
      _
    // Predicated region
    $region30: #{sherlock_ori_forward.1} parent=1 // pred_check
      _
    $region31: #{sherlock_ori_forward.1} parent=1 // pred_check_branch
      %90 = sbr.rel (0) target = $region33
    $region32: #{sherlock_ori_forward.1} parent=1 // pred_region
      _
    $region33: #{sherlock_ori_forward.1} parent=1 // pred_fallthru
      _
    // Predicated region
    $region34: #{sherlock_ori_forward.1} parent=1 // pred_check
      _
    $region35: #{sherlock_ori_forward.1} parent=1 // pred_check_branch
      %92 = sbr.rel (0) target = $region37
    $region36: #{sherlock_ori_forward.1} parent=1 // pred_region
      _
    $region37: #{sherlock_ori_forward.1} parent=1 // pred_fallthru
      _
    // Predicated region
    $region38: #{sherlock_ori_forward.1} parent=1 // pred_check
      _
    $region39: #{sherlock_ori_forward.1} parent=1 // pred_check_branch
      %94 = sbr.rel (0) target = $region41
    $region40: #{sherlock_ori_forward.1} parent=1 // pred_region
      %s96 = ssub.s32 16, 16
      %97 = vsyncadd [#allocation3], %s96
      %s99 = sshll.u32 [#allocation2], 4
      %s100 = int_to_ptr.vmem [resolvable:$true] %s99
      %102 = dma.hbm_to_vmem [thread:$0]  %s19, 16, %s100, [#allocation3]
    $region41: #{sherlock_ori_forward.1} parent=1 // pred_fallthru
      _
    // Predicated region
    $region42: #{sherlock_ori_forward.1} parent=1 // pred_check
      _
    $region43: #{sherlock_ori_forward.1} parent=1 // pred_check_branch
      %104 = sbr.rel (0) target = $region45
    $region44: #{sherlock_ori_forward.1} parent=1 // pred_region
      _
    $region45: #{sherlock_ori_forward.1} parent=1 // pred_fallthru
      _
    // Predicated region
    $region46: #{sherlock_ori_forward.1} parent=1 // pred_check
      _
    $region47: #{sherlock_ori_forward.1} parent=1 // pred_check_branch
      %106 = sbr.rel (0) target = $region49
    $region48: #{sherlock_ori_forward.1} parent=1 // pred_region
      %s108 = ssub.s32 32, 32
      %109 = vsyncadd [#allocation6], %s108
      %s111 = sshll.u32 [#allocation5], 4
      %s112 = int_to_ptr.vmem [resolvable:$true] %s111
      %114 = dma.hbm_to_vmem [thread:$0]  %s23, 32, %s112, [#allocation6]
    $region49: #{sherlock_ori_forward.1} parent=1 // pred_fallthru
      _
    // Predicated region
    $region50: #{sherlock_ori_forward.1} parent=1 // pred_check
      _
    $region51: #{sherlock_ori_forward.1} parent=1 // pred_check_branch
      %116 = sbr.rel (0) target = $region53
    $region52: #{sherlock_ori_forward.1} parent=1 // pred_region
      %s118 = ssub.s32 3200, 3200
      %119 = vsyncadd [#allocation6], %s118
      %s120 = sshll.u32 [#allocation7], 4
      %s121 = int_to_ptr.vmem [resolvable:$true] %s120
      %126 = dma.hbm_to_vmem [thread:$0]  %s25, 3200, %s121, [#allocation6], 128, 128, 8
    $region53: #{sherlock_ori_forward.1} parent=1 // pred_fallthru
      _
    // Predicated region
    $region54: #{sherlock_ori_forward.1} parent=1 // pred_check
      _
    $region55: #{sherlock_ori_forward.1} parent=1 // pred_check_branch
      %128 = sbr.rel (0) target = $region57
    $region56: #{sherlock_ori_forward.1} parent=1 // pred_region
      %s130 = ssub.s32 32, 32
      %131 = vsyncadd [#allocation9], %s130
      %s133 = sshll.u32 [#allocation8], 4
      %s134 = int_to_ptr.vmem [resolvable:$true] %s133
      %136 = dma.hbm_to_vmem [thread:$0]  %s27, 32, %s134, [#allocation9]
    $region57: #{sherlock_ori_forward.1} parent=1 // pred_fallthru
      _
    // Predicated region
    $region58: #{sherlock_ori_forward.1} parent=1 // pred_check
      _
    $region59: #{sherlock_ori_forward.1} parent=1 // pred_check_branch
      %138 = sbr.rel (0) target = $region61
    $region60: #{sherlock_ori_forward.1} parent=1 // pred_region
      _
    $region61: #{sherlock_ori_forward.1} parent=1 // pred_fallthru
      _
    // Predicated region
    $region62: #{sherlock_ori_forward.1} parent=1 // pred_check
      _
    $region63: #{sherlock_ori_forward.1} parent=1 // pred_check_branch
      %140 = sbr.rel (0) target = $region65
    $region64: #{sherlock_ori_forward.1} parent=1 // pred_region
      %s142 = ssub.s32 16, 16
      %143 = vsyncadd [#allocation9], %s142
      %s145 = sshll.u32 [#allocation10], 4
      %s146 = int_to_ptr.vmem [resolvable:$true] %s145
      %148 = dma.hbm_to_vmem [thread:$0]  %s31, 16, %s146, [#allocation9]
    $region65: #{sherlock_ori_forward.1} parent=1 // pred_fallthru
      _
    // Predicated region
    $region66: #{sherlock_ori_forward.1} parent=1 // pred_check
      _
    $region67: #{sherlock_ori_forward.1} parent=1 // pred_check_branch
      %150 = sbr.rel (0) target = $region69
    $region68: #{sherlock_ori_forward.1} parent=1 // pred_region
      _
    $region69: #{sherlock_ori_forward.1} parent=1 // pred_fallthru
      _
    // Predicated region
    $region70: #{sherlock_ori_forward.1} parent=1 // pred_check
      _
    $region71: #{sherlock_ori_forward.1} parent=1 // pred_check_branch
      %152 = sbr.rel (0) target = $region73
    $region72: #{sherlock_ori_forward.1} parent=1 // pred_region
      _
    $region73: #{sherlock_ori_forward.1} parent=1 // pred_fallthru
      _
    // Predicated region
    $region74: #{sherlock_ori_forward.1} parent=1 // pred_check
      _
    $region75: #{sherlock_ori_forward.1} parent=1 // pred_check_branch
      %154 = sbr.rel (0) target = $region77
    $region76: #{sherlock_ori_forward.1} parent=1 // pred_region
      _
    $region77: #{sherlock_ori_forward.1} parent=1 // pred_fallthru
      _
    // Predicated region
    $region78: #{sherlock_ori_forward.1} parent=1 // pred_check
      _
    $region79: #{sherlock_ori_forward.1} parent=1 // pred_check_branch
      %156 = sbr.rel (0) target = $region81
    $region80: #{sherlock_ori_forward.1} parent=1 // pred_region
      _
    $region81: #{sherlock_ori_forward.1} parent=1 // pred_fallthru
      _
    // Predicated region
    $region82: #{sherlock_ori_forward.1} parent=1 // pred_check
      _
    $region83: #{sherlock_ori_forward.1} parent=1 // pred_check_branch
      %158 = sbr.rel (0) target = $region85
    $region84: #{sherlock_ori_forward.1} parent=1 // pred_region
      _
    $region85: #{sherlock_ori_forward.1} parent=1 // pred_fallthru
      _
    // Predicated region
    $region86: #{sherlock_ori_forward.1} parent=1 // pred_check
      _
    $region87: #{sherlock_ori_forward.1} parent=1 // pred_check_branch
      %160 = sbr.rel (0) target = $region89
    $region88: #{sherlock_ori_forward.1} parent=1 // pred_region
      %s162 = ssub.s32 16, 16
      %163 = vsyncadd [#allocation12], %s162
      %s165 = sshll.u32 [#allocation11], 4
      %s166 = int_to_ptr.vmem [resolvable:$true] %s165
      %168 = dma.hbm_to_vmem [thread:$0]  %s43, 16, %s166, [#allocation12]
    $region89: #{sherlock_ori_forward.1} parent=1 // pred_fallthru
      _
    // Predicated region
    $region90: #{sherlock_ori_forward.1} parent=1 // pred_check
      _
    $region91: #{sherlock_ori_forward.1} parent=1 // pred_check_branch
      %170 = sbr.rel (0) target = $region93
    $region92: #{sherlock_ori_forward.1} parent=1 // pred_region
      %s172 = ssub.s32 2560, 2560
      %173 = vsyncadd [#allocation12], %s172
      %s174 = sshll.u32 [#allocation13], 4
      %s175 = int_to_ptr.vmem [resolvable:$true] %s174
      %180 = dma.hbm_to_vmem [thread:$0]  %s45, 2560, %s175, [#allocation12], 256, 256, 16
    $region93: #{sherlock_ori_forward.1} parent=1 // pred_fallthru
      _
    // Predicated region
    $region94: #{sherlock_ori_forward.1} parent=1 // pred_check
      _
    $region95: #{sherlock_ori_forward.1} parent=1 // pred_check_branch
      %182 = sbr.rel (0) target = $region97
    $region96: #{sherlock_ori_forward.1} parent=1 // pred_region
      %s184 = ssub.s32 2560, 2560
      %185 = vsyncadd [#allocation15], %s184
      %s186 = sshll.u32 [#allocation14], 4
      %s187 = int_to_ptr.vmem [resolvable:$true] %s186
      %192 = dma.hbm_to_vmem [thread:$0]  %s47, 2560, %s187, [#allocation15], 256, 256, 16
    $region97: #{sherlock_ori_forward.1} parent=1 // pred_fallthru
      _
    // Predicated region
    $region98: #{sherlock_ori_forward.1} parent=1 // pred_check
      _
    $region99: #{sherlock_ori_forward.1} parent=1 // pred_check_branch
      %194 = sbr.rel (0) target = $region101
    $region100: #{sherlock_ori_forward.1} parent=1 // pred_region
      %s196 = ssub.s32 2560, 2560
      %197 = vsyncadd [#allocation15], %s196
      %s198 = sshll.u32 [#allocation16], 4
      %s199 = int_to_ptr.vmem [resolvable:$true] %s198
      %204 = dma.hbm_to_vmem [thread:$0]  %s49, 2560, %s199, [#allocation15], 256, 256, 16
    $region101: #{sherlock_ori_forward.1} parent=1 // pred_fallthru
      _
    // Predicated region
    $region102: #{sherlock_ori_forward.1} parent=1 // pred_check
      _
    $region103: #{sherlock_ori_forward.1} parent=1 // pred_check_branch
      %206 = sbr.rel (0) target = $region105
    $region104: #{sherlock_ori_forward.1} parent=1 // pred_region
      %s208 = ssub.s32 1024, 1024
      %209 = vsyncadd [#allocation18], %s208
      %s210 = sshll.u32 [#allocation17], 4
      %s211 = int_to_ptr.vmem [resolvable:$true] %s210
      %216 = dma.hbm_to_vmem [thread:$0]  %s51, 1024, %s211, [#allocation18], 256, 256, 16
    $region105: #{sherlock_ori_forward.1} parent=1 // pred_fallthru
      _
    // Predicated region
    $region106: #{sherlock_ori_forward.1} parent=1 // pred_check
      _
    $region107: #{sherlock_ori_forward.1} parent=1 // pred_check_branch
      %218 = sbr.rel (0) target = $region109
    $region108: #{sherlock_ori_forward.1} parent=1 // pred_region
      _
    $region109: #{sherlock_ori_forward.1} parent=1 // pred_fallthru
      _
    // Predicated region
    $region110: #{sherlock_ori_forward.1} parent=1 // pred_check
      _
    $region111: #{sherlock_ori_forward.1} parent=1 // pred_check_branch
      %220 = sbr.rel (0) target = $region113
    $region112: #{sherlock_ori_forward.1} parent=1 // pred_region
      _
    $region113: #{sherlock_ori_forward.1} parent=1 // pred_fallthru
      _
    // Predicated region
    $region114: #{sherlock_ori_forward.1} parent=1 // pred_check
      _
    $region115: #{sherlock_ori_forward.1} parent=1 // pred_check_branch
      %222 = sbr.rel (0) target = $region117
    $region116: #{sherlock_ori_forward.1} parent=1 // pred_region
      _
    $region117: #{sherlock_ori_forward.1} parent=1 // pred_fallthru
      _
    // Predicated region
    $region118: #{sherlock_ori_forward.1} parent=1 // pred_check
      _
    $region119: #{sherlock_ori_forward.1} parent=1 // pred_check_branch
      %224 = sbr.rel (0) target = $region121
    $region120: #{sherlock_ori_forward.1} parent=1 // pred_region
      _
    $region121: #{sherlock_ori_forward.1} parent=1 // pred_fallthru
      _
    // Predicated region
    $region122: #{sherlock_ori_forward.1} parent=1 // pred_check
      _
    $region123: #{sherlock_ori_forward.1} parent=1 // pred_check_branch
      %226 = sbr.rel (0) target = $region125
    $region124: #{sherlock_ori_forward.1} parent=1 // pred_region
      %s228 = ssub.s32 16, 16
      %229 = vsyncadd [#allocation18], %s228
      %s231 = sshll.u32 [#allocation19], 4
      %s232 = int_to_ptr.vmem [resolvable:$true] %s231
      %234 = dma.hbm_to_vmem [thread:$0]  %s61, 16, %s232, [#allocation18]
    $region125: #{sherlock_ori_forward.1} parent=1 // pred_fallthru
      _
    // Predicated region
    $region126: #{sherlock_ori_forward.1} parent=1 // pred_check
      _
    $region127: #{sherlock_ori_forward.1} parent=1 // pred_check_branch
      %236 = sbr.rel (0) target = $region129
    $region128: #{sherlock_ori_forward.1} parent=1 // pred_region
      %237 = dma.done [#allocation3], 16
    $region129: #{sherlock_ori_forward.1} parent=1 // pred_fallthru
      _
    // Predicated region
    $region130: #{sherlock_ori_forward.1} parent=1 // pred_check
      _
    $region131: #{sherlock_ori_forward.1} parent=1 // pred_check_branch
      %239 = sbr.rel (0) target = $region133
    $region132: #{sherlock_ori_forward.1} parent=1 // pred_region
      %240 = dma.done [#allocation6], 32
    $region133: #{sherlock_ori_forward.1} parent=1 // pred_fallthru
      _
    // Predicated region
    $region134: #{sherlock_ori_forward.1} parent=1 // pred_check
      _
    $region135: #{sherlock_ori_forward.1} parent=1 // pred_check_branch
      %242 = sbr.rel (0) target = $region137
    $region136: #{sherlock_ori_forward.1} parent=1 // pred_region
      %243 = dma.done [#allocation6], 3200
    $region137: #{sherlock_ori_forward.1} parent=1 // pred_fallthru
      _
    // Predicated region
    $region138: #{sherlock_ori_forward.1} parent=1 // pred_check
      _
    $region139: #{sherlock_ori_forward.1} parent=1 // pred_check_branch
      %245 = sbr.rel (0) target = $region141
    $region140: #{sherlock_ori_forward.1} parent=1 // pred_region
      %246 = dma.done [#allocation9], 32
    $region141: #{sherlock_ori_forward.1} parent=1 // pred_fallthru
      _
    // Predicated region
    $region142: #{sherlock_ori_forward.1} parent=1 // pred_check
      _
    $region143: #{sherlock_ori_forward.1} parent=1 // pred_check_branch
      %248 = sbr.rel (0) target = $region145
    $region144: #{sherlock_ori_forward.1} parent=1 // pred_region
      %249 = dma.done [#allocation9], 16
    $region145: #{sherlock_ori_forward.1} parent=1 // pred_fallthru
      _
    // Predicated region
    $region146: #{sherlock_ori_forward.1} parent=1 // pred_check
      _
    $region147: #{sherlock_ori_forward.1} parent=1 // pred_check_branch
      %251 = sbr.rel (0) target = $region149
    $region148: #{sherlock_ori_forward.1} parent=1 // pred_region
      %252 = dma.done [#allocation12], 16
    $region149: #{sherlock_ori_forward.1} parent=1 // pred_fallthru
      _
    // Predicated region
    $region150: #{sherlock_ori_forward.1} parent=1 // pred_check
      _
    $region151: #{sherlock_ori_forward.1} parent=1 // pred_check_branch
      %254 = sbr.rel (0) target = $region153
    $region152: #{sherlock_ori_forward.1} parent=1 // pred_region
      %255 = dma.done [#allocation12], 2560
    $region153: #{sherlock_ori_forward.1} parent=1 // pred_fallthru
      _
    // Predicated region
    $region154: #{sherlock_ori_forward.1} parent=1 // pred_check
      _
    $region155: #{sherlock_ori_forward.1} parent=1 // pred_check_branch
      %257 = sbr.rel (0) target = $region157
    $region156: #{sherlock_ori_forward.1} parent=1 // pred_region
      %258 = dma.done [#allocation15], 2560
    $region157: #{sherlock_ori_forward.1} parent=1 // pred_fallthru
      _
    // Predicated region
    $region158: #{sherlock_ori_forward.1} parent=1 // pred_check
      _
    $region159: #{sherlock_ori_forward.1} parent=1 // pred_check_branch
      %260 = sbr.rel (0) target = $region161
    $region160: #{sherlock_ori_forward.1} parent=1 // pred_region
      %261 = dma.done [#allocation15], 2560
    $region161: #{sherlock_ori_forward.1} parent=1 // pred_fallthru
      _
    // Predicated region
    $region162: #{sherlock_ori_forward.1} parent=1 // pred_check
      _
    $region163: #{sherlock_ori_forward.1} parent=1 // pred_check_branch
      %263 = sbr.rel (0) target = $region165
    $region164: #{sherlock_ori_forward.1} parent=1 // pred_region
      %264 = dma.done [#allocation18], 1024
    $region165: #{sherlock_ori_forward.1} parent=1 // pred_fallthru
      _
    // Predicated region
    $region166: #{sherlock_ori_forward.1} parent=1 // pred_check
      _
    $region167: #{sherlock_ori_forward.1} parent=1 // pred_check_branch
      %266 = sbr.rel (0) target = $region169
    $region168: #{sherlock_ori_forward.1} parent=1 // pred_region
      %267 = dma.done [#allocation18], 16
    $region169: #{sherlock_ori_forward.1} parent=1 // pred_fallthru
      _
    %v268 = vld [vmem:[%s1] sm:$0xff]
    %v269 = vld [vmem:[%s1 + $0x8] sm:$0xff]
    %v270 = vld [vmem:[%s1 + $0x10] sm:$0xff]
    %v271 = vld [vmem:[%s1 + $0x18] sm:$0xff]
    %v272 = vld [vmem:[%s1 + $0x20] sm:$0xff]
    %v273 = vld [vmem:[%s1 + $0x28] sm:$0xff]
    %v274 = vld [vmem:[%s1 + $0x30] sm:$0xff]
    %v275 = vld [vmem:[%s1 + $0x38] sm:$0xff]
    %v276 = vld [vmem:[%s3] sm:$0xff]
    %v277 = vld [vmem:[%s3 + $0x8] sm:$0xff]
    %v278 = vld [vmem:[%s5] sm:$0xff]
    %v279 = vld [vmem:[%s5 + $0x8] sm:$0xff]
    %v280 = vld [vmem:[%s5 + $0x10] sm:$0xff]
    %v281 = vld [vmem:[%s5 + $0x18] sm:$0xff]
    %v282 = vld [vmem:[%s7] sm:$0xff]
    %v283 = vld [vmem:[%s9] sm:$0xff]
    %v284 = vld [vmem:[%s9 + $0x8] sm:$0xf]
    %v285 = vld [vmem:[%s9 + $0xc] sm:$0xff]
    %v286 = vld [vmem:[%s9 + $0x14] sm:$0xf]
    %v287 = vld [vmem:[%s9 + $0x18] sm:$0xff]
    %v288 = vld [vmem:[%s9 + $0x20] sm:$0xf]
    %v289 = vld [vmem:[%s9 + $0x24] sm:$0xff]
    %v290 = vld [vmem:[%s9 + $0x2c] sm:$0xf]
    %v291 = vld [vmem:[%s9 + $0x30] sm:$0xff]
    %v292 = vld [vmem:[%s9 + $0x38] sm:$0xf]
    %v293 = vld [vmem:[%s9 + $0x3c] sm:$0xff]
    %v294 = vld [vmem:[%s9 + $0x44] sm:$0xf]
    %v295 = vld [vmem:[%s9 + $0x48] sm:$0xff]
    %v296 = vld [vmem:[%s9 + $0x50] sm:$0xf]
    %v297 = vld [vmem:[%s9 + $0x54] sm:$0xff]
    %v298 = vld [vmem:[%s9 + $0x5c] sm:$0xf]
    %v299 = vld [vmem:[%s9 + $0x60] sm:$0xff]
    %v300 = vld [vmem:[%s9 + $0x68] sm:$0xf]
    %v301 = vld [vmem:[%s9 + $0x6c] sm:$0xff]
    %v302 = vld [vmem:[%s9 + $0x74] sm:$0xf]
    %v303 = vld [vmem:[%s9 + $0x78] sm:$0xff]
    %v304 = vld [vmem:[%s9 + $0x80] sm:$0xf]
    %v305 = vld [vmem:[%s9 + $0x84] sm:$0xff]
    %v306 = vld [vmem:[%s9 + $0x8c] sm:$0xf]
    %v307 = vld [vmem:[%s9 + $0x90] sm:$0xff]
    %v308 = vld [vmem:[%s9 + $0x98] sm:$0xf]
    %v309 = vld [vmem:[%s9 + $0x9c] sm:$0xff]
    %v310 = vld [vmem:[%s9 + $0xa4] sm:$0xf]
    %v311 = vld [vmem:[%s9 + $0xa8] sm:$0xff]
    %v312 = vld [vmem:[%s9 + $0xb0] sm:$0xf]
    %v313 = vld [vmem:[%s9 + $0xb4] sm:$0xff]
    %v314 = vld [vmem:[%s9 + $0xbc] sm:$0xf]
    %v315 = vld [vmem:[%s9 + $0xc0] sm:$0xff]
    %v316 = vld [vmem:[%s9 + $0xc8] sm:$0xf]
    %v317 = vld [vmem:[%s9 + $0xcc] sm:$0xff]
    %v318 = vld [vmem:[%s9 + $0xd4] sm:$0xf]
    %v319 = vld [vmem:[%s9 + $0xd8] sm:$0xff]
    %v320 = vld [vmem:[%s9 + $0xe0] sm:$0xf]
    %v321 = vld [vmem:[%s9 + $0xe4] sm:$0xff]
    %v322 = vld [vmem:[%s9 + $0xec] sm:$0xf]
    %v323 = vld [vmem:[%s9 + $0xf0] sm:$0xff]
    %v324 = vld [vmem:[%s9 + $0xf8] sm:$0xf]
    %v325 = vld [vmem:[%s9 + $0xfc] sm:$0xff]
    %v326 = vld [vmem:[%s9 + $0x104] sm:$0xf]
    %v327 = vld [vmem:[%s9 + $0x108] sm:$0xff]
    %v328 = vld [vmem:[%s9 + $0x110] sm:$0xf]
    %v329 = vld [vmem:[%s9 + $0x114] sm:$0xff]
    %v330 = vld [vmem:[%s9 + $0x11c] sm:$0xf]
    %v331 = vld [vmem:[%s9 + $0x120] sm:$0xff]
    %v332 = vld [vmem:[%s9 + $0x128] sm:$0xf]
    %v333 = vld [vmem:[%s9 + $0x12c] sm:$0xff]
    %v334 = vld [vmem:[%s9 + $0x134] sm:$0xf]
    %v335 = vld [vmem:[%s9 + $0x138] sm:$0xff]
    %v336 = vld [vmem:[%s9 + $0x140] sm:$0xf]
    %v337 = vld [vmem:[%s9 + $0x144] sm:$0xff]
    %v338 = vld [vmem:[%s9 + $0x14c] sm:$0xf]
    %v339 = vld [vmem:[%s9 + $0x150] sm:$0xff]
    %v340 = vld [vmem:[%s9 + $0x158] sm:$0xf]
    %v341 = vld [vmem:[%s9 + $0x15c] sm:$0xff]
    %v342 = vld [vmem:[%s9 + $0x164] sm:$0xf]
    %v343 = vld [vmem:[%s9 + $0x168] sm:$0xff]
    %v344 = vld [vmem:[%s9 + $0x170] sm:$0xf]
    %v345 = vld [vmem:[%s9 + $0x174] sm:$0xff]
    %v346 = vld [vmem:[%s9 + $0x17c] sm:$0xf]
    %v347 = vld [vmem:[%s9 + $0x180] sm:$0xff]
    %v348 = vld [vmem:[%s9 + $0x188] sm:$0xf]
    %v349 = vld [vmem:[%s9 + $0x18c] sm:$0xff]
    %v350 = vld [vmem:[%s9 + $0x194] sm:$0xf]
    %v351 = vld [vmem:[%s9 + $0x198] sm:$0xff]
    %v352 = vld [vmem:[%s9 + $0x1a0] sm:$0xf]
    %v353 = vld [vmem:[%s9 + $0x1a4] sm:$0xff]
    %v354 = vld [vmem:[%s9 + $0x1ac] sm:$0xf]
    %v355 = vld [vmem:[%s9 + $0x1b0] sm:$0xff]
    %v356 = vld [vmem:[%s9 + $0x1b8] sm:$0xf]
    %v357 = vld [vmem:[%s9 + $0x1bc] sm:$0xff]
    %v358 = vld [vmem:[%s9 + $0x1c4] sm:$0xf]
    %v359 = vld [vmem:[%s9 + $0x1c8] sm:$0xff]
    %v360 = vld [vmem:[%s9 + $0x1d0] sm:$0xf]
    %v361 = vld [vmem:[%s9 + $0x1d4] sm:$0xff]
    %v362 = vld [vmem:[%s9 + $0x1dc] sm:$0xf]
    %v363 = vld [vmem:[%s9 + $0x1e0] sm:$0xff]
    %v364 = vld [vmem:[%s9 + $0x1e8] sm:$0xf]
    %v365 = vld [vmem:[%s9 + $0x1ec] sm:$0xff]
    %v366 = vld [vmem:[%s9 + $0x1f4] sm:$0xf]
    %v367 = vld [vmem:[%s9 + $0x1f8] sm:$0xff]
    %v368 = vld [vmem:[%s9 + $0x200] sm:$0xf]
    %v369 = vld [vmem:[%s9 + $0x204] sm:$0xff]
    %v370 = vld [vmem:[%s9 + $0x20c] sm:$0xf]
    %v371 = vld [vmem:[%s9 + $0x210] sm:$0xff]
    %v372 = vld [vmem:[%s9 + $0x218] sm:$0xf]
    %v373 = vld [vmem:[%s9 + $0x21c] sm:$0xff]
    %v374 = vld [vmem:[%s9 + $0x224] sm:$0xf]
    %v375 = vld [vmem:[%s9 + $0x228] sm:$0xff]
    %v376 = vld [vmem:[%s9 + $0x230] sm:$0xf]
    %v377 = vld [vmem:[%s9 + $0x234] sm:$0xff]
    %v378 = vld [vmem:[%s9 + $0x23c] sm:$0xf]
    %v379 = vld [vmem:[%s9 + $0x240] sm:$0xff]
    %v380 = vld [vmem:[%s9 + $0x248] sm:$0xf]
    %v381 = vld [vmem:[%s9 + $0x24c] sm:$0xff]
    %v382 = vld [vmem:[%s9 + $0x254] sm:$0xf]
    %v383 = vld [vmem:[%s9 + $0x258] sm:$0xff]
    %v384 = vld [vmem:[%s9 + $0x260] sm:$0xf]
    %v385 = vld [vmem:[%s9 + $0x264] sm:$0xff]
    %v386 = vld [vmem:[%s9 + $0x26c] sm:$0xf]
    %v387 = vld [vmem:[%s9 + $0x270] sm:$0xff]
    %v388 = vld [vmem:[%s9 + $0x278] sm:$0xf]
    %v389 = vld [vmem:[%s9 + $0x27c] sm:$0xff]
    %v390 = vld [vmem:[%s9 + $0x284] sm:$0xf]
    %v391 = vld [vmem:[%s9 + $0x288] sm:$0xff]
    %v392 = vld [vmem:[%s9 + $0x290] sm:$0xf]
    %v393 = vld [vmem:[%s9 + $0x294] sm:$0xff]
    %v394 = vld [vmem:[%s9 + $0x29c] sm:$0xf]
    %v395 = vld [vmem:[%s9 + $0x2a0] sm:$0xff]
    %v396 = vld [vmem:[%s9 + $0x2a8] sm:$0xf]
    %v397 = vld [vmem:[%s9 + $0x2ac] sm:$0xff]
    %v398 = vld [vmem:[%s9 + $0x2b4] sm:$0xf]
    %v399 = vld [vmem:[%s9 + $0x2b8] sm:$0xff]
    %v400 = vld [vmem:[%s9 + $0x2c0] sm:$0xf]
    %v401 = vld [vmem:[%s9 + $0x2c4] sm:$0xff]
    %v402 = vld [vmem:[%s9 + $0x2cc] sm:$0xf]
    %v403 = vld [vmem:[%s9 + $0x2d0] sm:$0xff]
    %v404 = vld [vmem:[%s9 + $0x2d8] sm:$0xf]
    %v405 = vld [vmem:[%s9 + $0x2dc] sm:$0xff]
    %v406 = vld [vmem:[%s9 + $0x2e4] sm:$0xf]
    %v407 = vld [vmem:[%s9 + $0x2e8] sm:$0xff]
    %v408 = vld [vmem:[%s9 + $0x2f0] sm:$0xf]
    %v409 = vld [vmem:[%s9 + $0x2f4] sm:$0xff]
    %v410 = vld [vmem:[%s9 + $0x2fc] sm:$0xf]
    %v411 = vld [vmem:[%s9 + $0x300] sm:$0xff]
    %v412 = vld [vmem:[%s9 + $0x308] sm:$0xf]
    %v413 = vld [vmem:[%s9 + $0x30c] sm:$0xff]
    %v414 = vld [vmem:[%s9 + $0x314] sm:$0xf]
    %v415 = vld [vmem:[%s9 + $0x318] sm:$0xff]
    %v416 = vld [vmem:[%s9 + $0x320] sm:$0xf]
    %v417 = vld [vmem:[%s9 + $0x324] sm:$0xff]
    %v418 = vld [vmem:[%s9 + $0x32c] sm:$0xf]
    %v419 = vld [vmem:[%s9 + $0x330] sm:$0xff]
    %v420 = vld [vmem:[%s9 + $0x338] sm:$0xf]
    %v421 = vld [vmem:[%s9 + $0x33c] sm:$0xff]
    %v422 = vld [vmem:[%s9 + $0x344] sm:$0xf]
    %v423 = vld [vmem:[%s9 + $0x348] sm:$0xff]
    %v424 = vld [vmem:[%s9 + $0x350] sm:$0xf]
    %v425 = vld [vmem:[%s9 + $0x354] sm:$0xff]
    %v426 = vld [vmem:[%s9 + $0x35c] sm:$0xf]
    %v427 = vld [vmem:[%s9 + $0x360] sm:$0xff]
    %v428 = vld [vmem:[%s9 + $0x368] sm:$0xf]
    %v429 = vld [vmem:[%s9 + $0x36c] sm:$0xff]
    %v430 = vld [vmem:[%s9 + $0x374] sm:$0xf]
    %v431 = vld [vmem:[%s9 + $0x378] sm:$0xff]
    %v432 = vld [vmem:[%s9 + $0x380] sm:$0xf]
    %v433 = vld [vmem:[%s9 + $0x384] sm:$0xff]
    %v434 = vld [vmem:[%s9 + $0x38c] sm:$0xf]
    %v435 = vld [vmem:[%s9 + $0x390] sm:$0xff]
    %v436 = vld [vmem:[%s9 + $0x398] sm:$0xf]
    %v437 = vld [vmem:[%s9 + $0x39c] sm:$0xff]
    %v438 = vld [vmem:[%s9 + $0x3a4] sm:$0xf]
    %v439 = vld [vmem:[%s9 + $0x3a8] sm:$0xff]
    %v440 = vld [vmem:[%s9 + $0x3b0] sm:$0xf]
    %v441 = vld [vmem:[%s9 + $0x3b4] sm:$0xff]
    %v442 = vld [vmem:[%s9 + $0x3bc] sm:$0xf]
    %v443 = vld [vmem:[%s9 + $0x3c0] sm:$0xff]
    %v444 = vld [vmem:[%s9 + $0x3c8] sm:$0xf]
    %v445 = vld [vmem:[%s9 + $0x3cc] sm:$0xff]
    %v446 = vld [vmem:[%s9 + $0x3d4] sm:$0xf]
    %v447 = vld [vmem:[%s9 + $0x3d8] sm:$0xff]
    %v448 = vld [vmem:[%s9 + $0x3e0] sm:$0xf]
    %v449 = vld [vmem:[%s9 + $0x3e4] sm:$0xff]
    %v450 = vld [vmem:[%s9 + $0x3ec] sm:$0xf]
    %v451 = vld [vmem:[%s9 + $0x3f0] sm:$0xff]
    %v452 = vld [vmem:[%s9 + $0x3f8] sm:$0xf]
    %v453 = vld [vmem:[%s9 + $0x3fc] sm:$0xff]
    %v454 = vld [vmem:[%s9 + $0x404] sm:$0xf]
    %v455 = vld [vmem:[%s9 + $0x408] sm:$0xff]
    %v456 = vld [vmem:[%s9 + $0x410] sm:$0xf]
    %v457 = vld [vmem:[%s9 + $0x414] sm:$0xff]
    %v458 = vld [vmem:[%s9 + $0x41c] sm:$0xf]
    %v459 = vld [vmem:[%s9 + $0x420] sm:$0xff]
    %v460 = vld [vmem:[%s9 + $0x428] sm:$0xf]
    %v461 = vld [vmem:[%s9 + $0x42c] sm:$0xff]
    %v462 = vld [vmem:[%s9 + $0x434] sm:$0xf]
    %v463 = vld [vmem:[%s9 + $0x438] sm:$0xff]
    %v464 = vld [vmem:[%s9 + $0x440] sm:$0xf]
    %v465 = vld [vmem:[%s9 + $0x444] sm:$0xff]
    %v466 = vld [vmem:[%s9 + $0x44c] sm:$0xf]
    %v467 = vld [vmem:[%s9 + $0x450] sm:$0xff]
    %v468 = vld [vmem:[%s9 + $0x458] sm:$0xf]
    %v469 = vld [vmem:[%s9 + $0x45c] sm:$0xff]
    %v470 = vld [vmem:[%s9 + $0x464] sm:$0xf]
    %v471 = vld [vmem:[%s9 + $0x468] sm:$0xff]
    %v472 = vld [vmem:[%s9 + $0x470] sm:$0xf]
    %v473 = vld [vmem:[%s9 + $0x474] sm:$0xff]
    %v474 = vld [vmem:[%s9 + $0x47c] sm:$0xf]
    %v475 = vld [vmem:[%s9 + $0x480] sm:$0xff]
    %v476 = vld [vmem:[%s9 + $0x488] sm:$0xf]
    %v477 = vld [vmem:[%s9 + $0x48c] sm:$0xff]
    %v478 = vld [vmem:[%s9 + $0x494] sm:$0xf]
    %v479 = vld [vmem:[%s9 + $0x498] sm:$0xff]
    %v480 = vld [vmem:[%s9 + $0x4a0] sm:$0xf]
    %v481 = vld [vmem:[%s9 + $0x4a4] sm:$0xff]
    %v482 = vld [vmem:[%s9 + $0x4ac] sm:$0xf]
    %v483 = vld [vmem:[%s9 + $0x4b0] sm:$0xff]
    %v484 = vld [vmem:[%s9 + $0x4b8] sm:$0xf]
    %v485 = vld [vmem:[%s9 + $0x4bc] sm:$0xff]
    %v486 = vld [vmem:[%s9 + $0x4c4] sm:$0xf]
    %v487 = vld [vmem:[%s9 + $0x4c8] sm:$0xff]
    %v488 = vld [vmem:[%s9 + $0x4d0] sm:$0xf]
    %v489 = vld [vmem:[%s9 + $0x4d4] sm:$0xff]
    %v490 = vld [vmem:[%s9 + $0x4dc] sm:$0xf]
    %v491 = vld [vmem:[%s9 + $0x4e0] sm:$0xff]
    %v492 = vld [vmem:[%s9 + $0x4e8] sm:$0xf]
    %v493 = vld [vmem:[%s9 + $0x4ec] sm:$0xff]
    %v494 = vld [vmem:[%s9 + $0x4f4] sm:$0xf]
    %v495 = vld [vmem:[%s9 + $0x4f8] sm:$0xff]
    %v496 = vld [vmem:[%s9 + $0x500] sm:$0xf]
    %v497 = vld [vmem:[%s9 + $0x504] sm:$0xff]
    %v498 = vld [vmem:[%s9 + $0x50c] sm:$0xf]
    %v499 = vld [vmem:[%s9 + $0x510] sm:$0xff]
    %v500 = vld [vmem:[%s9 + $0x518] sm:$0xf]
    %v501 = vld [vmem:[%s9 + $0x51c] sm:$0xff]
    %v502 = vld [vmem:[%s9 + $0x524] sm:$0xf]
    %v503 = vld [vmem:[%s9 + $0x528] sm:$0xff]
    %v504 = vld [vmem:[%s9 + $0x530] sm:$0xf]
    %v505 = vld [vmem:[%s9 + $0x534] sm:$0xff]
    %v506 = vld [vmem:[%s9 + $0x53c] sm:$0xf]
    %v507 = vld [vmem:[%s9 + $0x540] sm:$0xff]
    %v508 = vld [vmem:[%s9 + $0x548] sm:$0xf]
    %v509 = vld [vmem:[%s9 + $0x54c] sm:$0xff]
    %v510 = vld [vmem:[%s9 + $0x554] sm:$0xf]
    %v511 = vld [vmem:[%s9 + $0x558] sm:$0xff]
    %v512 = vld [vmem:[%s9 + $0x560] sm:$0xf]
    %v513 = vld [vmem:[%s9 + $0x564] sm:$0xff]
    %v514 = vld [vmem:[%s9 + $0x56c] sm:$0xf]
    %v515 = vld [vmem:[%s9 + $0x570] sm:$0xff]
    %v516 = vld [vmem:[%s9 + $0x578] sm:$0xf]
    %v517 = vld [vmem:[%s9 + $0x57c] sm:$0xff]
    %v518 = vld [vmem:[%s9 + $0x584] sm:$0xf]
    %v519 = vld [vmem:[%s9 + $0x588] sm:$0xff]
    %v520 = vld [vmem:[%s9 + $0x590] sm:$0xf]
    %v521 = vld [vmem:[%s9 + $0x594] sm:$0xff]
    %v522 = vld [vmem:[%s9 + $0x59c] sm:$0xf]
    %v523 = vunpack.c.l.bf16 %v283
    %v524 = vunpack.c.h.bf16 %v283
    %v525 = vunpack.c.l.bf16 %v284
    %v526 = vunpack.c.l.bf16 %v285
    %v527 = vunpack.c.h.bf16 %v285
    %v528 = vunpack.c.l.bf16 %v286
    %v529 = vunpack.c.l.bf16 %v287
    %v530 = vunpack.c.h.bf16 %v287
    %v531 = vunpack.c.l.bf16 %v288
    %v532 = vunpack.c.l.bf16 %v289
    %v533 = vunpack.c.h.bf16 %v289
    %v534 = vunpack.c.l.bf16 %v290
    %v535 = vunpack.c.l.bf16 %v291
    %v536 = vunpack.c.h.bf16 %v291
    %v537 = vunpack.c.l.bf16 %v292
    %v538 = vunpack.c.l.bf16 %v293
    %v539 = vunpack.c.h.bf16 %v293
    %v540 = vunpack.c.l.bf16 %v294
    %v541 = vunpack.c.l.bf16 %v295
    %v542 = vunpack.c.h.bf16 %v295
    %v543 = vunpack.c.l.bf16 %v296
    %v544 = vunpack.c.l.bf16 %v297
    %v545 = vunpack.c.h.bf16 %v297
    %v546 = vunpack.c.l.bf16 %v298
    %v547 = vunpack.c.l.bf16 %v299
    %v548 = vunpack.c.h.bf16 %v299
    %v549 = vunpack.c.l.bf16 %v300
    %v550 = vunpack.c.l.bf16 %v301
    %v551 = vunpack.c.h.bf16 %v301
    %v552 = vunpack.c.l.bf16 %v302
    %v553 = vunpack.c.l.bf16 %v303
    %v554 = vunpack.c.h.bf16 %v303
    %v555 = vunpack.c.l.bf16 %v304
    %v556 = vunpack.c.l.bf16 %v305
    %v557 = vunpack.c.h.bf16 %v305
    %v558 = vunpack.c.l.bf16 %v306
    %v559 = vunpack.c.l.bf16 %v307
    %v560 = vunpack.c.h.bf16 %v307
    %v561 = vunpack.c.l.bf16 %v308
    %v562 = vunpack.c.l.bf16 %v309
    %v563 = vunpack.c.h.bf16 %v309
    %v564 = vunpack.c.l.bf16 %v310
    %v565 = vunpack.c.l.bf16 %v311
    %v566 = vunpack.c.h.bf16 %v311
    %v567 = vunpack.c.l.bf16 %v312
    %v568 = vunpack.c.l.bf16 %v313
    %v569 = vunpack.c.h.bf16 %v313
    %v570 = vunpack.c.l.bf16 %v314
    %v571 = vunpack.c.l.bf16 %v315
    %v572 = vunpack.c.h.bf16 %v315
    %v573 = vunpack.c.l.bf16 %v316
    %v574 = vunpack.c.l.bf16 %v317
    %v575 = vunpack.c.h.bf16 %v317
    %v576 = vunpack.c.l.bf16 %v318
    %v577 = vunpack.c.l.bf16 %v319
    %v578 = vunpack.c.h.bf16 %v319
    %v579 = vunpack.c.l.bf16 %v320
    %v580 = vunpack.c.l.bf16 %v321
    %v581 = vunpack.c.h.bf16 %v321
    %v582 = vunpack.c.l.bf16 %v322
    %v583 = vunpack.c.l.bf16 %v323
    %v584 = vunpack.c.h.bf16 %v323
    %v585 = vunpack.c.l.bf16 %v324
    %v586 = vunpack.c.l.bf16 %v325
    %v587 = vunpack.c.h.bf16 %v325
    %v588 = vunpack.c.l.bf16 %v326
    %v589 = vunpack.c.l.bf16 %v327
    %v590 = vunpack.c.h.bf16 %v327
    %v591 = vunpack.c.l.bf16 %v328
    %v592 = vunpack.c.l.bf16 %v329
    %v593 = vunpack.c.h.bf16 %v329
    %v594 = vunpack.c.l.bf16 %v330
    %v595 = vunpack.c.l.bf16 %v331
    %v596 = vunpack.c.h.bf16 %v331
    %v597 = vunpack.c.l.bf16 %v332
    %v598 = vunpack.c.l.bf16 %v333
    %v599 = vunpack.c.h.bf16 %v333
    %v600 = vunpack.c.l.bf16 %v334
    %v601 = vunpack.c.l.bf16 %v335
    %v602 = vunpack.c.h.bf16 %v335
    %v603 = vunpack.c.l.bf16 %v336
    %v604 = vunpack.c.l.bf16 %v337
    %v605 = vunpack.c.h.bf16 %v337
    %v606 = vunpack.c.l.bf16 %v338
    %v607 = vunpack.c.l.bf16 %v339
    %v608 = vunpack.c.h.bf16 %v339
    %v609 = vunpack.c.l.bf16 %v340
    %v610 = vunpack.c.l.bf16 %v341
    %v611 = vunpack.c.h.bf16 %v341
    %v612 = vunpack.c.l.bf16 %v342
    %v613 = vunpack.c.l.bf16 %v343
    %v614 = vunpack.c.h.bf16 %v343
    %v615 = vunpack.c.l.bf16 %v344
    %v616 = vunpack.c.l.bf16 %v345
    %v617 = vunpack.c.h.bf16 %v345
    %v618 = vunpack.c.l.bf16 %v346
    %v619 = vunpack.c.l.bf16 %v347
    %v620 = vunpack.c.h.bf16 %v347
    %v621 = vunpack.c.l.bf16 %v348
    %v622 = vunpack.c.l.bf16 %v349
    %v623 = vunpack.c.h.bf16 %v349
    %v624 = vunpack.c.l.bf16 %v350
    %v625 = vunpack.c.l.bf16 %v351
    %v626 = vunpack.c.h.bf16 %v351
    %v627 = vunpack.c.l.bf16 %v352
    %v628 = vunpack.c.l.bf16 %v353
    %v629 = vunpack.c.h.bf16 %v353
    %v630 = vunpack.c.l.bf16 %v354
    %v631 = vunpack.c.l.bf16 %v355
    %v632 = vunpack.c.h.bf16 %v355
    %v633 = vunpack.c.l.bf16 %v356
    %v634 = vunpack.c.l.bf16 %v357
    %v635 = vunpack.c.h.bf16 %v357
    %v636 = vunpack.c.l.bf16 %v358
    %v637 = vunpack.c.l.bf16 %v359
    %v638 = vunpack.c.h.bf16 %v359
    %v639 = vunpack.c.l.bf16 %v360
    %v640 = vunpack.c.l.bf16 %v361
    %v641 = vunpack.c.h.bf16 %v361
    %v642 = vunpack.c.l.bf16 %v362
    %v643 = vunpack.c.l.bf16 %v363
    %v644 = vunpack.c.h.bf16 %v363
    %v645 = vunpack.c.l.bf16 %v364
    %v646 = vunpack.c.l.bf16 %v365
    %v647 = vunpack.c.h.bf16 %v365
    %v648 = vunpack.c.l.bf16 %v366
    %v649 = vunpack.c.l.bf16 %v367
    %v650 = vunpack.c.h.bf16 %v367
    %v651 = vunpack.c.l.bf16 %v368
    %v652 = vunpack.c.l.bf16 %v369
    %v653 = vunpack.c.h.bf16 %v369
    %v654 = vunpack.c.l.bf16 %v370
    %v655 = vunpack.c.l.bf16 %v371
    %v656 = vunpack.c.h.bf16 %v371
    %v657 = vunpack.c.l.bf16 %v372
    %v658 = vunpack.c.l.bf16 %v373
    %v659 = vunpack.c.h.bf16 %v373
    %v660 = vunpack.c.l.bf16 %v374
    %v661 = vunpack.c.l.bf16 %v375
    %v662 = vunpack.c.h.bf16 %v375
    %v663 = vunpack.c.l.bf16 %v376
    %v664 = vunpack.c.l.bf16 %v377
    %v665 = vunpack.c.h.bf16 %v377
    %v666 = vunpack.c.l.bf16 %v378
    %v667 = vunpack.c.l.bf16 %v379
    %v668 = vunpack.c.h.bf16 %v379
    %v669 = vunpack.c.l.bf16 %v380
    %v670 = vunpack.c.l.bf16 %v381
    %v671 = vunpack.c.h.bf16 %v381
    %v672 = vunpack.c.l.bf16 %v382
    %v673 = vunpack.c.l.bf16 %v383
    %v674 = vunpack.c.h.bf16 %v383
    %v675 = vunpack.c.l.bf16 %v384
    %v676 = vunpack.c.l.bf16 %v385
    %v677 = vunpack.c.h.bf16 %v385
    %v678 = vunpack.c.l.bf16 %v386
    %v679 = vunpack.c.l.bf16 %v387
    %v680 = vunpack.c.h.bf16 %v387
    %v681 = vunpack.c.l.bf16 %v388
    %v682 = vunpack.c.l.bf16 %v389
    %v683 = vunpack.c.h.bf16 %v389
    %v684 = vunpack.c.l.bf16 %v390
    %v685 = vunpack.c.l.bf16 %v391
    %v686 = vunpack.c.h.bf16 %v391
    %v687 = vunpack.c.l.bf16 %v392
    %v688 = vunpack.c.l.bf16 %v393
    %v689 = vunpack.c.h.bf16 %v393
    %v690 = vunpack.c.l.bf16 %v394
    %v691 = vunpack.c.l.bf16 %v395
    %v692 = vunpack.c.h.bf16 %v395
    %v693 = vunpack.c.l.bf16 %v396
    %v694 = vunpack.c.l.bf16 %v397
    %v695 = vunpack.c.h.bf16 %v397
    %v696 = vunpack.c.l.bf16 %v398
    %v697 = vunpack.c.l.bf16 %v399
    %v698 = vunpack.c.h.bf16 %v399
    %v699 = vunpack.c.l.bf16 %v400
    %v700 = vunpack.c.l.bf16 %v401
    %v701 = vunpack.c.h.bf16 %v401
    %v702 = vunpack.c.l.bf16 %v402
    %v703 = vunpack.c.l.bf16 %v403
    %v704 = vunpack.c.h.bf16 %v403
    %v705 = vunpack.c.l.bf16 %v404
    %v706 = vunpack.c.l.bf16 %v405
    %v707 = vunpack.c.h.bf16 %v405
    %v708 = vunpack.c.l.bf16 %v406
    %v709 = vunpack.c.l.bf16 %v407
    %v710 = vunpack.c.h.bf16 %v407
    %v711 = vunpack.c.l.bf16 %v408
    %v712 = vunpack.c.l.bf16 %v409
    %v713 = vunpack.c.h.bf16 %v409
    %v714 = vunpack.c.l.bf16 %v410
    %v715 = vunpack.c.l.bf16 %v411
    %v716 = vunpack.c.h.bf16 %v411
    %v717 = vunpack.c.l.bf16 %v412
    %v718 = vunpack.c.l.bf16 %v413
    %v719 = vunpack.c.h.bf16 %v413
    %v720 = vunpack.c.l.bf16 %v414
    %v721 = vunpack.c.l.bf16 %v415
    %v722 = vunpack.c.h.bf16 %v415
    %v723 = vunpack.c.l.bf16 %v416
    %v724 = vunpack.c.l.bf16 %v417
    %v725 = vunpack.c.h.bf16 %v417
    %v726 = vunpack.c.l.bf16 %v418
    %v727 = vunpack.c.l.bf16 %v419
    %v728 = vunpack.c.h.bf16 %v419
    %v729 = vunpack.c.l.bf16 %v420
    %v730 = vunpack.c.l.bf16 %v421
    %v731 = vunpack.c.h.bf16 %v421
    %v732 = vunpack.c.l.bf16 %v422
    %v733 = vunpack.c.l.bf16 %v423
    %v734 = vunpack.c.h.bf16 %v423
    %v735 = vunpack.c.l.bf16 %v424
    %v736 = vunpack.c.l.bf16 %v425
    %v737 = vunpack.c.h.bf16 %v425
    %v738 = vunpack.c.l.bf16 %v426
    %v739 = vunpack.c.l.bf16 %v427
    %v740 = vunpack.c.h.bf16 %v427
    %v741 = vunpack.c.l.bf16 %v428
    %v742 = vunpack.c.l.bf16 %v429
    %v743 = vunpack.c.h.bf16 %v429
    %v744 = vunpack.c.l.bf16 %v430
    %v745 = vunpack.c.l.bf16 %v431
    %v746 = vunpack.c.h.bf16 %v431
    %v747 = vunpack.c.l.bf16 %v432
    %v748 = vunpack.c.l.bf16 %v433
    %v749 = vunpack.c.h.bf16 %v433
    %v750 = vunpack.c.l.bf16 %v434
    %v751 = vunpack.c.l.bf16 %v435
    %v752 = vunpack.c.h.bf16 %v435
    %v753 = vunpack.c.l.bf16 %v436
    %v754 = vunpack.c.l.bf16 %v437
    %v755 = vunpack.c.h.bf16 %v437
    %v756 = vunpack.c.l.bf16 %v438
    %v757 = vunpack.c.l.bf16 %v439
    %v758 = vunpack.c.h.bf16 %v439
    %v759 = vunpack.c.l.bf16 %v440
    %v760 = vunpack.c.l.bf16 %v441
    %v761 = vunpack.c.h.bf16 %v441
    %v762 = vunpack.c.l.bf16 %v442
    %v763 = vunpack.c.l.bf16 %v443
    %v764 = vunpack.c.h.bf16 %v443
    %v765 = vunpack.c.l.bf16 %v444
    %v766 = vunpack.c.l.bf16 %v445
    %v767 = vunpack.c.h.bf16 %v445
    %v768 = vunpack.c.l.bf16 %v446
    %v769 = vunpack.c.l.bf16 %v447
    %v770 = vunpack.c.h.bf16 %v447
    %v771 = vunpack.c.l.bf16 %v448
    %v772 = vunpack.c.l.bf16 %v449
    %v773 = vunpack.c.h.bf16 %v449
    %v774 = vunpack.c.l.bf16 %v450
    %v775 = vunpack.c.l.bf16 %v451
    %v776 = vunpack.c.h.bf16 %v451
    %v777 = vunpack.c.l.bf16 %v452
    %v778 = vunpack.c.l.bf16 %v453
    %v779 = vunpack.c.h.bf16 %v453
    %v780 = vunpack.c.l.bf16 %v454
    %v781 = vunpack.c.l.bf16 %v455
    %v782 = vunpack.c.h.bf16 %v455
    %v783 = vunpack.c.l.bf16 %v456
    %v784 = vunpack.c.l.bf16 %v457
    %v785 = vunpack.c.h.bf16 %v457
    %v786 = vunpack.c.l.bf16 %v458
    %v787 = vunpack.c.l.bf16 %v459
    %v788 = vunpack.c.h.bf16 %v459
    %v789 = vunpack.c.l.bf16 %v460
    %v790 = vunpack.c.l.bf16 %v461
    %v791 = vunpack.c.h.bf16 %v461
    %v792 = vunpack.c.l.bf16 %v462
    %v793 = vunpack.c.l.bf16 %v463
    %v794 = vunpack.c.h.bf16 %v463
    %v795 = vunpack.c.l.bf16 %v464
    %v796 = vunpack.c.l.bf16 %v465
    %v797 = vunpack.c.h.bf16 %v465
    %v798 = vunpack.c.l.bf16 %v466
    %v799 = vunpack.c.l.bf16 %v467
    %v800 = vunpack.c.h.bf16 %v467
    %v801 = vunpack.c.l.bf16 %v468
    %v802 = vunpack.c.l.bf16 %v469
    %v803 = vunpack.c.h.bf16 %v469
    %v804 = vunpack.c.l.bf16 %v470
    %v805 = vunpack.c.l.bf16 %v471
    %v806 = vunpack.c.h.bf16 %v471
    %v807 = vunpack.c.l.bf16 %v472
    %v808 = vunpack.c.l.bf16 %v473
    %v809 = vunpack.c.h.bf16 %v473
    %v810 = vunpack.c.l.bf16 %v474
    %v811 = vunpack.c.l.bf16 %v475
    %v812 = vunpack.c.h.bf16 %v475
    %v813 = vunpack.c.l.bf16 %v476
    %v814 = vunpack.c.l.bf16 %v477
    %v815 = vunpack.c.h.bf16 %v477
    %v816 = vunpack.c.l.bf16 %v478
    %v817 = vunpack.c.l.bf16 %v479
    %v818 = vunpack.c.h.bf16 %v479
    %v819 = vunpack.c.l.bf16 %v480
    %v820 = vunpack.c.l.bf16 %v481
    %v821 = vunpack.c.h.bf16 %v481
    %v822 = vunpack.c.l.bf16 %v482
    %v823 = vunpack.c.l.bf16 %v483
    %v824 = vunpack.c.h.bf16 %v483
    %v825 = vunpack.c.l.bf16 %v484
    %v826 = vunpack.c.l.bf16 %v485
    %v827 = vunpack.c.h.bf16 %v485
    %v828 = vunpack.c.l.bf16 %v486
    %v829 = vunpack.c.l.bf16 %v487
    %v830 = vunpack.c.h.bf16 %v487
    %v831 = vunpack.c.l.bf16 %v488
    %v832 = vunpack.c.l.bf16 %v489
    %v833 = vunpack.c.h.bf16 %v489
    %v834 = vunpack.c.l.bf16 %v490
    %v835 = vunpack.c.l.bf16 %v491
    %v836 = vunpack.c.h.bf16 %v491
    %v837 = vunpack.c.l.bf16 %v492
    %v838 = vunpack.c.l.bf16 %v493
    %v839 = vunpack.c.h.bf16 %v493
    %v840 = vunpack.c.l.bf16 %v494
    %v841 = vunpack.c.l.bf16 %v495
    %v842 = vunpack.c.h.bf16 %v495
    %v843 = vunpack.c.l.bf16 %v496
    %v844 = vunpack.c.l.bf16 %v497
    %v845 = vunpack.c.h.bf16 %v497
    %v846 = vunpack.c.l.bf16 %v498
    %v847 = vunpack.c.l.bf16 %v499
    %v848 = vunpack.c.h.bf16 %v499
    %v849 = vunpack.c.l.bf16 %v500
    %v850 = vunpack.c.l.bf16 %v501
    %v851 = vunpack.c.h.bf16 %v501
    %v852 = vunpack.c.l.bf16 %v502
    %v853 = vunpack.c.l.bf16 %v503
    %v854 = vunpack.c.h.bf16 %v503
    %v855 = vunpack.c.l.bf16 %v504
    %v856 = vunpack.c.l.bf16 %v505
    %v857 = vunpack.c.h.bf16 %v505
    %v858 = vunpack.c.l.bf16 %v506
    %v859 = vunpack.c.l.bf16 %v507
    %v860 = vunpack.c.h.bf16 %v507
    %v861 = vunpack.c.l.bf16 %v508
    %v862 = vunpack.c.l.bf16 %v509
    %v863 = vunpack.c.h.bf16 %v509
    %v864 = vunpack.c.l.bf16 %v510
    %v865 = vunpack.c.l.bf16 %v511
    %v866 = vunpack.c.h.bf16 %v511
    %v867 = vunpack.c.l.bf16 %v512
    %v868 = vunpack.c.l.bf16 %v513
    %v869 = vunpack.c.h.bf16 %v513
    %v870 = vunpack.c.l.bf16 %v514
    %v871 = vunpack.c.l.bf16 %v515
    %v872 = vunpack.c.h.bf16 %v515
    %v873 = vunpack.c.l.bf16 %v516
    %v874 = vunpack.c.l.bf16 %v517
    %v875 = vunpack.c.h.bf16 %v517
    %v876 = vunpack.c.l.bf16 %v518
    %v877 = vunpack.c.l.bf16 %v519
    %v878 = vunpack.c.h.bf16 %v519
    %v879 = vunpack.c.l.bf16 %v520
    %v880 = vunpack.c.l.bf16 %v521
    %v881 = vunpack.c.h.bf16 %v521
    %v882 = vunpack.c.l.bf16 %v522
    %v883 = vld [vmem:[%s11] sm:$0x7]
    %v885 = vlaneseq
    %v886 = vshrl.u32 %v885, 7
    %v887 = vsub.s32 0, %v886
    %v888 = vrot.slane %v883, %v887
    %v889 = vlaneseq
    %v890 = vshrl.u32 %v889, 7
    %v891 = vsub.s32 1, %v890
    %v892 = vrot.slane %v883, %v891
    %v893 = vlaneseq
    %v894 = vshrl.u32 %v893, 7
    %v895 = vsub.s32 2, %v894
    %v896 = vrot.slane %v883, %v895
    %vm900 = vcmask 523264
    %v902 = vsel %vm900, %v275, 0
    %904 = vmatprep.subr.mxu0 %v524
    %905 = vmatpush1.msra.mxu0 %v523
    %906 = vmatprep.subr.mxu0 %v527
    %907 = vmatpush1.msra.mxu0 %v526
    %908 = vmatprep.subr.mxu0 %v530
    %909 = vmatpush1.msra.mxu0 %v529
    %910 = vmatprep.subr.mxu0 %v533
    %911 = vmatpush1.msra.mxu0 %v532
    %912 = vmatprep.subr.mxu0 %v536
    %913 = vmatpush1.msra.mxu0 %v535
    %914 = vmatprep.subr.mxu0 %v539
    %915 = vmatpush1.msra.mxu0 %v538
    %916 = vmatprep.subr.mxu0 %v542
    %917 = vmatpush1.msra.mxu0 %v541
    %918 = vmatprep.subr.mxu0 %v545
    %919 = vmatpush1.msra.mxu0 %v544
    %920 = vmatprep.subr.mxu0 %v548
    %921 = vmatpush1.msra.mxu0 %v547
    %922 = vmatprep.subr.mxu0 %v551
    %923 = vmatpush1.msra.mxu0 %v550
    %924 = vmatprep.subr.mxu0 %v554
    %925 = vmatpush1.msra.mxu0 %v553
    %926 = vmatprep.subr.mxu0 %v557
    %927 = vmatpush1.msra.mxu0 %v556
    %928 = vmatprep.subr.mxu0 %v560
    %929 = vmatpush1.msra.mxu0 %v559
    %930 = vmatprep.subr.mxu0 %v563
    %931 = vmatpush1.msra.mxu0 %v562
    %932 = vmatprep.subr.mxu0 %v566
    %933 = vmatpush1.msra.mxu0 %v565
    %934 = vmatprep.subr.mxu0 %v569
    %935 = vmatpush1.msra.mxu0 %v568
    %936 = vmatprep.subr.mxu0 %v572
    %937 = vmatpush1.msra.mxu0 %v571
    %938 = vmatprep.subr.mxu0 %v575
    %939 = vmatpush1.msra.mxu0 %v574
    %940 = vmatprep.subr.mxu0 %v578
    %941 = vmatpush1.msra.mxu0 %v577
    %942 = vmatprep.subr.mxu0 %v581
    %943 = vmatpush1.msra.mxu0 %v580
    %944 = vmatprep.subr.mxu0 %v584
    %945 = vmatpush1.msra.mxu0 %v583
    %946 = vmatprep.subr.mxu0 %v587
    %947 = vmatpush1.msra.mxu0 %v586
    %948 = vmatprep.subr.mxu0 %v590
    %949 = vmatpush1.msra.mxu0 %v589
    %950 = vmatprep.subr.mxu0 %v593
    %951 = vmatpush1.msra.mxu0 %v592
    %952 = vmatprep.subr.mxu0 %v596
    %953 = vmatpush1.msra.mxu0 %v595
    %954 = vmatprep.subr.mxu0 %v599
    %955 = vmatpush1.msra.mxu0 %v598
    %956 = vmatprep.subr.mxu0 %v602
    %957 = vmatpush1.msra.mxu0 %v601
    %958 = vmatprep.subr.mxu0 %v605
    %959 = vmatpush1.msra.mxu0 %v604
    %960 = vmatprep.subr.mxu0 %v608
    %961 = vmatpush1.msra.mxu0 %v607
    %962 = vmatprep.subr.mxu0 %v611
    %963 = vmatpush1.msra.mxu0 %v610
    %964 = vmatprep.subr.mxu0 %v614
    %965 = vmatpush1.msra.mxu0 %v613
    %966 = vmatprep.subr.mxu0 %v617
    %967 = vmatpush1.msra.mxu0 %v616
    %968 = vmatprep.mubr.f32.mxu0 %v269
    %969 = vmatmul.mubr.f32.gmra.mrb[0].mxu0 %v268
    %v970 = vpop.f32.mrb[0].mxu0
    %v971 = vadd.f32 %v888, %v970
    %v972 = vpop.f32.mrb[0].mxu0
    %v973 = vadd.f32 %v892, %v972
    %974 = vdwg.mxu0
    %975 = vmatprep.subr.mxu0 %v620
    %976 = vmatpush1.msra.mxu0 %v619
    %977 = vmatprep.subr.mxu0 %v623
    %978 = vmatpush1.msra.mxu0 %v622
    %979 = vmatprep.subr.mxu0 %v626
    %980 = vmatpush1.msra.mxu0 %v625
    %981 = vmatprep.subr.mxu0 %v629
    %982 = vmatpush1.msra.mxu0 %v628
    %983 = vmatprep.subr.mxu0 %v632
    %984 = vmatpush1.msra.mxu0 %v631
    %985 = vmatprep.subr.mxu0 %v635
    %986 = vmatpush1.msra.mxu0 %v634
    %987 = vmatprep.subr.mxu0 %v638
    %988 = vmatpush1.msra.mxu0 %v637
    %989 = vmatprep.subr.mxu0 %v641
    %990 = vmatpush1.msra.mxu0 %v640
    %991 = vmatprep.subr.mxu0 %v644
    %992 = vmatpush1.msra.mxu0 %v643
    %993 = vmatprep.subr.mxu0 %v647
    %994 = vmatpush1.msra.mxu0 %v646
    %995 = vmatprep.subr.mxu0 %v650
    %996 = vmatpush1.msra.mxu0 %v649
    %997 = vmatprep.subr.mxu0 %v653
    %998 = vmatpush1.msra.mxu0 %v652
    %999 = vmatprep.subr.mxu0 %v656
    %1000 = vmatpush1.msra.mxu0 %v655
    %1001 = vmatprep.subr.mxu0 %v659
    %1002 = vmatpush1.msra.mxu0 %v658
    %1003 = vmatprep.subr.mxu0 %v662
    %1004 = vmatpush1.msra.mxu0 %v661
    %1005 = vmatprep.subr.mxu0 %v665
    %1006 = vmatpush1.msra.mxu0 %v664
    %1007 = vmatprep.subr.mxu0 %v668
    %1008 = vmatpush1.msra.mxu0 %v667
    %1009 = vmatprep.subr.mxu0 %v671
    %1010 = vmatpush1.msra.mxu0 %v670
    %1011 = vmatprep.subr.mxu0 %v674
    %1012 = vmatpush1.msra.mxu0 %v673
    %1013 = vmatprep.subr.mxu0 %v677
    %1014 = vmatpush1.msra.mxu0 %v676
    %1015 = vmatprep.subr.mxu0 %v680
    %1016 = vmatpush1.msra.mxu0 %v679
    %1017 = vmatprep.subr.mxu0 %v683
    %1018 = vmatpush1.msra.mxu0 %v682
    %1019 = vmatprep.subr.mxu0 %v686
    %1020 = vmatpush1.msra.mxu0 %v685
    %1021 = vmatprep.subr.mxu0 %v689
    %1022 = vmatpush1.msra.mxu0 %v688
    %1023 = vmatprep.subr.mxu0 %v692
    %1024 = vmatpush1.msra.mxu0 %v691
    %1025 = vmatprep.subr.mxu0 %v695
    %1026 = vmatpush1.msra.mxu0 %v694
    %1027 = vmatprep.subr.mxu0 %v698
    %1028 = vmatpush1.msra.mxu0 %v697
    %1029 = vmatprep.subr.mxu0 %v701
    %1030 = vmatpush1.msra.mxu0 %v700
    %1031 = vmatprep.subr.mxu0 %v704
    %1032 = vmatpush1.msra.mxu0 %v703
    %1033 = vmatprep.subr.mxu0 %v707
    %1034 = vmatpush1.msra.mxu0 %v706
    %1035 = vmatprep.subr.mxu0 %v710
    %1036 = vmatpush1.msra.mxu0 %v709
    %1037 = vmatprep.subr.mxu0 %v713
    %1038 = vmatpush1.msra.mxu0 %v712
    %1039 = vmatprep.mubr.f32.mxu0 %v271
    %1040 = vmatmul.mubr.f32.gmra.mrb[0].mxu0 %v270
    %v1041 = vpop.f32.mrb[0].mxu0
    %v1042 = vadd.f32 %v971, %v1041
    %v1043 = vpop.f32.mrb[0].mxu0
    %v1044 = vadd.f32 %v973, %v1043
    %1045 = vdwg.mxu0
    %1046 = vmatprep.subr.mxu0 %v716
    %1047 = vmatpush1.msra.mxu0 %v715
    %1048 = vmatprep.subr.mxu0 %v719
    %1049 = vmatpush1.msra.mxu0 %v718
    %1050 = vmatprep.subr.mxu0 %v722
    %1051 = vmatpush1.msra.mxu0 %v721
    %1052 = vmatprep.subr.mxu0 %v725
    %1053 = vmatpush1.msra.mxu0 %v724
    %1054 = vmatprep.subr.mxu0 %v728
    %1055 = vmatpush1.msra.mxu0 %v727
    %1056 = vmatprep.subr.mxu0 %v731
    %1057 = vmatpush1.msra.mxu0 %v730
    %1058 = vmatprep.subr.mxu0 %v734
    %1059 = vmatpush1.msra.mxu0 %v733
    %1060 = vmatprep.subr.mxu0 %v737
    %1061 = vmatpush1.msra.mxu0 %v736
    %1062 = vmatprep.subr.mxu0 %v740
    %1063 = vmatpush1.msra.mxu0 %v739
    %1064 = vmatprep.subr.mxu0 %v743
    %1065 = vmatpush1.msra.mxu0 %v742
    %1066 = vmatprep.subr.mxu0 %v746
    %1067 = vmatpush1.msra.mxu0 %v745
    %1068 = vmatprep.subr.mxu0 %v749
    %1069 = vmatpush1.msra.mxu0 %v748
    %1070 = vmatprep.subr.mxu0 %v752
    %1071 = vmatpush1.msra.mxu0 %v751
    %1072 = vmatprep.subr.mxu0 %v755
    %1073 = vmatpush1.msra.mxu0 %v754
    %1074 = vmatprep.subr.mxu0 %v758
    %1075 = vmatpush1.msra.mxu0 %v757
    %1076 = vmatprep.subr.mxu0 %v761
    %1077 = vmatpush1.msra.mxu0 %v760
    %1078 = vmatprep.subr.mxu0 %v764
    %1079 = vmatpush1.msra.mxu0 %v763
    %1080 = vmatprep.subr.mxu0 %v767
    %1081 = vmatpush1.msra.mxu0 %v766
    %1082 = vmatprep.subr.mxu0 %v770
    %1083 = vmatpush1.msra.mxu0 %v769
    %1084 = vmatprep.subr.mxu0 %v773
    %1085 = vmatpush1.msra.mxu0 %v772
    %1086 = vmatprep.subr.mxu0 %v776
    %1087 = vmatpush1.msra.mxu0 %v775
    %1088 = vmatprep.subr.mxu0 %v779
    %1089 = vmatpush1.msra.mxu0 %v778
    %1090 = vmatprep.subr.mxu0 %v782
    %1091 = vmatpush1.msra.mxu0 %v781
    %1092 = vmatprep.subr.mxu0 %v785
    %1093 = vmatpush1.msra.mxu0 %v784
    %1094 = vmatprep.subr.mxu0 %v788
    %1095 = vmatpush1.msra.mxu0 %v787
    %1096 = vmatprep.subr.mxu0 %v791
    %1097 = vmatpush1.msra.mxu0 %v790
    %1098 = vmatprep.subr.mxu0 %v794
    %1099 = vmatpush1.msra.mxu0 %v793
    %1100 = vmatprep.subr.mxu0 %v797
    %1101 = vmatpush1.msra.mxu0 %v796
    %1102 = vmatprep.subr.mxu0 %v800
    %1103 = vmatpush1.msra.mxu0 %v799
    %1104 = vmatprep.subr.mxu0 %v803
    %1105 = vmatpush1.msra.mxu0 %v802
    %1106 = vmatprep.subr.mxu0 %v806
    %1107 = vmatpush1.msra.mxu0 %v805
    %1108 = vmatprep.subr.mxu0 %v809
    %1109 = vmatpush1.msra.mxu0 %v808
    %1110 = vmatprep.mubr.f32.mxu0 %v273
    %1111 = vmatmul.mubr.f32.gmra.mrb[0].mxu0 %v272
    %v1112 = vpop.f32.mrb[0].mxu0
    %v1113 = vadd.f32 %v1042, %v1112
    %v1114 = vpop.f32.mrb[0].mxu0
    %v1115 = vadd.f32 %v1044, %v1114
    %1116 = vdwg.mxu0
    %1117 = vmatprep.subr.mxu0 %v812
    %1118 = vmatpush1.msra.mxu0 %v811
    %1119 = vmatprep.subr.mxu0 %v815
    %1120 = vmatpush1.msra.mxu0 %v814
    %1121 = vmatprep.subr.mxu0 %v818
    %1122 = vmatpush1.msra.mxu0 %v817
    %1123 = vmatprep.subr.mxu0 %v821
    %1124 = vmatpush1.msra.mxu0 %v820
    %1125 = vmatprep.subr.mxu0 %v824
    %1126 = vmatpush1.msra.mxu0 %v823
    %1127 = vmatprep.subr.mxu0 %v827
    %1128 = vmatpush1.msra.mxu0 %v826
    %1129 = vmatprep.subr.mxu0 %v830
    %1130 = vmatpush1.msra.mxu0 %v829
    %1131 = vmatprep.subr.mxu0 %v833
    %1132 = vmatpush1.msra.mxu0 %v832
    %1133 = vmatprep.subr.mxu0 %v836
    %1134 = vmatpush1.msra.mxu0 %v835
    %1135 = vmatprep.subr.mxu0 %v839
    %1136 = vmatpush1.msra.mxu0 %v838
    %1137 = vmatprep.subr.mxu0 %v842
    %1138 = vmatpush1.msra.mxu0 %v841
    %1139 = vmatprep.subr.mxu0 %v845
    %1140 = vmatpush1.msra.mxu0 %v844
    %1141 = vmatprep.subr.mxu0 %v848
    %1142 = vmatpush1.msra.mxu0 %v847
    %1143 = vmatprep.subr.mxu0 %v851
    %1144 = vmatpush1.msra.mxu0 %v850
    %1145 = vmatprep.subr.mxu0 %v854
    %1146 = vmatpush1.msra.mxu0 %v853
    %1147 = vmatprep.subr.mxu0 %v857
    %1148 = vmatpush1.msra.mxu0 %v856
    %1149 = vmatprep.subr.mxu0 %v860
    %1150 = vmatpush1.msra.mxu0 %v859
    %1151 = vmatprep.subr.mxu0 %v863
    %1152 = vmatpush1.msra.mxu0 %v862
    %1153 = vmatprep.subr.mxu0 %v866
    %1154 = vmatpush1.msra.mxu0 %v865
    %1155 = vmatprep.subr.mxu0 %v869
    %1156 = vmatpush1.msra.mxu0 %v868
    %1157 = vmatprep.subr.mxu0 %v872
    %1158 = vmatpush1.msra.mxu0 %v871
    %1159 = vmatprep.subr.mxu0 %v875
    %1160 = vmatpush1.msra.mxu0 %v874
    %1161 = vmatprep.subr.mxu0 %v878
    %1162 = vmatpush1.msra.mxu0 %v877
    %1163 = vmatprep.subr.mxu0 %v881
    %1164 = vmatpush1.msra.mxu0 %v880
    %1165 = vmatprep.subr.mxu0 0.0
    %1166 = vmatpush1.msra.mxu0 0.0
    %1167 = vmatprep.subr.mxu0 0.0
    %1168 = vmatpush1.msra.mxu0 0.0
    %1169 = vmatprep.subr.mxu0 0.0
    %1170 = vmatpush1.msra.mxu0 0.0
    %1171 = vmatprep.subr.mxu0 0.0
    %1172 = vmatpush1.msra.mxu0 0.0
    %1173 = vmatprep.subr.mxu0 0.0
    %1174 = vmatpush1.msra.mxu0 0.0
    %1175 = vmatprep.subr.mxu0 0.0
    %1176 = vmatpush1.msra.mxu0 0.0
    %1177 = vmatprep.subr.mxu0 0.0
    %1178 = vmatpush1.msra.mxu0 0.0
    %1179 = vmatprep.subr.mxu0 0.0
    %1180 = vmatpush1.msra.mxu0 0.0
    %1181 = vmatprep.mubr.f32.mxu0 %v902
    %1182 = vmatmul.mubr.f32.gmra.mrb[0].mxu0 %v274
    %v1183 = vpop.f32.mrb[0].mxu0
    %v1184 = vadd.f32 %v1113, %v1183
    %v1185 = vpop.f32.mrb[0].mxu0
    %v1186 = vadd.f32 %v1115, %v1185
    %1187 = vdwg.mxu0
    %1188 = vmatprep.subr.mxu0 0.0
    %1189 = vmatpush1.msra.mxu0 %v525
    %1190 = vmatprep.subr.mxu0 0.0
    %1191 = vmatpush1.msra.mxu0 %v528
    %1192 = vmatprep.subr.mxu0 0.0
    %1193 = vmatpush1.msra.mxu0 %v531
    %1194 = vmatprep.subr.mxu0 0.0
    %1195 = vmatpush1.msra.mxu0 %v534
    %1196 = vmatprep.subr.mxu0 0.0
    %1197 = vmatpush1.msra.mxu0 %v537
    %1198 = vmatprep.subr.mxu0 0.0
    %1199 = vmatpush1.msra.mxu0 %v540
    %1200 = vmatprep.subr.mxu0 0.0
    %1201 = vmatpush1.msra.mxu0 %v543
    %1202 = vmatprep.subr.mxu0 0.0
    %1203 = vmatpush1.msra.mxu0 %v546
    %1204 = vmatprep.subr.mxu0 0.0
    %1205 = vmatpush1.msra.mxu0 %v549
    %1206 = vmatprep.subr.mxu0 0.0
    %1207 = vmatpush1.msra.mxu0 %v552
    %1208 = vmatprep.subr.mxu0 0.0
    %1209 = vmatpush1.msra.mxu0 %v555
    %1210 = vmatprep.subr.mxu0 0.0
    %1211 = vmatpush1.msra.mxu0 %v558
    %1212 = vmatprep.subr.mxu0 0.0
    %1213 = vmatpush1.msra.mxu0 %v561
    %1214 = vmatprep.subr.mxu0 0.0
    %1215 = vmatpush1.msra.mxu0 %v564
    %1216 = vmatprep.subr.mxu0 0.0
    %1217 = vmatpush1.msra.mxu0 %v567
    %1218 = vmatprep.subr.mxu0 0.0
    %1219 = vmatpush1.msra.mxu0 %v570
    %1220 = vmatprep.subr.mxu0 0.0
    %1221 = vmatpush1.msra.mxu0 %v573
    %1222 = vmatprep.subr.mxu0 0.0
    %1223 = vmatpush1.msra.mxu0 %v576
    %1224 = vmatprep.subr.mxu0 0.0
    %1225 = vmatpush1.msra.mxu0 %v579
    %1226 = vmatprep.subr.mxu0 0.0
    %1227 = vmatpush1.msra.mxu0 %v582
    %1228 = vmatprep.subr.mxu0 0.0
    %1229 = vmatpush1.msra.mxu0 %v585
    %1230 = vmatprep.subr.mxu0 0.0
    %1231 = vmatpush1.msra.mxu0 %v588
    %1232 = vmatprep.subr.mxu0 0.0
    %1233 = vmatpush1.msra.mxu0 %v591
    %1234 = vmatprep.subr.mxu0 0.0
    %1235 = vmatpush1.msra.mxu0 %v594
    %1236 = vmatprep.subr.mxu0 0.0
    %1237 = vmatpush1.msra.mxu0 %v597
    %1238 = vmatprep.subr.mxu0 0.0
    %1239 = vmatpush1.msra.mxu0 %v600
    %1240 = vmatprep.subr.mxu0 0.0
    %1241 = vmatpush1.msra.mxu0 %v603
    %1242 = vmatprep.subr.mxu0 0.0
    %1243 = vmatpush1.msra.mxu0 %v606
    %1244 = vmatprep.subr.mxu0 0.0
    %1245 = vmatpush1.msra.mxu0 %v609
    %1246 = vmatprep.subr.mxu0 0.0
    %1247 = vmatpush1.msra.mxu0 %v612
    %1248 = vmatprep.subr.mxu0 0.0
    %1249 = vmatpush1.msra.mxu0 %v615
    %1250 = vmatprep.subr.mxu0 0.0
    %1251 = vmatpush1.msra.mxu0 %v618
    %1252 = vmatprep.mubr.f32.mxu0 %v269
    %1253 = vmatmul.mubr.f32.gmra.mrb[0].mxu0 %v268
    %v1254 = vpop.f32.mrb[0].mxu0
    %v1255 = vadd.f32 %v896, %v1254
    %v1256 = vpop.f32.mrb[0].mxu0
    %1257 = vdwg.mxu0
    %1258 = vmatprep.subr.mxu0 0.0
    %1259 = vmatpush1.msra.mxu0 %v621
    %1260 = vmatprep.subr.mxu0 0.0
    %1261 = vmatpush1.msra.mxu0 %v624
    %1262 = vmatprep.subr.mxu0 0.0
    %1263 = vmatpush1.msra.mxu0 %v627
    %1264 = vmatprep.subr.mxu0 0.0
    %1265 = vmatpush1.msra.mxu0 %v630
    %1266 = vmatprep.subr.mxu0 0.0
    %1267 = vmatpush1.msra.mxu0 %v633
    %1268 = vmatprep.subr.mxu0 0.0
    %1269 = vmatpush1.msra.mxu0 %v636
    %1270 = vmatprep.subr.mxu0 0.0
    %1271 = vmatpush1.msra.mxu0 %v639
    %1272 = vmatprep.subr.mxu0 0.0
    %1273 = vmatpush1.msra.mxu0 %v642
    %1274 = vmatprep.subr.mxu0 0.0
    %1275 = vmatpush1.msra.mxu0 %v645
    %1276 = vmatprep.subr.mxu0 0.0
    %1277 = vmatpush1.msra.mxu0 %v648
    %1278 = vmatprep.subr.mxu0 0.0
    %1279 = vmatpush1.msra.mxu0 %v651
    %1280 = vmatprep.subr.mxu0 0.0
    %1281 = vmatpush1.msra.mxu0 %v654
    %1282 = vmatprep.subr.mxu0 0.0
    %1283 = vmatpush1.msra.mxu0 %v657
    %1284 = vmatprep.subr.mxu0 0.0
    %1285 = vmatpush1.msra.mxu0 %v660
    %1286 = vmatprep.subr.mxu0 0.0
    %1287 = vmatpush1.msra.mxu0 %v663
    %1288 = vmatprep.subr.mxu0 0.0
    %1289 = vmatpush1.msra.mxu0 %v666
    %1290 = vmatprep.subr.mxu0 0.0
    %1291 = vmatpush1.msra.mxu0 %v669
    %1292 = vmatprep.subr.mxu0 0.0
    %1293 = vmatpush1.msra.mxu0 %v672
    %1294 = vmatprep.subr.mxu0 0.0
    %1295 = vmatpush1.msra.mxu0 %v675
    %1296 = vmatprep.subr.mxu0 0.0
    %1297 = vmatpush1.msra.mxu0 %v678
    %1298 = vmatprep.subr.mxu0 0.0
    %1299 = vmatpush1.msra.mxu0 %v681
    %1300 = vmatprep.subr.mxu0 0.0
    %1301 = vmatpush1.msra.mxu0 %v684
    %1302 = vmatprep.subr.mxu0 0.0
    %1303 = vmatpush1.msra.mxu0 %v687
    %1304 = vmatprep.subr.mxu0 0.0
    %1305 = vmatpush1.msra.mxu0 %v690
    %1306 = vmatprep.subr.mxu0 0.0
    %1307 = vmatpush1.msra.mxu0 %v693
    %1308 = vmatprep.subr.mxu0 0.0
    %1309 = vmatpush1.msra.mxu0 %v696
    %1310 = vmatprep.subr.mxu0 0.0
    %1311 = vmatpush1.msra.mxu0 %v699
    %1312 = vmatprep.subr.mxu0 0.0
    %1313 = vmatpush1.msra.mxu0 %v702
    %1314 = vmatprep.subr.mxu0 0.0
    %1315 = vmatpush1.msra.mxu0 %v705
    %1316 = vmatprep.subr.mxu0 0.0
    %1317 = vmatpush1.msra.mxu0 %v708
    %1318 = vmatprep.subr.mxu0 0.0
    %1319 = vmatpush1.msra.mxu0 %v711
    %1320 = vmatprep.subr.mxu0 0.0
    %1321 = vmatpush1.msra.mxu0 %v714
    %1322 = vmatprep.mubr.f32.mxu0 %v271
    %1323 = vmatmul.mubr.f32.gmra.mrb[0].mxu0 %v270
    %v1324 = vpop.f32.mrb[0].mxu0
    %v1325 = vadd.f32 %v1255, %v1324
    %v1326 = vpop.f32.mrb[0].mxu0
    %1327 = vdwg.mxu0
    %1328 = vmatprep.subr.mxu0 0.0
    %1329 = vmatpush1.msra.mxu0 %v717
    %1330 = vmatprep.subr.mxu0 0.0
    %1331 = vmatpush1.msra.mxu0 %v720
    %1332 = vmatprep.subr.mxu0 0.0
    %1333 = vmatpush1.msra.mxu0 %v723
    %1334 = vmatprep.subr.mxu0 0.0
    %1335 = vmatpush1.msra.mxu0 %v726
    %1336 = vmatprep.subr.mxu0 0.0
    %1337 = vmatpush1.msra.mxu0 %v729
    %1338 = vmatprep.subr.mxu0 0.0
    %1339 = vmatpush1.msra.mxu0 %v732
    %1340 = vmatprep.subr.mxu0 0.0
    %1341 = vmatpush1.msra.mxu0 %v735
    %1342 = vmatprep.subr.mxu0 0.0
    %1343 = vmatpush1.msra.mxu0 %v738
    %1344 = vmatprep.subr.mxu0 0.0
    %1345 = vmatpush1.msra.mxu0 %v741
    %1346 = vmatprep.subr.mxu0 0.0
    %1347 = vmatpush1.msra.mxu0 %v744
    %1348 = vmatprep.subr.mxu0 0.0
    %1349 = vmatpush1.msra.mxu0 %v747
    %1350 = vmatprep.subr.mxu0 0.0
    %1351 = vmatpush1.msra.mxu0 %v750
    %1352 = vmatprep.subr.mxu0 0.0
    %1353 = vmatpush1.msra.mxu0 %v753
    %1354 = vmatprep.subr.mxu0 0.0
    %1355 = vmatpush1.msra.mxu0 %v756
    %1356 = vmatprep.subr.mxu0 0.0
    %1357 = vmatpush1.msra.mxu0 %v759
    %1358 = vmatprep.subr.mxu0 0.0
    %1359 = vmatpush1.msra.mxu0 %v762
    %1360 = vmatprep.subr.mxu0 0.0
    %1361 = vmatpush1.msra.mxu0 %v765
    %1362 = vmatprep.subr.mxu0 0.0
    %1363 = vmatpush1.msra.mxu0 %v768
    %1364 = vmatprep.subr.mxu0 0.0
    %1365 = vmatpush1.msra.mxu0 %v771
    %1366 = vmatprep.subr.mxu0 0.0
    %1367 = vmatpush1.msra.mxu0 %v774
    %1368 = vmatprep.subr.mxu0 0.0
    %1369 = vmatpush1.msra.mxu0 %v777
    %1370 = vmatprep.subr.mxu0 0.0
    %1371 = vmatpush1.msra.mxu0 %v780
    %1372 = vmatprep.subr.mxu0 0.0
    %1373 = vmatpush1.msra.mxu0 %v783
    %1374 = vmatprep.subr.mxu0 0.0
    %1375 = vmatpush1.msra.mxu0 %v786
    %1376 = vmatprep.subr.mxu0 0.0
    %1377 = vmatpush1.msra.mxu0 %v789
    %1378 = vmatprep.subr.mxu0 0.0
    %1379 = vmatpush1.msra.mxu0 %v792
    %1380 = vmatprep.subr.mxu0 0.0
    %1381 = vmatpush1.msra.mxu0 %v795
    %1382 = vmatprep.subr.mxu0 0.0
    %1383 = vmatpush1.msra.mxu0 %v798
    %1384 = vmatprep.subr.mxu0 0.0
    %1385 = vmatpush1.msra.mxu0 %v801
    %1386 = vmatprep.subr.mxu0 0.0
    %1387 = vmatpush1.msra.mxu0 %v804
    %1388 = vmatprep.subr.mxu0 0.0
    %1389 = vmatpush1.msra.mxu0 %v807
    %1390 = vmatprep.subr.mxu0 0.0
    %1391 = vmatpush1.msra.mxu0 %v810
    %1392 = vmatprep.mubr.f32.mxu0 %v273
    %1393 = vmatmul.mubr.f32.gmra.mrb[0].mxu0 %v272
    %v1394 = vpop.f32.mrb[0].mxu0
    %v1395 = vadd.f32 %v1325, %v1394
    %v1396 = vpop.f32.mrb[0].mxu0
    %1397 = vdwg.mxu0
    %1398 = vmatprep.subr.mxu0 0.0
    %1399 = vmatpush1.msra.mxu0 %v813
    %1400 = vmatprep.subr.mxu0 0.0
    %1401 = vmatpush1.msra.mxu0 %v816
    %1402 = vmatprep.subr.mxu0 0.0
    %1403 = vmatpush1.msra.mxu0 %v819
    %1404 = vmatprep.subr.mxu0 0.0
    %1405 = vmatpush1.msra.mxu0 %v822
    %1406 = vmatprep.subr.mxu0 0.0
    %1407 = vmatpush1.msra.mxu0 %v825
    %1408 = vmatprep.subr.mxu0 0.0
    %1409 = vmatpush1.msra.mxu0 %v828
    %1410 = vmatprep.subr.mxu0 0.0
    %1411 = vmatpush1.msra.mxu0 %v831
    %1412 = vmatprep.subr.mxu0 0.0
    %1413 = vmatpush1.msra.mxu0 %v834
    %1414 = vmatprep.subr.mxu0 0.0
    %1415 = vmatpush1.msra.mxu0 %v837
    %1416 = vmatprep.subr.mxu0 0.0
    %1417 = vmatpush1.msra.mxu0 %v840
    %1418 = vmatprep.subr.mxu0 0.0
    %1419 = vmatpush1.msra.mxu0 %v843
    %1420 = vmatprep.subr.mxu0 0.0
    %1421 = vmatpush1.msra.mxu0 %v846
    %1422 = vmatprep.subr.mxu0 0.0
    %1423 = vmatpush1.msra.mxu0 %v849
    %1424 = vmatprep.subr.mxu0 0.0
    %1425 = vmatpush1.msra.mxu0 %v852
    %1426 = vmatprep.subr.mxu0 0.0
    %1427 = vmatpush1.msra.mxu0 %v855
    %1428 = vmatprep.subr.mxu0 0.0
    %1429 = vmatpush1.msra.mxu0 %v858
    %1430 = vmatprep.subr.mxu0 0.0
    %1431 = vmatpush1.msra.mxu0 %v861
    %1432 = vmatprep.subr.mxu0 0.0
    %1433 = vmatpush1.msra.mxu0 %v864
    %1434 = vmatprep.subr.mxu0 0.0
    %1435 = vmatpush1.msra.mxu0 %v867
    %1436 = vmatprep.subr.mxu0 0.0
    %1437 = vmatpush1.msra.mxu0 %v870
    %1438 = vmatprep.subr.mxu0 0.0
    %1439 = vmatpush1.msra.mxu0 %v873
    %1440 = vmatprep.subr.mxu0 0.0
    %1441 = vmatpush1.msra.mxu0 %v876
    %1442 = vmatprep.subr.mxu0 0.0
    %1443 = vmatpush1.msra.mxu0 %v879
    %1444 = vmatprep.subr.mxu0 0.0
    %1445 = vmatpush1.msra.mxu0 %v882
    %1446 = vmatprep.subr.mxu0 0.0
    %1447 = vmatpush1.msra.mxu0 0.0
    %1448 = vmatprep.subr.mxu0 0.0
    %1449 = vmatpush1.msra.mxu0 0.0
    %1450 = vmatprep.subr.mxu0 0.0
    %1451 = vmatpush1.msra.mxu0 0.0
    %1452 = vmatprep.subr.mxu0 0.0
    %1453 = vmatpush1.msra.mxu0 0.0
    %1454 = vmatprep.subr.mxu0 0.0
    %1455 = vmatpush1.msra.mxu0 0.0
    %1456 = vmatprep.subr.mxu0 0.0
    %1457 = vmatpush1.msra.mxu0 0.0
    %1458 = vmatprep.subr.mxu0 0.0
    %1459 = vmatpush1.msra.mxu0 0.0
    %1460 = vmatprep.subr.mxu0 0.0
    %1461 = vmatpush1.msra.mxu0 0.0
    %1462 = vmatprep.mubr.f32.mxu0 %v902
    %1463 = vmatmul.mubr.f32.gmra.mrb[0].mxu0 %v274
    %v1464 = vpop.f32.mrb[0].mxu0
    %v1465 = vadd.f32 %v1395, %v1464
    %v1466 = vpop.f32.mrb[0].mxu0
    %1467 = vdwg.mxu0
    %v1468 = vmax.f32 %v1184, 0.0
    %v1469 = vmax.f32 %v1186, 0.0
    %v1470 = vmax.f32 %v1465, 0.0
    %v1471 = vld [vmem:[%s13] sm:$0xff]
    %v1472 = vld [vmem:[%s13 + $0x8] sm:$0xf]
    %v1473 = vld [vmem:[%s13 + $0xc] sm:$0xff]
    %v1474 = vld [vmem:[%s13 + $0x14] sm:$0xf]
    %v1475 = vld [vmem:[%s13 + $0x18] sm:$0xff]
    %v1476 = vld [vmem:[%s13 + $0x20] sm:$0xf]
    %v1477 = vld [vmem:[%s13 + $0x24] sm:$0xff]
    %v1478 = vld [vmem:[%s13 + $0x2c] sm:$0xf]
    %v1479 = vld [vmem:[%s13 + $0x30] sm:$0xff]
    %v1480 = vld [vmem:[%s13 + $0x38] sm:$0xf]
    %v1481 = vld [vmem:[%s13 + $0x3c] sm:$0xff]
    %v1482 = vld [vmem:[%s13 + $0x44] sm:$0xf]
    %v1483 = vld [vmem:[%s13 + $0x48] sm:$0xff]
    %v1484 = vld [vmem:[%s13 + $0x50] sm:$0xf]
    %v1485 = vld [vmem:[%s13 + $0x54] sm:$0xff]
    %v1486 = vld [vmem:[%s13 + $0x5c] sm:$0xf]
    %v1487 = vld [vmem:[%s13 + $0x60] sm:$0xff]
    %v1488 = vld [vmem:[%s13 + $0x68] sm:$0xf]
    %v1489 = vld [vmem:[%s13 + $0x6c] sm:$0xff]
    %v1490 = vld [vmem:[%s13 + $0x74] sm:$0xf]
    %v1491 = vld [vmem:[%s13 + $0x78] sm:$0xff]
    %v1492 = vld [vmem:[%s13 + $0x80] sm:$0xf]
    %v1493 = vld [vmem:[%s13 + $0x84] sm:$0xff]
    %v1494 = vld [vmem:[%s13 + $0x8c] sm:$0xf]
    %v1495 = vld [vmem:[%s13 + $0x90] sm:$0xff]
    %v1496 = vld [vmem:[%s13 + $0x98] sm:$0xf]
    %v1497 = vld [vmem:[%s13 + $0x9c] sm:$0xff]
    %v1498 = vld [vmem:[%s13 + $0xa4] sm:$0xf]
    %v1499 = vld [vmem:[%s13 + $0xa8] sm:$0xff]
    %v1500 = vld [vmem:[%s13 + $0xb0] sm:$0xf]
    %v1501 = vld [vmem:[%s13 + $0xb4] sm:$0xff]
    %v1502 = vld [vmem:[%s13 + $0xbc] sm:$0xf]
    %v1503 = vld [vmem:[%s13 + $0xc0] sm:$0xff]
    %v1504 = vld [vmem:[%s13 + $0xc8] sm:$0xf]
    %v1505 = vld [vmem:[%s13 + $0xcc] sm:$0xff]
    %v1506 = vld [vmem:[%s13 + $0xd4] sm:$0xf]
    %v1507 = vld [vmem:[%s13 + $0xd8] sm:$0xff]
    %v1508 = vld [vmem:[%s13 + $0xe0] sm:$0xf]
    %v1509 = vld [vmem:[%s13 + $0xe4] sm:$0xff]
    %v1510 = vld [vmem:[%s13 + $0xec] sm:$0xf]
    %v1511 = vld [vmem:[%s13 + $0xf0] sm:$0xff]
    %v1512 = vld [vmem:[%s13 + $0xf8] sm:$0xf]
    %v1513 = vld [vmem:[%s13 + $0xfc] sm:$0xff]
    %v1514 = vld [vmem:[%s13 + $0x104] sm:$0xf]
    %v1515 = vld [vmem:[%s13 + $0x108] sm:$0xff]
    %v1516 = vld [vmem:[%s13 + $0x110] sm:$0xf]
    %v1517 = vld [vmem:[%s13 + $0x114] sm:$0xff]
    %v1518 = vld [vmem:[%s13 + $0x11c] sm:$0xf]
    %v1519 = vld [vmem:[%s13 + $0x120] sm:$0xff]
    %v1520 = vld [vmem:[%s13 + $0x128] sm:$0xf]
    %v1521 = vld [vmem:[%s13 + $0x12c] sm:$0xff]
    %v1522 = vld [vmem:[%s13 + $0x134] sm:$0xf]
    %v1523 = vld [vmem:[%s13 + $0x138] sm:$0xff]
    %v1524 = vld [vmem:[%s13 + $0x140] sm:$0xf]
    %v1525 = vld [vmem:[%s13 + $0x144] sm:$0xff]
    %v1526 = vld [vmem:[%s13 + $0x14c] sm:$0xf]
    %v1527 = vld [vmem:[%s13 + $0x150] sm:$0xff]
    %v1528 = vld [vmem:[%s13 + $0x158] sm:$0xf]
    %v1529 = vld [vmem:[%s13 + $0x15c] sm:$0xff]
    %v1530 = vld [vmem:[%s13 + $0x164] sm:$0xf]
    %v1531 = vld [vmem:[%s13 + $0x168] sm:$0xff]
    %v1532 = vld [vmem:[%s13 + $0x170] sm:$0xf]
    %v1533 = vld [vmem:[%s13 + $0x174] sm:$0xff]
    %v1534 = vld [vmem:[%s13 + $0x17c] sm:$0xf]
    %v1535 = vld [vmem:[%s13 + $0x180] sm:$0xff]
    %v1536 = vld [vmem:[%s13 + $0x188] sm:$0xf]
    %v1537 = vld [vmem:[%s13 + $0x18c] sm:$0xff]
    %v1538 = vld [vmem:[%s13 + $0x194] sm:$0xf]
    %v1539 = vld [vmem:[%s13 + $0x198] sm:$0xff]
    %v1540 = vld [vmem:[%s13 + $0x1a0] sm:$0xf]
    %v1541 = vld [vmem:[%s13 + $0x1a4] sm:$0xff]
    %v1542 = vld [vmem:[%s13 + $0x1ac] sm:$0xf]
    %v1543 = vld [vmem:[%s13 + $0x1b0] sm:$0xff]
    %v1544 = vld [vmem:[%s13 + $0x1b8] sm:$0xf]
    %v1545 = vld [vmem:[%s13 + $0x1bc] sm:$0x33]
    %v1546 = vld [vmem:[%s13 + $0x1c4] sm:$0x3]
    %v1547 = vunpack.c.l.bf16 %v1471
    %v1548 = vunpack.c.h.bf16 %v1471
    %v1549 = vunpack.c.l.bf16 %v1472
    %v1550 = vunpack.c.l.bf16 %v1473
    %v1551 = vunpack.c.h.bf16 %v1473
    %v1552 = vunpack.c.l.bf16 %v1474
    %v1553 = vunpack.c.l.bf16 %v1475
    %v1554 = vunpack.c.h.bf16 %v1475
    %v1555 = vunpack.c.l.bf16 %v1476
    %v1556 = vunpack.c.l.bf16 %v1477
    %v1557 = vunpack.c.h.bf16 %v1477
    %v1558 = vunpack.c.l.bf16 %v1478
    %v1559 = vunpack.c.l.bf16 %v1479
    %v1560 = vunpack.c.h.bf16 %v1479
    %v1561 = vunpack.c.l.bf16 %v1480
    %v1562 = vunpack.c.l.bf16 %v1481
    %v1563 = vunpack.c.h.bf16 %v1481
    %v1564 = vunpack.c.l.bf16 %v1482
    %v1565 = vunpack.c.l.bf16 %v1483
    %v1566 = vunpack.c.h.bf16 %v1483
    %v1567 = vunpack.c.l.bf16 %v1484
    %v1568 = vunpack.c.l.bf16 %v1485
    %v1569 = vunpack.c.h.bf16 %v1485
    %v1570 = vunpack.c.l.bf16 %v1486
    %v1571 = vunpack.c.l.bf16 %v1487
    %v1572 = vunpack.c.h.bf16 %v1487
    %v1573 = vunpack.c.l.bf16 %v1488
    %v1574 = vunpack.c.l.bf16 %v1489
    %v1575 = vunpack.c.h.bf16 %v1489
    %v1576 = vunpack.c.l.bf16 %v1490
    %v1577 = vunpack.c.l.bf16 %v1491
    %v1578 = vunpack.c.h.bf16 %v1491
    %v1579 = vunpack.c.l.bf16 %v1492
    %v1580 = vunpack.c.l.bf16 %v1493
    %v1581 = vunpack.c.h.bf16 %v1493
    %v1582 = vunpack.c.l.bf16 %v1494
    %v1583 = vunpack.c.l.bf16 %v1495
    %v1584 = vunpack.c.h.bf16 %v1495
    %v1585 = vunpack.c.l.bf16 %v1496
    %v1586 = vunpack.c.l.bf16 %v1497
    %v1587 = vunpack.c.h.bf16 %v1497
    %v1588 = vunpack.c.l.bf16 %v1498
    %v1589 = vunpack.c.l.bf16 %v1499
    %v1590 = vunpack.c.h.bf16 %v1499
    %v1591 = vunpack.c.l.bf16 %v1500
    %v1592 = vunpack.c.l.bf16 %v1501
    %v1593 = vunpack.c.h.bf16 %v1501
    %v1594 = vunpack.c.l.bf16 %v1502
    %v1595 = vunpack.c.l.bf16 %v1503
    %v1596 = vunpack.c.h.bf16 %v1503
    %v1597 = vunpack.c.l.bf16 %v1504
    %v1598 = vunpack.c.l.bf16 %v1505
    %v1599 = vunpack.c.h.bf16 %v1505
    %v1600 = vunpack.c.l.bf16 %v1506
    %v1601 = vunpack.c.l.bf16 %v1507
    %v1602 = vunpack.c.h.bf16 %v1507
    %v1603 = vunpack.c.l.bf16 %v1508
    %v1604 = vunpack.c.l.bf16 %v1509
    %v1605 = vunpack.c.h.bf16 %v1509
    %v1606 = vunpack.c.l.bf16 %v1510
    %v1607 = vunpack.c.l.bf16 %v1511
    %v1608 = vunpack.c.h.bf16 %v1511
    %v1609 = vunpack.c.l.bf16 %v1512
    %v1610 = vunpack.c.l.bf16 %v1513
    %v1611 = vunpack.c.h.bf16 %v1513
    %v1612 = vunpack.c.l.bf16 %v1514
    %v1613 = vunpack.c.l.bf16 %v1515
    %v1614 = vunpack.c.h.bf16 %v1515
    %v1615 = vunpack.c.l.bf16 %v1516
    %v1616 = vunpack.c.l.bf16 %v1517
    %v1617 = vunpack.c.h.bf16 %v1517
    %v1618 = vunpack.c.l.bf16 %v1518
    %v1619 = vunpack.c.l.bf16 %v1519
    %v1620 = vunpack.c.h.bf16 %v1519
    %v1621 = vunpack.c.l.bf16 %v1520
    %v1622 = vunpack.c.l.bf16 %v1521
    %v1623 = vunpack.c.h.bf16 %v1521
    %v1624 = vunpack.c.l.bf16 %v1522
    %v1625 = vunpack.c.l.bf16 %v1523
    %v1626 = vunpack.c.h.bf16 %v1523
    %v1627 = vunpack.c.l.bf16 %v1524
    %v1628 = vunpack.c.l.bf16 %v1525
    %v1629 = vunpack.c.h.bf16 %v1525
    %v1630 = vunpack.c.l.bf16 %v1526
    %v1631 = vunpack.c.l.bf16 %v1527
    %v1632 = vunpack.c.h.bf16 %v1527
    %v1633 = vunpack.c.l.bf16 %v1528
    %v1634 = vunpack.c.l.bf16 %v1529
    %v1635 = vunpack.c.h.bf16 %v1529
    %v1636 = vunpack.c.l.bf16 %v1530
    %v1637 = vunpack.c.l.bf16 %v1531
    %v1638 = vunpack.c.h.bf16 %v1531
    %v1639 = vunpack.c.l.bf16 %v1532
    %v1640 = vunpack.c.l.bf16 %v1533
    %v1641 = vunpack.c.h.bf16 %v1533
    %v1642 = vunpack.c.l.bf16 %v1534
    %v1643 = vunpack.c.l.bf16 %v1535
    %v1644 = vunpack.c.h.bf16 %v1535
    %v1645 = vunpack.c.l.bf16 %v1536
    %v1646 = vunpack.c.l.bf16 %v1537
    %v1647 = vunpack.c.h.bf16 %v1537
    %v1648 = vunpack.c.l.bf16 %v1538
    %v1649 = vunpack.c.l.bf16 %v1539
    %v1650 = vunpack.c.h.bf16 %v1539
    %v1651 = vunpack.c.l.bf16 %v1540
    %v1652 = vunpack.c.l.bf16 %v1541
    %v1653 = vunpack.c.h.bf16 %v1541
    %v1654 = vunpack.c.l.bf16 %v1542
    %v1655 = vunpack.c.l.bf16 %v1543
    %v1656 = vunpack.c.h.bf16 %v1543
    %v1657 = vunpack.c.l.bf16 %v1544
    %v1658 = vunpack.c.l.bf16 %v1545
    %v1659 = vunpack.c.h.bf16 %v1545
    %v1660 = vunpack.c.l.bf16 %v1546
    %v1661 = vld [vmem:[%s15] sm:$0x7]
    %v1663 = vlaneseq
    %v1664 = vshrl.u32 %v1663, 7
    %v1665 = vsub.s32 0, %v1664
    %v1666 = vrot.slane %v1661, %v1665
    %v1667 = vlaneseq
    %v1668 = vshrl.u32 %v1667, 7
    %v1669 = vsub.s32 1, %v1668
    %v1670 = vrot.slane %v1661, %v1669
    %v1671 = vlaneseq
    %v1672 = vshrl.u32 %v1671, 7
    %v1673 = vsub.s32 2, %v1672
    %v1674 = vrot.slane %v1661, %v1673
    %vm1678 = vcmask 359424
    %v1680 = vsel %vm1678, %v1470, 0
    %vm1682 = vcmask 1043456
    %v1684 = vsel %vm1682, %v1658, 0
    %v1687 = vsel %vm1682, %v1659, 0
    %v1690 = vsel %vm1682, %v1660, 0
    %1692 = vmatprep.subr.mxu0 %v1548
    %1693 = vmatpush1.msra.mxu0 %v1547
    %1694 = vmatprep.subr.mxu0 %v1551
    %1695 = vmatpush1.msra.mxu0 %v1550
    %1696 = vmatprep.subr.mxu0 %v1554
    %1697 = vmatpush1.msra.mxu0 %v1553
    %1698 = vmatprep.subr.mxu0 %v1557
    %1699 = vmatpush1.msra.mxu0 %v1556
    %1700 = vmatprep.subr.mxu0 %v1560
    %1701 = vmatpush1.msra.mxu0 %v1559
    %1702 = vmatprep.subr.mxu0 %v1563
    %1703 = vmatpush1.msra.mxu0 %v1562
    %1704 = vmatprep.subr.mxu0 %v1566
    %1705 = vmatpush1.msra.mxu0 %v1565
    %1706 = vmatprep.subr.mxu0 %v1569
    %1707 = vmatpush1.msra.mxu0 %v1568
    %1708 = vmatprep.subr.mxu0 %v1572
    %1709 = vmatpush1.msra.mxu0 %v1571
    %1710 = vmatprep.subr.mxu0 %v1575
    %1711 = vmatpush1.msra.mxu0 %v1574
    %1712 = vmatprep.subr.mxu0 %v1578
    %1713 = vmatpush1.msra.mxu0 %v1577
    %1714 = vmatprep.subr.mxu0 %v1581
    %1715 = vmatpush1.msra.mxu0 %v1580
    %1716 = vmatprep.subr.mxu0 %v1584
    %1717 = vmatpush1.msra.mxu0 %v1583
    %1718 = vmatprep.subr.mxu0 %v1587
    %1719 = vmatpush1.msra.mxu0 %v1586
    %1720 = vmatprep.subr.mxu0 %v1590
    %1721 = vmatpush1.msra.mxu0 %v1589
    %1722 = vmatprep.subr.mxu0 %v1593
    %1723 = vmatpush1.msra.mxu0 %v1592
    %1724 = vmatprep.subr.mxu0 %v1596
    %1725 = vmatpush1.msra.mxu0 %v1595
    %1726 = vmatprep.subr.mxu0 %v1599
    %1727 = vmatpush1.msra.mxu0 %v1598
    %1728 = vmatprep.subr.mxu0 %v1602
    %1729 = vmatpush1.msra.mxu0 %v1601
    %1730 = vmatprep.subr.mxu0 %v1605
    %1731 = vmatpush1.msra.mxu0 %v1604
    %1732 = vmatprep.subr.mxu0 %v1608
    %1733 = vmatpush1.msra.mxu0 %v1607
    %1734 = vmatprep.subr.mxu0 %v1611
    %1735 = vmatpush1.msra.mxu0 %v1610
    %1736 = vmatprep.subr.mxu0 %v1614
    %1737 = vmatpush1.msra.mxu0 %v1613
    %1738 = vmatprep.subr.mxu0 %v1617
    %1739 = vmatpush1.msra.mxu0 %v1616
    %1740 = vmatprep.subr.mxu0 %v1620
    %1741 = vmatpush1.msra.mxu0 %v1619
    %1742 = vmatprep.subr.mxu0 %v1623
    %1743 = vmatpush1.msra.mxu0 %v1622
    %1744 = vmatprep.subr.mxu0 %v1626
    %1745 = vmatpush1.msra.mxu0 %v1625
    %1746 = vmatprep.subr.mxu0 %v1629
    %1747 = vmatpush1.msra.mxu0 %v1628
    %1748 = vmatprep.subr.mxu0 %v1632
    %1749 = vmatpush1.msra.mxu0 %v1631
    %1750 = vmatprep.subr.mxu0 %v1635
    %1751 = vmatpush1.msra.mxu0 %v1634
    %1752 = vmatprep.subr.mxu0 %v1638
    %1753 = vmatpush1.msra.mxu0 %v1637
    %1754 = vmatprep.subr.mxu0 %v1641
    %1755 = vmatpush1.msra.mxu0 %v1640
    %1756 = vmatprep.mubr.f32.mxu0 %v1469
    %1757 = vmatmul.mubr.f32.gmra.mrb[0].mxu0 %v1468
    %v1758 = vpop.f32.mrb[0].mxu0
    %v1759 = vadd.f32 %v1666, %v1758
    %v1760 = vpop.f32.mrb[0].mxu0
    %v1761 = vadd.f32 %v1670, %v1760
    %1762 = vdwg.mxu0
    %1763 = vmatprep.subr.mxu0 %v1644
    %1764 = vmatpush1.msra.mxu0 %v1643
    %1765 = vmatprep.subr.mxu0 %v1647
    %1766 = vmatpush1.msra.mxu0 %v1646
    %1767 = vmatprep.subr.mxu0 %v1650
    %1768 = vmatpush1.msra.mxu0 %v1649
    %1769 = vmatprep.subr.mxu0 %v1653
    %1770 = vmatpush1.msra.mxu0 %v1652
    %1771 = vmatprep.subr.mxu0 %v1656
    %1772 = vmatpush1.msra.mxu0 %v1655
    %1773 = vmatprep.subr.mxu0 %v1687
    %1774 = vmatpush1.msra.mxu0 %v1684
    %1775 = vmatprep.subr.mxu0 0.0
    %1776 = vmatpush1.msra.mxu0 0.0
    %1777 = vmatprep.subr.mxu0 0.0
    %1778 = vmatpush1.msra.mxu0 0.0
    %1779 = vmatprep.subr.mxu0 0.0
    %1780 = vmatpush1.msra.mxu0 0.0
    %1781 = vmatprep.subr.mxu0 0.0
    %1782 = vmatpush1.msra.mxu0 0.0
    %1783 = vmatprep.subr.mxu0 0.0
    %1784 = vmatpush1.msra.mxu0 0.0
    %1785 = vmatprep.subr.mxu0 0.0
    %1786 = vmatpush1.msra.mxu0 0.0
    %1787 = vmatprep.subr.mxu0 0.0
    %1788 = vmatpush1.msra.mxu0 0.0
    %1789 = vmatprep.subr.mxu0 0.0
    %1790 = vmatpush1.msra.mxu0 0.0
    %1791 = vmatprep.subr.mxu0 0.0
    %1792 = vmatpush1.msra.mxu0 0.0
    %1793 = vmatprep.subr.mxu0 0.0
    %1794 = vmatpush1.msra.mxu0 0.0
    %1795 = vmatprep.subr.mxu0 0.0
    %1796 = vmatpush1.msra.mxu0 0.0
    %1797 = vmatprep.subr.mxu0 0.0
    %1798 = vmatpush1.msra.mxu0 0.0
    %1799 = vmatprep.subr.mxu0 0.0
    %1800 = vmatpush1.msra.mxu0 0.0
    %1801 = vmatprep.subr.mxu0 0.0
    %1802 = vmatpush1.msra.mxu0 0.0
    %1803 = vmatprep.subr.mxu0 0.0
    %1804 = vmatpush1.msra.mxu0 0.0
    %1805 = vmatprep.subr.mxu0 0.0
    %1806 = vmatpush1.msra.mxu0 0.0
    %1807 = vmatprep.subr.mxu0 0.0
    %1808 = vmatpush1.msra.mxu0 0.0
    %1809 = vmatprep.subr.mxu0 0.0
    %1810 = vmatpush1.msra.mxu0 0.0
    %1811 = vmatprep.subr.mxu0 0.0
    %1812 = vmatpush1.msra.mxu0 0.0
    %1813 = vmatprep.subr.mxu0 0.0
    %1814 = vmatpush1.msra.mxu0 0.0
    %1815 = vmatprep.subr.mxu0 0.0
    %1816 = vmatpush1.msra.mxu0 0.0
    %1817 = vmatprep.subr.mxu0 0.0
    %1818 = vmatpush1.msra.mxu0 0.0
    %1819 = vmatprep.subr.mxu0 0.0
    %1820 = vmatpush1.msra.mxu0 0.0
    %1821 = vmatprep.subr.mxu0 0.0
    %1822 = vmatpush1.msra.mxu0 0.0
    %1823 = vmatprep.subr.mxu0 0.0
    %1824 = vmatpush1.msra.mxu0 0.0
    %1825 = vmatprep.subr.mxu0 0.0
    %1826 = vmatpush1.msra.mxu0 0.0
    %1827 = vmatprep.mubr.f32.mxu0 0.0
    %1828 = vmatmul.mubr.f32.gmra.mrb[0].mxu0 %v1680
    %v1829 = vpop.f32.mrb[0].mxu0
    %v1830 = vadd.f32 %v1759, %v1829
    %v1831 = vpop.f32.mrb[0].mxu0
    %v1832 = vadd.f32 %v1761, %v1831
    %1833 = vdwg.mxu0
    %1834 = vmatprep.subr.mxu0 0.0
    %1835 = vmatpush1.msra.mxu0 %v1549
    %1836 = vmatprep.subr.mxu0 0.0
    %1837 = vmatpush1.msra.mxu0 %v1552
    %1838 = vmatprep.subr.mxu0 0.0
    %1839 = vmatpush1.msra.mxu0 %v1555
    %1840 = vmatprep.subr.mxu0 0.0
    %1841 = vmatpush1.msra.mxu0 %v1558
    %1842 = vmatprep.subr.mxu0 0.0
    %1843 = vmatpush1.msra.mxu0 %v1561
    %1844 = vmatprep.subr.mxu0 0.0
    %1845 = vmatpush1.msra.mxu0 %v1564
    %1846 = vmatprep.subr.mxu0 0.0
    %1847 = vmatpush1.msra.mxu0 %v1567
    %1848 = vmatprep.subr.mxu0 0.0
    %1849 = vmatpush1.msra.mxu0 %v1570
    %1850 = vmatprep.subr.mxu0 0.0
    %1851 = vmatpush1.msra.mxu0 %v1573
    %1852 = vmatprep.subr.mxu0 0.0
    %1853 = vmatpush1.msra.mxu0 %v1576
    %1854 = vmatprep.subr.mxu0 0.0
    %1855 = vmatpush1.msra.mxu0 %v1579
    %1856 = vmatprep.subr.mxu0 0.0
    %1857 = vmatpush1.msra.mxu0 %v1582
    %1858 = vmatprep.subr.mxu0 0.0
    %1859 = vmatpush1.msra.mxu0 %v1585
    %1860 = vmatprep.subr.mxu0 0.0
    %1861 = vmatpush1.msra.mxu0 %v1588
    %1862 = vmatprep.subr.mxu0 0.0
    %1863 = vmatpush1.msra.mxu0 %v1591
    %1864 = vmatprep.subr.mxu0 0.0
    %1865 = vmatpush1.msra.mxu0 %v1594
    %1866 = vmatprep.subr.mxu0 0.0
    %1867 = vmatpush1.msra.mxu0 %v1597
    %1868 = vmatprep.subr.mxu0 0.0
    %1869 = vmatpush1.msra.mxu0 %v1600
    %1870 = vmatprep.subr.mxu0 0.0
    %1871 = vmatpush1.msra.mxu0 %v1603
    %1872 = vmatprep.subr.mxu0 0.0
    %1873 = vmatpush1.msra.mxu0 %v1606
    %1874 = vmatprep.subr.mxu0 0.0
    %1875 = vmatpush1.msra.mxu0 %v1609
    %1876 = vmatprep.subr.mxu0 0.0
    %1877 = vmatpush1.msra.mxu0 %v1612
    %1878 = vmatprep.subr.mxu0 0.0
    %1879 = vmatpush1.msra.mxu0 %v1615
    %1880 = vmatprep.subr.mxu0 0.0
    %1881 = vmatpush1.msra.mxu0 %v1618
    %1882 = vmatprep.subr.mxu0 0.0
    %1883 = vmatpush1.msra.mxu0 %v1621
    %1884 = vmatprep.subr.mxu0 0.0
    %1885 = vmatpush1.msra.mxu0 %v1624
    %1886 = vmatprep.subr.mxu0 0.0
    %1887 = vmatpush1.msra.mxu0 %v1627
    %1888 = vmatprep.subr.mxu0 0.0
    %1889 = vmatpush1.msra.mxu0 %v1630
    %1890 = vmatprep.subr.mxu0 0.0
    %1891 = vmatpush1.msra.mxu0 %v1633
    %1892 = vmatprep.subr.mxu0 0.0
    %1893 = vmatpush1.msra.mxu0 %v1636
    %1894 = vmatprep.subr.mxu0 0.0
    %1895 = vmatpush1.msra.mxu0 %v1639
    %1896 = vmatprep.subr.mxu0 0.0
    %1897 = vmatpush1.msra.mxu0 %v1642
    %1898 = vmatprep.mubr.f32.mxu0 %v1469
    %1899 = vmatmul.mubr.f32.gmra.mrb[0].mxu0 %v1468
    %v1900 = vpop.f32.mrb[0].mxu0
    %v1901 = vadd.f32 %v1674, %v1900
    %v1902 = vpop.f32.mrb[0].mxu0
    %1903 = vdwg.mxu0
    %1904 = vmatprep.subr.mxu0 0.0
    %1905 = vmatpush1.msra.mxu0 %v1645
    %1906 = vmatprep.subr.mxu0 0.0
    %1907 = vmatpush1.msra.mxu0 %v1648
    %1908 = vmatprep.subr.mxu0 0.0
    %1909 = vmatpush1.msra.mxu0 %v1651
    %1910 = vmatprep.subr.mxu0 0.0
    %1911 = vmatpush1.msra.mxu0 %v1654
    %1912 = vmatprep.subr.mxu0 0.0
    %1913 = vmatpush1.msra.mxu0 %v1657
    %1914 = vmatprep.subr.mxu0 0.0
    %1915 = vmatpush1.msra.mxu0 %v1690
    %1916 = vmatprep.subr.mxu0 0.0
    %1917 = vmatpush1.msra.mxu0 0.0
    %1918 = vmatprep.subr.mxu0 0.0
    %1919 = vmatpush1.msra.mxu0 0.0
    %1920 = vmatprep.subr.mxu0 0.0
    %1921 = vmatpush1.msra.mxu0 0.0
    %1922 = vmatprep.subr.mxu0 0.0
    %1923 = vmatpush1.msra.mxu0 0.0
    %1924 = vmatprep.subr.mxu0 0.0
    %1925 = vmatpush1.msra.mxu0 0.0
    %1926 = vmatprep.subr.mxu0 0.0
    %1927 = vmatpush1.msra.mxu0 0.0
    %1928 = vmatprep.subr.mxu0 0.0
    %1929 = vmatpush1.msra.mxu0 0.0
    %1930 = vmatprep.subr.mxu0 0.0
    %1931 = vmatpush1.msra.mxu0 0.0
    %1932 = vmatprep.subr.mxu0 0.0
    %1933 = vmatpush1.msra.mxu0 0.0
    %1934 = vmatprep.subr.mxu0 0.0
    %1935 = vmatpush1.msra.mxu0 0.0
    %1936 = vmatprep.subr.mxu0 0.0
    %1937 = vmatpush1.msra.mxu0 0.0
    %1938 = vmatprep.subr.mxu0 0.0
    %1939 = vmatpush1.msra.mxu0 0.0
    %1940 = vmatprep.subr.mxu0 0.0
    %1941 = vmatpush1.msra.mxu0 0.0
    %1942 = vmatprep.subr.mxu0 0.0
    %1943 = vmatpush1.msra.mxu0 0.0
    %1944 = vmatprep.subr.mxu0 0.0
    %1945 = vmatpush1.msra.mxu0 0.0
    %1946 = vmatprep.subr.mxu0 0.0
    %1947 = vmatpush1.msra.mxu0 0.0
    %1948 = vmatprep.subr.mxu0 0.0
    %1949 = vmatpush1.msra.mxu0 0.0
    %1950 = vmatprep.subr.mxu0 0.0
    %1951 = vmatpush1.msra.mxu0 0.0
    %1952 = vmatprep.subr.mxu0 0.0
    %1953 = vmatpush1.msra.mxu0 0.0
    %1954 = vmatprep.subr.mxu0 0.0
    %1955 = vmatpush1.msra.mxu0 0.0
    %1956 = vmatprep.subr.mxu0 0.0
    %1957 = vmatpush1.msra.mxu0 0.0
    %1958 = vmatprep.subr.mxu0 0.0
    %1959 = vmatpush1.msra.mxu0 0.0
    %1960 = vmatprep.subr.mxu0 0.0
    %1961 = vmatpush1.msra.mxu0 0.0
    %1962 = vmatprep.subr.mxu0 0.0
    %1963 = vmatpush1.msra.mxu0 0.0
    %1964 = vmatprep.subr.mxu0 0.0
    %1965 = vmatpush1.msra.mxu0 0.0
    %1966 = vmatprep.subr.mxu0 0.0
    %1967 = vmatpush1.msra.mxu0 0.0
    %1968 = vmatprep.mubr.f32.mxu0 0.0
    %1969 = vmatmul.mubr.f32.gmra.mrb[0].mxu0 %v1680
    %v1970 = vpop.f32.mrb[0].mxu0
    %v1971 = vadd.f32 %v1901, %v1970
    %v1972 = vpop.f32.mrb[0].mxu0
    %1973 = vdwg.mxu0
    %v1974 = vmax.f32 %v1830, 0.0
    %v1975 = vmax.f32 %v1832, 0.0
    %v1976 = vmax.f32 %v1971, 0.0
    %v1977 = vld [vmem:[%s17] sm:$0xf]
    %v1978 = vld [vmem:[%s17 + $0x4] sm:$0xf]
    %v1979 = vld [vmem:[%s17 + $0x8] sm:$0xf]
    %v1980 = vld [vmem:[%s17 + $0xc] sm:$0xf]
    %v1981 = vld [vmem:[%s17 + $0x10] sm:$0xf]
    %v1982 = vld [vmem:[%s17 + $0x14] sm:$0xf]
    %v1983 = vld [vmem:[%s17 + $0x18] sm:$0xf]
    %v1984 = vld [vmem:[%s17 + $0x1c] sm:$0xf]
    %v1985 = vld [vmem:[%s17 + $0x20] sm:$0xf]
    %v1986 = vld [vmem:[%s17 + $0x24] sm:$0xf]
    %v1987 = vld [vmem:[%s17 + $0x28] sm:$0xf]
    %v1988 = vld [vmem:[%s17 + $0x2c] sm:$0xf]
    %v1989 = vld [vmem:[%s17 + $0x30] sm:$0xf]
    %v1990 = vld [vmem:[%s17 + $0x34] sm:$0xf]
    %v1991 = vld [vmem:[%s17 + $0x38] sm:$0xf]
    %v1992 = vld [vmem:[%s17 + $0x3c] sm:$0xf]
    %v1993 = vld [vmem:[%s17 + $0x40] sm:$0xf]
    %v1994 = vld [vmem:[%s17 + $0x44] sm:$0xf]
    %v1995 = vld [vmem:[%s17 + $0x48] sm:$0xf]
    %v1996 = vld [vmem:[%s17 + $0x4c] sm:$0xf]
    %v1997 = vld [vmem:[%s17 + $0x50] sm:$0xf]
    %v1998 = vld [vmem:[%s17 + $0x54] sm:$0xf]
    %v1999 = vld [vmem:[%s17 + $0x58] sm:$0xf]
    %v2000 = vld [vmem:[%s17 + $0x5c] sm:$0xf]
    %v2001 = vld [vmem:[%s17 + $0x60] sm:$0xf]
    %v2002 = vld [vmem:[%s17 + $0x64] sm:$0xf]
    %v2003 = vld [vmem:[%s17 + $0x68] sm:$0xf]
    %v2004 = vld [vmem:[%s17 + $0x6c] sm:$0xf]
    %v2005 = vld [vmem:[%s17 + $0x70] sm:$0xf]
    %v2006 = vld [vmem:[%s17 + $0x74] sm:$0xf]
    %v2007 = vld [vmem:[%s17 + $0x78] sm:$0xf]
    %v2008 = vld [vmem:[%s17 + $0x7c] sm:$0xf]
    %v2009 = vld [vmem:[%s17 + $0x80] sm:$0xf]
    %v2010 = vld [vmem:[%s17 + $0x84] sm:$0xf]
    %v2011 = vld [vmem:[%s17 + $0x88] sm:$0xf]
    %v2012 = vld [vmem:[%s17 + $0x8c] sm:$0xf]
    %v2013 = vld [vmem:[%s17 + $0x90] sm:$0xf]
    %v2014 = vld [vmem:[%s17 + $0x94] sm:$0x3]
    %v2015 = vunpack.c.l.bf16 %v1977
    %v2016 = vunpack.c.l.bf16 %v1978
    %v2017 = vunpack.c.l.bf16 %v1979
    %v2018 = vunpack.c.l.bf16 %v1980
    %v2019 = vunpack.c.l.bf16 %v1981
    %v2020 = vunpack.c.l.bf16 %v1982
    %v2021 = vunpack.c.l.bf16 %v1983
    %v2022 = vunpack.c.l.bf16 %v1984
    %v2023 = vunpack.c.l.bf16 %v1985
    %v2024 = vunpack.c.l.bf16 %v1986
    %v2025 = vunpack.c.l.bf16 %v1987
    %v2026 = vunpack.c.l.bf16 %v1988
    %v2027 = vunpack.c.l.bf16 %v1989
    %v2028 = vunpack.c.l.bf16 %v1990
    %v2029 = vunpack.c.l.bf16 %v1991
    %v2030 = vunpack.c.l.bf16 %v1992
    %v2031 = vunpack.c.l.bf16 %v1993
    %v2032 = vunpack.c.l.bf16 %v1994
    %v2033 = vunpack.c.l.bf16 %v1995
    %v2034 = vunpack.c.l.bf16 %v1996
    %v2035 = vunpack.c.l.bf16 %v1997
    %v2036 = vunpack.c.l.bf16 %v1998
    %v2037 = vunpack.c.l.bf16 %v1999
    %v2038 = vunpack.c.l.bf16 %v2000
    %v2039 = vunpack.c.l.bf16 %v2001
    %v2040 = vunpack.c.l.bf16 %v2002
    %v2041 = vunpack.c.l.bf16 %v2003
    %v2042 = vunpack.c.l.bf16 %v2004
    %v2043 = vunpack.c.l.bf16 %v2005
    %v2044 = vunpack.c.l.bf16 %v2006
    %v2045 = vunpack.c.l.bf16 %v2007
    %v2046 = vunpack.c.l.bf16 %v2008
    %v2047 = vunpack.c.l.bf16 %v2009
    %v2048 = vunpack.c.l.bf16 %v2010
    %v2049 = vunpack.c.l.bf16 %v2011
    %v2050 = vunpack.c.l.bf16 %v2012
    %v2051 = vunpack.c.l.bf16 %v2013
    %v2052 = vunpack.c.l.bf16 %v2014
    %v2053 = vld [vmem:[#allocation2] sm:$0x1]
    %v2055 = vlaneseq
    %v2056 = vshrl.u32 %v2055, 7
    %v2057 = vsub.s32 0, %v2056
    %v2058 = vrot.slane %v2053, %v2057
    %v2061 = vsel %vm1678, %v1976, 0
    %v2064 = vsel %vm1682, %v2052, 0
    %2066 = vmatprep.subr.mxu0 0.0
    %2067 = vmatpush1.msra.mxu0 %v2015
    %2068 = vmatprep.subr.mxu0 0.0
    %2069 = vmatpush1.msra.mxu0 %v2016
    %2070 = vmatprep.subr.mxu0 0.0
    %2071 = vmatpush1.msra.mxu0 %v2017
    %2072 = vmatprep.subr.mxu0 0.0
    %2073 = vmatpush1.msra.mxu0 %v2018
    %2074 = vmatprep.subr.mxu0 0.0
    %2075 = vmatpush1.msra.mxu0 %v2019
    %2076 = vmatprep.subr.mxu0 0.0
    %2077 = vmatpush1.msra.mxu0 %v2020
    %2078 = vmatprep.subr.mxu0 0.0
    %2079 = vmatpush1.msra.mxu0 %v2021
    %2080 = vmatprep.subr.mxu0 0.0
    %2081 = vmatpush1.msra.mxu0 %v2022
    %2082 = vmatprep.subr.mxu0 0.0
    %2083 = vmatpush1.msra.mxu0 %v2023
    %2084 = vmatprep.subr.mxu0 0.0
    %2085 = vmatpush1.msra.mxu0 %v2024
    %2086 = vmatprep.subr.mxu0 0.0
    %2087 = vmatpush1.msra.mxu0 %v2025
    %2088 = vmatprep.subr.mxu0 0.0
    %2089 = vmatpush1.msra.mxu0 %v2026
    %2090 = vmatprep.subr.mxu0 0.0
    %2091 = vmatpush1.msra.mxu0 %v2027
    %2092 = vmatprep.subr.mxu0 0.0
    %2093 = vmatpush1.msra.mxu0 %v2028
    %2094 = vmatprep.subr.mxu0 0.0
    %2095 = vmatpush1.msra.mxu0 %v2029
    %2096 = vmatprep.subr.mxu0 0.0
    %2097 = vmatpush1.msra.mxu0 %v2030
    %2098 = vmatprep.subr.mxu0 0.0
    %2099 = vmatpush1.msra.mxu0 %v2031
    %2100 = vmatprep.subr.mxu0 0.0
    %2101 = vmatpush1.msra.mxu0 %v2032
    %2102 = vmatprep.subr.mxu0 0.0
    %2103 = vmatpush1.msra.mxu0 %v2033
    %2104 = vmatprep.subr.mxu0 0.0
    %2105 = vmatpush1.msra.mxu0 %v2034
    %2106 = vmatprep.subr.mxu0 0.0
    %2107 = vmatpush1.msra.mxu0 %v2035
    %2108 = vmatprep.subr.mxu0 0.0
    %2109 = vmatpush1.msra.mxu0 %v2036
    %2110 = vmatprep.subr.mxu0 0.0
    %2111 = vmatpush1.msra.mxu0 %v2037
    %2112 = vmatprep.subr.mxu0 0.0
    %2113 = vmatpush1.msra.mxu0 %v2038
    %2114 = vmatprep.subr.mxu0 0.0
    %2115 = vmatpush1.msra.mxu0 %v2039
    %2116 = vmatprep.subr.mxu0 0.0
    %2117 = vmatpush1.msra.mxu0 %v2040
    %2118 = vmatprep.subr.mxu0 0.0
    %2119 = vmatpush1.msra.mxu0 %v2041
    %2120 = vmatprep.subr.mxu0 0.0
    %2121 = vmatpush1.msra.mxu0 %v2042
    %2122 = vmatprep.subr.mxu0 0.0
    %2123 = vmatpush1.msra.mxu0 %v2043
    %2124 = vmatprep.subr.mxu0 0.0
    %2125 = vmatpush1.msra.mxu0 %v2044
    %2126 = vmatprep.subr.mxu0 0.0
    %2127 = vmatpush1.msra.mxu0 %v2045
    %2128 = vmatprep.subr.mxu0 0.0
    %2129 = vmatpush1.msra.mxu0 %v2046
    %2130 = vmatprep.mubr.f32.mxu0 %v1975
    %2131 = vmatmul.mubr.f32.gmra.mrb[0].mxu0 %v1974
    %v2132 = vpop.f32.mrb[0].mxu0
    %v2133 = vadd.f32 %v2058, %v2132
    %v2134 = vpop.f32.mrb[0].mxu0
    %2135 = vdwg.mxu0
    %2136 = vmatprep.subr.mxu0 0.0
    %2137 = vmatpush1.msra.mxu0 %v2047
    %2138 = vmatprep.subr.mxu0 0.0
    %2139 = vmatpush1.msra.mxu0 %v2048
    %2140 = vmatprep.subr.mxu0 0.0
    %2141 = vmatpush1.msra.mxu0 %v2049
    %2142 = vmatprep.subr.mxu0 0.0
    %2143 = vmatpush1.msra.mxu0 %v2050
    %2144 = vmatprep.subr.mxu0 0.0
    %2145 = vmatpush1.msra.mxu0 %v2051
    %2146 = vmatprep.subr.mxu0 0.0
    %2147 = vmatpush1.msra.mxu0 %v2064
    %2148 = vmatprep.subr.mxu0 0.0
    %2149 = vmatpush1.msra.mxu0 0.0
    %2150 = vmatprep.subr.mxu0 0.0
    %2151 = vmatpush1.msra.mxu0 0.0
    %2152 = vmatprep.subr.mxu0 0.0
    %2153 = vmatpush1.msra.mxu0 0.0
    %2154 = vmatprep.subr.mxu0 0.0
    %2155 = vmatpush1.msra.mxu0 0.0
    %2156 = vmatprep.subr.mxu0 0.0
    %2157 = vmatpush1.msra.mxu0 0.0
    %2158 = vmatprep.subr.mxu0 0.0
    %2159 = vmatpush1.msra.mxu0 0.0
    %2160 = vmatprep.subr.mxu0 0.0
    %2161 = vmatpush1.msra.mxu0 0.0
    %2162 = vmatprep.subr.mxu0 0.0
    %2163 = vmatpush1.msra.mxu0 0.0
    %2164 = vmatprep.subr.mxu0 0.0
    %2165 = vmatpush1.msra.mxu0 0.0
    %2166 = vmatprep.subr.mxu0 0.0
    %2167 = vmatpush1.msra.mxu0 0.0
    %2168 = vmatprep.subr.mxu0 0.0
    %2169 = vmatpush1.msra.mxu0 0.0
    %2170 = vmatprep.subr.mxu0 0.0
    %2171 = vmatpush1.msra.mxu0 0.0
    %2172 = vmatprep.subr.mxu0 0.0
    %2173 = vmatpush1.msra.mxu0 0.0
    %2174 = vmatprep.subr.mxu0 0.0
    %2175 = vmatpush1.msra.mxu0 0.0
    %2176 = vmatprep.subr.mxu0 0.0
    %2177 = vmatpush1.msra.mxu0 0.0
    %2178 = vmatprep.subr.mxu0 0.0
    %2179 = vmatpush1.msra.mxu0 0.0
    %2180 = vmatprep.subr.mxu0 0.0
    %2181 = vmatpush1.msra.mxu0 0.0
    %2182 = vmatprep.subr.mxu0 0.0
    %2183 = vmatpush1.msra.mxu0 0.0
    %2184 = vmatprep.subr.mxu0 0.0
    %2185 = vmatpush1.msra.mxu0 0.0
    %2186 = vmatprep.subr.mxu0 0.0
    %2187 = vmatpush1.msra.mxu0 0.0
    %2188 = vmatprep.subr.mxu0 0.0
    %2189 = vmatpush1.msra.mxu0 0.0
    %2190 = vmatprep.subr.mxu0 0.0
    %2191 = vmatpush1.msra.mxu0 0.0
    %2192 = vmatprep.subr.mxu0 0.0
    %2193 = vmatpush1.msra.mxu0 0.0
    %2194 = vmatprep.subr.mxu0 0.0
    %2195 = vmatpush1.msra.mxu0 0.0
    %2196 = vmatprep.subr.mxu0 0.0
    %2197 = vmatpush1.msra.mxu0 0.0
    %2198 = vmatprep.subr.mxu0 0.0
    %2199 = vmatpush1.msra.mxu0 0.0
    %2200 = vmatprep.mubr.f32.mxu0 0.0
    %2201 = vmatmul.mubr.f32.gmra.mrb[0].mxu0 %v2061
    %v2202 = vpop.f32.mrb[0].mxu0
    %v2203 = vadd.f32 %v2133, %v2202
    %v2204 = vpop.f32.mrb[0].mxu0
    %2205 = vdwg.mxu0
    %v2206 = vld [vmem:[%s21] sm:$0xff]
    %v2207 = vld [vmem:[%s21 + $0x8] sm:$0xff]
    %v2208 = vld [vmem:[%s21 + $0x10] sm:$0xff]
    %v2209 = vld [vmem:[%s21 + $0x18] sm:$0xff]
    %v2210 = vld [vmem:[%s21 + $0x20] sm:$0xff]
    %v2211 = vld [vmem:[%s21 + $0x28] sm:$0xff]
    %v2212 = vld [vmem:[%s21 + $0x30] sm:$0xff]
    %v2213 = vld [vmem:[%s21 + $0x38] sm:$0xff]
    %v2214 = vld [vmem:[%s21 + $0x40] sm:$0xff]
    %v2215 = vld [vmem:[%s21 + $0x48] sm:$0xff]
    %v2216 = vld [vmem:[%s21 + $0x50] sm:$0xff]
    %v2217 = vld [vmem:[%s21 + $0x58] sm:$0xff]
    %v2218 = vld [vmem:[%s21 + $0x60] sm:$0xff]
    %v2219 = vld [vmem:[%s21 + $0x68] sm:$0xff]
    %v2220 = vld [vmem:[%s21 + $0x70] sm:$0xff]
    %v2221 = vld [vmem:[%s21 + $0x78] sm:$0xff]
    %v2222 = vld [vmem:[%s21 + $0x80] sm:$0xff]
    %v2223 = vld [vmem:[%s21 + $0x88] sm:$0xff]
    %v2224 = vld [vmem:[%s21 + $0x90] sm:$0xff]
    %v2225 = vld [vmem:[%s21 + $0x98] sm:$0xff]
    %v2226 = vld [vmem:[%s21 + $0xa0] sm:$0xff]
    %v2227 = vld [vmem:[%s21 + $0xa8] sm:$0xff]
    %v2228 = vld [vmem:[%s21 + $0xb0] sm:$0xff]
    %v2229 = vld [vmem:[%s21 + $0xb8] sm:$0xff]
    %v2230 = vld [vmem:[%s21 + $0xc0] sm:$0xff]
    %v2231 = vld [vmem:[%s21 + $0xc8] sm:$0x11]
    %v2232 = vunpack.c.l.bf16 %v2206
    %v2233 = vunpack.c.h.bf16 %v2206
    %v2234 = vunpack.c.l.bf16 %v2207
    %v2235 = vunpack.c.h.bf16 %v2207
    %v2236 = vunpack.c.l.bf16 %v2208
    %v2237 = vunpack.c.h.bf16 %v2208
    %v2238 = vunpack.c.l.bf16 %v2209
    %v2239 = vunpack.c.h.bf16 %v2209
    %v2240 = vunpack.c.l.bf16 %v2210
    %v2241 = vunpack.c.h.bf16 %v2210
    %v2242 = vunpack.c.l.bf16 %v2211
    %v2243 = vunpack.c.h.bf16 %v2211
    %v2244 = vunpack.c.l.bf16 %v2212
    %v2245 = vunpack.c.h.bf16 %v2212
    %v2246 = vunpack.c.l.bf16 %v2213
    %v2247 = vunpack.c.h.bf16 %v2213
    %v2248 = vunpack.c.l.bf16 %v2214
    %v2249 = vunpack.c.h.bf16 %v2214
    %v2250 = vunpack.c.l.bf16 %v2215
    %v2251 = vunpack.c.h.bf16 %v2215
    %v2252 = vunpack.c.l.bf16 %v2216
    %v2253 = vunpack.c.h.bf16 %v2216
    %v2254 = vunpack.c.l.bf16 %v2217
    %v2255 = vunpack.c.h.bf16 %v2217
    %v2256 = vunpack.c.l.bf16 %v2218
    %v2257 = vunpack.c.h.bf16 %v2218
    %v2258 = vunpack.c.l.bf16 %v2219
    %v2259 = vunpack.c.h.bf16 %v2219
    %v2260 = vunpack.c.l.bf16 %v2220
    %v2261 = vunpack.c.h.bf16 %v2220
    %v2262 = vunpack.c.l.bf16 %v2221
    %v2263 = vunpack.c.h.bf16 %v2221
    %v2264 = vunpack.c.l.bf16 %v2222
    %v2265 = vunpack.c.h.bf16 %v2222
    %v2266 = vunpack.c.l.bf16 %v2223
    %v2267 = vunpack.c.h.bf16 %v2223
    %v2268 = vunpack.c.l.bf16 %v2224
    %v2269 = vunpack.c.h.bf16 %v2224
    %v2270 = vunpack.c.l.bf16 %v2225
    %v2271 = vunpack.c.h.bf16 %v2225
    %v2272 = vunpack.c.l.bf16 %v2226
    %v2273 = vunpack.c.h.bf16 %v2226
    %v2274 = vunpack.c.l.bf16 %v2227
    %v2275 = vunpack.c.h.bf16 %v2227
    %v2276 = vunpack.c.l.bf16 %v2228
    %v2277 = vunpack.c.h.bf16 %v2228
    %v2278 = vunpack.c.l.bf16 %v2229
    %v2279 = vunpack.c.h.bf16 %v2229
    %v2280 = vunpack.c.l.bf16 %v2230
    %v2281 = vunpack.c.h.bf16 %v2230
    %v2282 = vunpack.c.l.bf16 %v2231
    %v2283 = vunpack.c.h.bf16 %v2231
    %v2284 = vld [vmem:[#allocation5] sm:$0x3]
    %v2286 = vlaneseq
    %v2287 = vshrl.u32 %v2286, 7
    %v2288 = vsub.s32 0, %v2287
    %v2289 = vrot.slane %v2284, %v2288
    %v2290 = vlaneseq
    %v2291 = vshrl.u32 %v2290, 7
    %v2292 = vsub.s32 1, %v2291
    %v2293 = vrot.slane %v2284, %v2292
    %vm2296 = vcmask 596992
    %v2298 = vsel %vm2296, %v277, 0
    %vm2300 = vcmask 1040384
    %v2302 = vsel %vm2300, %v2282, 0
    %v2305 = vsel %vm2300, %v2283, 0
    %2307 = vmatprep.subr.mxu0 %v2233
    %2308 = vmatpush1.msra.mxu0 %v2232
    %2309 = vmatprep.subr.mxu0 %v2235
    %2310 = vmatpush1.msra.mxu0 %v2234
    %2311 = vmatprep.subr.mxu0 %v2237
    %2312 = vmatpush1.msra.mxu0 %v2236
    %2313 = vmatprep.subr.mxu0 %v2239
    %2314 = vmatpush1.msra.mxu0 %v2238
    %2315 = vmatprep.subr.mxu0 %v2241
    %2316 = vmatpush1.msra.mxu0 %v2240
    %2317 = vmatprep.subr.mxu0 %v2243
    %2318 = vmatpush1.msra.mxu0 %v2242
    %2319 = vmatprep.subr.mxu0 %v2245
    %2320 = vmatpush1.msra.mxu0 %v2244
    %2321 = vmatprep.subr.mxu0 %v2247
    %2322 = vmatpush1.msra.mxu0 %v2246
    %2323 = vmatprep.subr.mxu0 %v2249
    %2324 = vmatpush1.msra.mxu0 %v2248
    %2325 = vmatprep.subr.mxu0 %v2251
    %2326 = vmatpush1.msra.mxu0 %v2250
    %2327 = vmatprep.subr.mxu0 %v2253
    %2328 = vmatpush1.msra.mxu0 %v2252
    %2329 = vmatprep.subr.mxu0 %v2255
    %2330 = vmatpush1.msra.mxu0 %v2254
    %2331 = vmatprep.subr.mxu0 %v2257
    %2332 = vmatpush1.msra.mxu0 %v2256
    %2333 = vmatprep.subr.mxu0 %v2259
    %2334 = vmatpush1.msra.mxu0 %v2258
    %2335 = vmatprep.subr.mxu0 %v2261
    %2336 = vmatpush1.msra.mxu0 %v2260
    %2337 = vmatprep.subr.mxu0 %v2263
    %2338 = vmatpush1.msra.mxu0 %v2262
    %2339 = vmatprep.subr.mxu0 %v2265
    %2340 = vmatpush1.msra.mxu0 %v2264
    %2341 = vmatprep.subr.mxu0 %v2267
    %2342 = vmatpush1.msra.mxu0 %v2266
    %2343 = vmatprep.subr.mxu0 %v2269
    %2344 = vmatpush1.msra.mxu0 %v2268
    %2345 = vmatprep.subr.mxu0 %v2271
    %2346 = vmatpush1.msra.mxu0 %v2270
    %2347 = vmatprep.subr.mxu0 %v2273
    %2348 = vmatpush1.msra.mxu0 %v2272
    %2349 = vmatprep.subr.mxu0 %v2275
    %2350 = vmatpush1.msra.mxu0 %v2274
    %2351 = vmatprep.subr.mxu0 %v2277
    %2352 = vmatpush1.msra.mxu0 %v2276
    %2353 = vmatprep.subr.mxu0 %v2279
    %2354 = vmatpush1.msra.mxu0 %v2278
    %2355 = vmatprep.subr.mxu0 %v2281
    %2356 = vmatpush1.msra.mxu0 %v2280
    %2357 = vmatprep.subr.mxu0 %v2305
    %2358 = vmatpush1.msra.mxu0 %v2302
    %2359 = vmatprep.subr.mxu0 0.0
    %2360 = vmatpush1.msra.mxu0 0.0
    %2361 = vmatprep.subr.mxu0 0.0
    %2362 = vmatpush1.msra.mxu0 0.0
    %2363 = vmatprep.subr.mxu0 0.0
    %2364 = vmatpush1.msra.mxu0 0.0
    %2365 = vmatprep.subr.mxu0 0.0
    %2366 = vmatpush1.msra.mxu0 0.0
    %2367 = vmatprep.subr.mxu0 0.0
    %2368 = vmatpush1.msra.mxu0 0.0
    %2369 = vmatprep.subr.mxu0 0.0
    %2370 = vmatpush1.msra.mxu0 0.0
    %2371 = vmatprep.mubr.f32.mxu0 %v2298
    %2372 = vmatmul.mubr.f32.gmra.mrb[0].mxu0 %v276
    %v2373 = vpop.f32.mrb[0].mxu0
    %v2374 = vadd.f32 %v2289, %v2373
    %v2375 = vpop.f32.mrb[0].mxu0
    %v2376 = vadd.f32 %v2293, %v2375
    %2377 = vdwg.mxu0
    %v2378 = vmax.f32 %v2374, 0.0
    %v2379 = vmax.f32 %v2376, 0.0
    %v2380 = vld [vmem:[#allocation7] sm:$0xff]
    %v2381 = vld [vmem:[#allocation7 + $0x8] sm:$0xff]
    %v2382 = vld [vmem:[#allocation7 + $0x10] sm:$0xff]
    %v2383 = vld [vmem:[#allocation7 + $0x18] sm:$0xff]
    %v2384 = vld [vmem:[#allocation7 + $0x20] sm:$0xff]
    %v2385 = vld [vmem:[#allocation7 + $0x28] sm:$0xff]
    %v2386 = vld [vmem:[#allocation7 + $0x30] sm:$0xff]
    %v2387 = vld [vmem:[#allocation7 + $0x38] sm:$0xff]
    %v2388 = vld [vmem:[#allocation7 + $0x40] sm:$0xff]
    %v2389 = vld [vmem:[#allocation7 + $0x48] sm:$0xff]
    %v2390 = vld [vmem:[#allocation7 + $0x50] sm:$0xff]
    %v2391 = vld [vmem:[#allocation7 + $0x58] sm:$0xff]
    %v2392 = vld [vmem:[#allocation7 + $0x60] sm:$0xff]
    %v2393 = vld [vmem:[#allocation7 + $0x68] sm:$0xff]
    %v2394 = vld [vmem:[#allocation7 + $0x70] sm:$0xff]
    %v2395 = vld [vmem:[#allocation7 + $0x78] sm:$0xff]
    %v2396 = vld [vmem:[#allocation7 + $0x80] sm:$0xff]
    %v2397 = vld [vmem:[#allocation7 + $0x88] sm:$0xff]
    %v2398 = vld [vmem:[#allocation7 + $0x90] sm:$0xff]
    %v2399 = vld [vmem:[#allocation7 + $0x98] sm:$0xff]
    %v2400 = vld [vmem:[#allocation7 + $0xa0] sm:$0xff]
    %v2401 = vld [vmem:[#allocation7 + $0xa8] sm:$0xff]
    %v2402 = vld [vmem:[#allocation7 + $0xb0] sm:$0xff]
    %v2403 = vld [vmem:[#allocation7 + $0xb8] sm:$0xff]
    %v2404 = vld [vmem:[#allocation7 + $0xc0] sm:$0xff]
    %v2405 = vunpack.c.l.bf16 %v2380
    %v2406 = vunpack.c.h.bf16 %v2380
    %v2407 = vunpack.c.l.bf16 %v2381
    %v2408 = vunpack.c.h.bf16 %v2381
    %v2409 = vunpack.c.l.bf16 %v2382
    %v2410 = vunpack.c.h.bf16 %v2382
    %v2411 = vunpack.c.l.bf16 %v2383
    %v2412 = vunpack.c.h.bf16 %v2383
    %v2413 = vunpack.c.l.bf16 %v2384
    %v2414 = vunpack.c.h.bf16 %v2384
    %v2415 = vunpack.c.l.bf16 %v2385
    %v2416 = vunpack.c.h.bf16 %v2385
    %v2417 = vunpack.c.l.bf16 %v2386
    %v2418 = vunpack.c.h.bf16 %v2386
    %v2419 = vunpack.c.l.bf16 %v2387
    %v2420 = vunpack.c.h.bf16 %v2387
    %v2421 = vunpack.c.l.bf16 %v2388
    %v2422 = vunpack.c.h.bf16 %v2388
    %v2423 = vunpack.c.l.bf16 %v2389
    %v2424 = vunpack.c.h.bf16 %v2389
    %v2425 = vunpack.c.l.bf16 %v2390
    %v2426 = vunpack.c.h.bf16 %v2390
    %v2427 = vunpack.c.l.bf16 %v2391
    %v2428 = vunpack.c.h.bf16 %v2391
    %v2429 = vunpack.c.l.bf16 %v2392
    %v2430 = vunpack.c.h.bf16 %v2392
    %v2431 = vunpack.c.l.bf16 %v2393
    %v2432 = vunpack.c.h.bf16 %v2393
    %v2433 = vunpack.c.l.bf16 %v2394
    %v2434 = vunpack.c.h.bf16 %v2394
    %v2435 = vunpack.c.l.bf16 %v2395
    %v2436 = vunpack.c.h.bf16 %v2395
    %v2437 = vunpack.c.l.bf16 %v2396
    %v2438 = vunpack.c.h.bf16 %v2396
    %v2439 = vunpack.c.l.bf16 %v2397
    %v2440 = vunpack.c.h.bf16 %v2397
    %v2441 = vunpack.c.l.bf16 %v2398
    %v2442 = vunpack.c.h.bf16 %v2398
    %v2443 = vunpack.c.l.bf16 %v2399
    %v2444 = vunpack.c.h.bf16 %v2399
    %v2445 = vunpack.c.l.bf16 %v2400
    %v2446 = vunpack.c.h.bf16 %v2400
    %v2447 = vunpack.c.l.bf16 %v2401
    %v2448 = vunpack.c.h.bf16 %v2401
    %v2449 = vunpack.c.l.bf16 %v2402
    %v2450 = vunpack.c.h.bf16 %v2402
    %v2451 = vunpack.c.l.bf16 %v2403
    %v2452 = vunpack.c.h.bf16 %v2403
    %v2453 = vunpack.c.l.bf16 %v2404
    %v2454 = vunpack.c.h.bf16 %v2404
    %v2455 = vld [vmem:[#allocation8] sm:$0x3]
    %v2457 = vlaneseq
    %v2458 = vshrl.u32 %v2457, 7
    %v2459 = vsub.s32 0, %v2458
    %v2460 = vrot.slane %v2455, %v2459
    %v2461 = vlaneseq
    %v2462 = vshrl.u32 %v2461, 7
    %v2463 = vsub.s32 1, %v2462
    %v2464 = vrot.slane %v2455, %v2463
    %vm2467 = vcmask 588800
    %v2469 = vsel %vm2467, %v2379, 0
    %2471 = vmatprep.subr.mxu0 %v2406
    %2472 = vmatpush1.msra.mxu0 %v2405
    %2473 = vmatprep.subr.mxu0 %v2408
    %2474 = vmatpush1.msra.mxu0 %v2407
    %2475 = vmatprep.subr.mxu0 %v2410
    %2476 = vmatpush1.msra.mxu0 %v2409
    %2477 = vmatprep.subr.mxu0 %v2412
    %2478 = vmatpush1.msra.mxu0 %v2411
    %2479 = vmatprep.subr.mxu0 %v2414
    %2480 = vmatpush1.msra.mxu0 %v2413
    %2481 = vmatprep.subr.mxu0 %v2416
    %2482 = vmatpush1.msra.mxu0 %v2415
    %2483 = vmatprep.subr.mxu0 %v2418
    %2484 = vmatpush1.msra.mxu0 %v2417
    %2485 = vmatprep.subr.mxu0 %v2420
    %2486 = vmatpush1.msra.mxu0 %v2419
    %2487 = vmatprep.subr.mxu0 %v2422
    %2488 = vmatpush1.msra.mxu0 %v2421
    %2489 = vmatprep.subr.mxu0 %v2424
    %2490 = vmatpush1.msra.mxu0 %v2423
    %2491 = vmatprep.subr.mxu0 %v2426
    %2492 = vmatpush1.msra.mxu0 %v2425
    %2493 = vmatprep.subr.mxu0 %v2428
    %2494 = vmatpush1.msra.mxu0 %v2427
    %2495 = vmatprep.subr.mxu0 %v2430
    %2496 = vmatpush1.msra.mxu0 %v2429
    %2497 = vmatprep.subr.mxu0 %v2432
    %2498 = vmatpush1.msra.mxu0 %v2431
    %2499 = vmatprep.subr.mxu0 %v2434
    %2500 = vmatpush1.msra.mxu0 %v2433
    %2501 = vmatprep.subr.mxu0 %v2436
    %2502 = vmatpush1.msra.mxu0 %v2435
    %2503 = vmatprep.subr.mxu0 %v2438
    %2504 = vmatpush1.msra.mxu0 %v2437
    %2505 = vmatprep.subr.mxu0 %v2440
    %2506 = vmatpush1.msra.mxu0 %v2439
    %2507 = vmatprep.subr.mxu0 %v2442
    %2508 = vmatpush1.msra.mxu0 %v2441
    %2509 = vmatprep.subr.mxu0 %v2444
    %2510 = vmatpush1.msra.mxu0 %v2443
    %2511 = vmatprep.subr.mxu0 %v2446
    %2512 = vmatpush1.msra.mxu0 %v2445
    %2513 = vmatprep.subr.mxu0 %v2448
    %2514 = vmatpush1.msra.mxu0 %v2447
    %2515 = vmatprep.subr.mxu0 %v2450
    %2516 = vmatpush1.msra.mxu0 %v2449
    %2517 = vmatprep.subr.mxu0 %v2452
    %2518 = vmatpush1.msra.mxu0 %v2451
    %2519 = vmatprep.subr.mxu0 %v2454
    %2520 = vmatpush1.msra.mxu0 %v2453
    %2521 = vmatprep.subr.mxu0 0.0
    %2522 = vmatpush1.msra.mxu0 0.0
    %2523 = vmatprep.subr.mxu0 0.0
    %2524 = vmatpush1.msra.mxu0 0.0
    %2525 = vmatprep.subr.mxu0 0.0
    %2526 = vmatpush1.msra.mxu0 0.0
    %2527 = vmatprep.subr.mxu0 0.0
    %2528 = vmatpush1.msra.mxu0 0.0
    %2529 = vmatprep.subr.mxu0 0.0
    %2530 = vmatpush1.msra.mxu0 0.0
    %2531 = vmatprep.subr.mxu0 0.0
    %2532 = vmatpush1.msra.mxu0 0.0
    %2533 = vmatprep.subr.mxu0 0.0
    %2534 = vmatpush1.msra.mxu0 0.0
    %2535 = vmatprep.mubr.f32.mxu0 %v2469
    %2536 = vmatmul.mubr.f32.gmra.mrb[0].mxu0 %v2378
    %v2537 = vpop.f32.mrb[0].mxu0
    %v2538 = vadd.f32 %v2460, %v2537
    %v2539 = vpop.f32.mrb[0].mxu0
    %v2540 = vadd.f32 %v2464, %v2539
    %2541 = vdwg.mxu0
    %v2542 = vmax.f32 %v2538, 0.0
    %v2543 = vmax.f32 %v2540, 0.0
    %v2544 = vld [vmem:[%s29] sm:$0xf]
    %v2545 = vld [vmem:[%s29 + $0x4] sm:$0xf]
    %v2546 = vld [vmem:[%s29 + $0x8] sm:$0xf]
    %v2547 = vld [vmem:[%s29 + $0xc] sm:$0xf]
    %v2548 = vld [vmem:[%s29 + $0x10] sm:$0xf]
    %v2549 = vld [vmem:[%s29 + $0x14] sm:$0xf]
    %v2550 = vld [vmem:[%s29 + $0x18] sm:$0xf]
    %v2551 = vld [vmem:[%s29 + $0x1c] sm:$0xf]
    %v2552 = vld [vmem:[%s29 + $0x20] sm:$0xf]
    %v2553 = vld [vmem:[%s29 + $0x24] sm:$0xf]
    %v2554 = vld [vmem:[%s29 + $0x28] sm:$0xf]
    %v2555 = vld [vmem:[%s29 + $0x2c] sm:$0xf]
    %v2556 = vld [vmem:[%s29 + $0x30] sm:$0xf]
    %v2557 = vld [vmem:[%s29 + $0x34] sm:$0xf]
    %v2558 = vld [vmem:[%s29 + $0x38] sm:$0xf]
    %v2559 = vld [vmem:[%s29 + $0x3c] sm:$0xf]
    %v2560 = vld [vmem:[%s29 + $0x40] sm:$0xf]
    %v2561 = vld [vmem:[%s29 + $0x44] sm:$0xf]
    %v2562 = vld [vmem:[%s29 + $0x48] sm:$0xf]
    %v2563 = vld [vmem:[%s29 + $0x4c] sm:$0xf]
    %v2564 = vld [vmem:[%s29 + $0x50] sm:$0xf]
    %v2565 = vld [vmem:[%s29 + $0x54] sm:$0xf]
    %v2566 = vld [vmem:[%s29 + $0x58] sm:$0xf]
    %v2567 = vld [vmem:[%s29 + $0x5c] sm:$0xf]
    %v2568 = vld [vmem:[%s29 + $0x60] sm:$0xf]
    %v2569 = vunpack.c.l.bf16 %v2544
    %v2570 = vunpack.c.l.bf16 %v2545
    %v2571 = vunpack.c.l.bf16 %v2546
    %v2572 = vunpack.c.l.bf16 %v2547
    %v2573 = vunpack.c.l.bf16 %v2548
    %v2574 = vunpack.c.l.bf16 %v2549
    %v2575 = vunpack.c.l.bf16 %v2550
    %v2576 = vunpack.c.l.bf16 %v2551
    %v2577 = vunpack.c.l.bf16 %v2552
    %v2578 = vunpack.c.l.bf16 %v2553
    %v2579 = vunpack.c.l.bf16 %v2554
    %v2580 = vunpack.c.l.bf16 %v2555
    %v2581 = vunpack.c.l.bf16 %v2556
    %v2582 = vunpack.c.l.bf16 %v2557
    %v2583 = vunpack.c.l.bf16 %v2558
    %v2584 = vunpack.c.l.bf16 %v2559
    %v2585 = vunpack.c.l.bf16 %v2560
    %v2586 = vunpack.c.l.bf16 %v2561
    %v2587 = vunpack.c.l.bf16 %v2562
    %v2588 = vunpack.c.l.bf16 %v2563
    %v2589 = vunpack.c.l.bf16 %v2564
    %v2590 = vunpack.c.l.bf16 %v2565
    %v2591 = vunpack.c.l.bf16 %v2566
    %v2592 = vunpack.c.l.bf16 %v2567
    %v2593 = vunpack.c.l.bf16 %v2568
    %v2594 = vld [vmem:[#allocation10] sm:$0x1]
    %v2596 = vlaneseq
    %v2597 = vshrl.u32 %v2596, 7
    %v2598 = vsub.s32 0, %v2597
    %v2599 = vrot.slane %v2594, %v2598
    %v2602 = vsel %vm2467, %v2543, 0
    %2604 = vmatprep.subr.mxu0 0.0
    %2605 = vmatpush1.msra.mxu0 %v2569
    %2606 = vmatprep.subr.mxu0 0.0
    %2607 = vmatpush1.msra.mxu0 %v2570
    %2608 = vmatprep.subr.mxu0 0.0
    %2609 = vmatpush1.msra.mxu0 %v2571
    %2610 = vmatprep.subr.mxu0 0.0
    %2611 = vmatpush1.msra.mxu0 %v2572
    %2612 = vmatprep.subr.mxu0 0.0
    %2613 = vmatpush1.msra.mxu0 %v2573
    %2614 = vmatprep.subr.mxu0 0.0
    %2615 = vmatpush1.msra.mxu0 %v2574
    %2616 = vmatprep.subr.mxu0 0.0
    %2617 = vmatpush1.msra.mxu0 %v2575
    %2618 = vmatprep.subr.mxu0 0.0
    %2619 = vmatpush1.msra.mxu0 %v2576
    %2620 = vmatprep.subr.mxu0 0.0
    %2621 = vmatpush1.msra.mxu0 %v2577
    %2622 = vmatprep.subr.mxu0 0.0
    %2623 = vmatpush1.msra.mxu0 %v2578
    %2624 = vmatprep.subr.mxu0 0.0
    %2625 = vmatpush1.msra.mxu0 %v2579
    %2626 = vmatprep.subr.mxu0 0.0
    %2627 = vmatpush1.msra.mxu0 %v2580
    %2628 = vmatprep.subr.mxu0 0.0
    %2629 = vmatpush1.msra.mxu0 %v2581
    %2630 = vmatprep.subr.mxu0 0.0
    %2631 = vmatpush1.msra.mxu0 %v2582
    %2632 = vmatprep.subr.mxu0 0.0
    %2633 = vmatpush1.msra.mxu0 %v2583
    %2634 = vmatprep.subr.mxu0 0.0
    %2635 = vmatpush1.msra.mxu0 %v2584
    %2636 = vmatprep.subr.mxu0 0.0
    %2637 = vmatpush1.msra.mxu0 %v2585
    %2638 = vmatprep.subr.mxu0 0.0
    %2639 = vmatpush1.msra.mxu0 %v2586
    %2640 = vmatprep.subr.mxu0 0.0
    %2641 = vmatpush1.msra.mxu0 %v2587
    %2642 = vmatprep.subr.mxu0 0.0
    %2643 = vmatpush1.msra.mxu0 %v2588
    %2644 = vmatprep.subr.mxu0 0.0
    %2645 = vmatpush1.msra.mxu0 %v2589
    %2646 = vmatprep.subr.mxu0 0.0
    %2647 = vmatpush1.msra.mxu0 %v2590
    %2648 = vmatprep.subr.mxu0 0.0
    %2649 = vmatpush1.msra.mxu0 %v2591
    %2650 = vmatprep.subr.mxu0 0.0
    %2651 = vmatpush1.msra.mxu0 %v2592
    %2652 = vmatprep.subr.mxu0 0.0
    %2653 = vmatpush1.msra.mxu0 %v2593
    %2654 = vmatprep.subr.mxu0 0.0
    %2655 = vmatpush1.msra.mxu0 0.0
    %2656 = vmatprep.subr.mxu0 0.0
    %2657 = vmatpush1.msra.mxu0 0.0
    %2658 = vmatprep.subr.mxu0 0.0
    %2659 = vmatpush1.msra.mxu0 0.0
    %2660 = vmatprep.subr.mxu0 0.0
    %2661 = vmatpush1.msra.mxu0 0.0
    %2662 = vmatprep.subr.mxu0 0.0
    %2663 = vmatpush1.msra.mxu0 0.0
    %2664 = vmatprep.subr.mxu0 0.0
    %2665 = vmatpush1.msra.mxu0 0.0
    %2666 = vmatprep.subr.mxu0 0.0
    %2667 = vmatpush1.msra.mxu0 0.0
    %2668 = vmatprep.mubr.f32.mxu0 %v2602
    %2669 = vmatmul.mubr.f32.gmra.mrb[0].mxu0 %v2542
    %v2670 = vpop.f32.mrb[0].mxu0
    %v2671 = vadd.f32 %v2599, %v2670
    %v2672 = vpop.f32.mrb[0].mxu0
    %2673 = vdwg.mxu0
    %v2674 = vld [vmem:[%s33] sm:$0xff]
    %v2675 = vld [vmem:[%s33 + $0x8] sm:$0xff]
    %v2676 = vld [vmem:[%s33 + $0x10] sm:$0xff]
    %v2677 = vld [vmem:[%s33 + $0x18] sm:$0xff]
    %v2678 = vld [vmem:[%s33 + $0x20] sm:$0xff]
    %v2679 = vld [vmem:[%s33 + $0x28] sm:$0xff]
    %v2680 = vld [vmem:[%s33 + $0x30] sm:$0xff]
    %v2681 = vld [vmem:[%s33 + $0x38] sm:$0xff]
    %v2682 = vld [vmem:[%s33 + $0x40] sm:$0xff]
    %v2683 = vld [vmem:[%s33 + $0x48] sm:$0xff]
    %v2684 = vld [vmem:[%s33 + $0x50] sm:$0xff]
    %v2685 = vld [vmem:[%s33 + $0x58] sm:$0xff]
    %v2686 = vld [vmem:[%s33 + $0x60] sm:$0xff]
    %v2687 = vld [vmem:[%s33 + $0x68] sm:$0xff]
    %v2688 = vld [vmem:[%s33 + $0x70] sm:$0xff]
    %v2689 = vld [vmem:[%s33 + $0x78] sm:$0xff]
    %v2690 = vld [vmem:[%s33 + $0x80] sm:$0xff]
    %v2691 = vld [vmem:[%s33 + $0x88] sm:$0xff]
    %v2692 = vld [vmem:[%s33 + $0x90] sm:$0xff]
    %v2693 = vld [vmem:[%s33 + $0x98] sm:$0xff]
    %v2694 = vld [vmem:[%s33 + $0xa0] sm:$0xff]
    %v2695 = vld [vmem:[%s33 + $0xa8] sm:$0xff]
    %v2696 = vld [vmem:[%s33 + $0xb0] sm:$0xff]
    %v2697 = vld [vmem:[%s33 + $0xb8] sm:$0xff]
    %v2698 = vld [vmem:[%s33 + $0xc0] sm:$0xff]
    %v2699 = vld [vmem:[%s33 + $0xc8] sm:$0xff]
    %v2700 = vld [vmem:[%s33 + $0xd0] sm:$0xff]
    %v2701 = vld [vmem:[%s33 + $0xd8] sm:$0xff]
    %v2702 = vld [vmem:[%s33 + $0xe0] sm:$0xff]
    %v2703 = vld [vmem:[%s33 + $0xe8] sm:$0xff]
    %v2704 = vld [vmem:[%s33 + $0xf0] sm:$0xff]
    %v2705 = vld [vmem:[%s33 + $0xf8] sm:$0xff]
    %v2706 = vld [vmem:[%s33 + $0x100] sm:$0xff]
    %v2707 = vld [vmem:[%s33 + $0x108] sm:$0xff]
    %v2708 = vld [vmem:[%s33 + $0x110] sm:$0xff]
    %v2709 = vld [vmem:[%s33 + $0x118] sm:$0xff]
    %v2710 = vld [vmem:[%s33 + $0x120] sm:$0xff]
    %v2711 = vld [vmem:[%s33 + $0x128] sm:$0xff]
    %v2712 = vld [vmem:[%s33 + $0x130] sm:$0xff]
    %v2713 = vld [vmem:[%s33 + $0x138] sm:$0xff]
    %v2714 = vld [vmem:[%s33 + $0x140] sm:$0xff]
    %v2715 = vld [vmem:[%s33 + $0x148] sm:$0xff]
    %v2716 = vld [vmem:[%s33 + $0x150] sm:$0xff]
    %v2717 = vld [vmem:[%s33 + $0x158] sm:$0xff]
    %v2718 = vld [vmem:[%s33 + $0x160] sm:$0xff]
    %v2719 = vld [vmem:[%s33 + $0x168] sm:$0xff]
    %v2720 = vld [vmem:[%s33 + $0x170] sm:$0xff]
    %v2721 = vld [vmem:[%s33 + $0x178] sm:$0xff]
    %v2722 = vld [vmem:[%s33 + $0x180] sm:$0xff]
    %v2723 = vld [vmem:[%s33 + $0x188] sm:$0xff]
    %v2724 = vld [vmem:[%s33 + $0x190] sm:$0xff]
    %v2725 = vld [vmem:[%s33 + $0x198] sm:$0xff]
    %v2726 = vld [vmem:[%s33 + $0x1a0] sm:$0xff]
    %v2727 = vld [vmem:[%s33 + $0x1a8] sm:$0xff]
    %v2728 = vld [vmem:[%s33 + $0x1b0] sm:$0xff]
    %v2729 = vld [vmem:[%s33 + $0x1b8] sm:$0xff]
    %v2730 = vld [vmem:[%s33 + $0x1c0] sm:$0xff]
    %v2731 = vld [vmem:[%s33 + $0x1c8] sm:$0xff]
    %v2732 = vld [vmem:[%s33 + $0x1d0] sm:$0xff]
    %v2733 = vld [vmem:[%s33 + $0x1d8] sm:$0xff]
    %v2734 = vld [vmem:[%s33 + $0x1e0] sm:$0xff]
    %v2735 = vld [vmem:[%s33 + $0x1e8] sm:$0xff]
    %v2736 = vld [vmem:[%s33 + $0x1f0] sm:$0xff]
    %v2737 = vld [vmem:[%s33 + $0x1f8] sm:$0xff]
    %v2738 = vld [vmem:[%s33 + $0x200] sm:$0xff]
    %v2739 = vld [vmem:[%s33 + $0x208] sm:$0xff]
    %v2740 = vld [vmem:[%s33 + $0x210] sm:$0xff]
    %v2741 = vld [vmem:[%s33 + $0x218] sm:$0xff]
    %v2742 = vld [vmem:[%s33 + $0x220] sm:$0xff]
    %v2743 = vld [vmem:[%s33 + $0x228] sm:$0xff]
    %v2744 = vld [vmem:[%s33 + $0x230] sm:$0xff]
    %v2745 = vld [vmem:[%s33 + $0x238] sm:$0xff]
    %v2746 = vld [vmem:[%s33 + $0x240] sm:$0xff]
    %v2747 = vld [vmem:[%s33 + $0x248] sm:$0xff]
    %v2748 = vld [vmem:[%s33 + $0x250] sm:$0xff]
    %v2749 = vld [vmem:[%s33 + $0x258] sm:$0xff]
    %v2750 = vld [vmem:[%s33 + $0x260] sm:$0xff]
    %v2751 = vld [vmem:[%s33 + $0x268] sm:$0xff]
    %v2752 = vld [vmem:[%s33 + $0x270] sm:$0xff]
    %v2753 = vld [vmem:[%s33 + $0x278] sm:$0xff]
    %v2754 = vld [vmem:[%s33 + $0x280] sm:$0xff]
    %v2755 = vld [vmem:[%s33 + $0x288] sm:$0xff]
    %v2756 = vld [vmem:[%s33 + $0x290] sm:$0xff]
    %v2757 = vld [vmem:[%s33 + $0x298] sm:$0xff]
    %v2758 = vld [vmem:[%s33 + $0x2a0] sm:$0xff]
    %v2759 = vld [vmem:[%s33 + $0x2a8] sm:$0xff]
    %v2760 = vld [vmem:[%s33 + $0x2b0] sm:$0xff]
    %v2761 = vld [vmem:[%s33 + $0x2b8] sm:$0xff]
    %v2762 = vld [vmem:[%s33 + $0x2c0] sm:$0xff]
    %v2763 = vld [vmem:[%s33 + $0x2c8] sm:$0xff]
    %v2764 = vld [vmem:[%s33 + $0x2d0] sm:$0xff]
    %v2765 = vld [vmem:[%s33 + $0x2d8] sm:$0xff]
    %v2766 = vld [vmem:[%s33 + $0x2e0] sm:$0xff]
    %v2767 = vld [vmem:[%s33 + $0x2e8] sm:$0xff]
    %v2768 = vld [vmem:[%s33 + $0x2f0] sm:$0xff]
    %v2769 = vld [vmem:[%s33 + $0x2f8] sm:$0xff]
    %v2770 = vld [vmem:[%s33 + $0x300] sm:$0xff]
    %v2771 = vld [vmem:[%s33 + $0x308] sm:$0xff]
    %v2772 = vld [vmem:[%s33 + $0x310] sm:$0xff]
    %v2773 = vld [vmem:[%s33 + $0x318] sm:$0xff]
    %v2774 = vunpack.c.l.bf16 %v2674
    %v2775 = vunpack.c.h.bf16 %v2674
    %v2776 = vunpack.c.l.bf16 %v2675
    %v2777 = vunpack.c.h.bf16 %v2675
    %v2778 = vunpack.c.l.bf16 %v2676
    %v2779 = vunpack.c.h.bf16 %v2676
    %v2780 = vunpack.c.l.bf16 %v2677
    %v2781 = vunpack.c.h.bf16 %v2677
    %v2782 = vunpack.c.l.bf16 %v2678
    %v2783 = vunpack.c.h.bf16 %v2678
    %v2784 = vunpack.c.l.bf16 %v2679
    %v2785 = vunpack.c.h.bf16 %v2679
    %v2786 = vunpack.c.l.bf16 %v2680
    %v2787 = vunpack.c.h.bf16 %v2680
    %v2788 = vunpack.c.l.bf16 %v2681
    %v2789 = vunpack.c.h.bf16 %v2681
    %v2790 = vunpack.c.l.bf16 %v2682
    %v2791 = vunpack.c.h.bf16 %v2682
    %v2792 = vunpack.c.l.bf16 %v2683
    %v2793 = vunpack.c.h.bf16 %v2683
    %v2794 = vunpack.c.l.bf16 %v2684
    %v2795 = vunpack.c.h.bf16 %v2684
    %v2796 = vunpack.c.l.bf16 %v2685
    %v2797 = vunpack.c.h.bf16 %v2685
    %v2798 = vunpack.c.l.bf16 %v2686
    %v2799 = vunpack.c.h.bf16 %v2686
    %v2800 = vunpack.c.l.bf16 %v2687
    %v2801 = vunpack.c.h.bf16 %v2687
    %v2802 = vunpack.c.l.bf16 %v2688
    %v2803 = vunpack.c.h.bf16 %v2688
    %v2804 = vunpack.c.l.bf16 %v2689
    %v2805 = vunpack.c.h.bf16 %v2689
    %v2806 = vunpack.c.l.bf16 %v2690
    %v2807 = vunpack.c.h.bf16 %v2690
    %v2808 = vunpack.c.l.bf16 %v2691
    %v2809 = vunpack.c.h.bf16 %v2691
    %v2810 = vunpack.c.l.bf16 %v2692
    %v2811 = vunpack.c.h.bf16 %v2692
    %v2812 = vunpack.c.l.bf16 %v2693
    %v2813 = vunpack.c.h.bf16 %v2693
    %v2814 = vunpack.c.l.bf16 %v2694
    %v2815 = vunpack.c.h.bf16 %v2694
    %v2816 = vunpack.c.l.bf16 %v2695
    %v2817 = vunpack.c.h.bf16 %v2695
    %v2818 = vunpack.c.l.bf16 %v2696
    %v2819 = vunpack.c.h.bf16 %v2696
    %v2820 = vunpack.c.l.bf16 %v2697
    %v2821 = vunpack.c.h.bf16 %v2697
    %v2822 = vunpack.c.l.bf16 %v2698
    %v2823 = vunpack.c.h.bf16 %v2698
    %v2824 = vunpack.c.l.bf16 %v2699
    %v2825 = vunpack.c.h.bf16 %v2699
    %v2826 = vunpack.c.l.bf16 %v2700
    %v2827 = vunpack.c.h.bf16 %v2700
    %v2828 = vunpack.c.l.bf16 %v2701
    %v2829 = vunpack.c.h.bf16 %v2701
    %v2830 = vunpack.c.l.bf16 %v2702
    %v2831 = vunpack.c.h.bf16 %v2702
    %v2832 = vunpack.c.l.bf16 %v2703
    %v2833 = vunpack.c.h.bf16 %v2703
    %v2834 = vunpack.c.l.bf16 %v2704
    %v2835 = vunpack.c.h.bf16 %v2704
    %v2836 = vunpack.c.l.bf16 %v2705
    %v2837 = vunpack.c.h.bf16 %v2705
    %v2838 = vunpack.c.l.bf16 %v2706
    %v2839 = vunpack.c.h.bf16 %v2706
    %v2840 = vunpack.c.l.bf16 %v2707
    %v2841 = vunpack.c.h.bf16 %v2707
    %v2842 = vunpack.c.l.bf16 %v2708
    %v2843 = vunpack.c.h.bf16 %v2708
    %v2844 = vunpack.c.l.bf16 %v2709
    %v2845 = vunpack.c.h.bf16 %v2709
    %v2846 = vunpack.c.l.bf16 %v2710
    %v2847 = vunpack.c.h.bf16 %v2710
    %v2848 = vunpack.c.l.bf16 %v2711
    %v2849 = vunpack.c.h.bf16 %v2711
    %v2850 = vunpack.c.l.bf16 %v2712
    %v2851 = vunpack.c.h.bf16 %v2712
    %v2852 = vunpack.c.l.bf16 %v2713
    %v2853 = vunpack.c.h.bf16 %v2713
    %v2854 = vunpack.c.l.bf16 %v2714
    %v2855 = vunpack.c.h.bf16 %v2714
    %v2856 = vunpack.c.l.bf16 %v2715
    %v2857 = vunpack.c.h.bf16 %v2715
    %v2858 = vunpack.c.l.bf16 %v2716
    %v2859 = vunpack.c.h.bf16 %v2716
    %v2860 = vunpack.c.l.bf16 %v2717
    %v2861 = vunpack.c.h.bf16 %v2717
    %v2862 = vunpack.c.l.bf16 %v2718
    %v2863 = vunpack.c.h.bf16 %v2718
    %v2864 = vunpack.c.l.bf16 %v2719
    %v2865 = vunpack.c.h.bf16 %v2719
    %v2866 = vunpack.c.l.bf16 %v2720
    %v2867 = vunpack.c.h.bf16 %v2720
    %v2868 = vunpack.c.l.bf16 %v2721
    %v2869 = vunpack.c.h.bf16 %v2721
    %v2870 = vunpack.c.l.bf16 %v2722
    %v2871 = vunpack.c.h.bf16 %v2722
    %v2872 = vunpack.c.l.bf16 %v2723
    %v2873 = vunpack.c.h.bf16 %v2723
    %v2874 = vunpack.c.l.bf16 %v2724
    %v2875 = vunpack.c.h.bf16 %v2724
    %v2876 = vunpack.c.l.bf16 %v2725
    %v2877 = vunpack.c.h.bf16 %v2725
    %v2878 = vunpack.c.l.bf16 %v2726
    %v2879 = vunpack.c.h.bf16 %v2726
    %v2880 = vunpack.c.l.bf16 %v2727
    %v2881 = vunpack.c.h.bf16 %v2727
    %v2882 = vunpack.c.l.bf16 %v2728
    %v2883 = vunpack.c.h.bf16 %v2728
    %v2884 = vunpack.c.l.bf16 %v2729
    %v2885 = vunpack.c.h.bf16 %v2729
    %v2886 = vunpack.c.l.bf16 %v2730
    %v2887 = vunpack.c.h.bf16 %v2730
    %v2888 = vunpack.c.l.bf16 %v2731
    %v2889 = vunpack.c.h.bf16 %v2731
    %v2890 = vunpack.c.l.bf16 %v2732
    %v2891 = vunpack.c.h.bf16 %v2732
    %v2892 = vunpack.c.l.bf16 %v2733
    %v2893 = vunpack.c.h.bf16 %v2733
    %v2894 = vunpack.c.l.bf16 %v2734
    %v2895 = vunpack.c.h.bf16 %v2734
    %v2896 = vunpack.c.l.bf16 %v2735
    %v2897 = vunpack.c.h.bf16 %v2735
    %v2898 = vunpack.c.l.bf16 %v2736
    %v2899 = vunpack.c.h.bf16 %v2736
    %v2900 = vunpack.c.l.bf16 %v2737
    %v2901 = vunpack.c.h.bf16 %v2737
    %v2902 = vunpack.c.l.bf16 %v2738
    %v2903 = vunpack.c.h.bf16 %v2738
    %v2904 = vunpack.c.l.bf16 %v2739
    %v2905 = vunpack.c.h.bf16 %v2739
    %v2906 = vunpack.c.l.bf16 %v2740
    %v2907 = vunpack.c.h.bf16 %v2740
    %v2908 = vunpack.c.l.bf16 %v2741
    %v2909 = vunpack.c.h.bf16 %v2741
    %v2910 = vunpack.c.l.bf16 %v2742
    %v2911 = vunpack.c.h.bf16 %v2742
    %v2912 = vunpack.c.l.bf16 %v2743
    %v2913 = vunpack.c.h.bf16 %v2743
    %v2914 = vunpack.c.l.bf16 %v2744
    %v2915 = vunpack.c.h.bf16 %v2744
    %v2916 = vunpack.c.l.bf16 %v2745
    %v2917 = vunpack.c.h.bf16 %v2745
    %v2918 = vunpack.c.l.bf16 %v2746
    %v2919 = vunpack.c.h.bf16 %v2746
    %v2920 = vunpack.c.l.bf16 %v2747
    %v2921 = vunpack.c.h.bf16 %v2747
    %v2922 = vunpack.c.l.bf16 %v2748
    %v2923 = vunpack.c.h.bf16 %v2748
    %v2924 = vunpack.c.l.bf16 %v2749
    %v2925 = vunpack.c.h.bf16 %v2749
    %v2926 = vunpack.c.l.bf16 %v2750
    %v2927 = vunpack.c.h.bf16 %v2750
    %v2928 = vunpack.c.l.bf16 %v2751
    %v2929 = vunpack.c.h.bf16 %v2751
    %v2930 = vunpack.c.l.bf16 %v2752
    %v2931 = vunpack.c.h.bf16 %v2752
    %v2932 = vunpack.c.l.bf16 %v2753
    %v2933 = vunpack.c.h.bf16 %v2753
    %v2934 = vunpack.c.l.bf16 %v2754
    %v2935 = vunpack.c.h.bf16 %v2754
    %v2936 = vunpack.c.l.bf16 %v2755
    %v2937 = vunpack.c.h.bf16 %v2755
    %v2938 = vunpack.c.l.bf16 %v2756
    %v2939 = vunpack.c.h.bf16 %v2756
    %v2940 = vunpack.c.l.bf16 %v2757
    %v2941 = vunpack.c.h.bf16 %v2757
    %v2942 = vunpack.c.l.bf16 %v2758
    %v2943 = vunpack.c.h.bf16 %v2758
    %v2944 = vunpack.c.l.bf16 %v2759
    %v2945 = vunpack.c.h.bf16 %v2759
    %v2946 = vunpack.c.l.bf16 %v2760
    %v2947 = vunpack.c.h.bf16 %v2760
    %v2948 = vunpack.c.l.bf16 %v2761
    %v2949 = vunpack.c.h.bf16 %v2761
    %v2950 = vunpack.c.l.bf16 %v2762
    %v2951 = vunpack.c.h.bf16 %v2762
    %v2952 = vunpack.c.l.bf16 %v2763
    %v2953 = vunpack.c.h.bf16 %v2763
    %v2954 = vunpack.c.l.bf16 %v2764
    %v2955 = vunpack.c.h.bf16 %v2764
    %v2956 = vunpack.c.l.bf16 %v2765
    %v2957 = vunpack.c.h.bf16 %v2765
    %v2958 = vunpack.c.l.bf16 %v2766
    %v2959 = vunpack.c.h.bf16 %v2766
    %v2960 = vunpack.c.l.bf16 %v2767
    %v2961 = vunpack.c.h.bf16 %v2767
    %v2962 = vunpack.c.l.bf16 %v2768
    %v2963 = vunpack.c.h.bf16 %v2768
    %v2964 = vunpack.c.l.bf16 %v2769
    %v2965 = vunpack.c.h.bf16 %v2769
    %v2966 = vunpack.c.l.bf16 %v2770
    %v2967 = vunpack.c.h.bf16 %v2770
    %v2968 = vunpack.c.l.bf16 %v2771
    %v2969 = vunpack.c.h.bf16 %v2771
    %v2970 = vunpack.c.l.bf16 %v2772
    %v2971 = vunpack.c.h.bf16 %v2772
    %v2972 = vunpack.c.l.bf16 %v2773
    %v2973 = vunpack.c.h.bf16 %v2773
    %v2974 = vld [vmem:[%s35] sm:$0xf]
    %v2976 = vlaneseq
    %v2977 = vshrl.u32 %v2976, 7
    %v2978 = vsub.s32 0, %v2977
    %v2979 = vrot.slane %v2974, %v2978
    %v2980 = vlaneseq
    %v2981 = vshrl.u32 %v2980, 7
    %v2982 = vsub.s32 1, %v2981
    %v2983 = vrot.slane %v2974, %v2982
    %v2984 = vlaneseq
    %v2985 = vshrl.u32 %v2984, 7
    %v2986 = vsub.s32 2, %v2985
    %v2987 = vrot.slane %v2974, %v2986
    %v2988 = vlaneseq
    %v2989 = vshrl.u32 %v2988, 7
    %v2990 = vsub.s32 3, %v2989
    %v2991 = vrot.slane %v2974, %v2990
    %vm2996 = vcmask 130048
    %v2998 = vsel %vm2996, %v281, 0
    %3000 = vmatprep.subr.mxu0 %v2775
    %3001 = vmatpush1.msra.mxu0 %v2774
    %3002 = vmatprep.subr.mxu0 %v2779
    %3003 = vmatpush1.msra.mxu0 %v2778
    %3004 = vmatprep.subr.mxu0 %v2783
    %3005 = vmatpush1.msra.mxu0 %v2782
    %3006 = vmatprep.subr.mxu0 %v2787
    %3007 = vmatpush1.msra.mxu0 %v2786
    %3008 = vmatprep.subr.mxu0 %v2791
    %3009 = vmatpush1.msra.mxu0 %v2790
    %3010 = vmatprep.subr.mxu0 %v2795
    %3011 = vmatpush1.msra.mxu0 %v2794
    %3012 = vmatprep.subr.mxu0 %v2799
    %3013 = vmatpush1.msra.mxu0 %v2798
    %3014 = vmatprep.subr.mxu0 %v2803
    %3015 = vmatpush1.msra.mxu0 %v2802
    %3016 = vmatprep.subr.mxu0 %v2807
    %3017 = vmatpush1.msra.mxu0 %v2806
    %3018 = vmatprep.subr.mxu0 %v2811
    %3019 = vmatpush1.msra.mxu0 %v2810
    %3020 = vmatprep.subr.mxu0 %v2815
    %3021 = vmatpush1.msra.mxu0 %v2814
    %3022 = vmatprep.subr.mxu0 %v2819
    %3023 = vmatpush1.msra.mxu0 %v2818
    %3024 = vmatprep.subr.mxu0 %v2823
    %3025 = vmatpush1.msra.mxu0 %v2822
    %3026 = vmatprep.subr.mxu0 %v2827
    %3027 = vmatpush1.msra.mxu0 %v2826
    %3028 = vmatprep.subr.mxu0 %v2831
    %3029 = vmatpush1.msra.mxu0 %v2830
    %3030 = vmatprep.subr.mxu0 %v2835
    %3031 = vmatpush1.msra.mxu0 %v2834
    %3032 = vmatprep.subr.mxu0 %v2839
    %3033 = vmatpush1.msra.mxu0 %v2838
    %3034 = vmatprep.subr.mxu0 %v2843
    %3035 = vmatpush1.msra.mxu0 %v2842
    %3036 = vmatprep.subr.mxu0 %v2847
    %3037 = vmatpush1.msra.mxu0 %v2846
    %3038 = vmatprep.subr.mxu0 %v2851
    %3039 = vmatpush1.msra.mxu0 %v2850
    %3040 = vmatprep.subr.mxu0 %v2855
    %3041 = vmatpush1.msra.mxu0 %v2854
    %3042 = vmatprep.subr.mxu0 %v2859
    %3043 = vmatpush1.msra.mxu0 %v2858
    %3044 = vmatprep.subr.mxu0 %v2863
    %3045 = vmatpush1.msra.mxu0 %v2862
    %3046 = vmatprep.subr.mxu0 %v2867
    %3047 = vmatpush1.msra.mxu0 %v2866
    %3048 = vmatprep.subr.mxu0 %v2871
    %3049 = vmatpush1.msra.mxu0 %v2870
    %3050 = vmatprep.subr.mxu0 %v2875
    %3051 = vmatpush1.msra.mxu0 %v2874
    %3052 = vmatprep.subr.mxu0 %v2879
    %3053 = vmatpush1.msra.mxu0 %v2878
    %3054 = vmatprep.subr.mxu0 %v2883
    %3055 = vmatpush1.msra.mxu0 %v2882
    %3056 = vmatprep.subr.mxu0 %v2887
    %3057 = vmatpush1.msra.mxu0 %v2886
    %3058 = vmatprep.subr.mxu0 %v2891
    %3059 = vmatpush1.msra.mxu0 %v2890
    %3060 = vmatprep.subr.mxu0 %v2895
    %3061 = vmatpush1.msra.mxu0 %v2894
    %3062 = vmatprep.subr.mxu0 %v2899
    %3063 = vmatpush1.msra.mxu0 %v2898
    %3064 = vmatprep.mubr.f32.mxu0 %v279
    %3065 = vmatmul.mubr.f32.gmra.mrb[0].mxu0 %v278
    %v3066 = vpop.f32.mrb[0].mxu0
    %v3067 = vadd.f32 %v2979, %v3066
    %v3068 = vpop.f32.mrb[0].mxu0
    %v3069 = vadd.f32 %v2983, %v3068
    %3070 = vdwg.mxu0
    %3071 = vmatprep.subr.mxu0 %v2903
    %3072 = vmatpush1.msra.mxu0 %v2902
    %3073 = vmatprep.subr.mxu0 %v2907
    %3074 = vmatpush1.msra.mxu0 %v2906
    %3075 = vmatprep.subr.mxu0 %v2911
    %3076 = vmatpush1.msra.mxu0 %v2910
    %3077 = vmatprep.subr.mxu0 %v2915
    %3078 = vmatpush1.msra.mxu0 %v2914
    %3079 = vmatprep.subr.mxu0 %v2919
    %3080 = vmatpush1.msra.mxu0 %v2918
    %3081 = vmatprep.subr.mxu0 %v2923
    %3082 = vmatpush1.msra.mxu0 %v2922
    %3083 = vmatprep.subr.mxu0 %v2927
    %3084 = vmatpush1.msra.mxu0 %v2926
    %3085 = vmatprep.subr.mxu0 %v2931
    %3086 = vmatpush1.msra.mxu0 %v2930
    %3087 = vmatprep.subr.mxu0 %v2935
    %3088 = vmatpush1.msra.mxu0 %v2934
    %3089 = vmatprep.subr.mxu0 %v2939
    %3090 = vmatpush1.msra.mxu0 %v2938
    %3091 = vmatprep.subr.mxu0 %v2943
    %3092 = vmatpush1.msra.mxu0 %v2942
    %3093 = vmatprep.subr.mxu0 %v2947
    %3094 = vmatpush1.msra.mxu0 %v2946
    %3095 = vmatprep.subr.mxu0 %v2951
    %3096 = vmatpush1.msra.mxu0 %v2950
    %3097 = vmatprep.subr.mxu0 %v2955
    %3098 = vmatpush1.msra.mxu0 %v2954
    %3099 = vmatprep.subr.mxu0 %v2959
    %3100 = vmatpush1.msra.mxu0 %v2958
    %3101 = vmatprep.subr.mxu0 %v2963
    %3102 = vmatpush1.msra.mxu0 %v2962
    %3103 = vmatprep.subr.mxu0 %v2967
    %3104 = vmatpush1.msra.mxu0 %v2966
    %3105 = vmatprep.subr.mxu0 %v2971
    %3106 = vmatpush1.msra.mxu0 %v2970
    %3107 = vmatprep.subr.mxu0 0.0
    %3108 = vmatpush1.msra.mxu0 0.0
    %3109 = vmatprep.subr.mxu0 0.0
    %3110 = vmatpush1.msra.mxu0 0.0
    %3111 = vmatprep.subr.mxu0 0.0
    %3112 = vmatpush1.msra.mxu0 0.0
    %3113 = vmatprep.subr.mxu0 0.0
    %3114 = vmatpush1.msra.mxu0 0.0
    %3115 = vmatprep.subr.mxu0 0.0
    %3116 = vmatpush1.msra.mxu0 0.0
    %3117 = vmatprep.subr.mxu0 0.0
    %3118 = vmatpush1.msra.mxu0 0.0
    %3119 = vmatprep.subr.mxu0 0.0
    %3120 = vmatpush1.msra.mxu0 0.0
    %3121 = vmatprep.subr.mxu0 0.0
    %3122 = vmatpush1.msra.mxu0 0.0
    %3123 = vmatprep.subr.mxu0 0.0
    %3124 = vmatpush1.msra.mxu0 0.0
    %3125 = vmatprep.subr.mxu0 0.0
    %3126 = vmatpush1.msra.mxu0 0.0
    %3127 = vmatprep.subr.mxu0 0.0
    %3128 = vmatpush1.msra.mxu0 0.0
    %3129 = vmatprep.subr.mxu0 0.0
    %3130 = vmatpush1.msra.mxu0 0.0
    %3131 = vmatprep.subr.mxu0 0.0
    %3132 = vmatpush1.msra.mxu0 0.0
    %3133 = vmatprep.subr.mxu0 0.0
    %3134 = vmatpush1.msra.mxu0 0.0
    %3135 = vmatprep.mubr.f32.mxu0 %v2998
    %3136 = vmatmul.mubr.f32.gmra.mrb[0].mxu0 %v280
    %v3137 = vpop.f32.mrb[0].mxu0
    %v3138 = vadd.f32 %v3067, %v3137
    %v3139 = vpop.f32.mrb[0].mxu0
    %v3140 = vadd.f32 %v3069, %v3139
    %3141 = vdwg.mxu0
    %3142 = vmatprep.subr.mxu0 %v2777
    %3143 = vmatpush1.msra.mxu0 %v2776
    %3144 = vmatprep.subr.mxu0 %v2781
    %3145 = vmatpush1.msra.mxu0 %v2780
    %3146 = vmatprep.subr.mxu0 %v2785
    %3147 = vmatpush1.msra.mxu0 %v2784
    %3148 = vmatprep.subr.mxu0 %v2789
    %3149 = vmatpush1.msra.mxu0 %v2788
    %3150 = vmatprep.subr.mxu0 %v2793
    %3151 = vmatpush1.msra.mxu0 %v2792
    %3152 = vmatprep.subr.mxu0 %v2797
    %3153 = vmatpush1.msra.mxu0 %v2796
    %3154 = vmatprep.subr.mxu0 %v2801
    %3155 = vmatpush1.msra.mxu0 %v2800
    %3156 = vmatprep.subr.mxu0 %v2805
    %3157 = vmatpush1.msra.mxu0 %v2804
    %3158 = vmatprep.subr.mxu0 %v2809
    %3159 = vmatpush1.msra.mxu0 %v2808
    %3160 = vmatprep.subr.mxu0 %v2813
    %3161 = vmatpush1.msra.mxu0 %v2812
    %3162 = vmatprep.subr.mxu0 %v2817
    %3163 = vmatpush1.msra.mxu0 %v2816
    %3164 = vmatprep.subr.mxu0 %v2821
    %3165 = vmatpush1.msra.mxu0 %v2820
    %3166 = vmatprep.subr.mxu0 %v2825
    %3167 = vmatpush1.msra.mxu0 %v2824
    %3168 = vmatprep.subr.mxu0 %v2829
    %3169 = vmatpush1.msra.mxu0 %v2828
    %3170 = vmatprep.subr.mxu0 %v2833
    %3171 = vmatpush1.msra.mxu0 %v2832
    %3172 = vmatprep.subr.mxu0 %v2837
    %3173 = vmatpush1.msra.mxu0 %v2836
    %3174 = vmatprep.subr.mxu0 %v2841
    %3175 = vmatpush1.msra.mxu0 %v2840
    %3176 = vmatprep.subr.mxu0 %v2845
    %3177 = vmatpush1.msra.mxu0 %v2844
    %3178 = vmatprep.subr.mxu0 %v2849
    %3179 = vmatpush1.msra.mxu0 %v2848
    %3180 = vmatprep.subr.mxu0 %v2853
    %3181 = vmatpush1.msra.mxu0 %v2852
    %3182 = vmatprep.subr.mxu0 %v2857
    %3183 = vmatpush1.msra.mxu0 %v2856
    %3184 = vmatprep.subr.mxu0 %v2861
    %3185 = vmatpush1.msra.mxu0 %v2860
    %3186 = vmatprep.subr.mxu0 %v2865
    %3187 = vmatpush1.msra.mxu0 %v2864
    %3188 = vmatprep.subr.mxu0 %v2869
    %3189 = vmatpush1.msra.mxu0 %v2868
    %3190 = vmatprep.subr.mxu0 %v2873
    %3191 = vmatpush1.msra.mxu0 %v2872
    %3192 = vmatprep.subr.mxu0 %v2877
    %3193 = vmatpush1.msra.mxu0 %v2876
    %3194 = vmatprep.subr.mxu0 %v2881
    %3195 = vmatpush1.msra.mxu0 %v2880
    %3196 = vmatprep.subr.mxu0 %v2885
    %3197 = vmatpush1.msra.mxu0 %v2884
    %3198 = vmatprep.subr.mxu0 %v2889
    %3199 = vmatpush1.msra.mxu0 %v2888
    %3200 = vmatprep.subr.mxu0 %v2893
    %3201 = vmatpush1.msra.mxu0 %v2892
    %3202 = vmatprep.subr.mxu0 %v2897
    %3203 = vmatpush1.msra.mxu0 %v2896
    %3204 = vmatprep.subr.mxu0 %v2901
    %3205 = vmatpush1.msra.mxu0 %v2900
    %3206 = vmatprep.mubr.f32.mxu0 %v279
    %3207 = vmatmul.mubr.f32.gmra.mrb[0].mxu0 %v278
    %v3208 = vpop.f32.mrb[0].mxu0
    %v3209 = vadd.f32 %v2987, %v3208
    %v3210 = vpop.f32.mrb[0].mxu0
    %v3211 = vadd.f32 %v2991, %v3210
    %3212 = vdwg.mxu0
    %3213 = vmatprep.subr.mxu0 %v2905
    %3214 = vmatpush1.msra.mxu0 %v2904
    %3215 = vmatprep.subr.mxu0 %v2909
    %3216 = vmatpush1.msra.mxu0 %v2908
    %3217 = vmatprep.subr.mxu0 %v2913
    %3218 = vmatpush1.msra.mxu0 %v2912
    %3219 = vmatprep.subr.mxu0 %v2917
    %3220 = vmatpush1.msra.mxu0 %v2916
    %3221 = vmatprep.subr.mxu0 %v2921
    %3222 = vmatpush1.msra.mxu0 %v2920
    %3223 = vmatprep.subr.mxu0 %v2925
    %3224 = vmatpush1.msra.mxu0 %v2924
    %3225 = vmatprep.subr.mxu0 %v2929
    %3226 = vmatpush1.msra.mxu0 %v2928
    %3227 = vmatprep.subr.mxu0 %v2933
    %3228 = vmatpush1.msra.mxu0 %v2932
    %3229 = vmatprep.subr.mxu0 %v2937
    %3230 = vmatpush1.msra.mxu0 %v2936
    %3231 = vmatprep.subr.mxu0 %v2941
    %3232 = vmatpush1.msra.mxu0 %v2940
    %3233 = vmatprep.subr.mxu0 %v2945
    %3234 = vmatpush1.msra.mxu0 %v2944
    %3235 = vmatprep.subr.mxu0 %v2949
    %3236 = vmatpush1.msra.mxu0 %v2948
    %3237 = vmatprep.subr.mxu0 %v2953
    %3238 = vmatpush1.msra.mxu0 %v2952
    %3239 = vmatprep.subr.mxu0 %v2957
    %3240 = vmatpush1.msra.mxu0 %v2956
    %3241 = vmatprep.subr.mxu0 %v2961
    %3242 = vmatpush1.msra.mxu0 %v2960
    %3243 = vmatprep.subr.mxu0 %v2965
    %3244 = vmatpush1.msra.mxu0 %v2964
    %3245 = vmatprep.subr.mxu0 %v2969
    %3246 = vmatpush1.msra.mxu0 %v2968
    %3247 = vmatprep.subr.mxu0 %v2973
    %3248 = vmatpush1.msra.mxu0 %v2972
    %3249 = vmatprep.subr.mxu0 0.0
    %3250 = vmatpush1.msra.mxu0 0.0
    %3251 = vmatprep.subr.mxu0 0.0
    %3252 = vmatpush1.msra.mxu0 0.0
    %3253 = vmatprep.subr.mxu0 0.0
    %3254 = vmatpush1.msra.mxu0 0.0
    %3255 = vmatprep.subr.mxu0 0.0
    %3256 = vmatpush1.msra.mxu0 0.0
    %3257 = vmatprep.subr.mxu0 0.0
    %3258 = vmatpush1.msra.mxu0 0.0
    %3259 = vmatprep.subr.mxu0 0.0
    %3260 = vmatpush1.msra.mxu0 0.0
    %3261 = vmatprep.subr.mxu0 0.0
    %3262 = vmatpush1.msra.mxu0 0.0
    %3263 = vmatprep.subr.mxu0 0.0
    %3264 = vmatpush1.msra.mxu0 0.0
    %3265 = vmatprep.subr.mxu0 0.0
    %3266 = vmatpush1.msra.mxu0 0.0
    %3267 = vmatprep.subr.mxu0 0.0
    %3268 = vmatpush1.msra.mxu0 0.0
    %3269 = vmatprep.subr.mxu0 0.0
    %3270 = vmatpush1.msra.mxu0 0.0
    %3271 = vmatprep.subr.mxu0 0.0
    %3272 = vmatpush1.msra.mxu0 0.0
    %3273 = vmatprep.subr.mxu0 0.0
    %3274 = vmatpush1.msra.mxu0 0.0
    %3275 = vmatprep.subr.mxu0 0.0
    %3276 = vmatpush1.msra.mxu0 0.0
    %3277 = vmatprep.mubr.f32.mxu0 %v2998
    %3278 = vmatmul.mubr.f32.gmra.mrb[0].mxu0 %v280
    %v3279 = vpop.f32.mrb[0].mxu0
    %v3280 = vadd.f32 %v3209, %v3279
    %v3281 = vpop.f32.mrb[0].mxu0
    %v3282 = vadd.f32 %v3211, %v3281
    %3283 = vdwg.mxu0
    %v3284 = vmax.f32 %v3138, 0.0
    %v3285 = vmax.f32 %v3140, 0.0
    %v3286 = vmax.f32 %v3280, 0.0
    %v3287 = vmax.f32 %v3282, 0.0
    %v3288 = vld [vmem:[%s37] sm:$0xff]
    %v3289 = vld [vmem:[%s37 + $0x8] sm:$0xff]
    %v3290 = vld [vmem:[%s37 + $0x10] sm:$0xff]
    %v3291 = vld [vmem:[%s37 + $0x18] sm:$0xff]
    %v3292 = vld [vmem:[%s37 + $0x20] sm:$0xff]
    %v3293 = vld [vmem:[%s37 + $0x28] sm:$0xff]
    %v3294 = vld [vmem:[%s37 + $0x30] sm:$0xff]
    %v3295 = vld [vmem:[%s37 + $0x38] sm:$0xff]
    %v3296 = vld [vmem:[%s37 + $0x40] sm:$0xff]
    %v3297 = vld [vmem:[%s37 + $0x48] sm:$0xff]
    %v3298 = vld [vmem:[%s37 + $0x50] sm:$0xff]
    %v3299 = vld [vmem:[%s37 + $0x58] sm:$0xff]
    %v3300 = vld [vmem:[%s37 + $0x60] sm:$0xff]
    %v3301 = vld [vmem:[%s37 + $0x68] sm:$0xff]
    %v3302 = vld [vmem:[%s37 + $0x70] sm:$0xff]
    %v3303 = vld [vmem:[%s37 + $0x78] sm:$0xff]
    %v3304 = vld [vmem:[%s37 + $0x80] sm:$0xff]
    %v3305 = vld [vmem:[%s37 + $0x88] sm:$0xff]
    %v3306 = vld [vmem:[%s37 + $0x90] sm:$0xff]
    %v3307 = vld [vmem:[%s37 + $0x98] sm:$0xff]
    %v3308 = vld [vmem:[%s37 + $0xa0] sm:$0xff]
    %v3309 = vld [vmem:[%s37 + $0xa8] sm:$0xff]
    %v3310 = vld [vmem:[%s37 + $0xb0] sm:$0xff]
    %v3311 = vld [vmem:[%s37 + $0xb8] sm:$0xff]
    %v3312 = vld [vmem:[%s37 + $0xc0] sm:$0xff]
    %v3313 = vld [vmem:[%s37 + $0xc8] sm:$0xff]
    %v3314 = vld [vmem:[%s37 + $0xd0] sm:$0xff]
    %v3315 = vld [vmem:[%s37 + $0xd8] sm:$0xff]
    %v3316 = vld [vmem:[%s37 + $0xe0] sm:$0xff]
    %v3317 = vld [vmem:[%s37 + $0xe8] sm:$0xff]
    %v3318 = vld [vmem:[%s37 + $0xf0] sm:$0xff]
    %v3319 = vld [vmem:[%s37 + $0xf8] sm:$0xff]
    %v3320 = vld [vmem:[%s37 + $0x100] sm:$0xff]
    %v3321 = vld [vmem:[%s37 + $0x108] sm:$0xff]
    %v3322 = vld [vmem:[%s37 + $0x110] sm:$0xff]
    %v3323 = vld [vmem:[%s37 + $0x118] sm:$0xff]
    %v3324 = vld [vmem:[%s37 + $0x120] sm:$0xff]
    %v3325 = vld [vmem:[%s37 + $0x128] sm:$0xff]
    %v3326 = vld [vmem:[%s37 + $0x130] sm:$0xff]
    %v3327 = vld [vmem:[%s37 + $0x138] sm:$0xff]
    %v3328 = vld [vmem:[%s37 + $0x140] sm:$0xff]
    %v3329 = vld [vmem:[%s37 + $0x148] sm:$0xff]
    %v3330 = vld [vmem:[%s37 + $0x150] sm:$0xff]
    %v3331 = vld [vmem:[%s37 + $0x158] sm:$0xff]
    %v3332 = vld [vmem:[%s37 + $0x160] sm:$0xff]
    %v3333 = vld [vmem:[%s37 + $0x168] sm:$0xff]
    %v3334 = vld [vmem:[%s37 + $0x170] sm:$0xff]
    %v3335 = vld [vmem:[%s37 + $0x178] sm:$0xff]
    %v3336 = vld [vmem:[%s37 + $0x180] sm:$0xff]
    %v3337 = vld [vmem:[%s37 + $0x188] sm:$0xff]
    %v3338 = vld [vmem:[%s37 + $0x190] sm:$0xff]
    %v3339 = vld [vmem:[%s37 + $0x198] sm:$0xff]
    %v3340 = vld [vmem:[%s37 + $0x1a0] sm:$0xff]
    %v3341 = vld [vmem:[%s37 + $0x1a8] sm:$0xff]
    %v3342 = vld [vmem:[%s37 + $0x1b0] sm:$0xff]
    %v3343 = vld [vmem:[%s37 + $0x1b8] sm:$0xff]
    %v3344 = vld [vmem:[%s37 + $0x1c0] sm:$0xff]
    %v3345 = vld [vmem:[%s37 + $0x1c8] sm:$0xff]
    %v3346 = vld [vmem:[%s37 + $0x1d0] sm:$0xff]
    %v3347 = vld [vmem:[%s37 + $0x1d8] sm:$0xff]
    %v3348 = vld [vmem:[%s37 + $0x1e0] sm:$0xff]
    %v3349 = vld [vmem:[%s37 + $0x1e8] sm:$0xff]
    %v3350 = vld [vmem:[%s37 + $0x1f0] sm:$0xff]
    %v3351 = vld [vmem:[%s37 + $0x1f8] sm:$0xff]
    %v3352 = vld [vmem:[%s37 + $0x200] sm:$0xff]
    %v3353 = vld [vmem:[%s37 + $0x208] sm:$0xff]
    %v3354 = vld [vmem:[%s37 + $0x210] sm:$0xff]
    %v3355 = vld [vmem:[%s37 + $0x218] sm:$0xff]
    %v3356 = vld [vmem:[%s37 + $0x220] sm:$0xff]
    %v3357 = vld [vmem:[%s37 + $0x228] sm:$0xff]
    %v3358 = vld [vmem:[%s37 + $0x230] sm:$0xff]
    %v3359 = vld [vmem:[%s37 + $0x238] sm:$0xff]
    %v3360 = vld [vmem:[%s37 + $0x240] sm:$0xff]
    %v3361 = vld [vmem:[%s37 + $0x248] sm:$0xff]
    %v3362 = vld [vmem:[%s37 + $0x250] sm:$0xff]
    %v3363 = vld [vmem:[%s37 + $0x258] sm:$0xff]
    %v3364 = vld [vmem:[%s37 + $0x260] sm:$0xff]
    %v3365 = vld [vmem:[%s37 + $0x268] sm:$0xff]
    %v3366 = vld [vmem:[%s37 + $0x270] sm:$0xff]
    %v3367 = vld [vmem:[%s37 + $0x278] sm:$0xff]
    %v3368 = vld [vmem:[%s37 + $0x280] sm:$0xff]
    %v3369 = vld [vmem:[%s37 + $0x288] sm:$0xff]
    %v3370 = vld [vmem:[%s37 + $0x290] sm:$0xff]
    %v3371 = vld [vmem:[%s37 + $0x298] sm:$0xff]
    %v3372 = vld [vmem:[%s37 + $0x2a0] sm:$0xff]
    %v3373 = vld [vmem:[%s37 + $0x2a8] sm:$0xff]
    %v3374 = vld [vmem:[%s37 + $0x2b0] sm:$0xff]
    %v3375 = vld [vmem:[%s37 + $0x2b8] sm:$0xff]
    %v3376 = vld [vmem:[%s37 + $0x2c0] sm:$0xff]
    %v3377 = vld [vmem:[%s37 + $0x2c8] sm:$0xff]
    %v3378 = vld [vmem:[%s37 + $0x2d0] sm:$0xff]
    %v3379 = vld [vmem:[%s37 + $0x2d8] sm:$0xff]
    %v3380 = vld [vmem:[%s37 + $0x2e0] sm:$0xff]
    %v3381 = vld [vmem:[%s37 + $0x2e8] sm:$0xff]
    %v3382 = vld [vmem:[%s37 + $0x2f0] sm:$0xff]
    %v3383 = vld [vmem:[%s37 + $0x2f8] sm:$0xff]
    %v3384 = vld [vmem:[%s37 + $0x300] sm:$0xff]
    %v3385 = vld [vmem:[%s37 + $0x308] sm:$0xff]
    %v3386 = vld [vmem:[%s37 + $0x310] sm:$0xff]
    %v3387 = vld [vmem:[%s37 + $0x318] sm:$0xff]
    %v3388 = vunpack.c.l.bf16 %v3288
    %v3389 = vunpack.c.h.bf16 %v3288
    %v3390 = vunpack.c.l.bf16 %v3289
    %v3391 = vunpack.c.h.bf16 %v3289
    %v3392 = vunpack.c.l.bf16 %v3290
    %v3393 = vunpack.c.h.bf16 %v3290
    %v3394 = vunpack.c.l.bf16 %v3291
    %v3395 = vunpack.c.h.bf16 %v3291
    %v3396 = vunpack.c.l.bf16 %v3292
    %v3397 = vunpack.c.h.bf16 %v3292
    %v3398 = vunpack.c.l.bf16 %v3293
    %v3399 = vunpack.c.h.bf16 %v3293
    %v3400 = vunpack.c.l.bf16 %v3294
    %v3401 = vunpack.c.h.bf16 %v3294
    %v3402 = vunpack.c.l.bf16 %v3295
    %v3403 = vunpack.c.h.bf16 %v3295
    %v3404 = vunpack.c.l.bf16 %v3296
    %v3405 = vunpack.c.h.bf16 %v3296
    %v3406 = vunpack.c.l.bf16 %v3297
    %v3407 = vunpack.c.h.bf16 %v3297
    %v3408 = vunpack.c.l.bf16 %v3298
    %v3409 = vunpack.c.h.bf16 %v3298
    %v3410 = vunpack.c.l.bf16 %v3299
    %v3411 = vunpack.c.h.bf16 %v3299
    %v3412 = vunpack.c.l.bf16 %v3300
    %v3413 = vunpack.c.h.bf16 %v3300
    %v3414 = vunpack.c.l.bf16 %v3301
    %v3415 = vunpack.c.h.bf16 %v3301
    %v3416 = vunpack.c.l.bf16 %v3302
    %v3417 = vunpack.c.h.bf16 %v3302
    %v3418 = vunpack.c.l.bf16 %v3303
    %v3419 = vunpack.c.h.bf16 %v3303
    %v3420 = vunpack.c.l.bf16 %v3304
    %v3421 = vunpack.c.h.bf16 %v3304
    %v3422 = vunpack.c.l.bf16 %v3305
    %v3423 = vunpack.c.h.bf16 %v3305
    %v3424 = vunpack.c.l.bf16 %v3306
    %v3425 = vunpack.c.h.bf16 %v3306
    %v3426 = vunpack.c.l.bf16 %v3307
    %v3427 = vunpack.c.h.bf16 %v3307
    %v3428 = vunpack.c.l.bf16 %v3308
    %v3429 = vunpack.c.h.bf16 %v3308
    %v3430 = vunpack.c.l.bf16 %v3309
    %v3431 = vunpack.c.h.bf16 %v3309
    %v3432 = vunpack.c.l.bf16 %v3310
    %v3433 = vunpack.c.h.bf16 %v3310
    %v3434 = vunpack.c.l.bf16 %v3311
    %v3435 = vunpack.c.h.bf16 %v3311
    %v3436 = vunpack.c.l.bf16 %v3312
    %v3437 = vunpack.c.h.bf16 %v3312
    %v3438 = vunpack.c.l.bf16 %v3313
    %v3439 = vunpack.c.h.bf16 %v3313
    %v3440 = vunpack.c.l.bf16 %v3314
    %v3441 = vunpack.c.h.bf16 %v3314
    %v3442 = vunpack.c.l.bf16 %v3315
    %v3443 = vunpack.c.h.bf16 %v3315
    %v3444 = vunpack.c.l.bf16 %v3316
    %v3445 = vunpack.c.h.bf16 %v3316
    %v3446 = vunpack.c.l.bf16 %v3317
    %v3447 = vunpack.c.h.bf16 %v3317
    %v3448 = vunpack.c.l.bf16 %v3318
    %v3449 = vunpack.c.h.bf16 %v3318
    %v3450 = vunpack.c.l.bf16 %v3319
    %v3451 = vunpack.c.h.bf16 %v3319
    %v3452 = vunpack.c.l.bf16 %v3320
    %v3453 = vunpack.c.h.bf16 %v3320
    %v3454 = vunpack.c.l.bf16 %v3321
    %v3455 = vunpack.c.h.bf16 %v3321
    %v3456 = vunpack.c.l.bf16 %v3322
    %v3457 = vunpack.c.h.bf16 %v3322
    %v3458 = vunpack.c.l.bf16 %v3323
    %v3459 = vunpack.c.h.bf16 %v3323
    %v3460 = vunpack.c.l.bf16 %v3324
    %v3461 = vunpack.c.h.bf16 %v3324
    %v3462 = vunpack.c.l.bf16 %v3325
    %v3463 = vunpack.c.h.bf16 %v3325
    %v3464 = vunpack.c.l.bf16 %v3326
    %v3465 = vunpack.c.h.bf16 %v3326
    %v3466 = vunpack.c.l.bf16 %v3327
    %v3467 = vunpack.c.h.bf16 %v3327
    %v3468 = vunpack.c.l.bf16 %v3328
    %v3469 = vunpack.c.h.bf16 %v3328
    %v3470 = vunpack.c.l.bf16 %v3329
    %v3471 = vunpack.c.h.bf16 %v3329
    %v3472 = vunpack.c.l.bf16 %v3330
    %v3473 = vunpack.c.h.bf16 %v3330
    %v3474 = vunpack.c.l.bf16 %v3331
    %v3475 = vunpack.c.h.bf16 %v3331
    %v3476 = vunpack.c.l.bf16 %v3332
    %v3477 = vunpack.c.h.bf16 %v3332
    %v3478 = vunpack.c.l.bf16 %v3333
    %v3479 = vunpack.c.h.bf16 %v3333
    %v3480 = vunpack.c.l.bf16 %v3334
    %v3481 = vunpack.c.h.bf16 %v3334
    %v3482 = vunpack.c.l.bf16 %v3335
    %v3483 = vunpack.c.h.bf16 %v3335
    %v3484 = vunpack.c.l.bf16 %v3336
    %v3485 = vunpack.c.h.bf16 %v3336
    %v3486 = vunpack.c.l.bf16 %v3337
    %v3487 = vunpack.c.h.bf16 %v3337
    %v3488 = vunpack.c.l.bf16 %v3338
    %v3489 = vunpack.c.h.bf16 %v3338
    %v3490 = vunpack.c.l.bf16 %v3339
    %v3491 = vunpack.c.h.bf16 %v3339
    %v3492 = vunpack.c.l.bf16 %v3340
    %v3493 = vunpack.c.h.bf16 %v3340
    %v3494 = vunpack.c.l.bf16 %v3341
    %v3495 = vunpack.c.h.bf16 %v3341
    %v3496 = vunpack.c.l.bf16 %v3342
    %v3497 = vunpack.c.h.bf16 %v3342
    %v3498 = vunpack.c.l.bf16 %v3343
    %v3499 = vunpack.c.h.bf16 %v3343
    %v3500 = vunpack.c.l.bf16 %v3344
    %v3501 = vunpack.c.h.bf16 %v3344
    %v3502 = vunpack.c.l.bf16 %v3345
    %v3503 = vunpack.c.h.bf16 %v3345
    %v3504 = vunpack.c.l.bf16 %v3346
    %v3505 = vunpack.c.h.bf16 %v3346
    %v3506 = vunpack.c.l.bf16 %v3347
    %v3507 = vunpack.c.h.bf16 %v3347
    %v3508 = vunpack.c.l.bf16 %v3348
    %v3509 = vunpack.c.h.bf16 %v3348
    %v3510 = vunpack.c.l.bf16 %v3349
    %v3511 = vunpack.c.h.bf16 %v3349
    %v3512 = vunpack.c.l.bf16 %v3350
    %v3513 = vunpack.c.h.bf16 %v3350
    %v3514 = vunpack.c.l.bf16 %v3351
    %v3515 = vunpack.c.h.bf16 %v3351
    %v3516 = vunpack.c.l.bf16 %v3352
    %v3517 = vunpack.c.h.bf16 %v3352
    %v3518 = vunpack.c.l.bf16 %v3353
    %v3519 = vunpack.c.h.bf16 %v3353
    %v3520 = vunpack.c.l.bf16 %v3354
    %v3521 = vunpack.c.h.bf16 %v3354
    %v3522 = vunpack.c.l.bf16 %v3355
    %v3523 = vunpack.c.h.bf16 %v3355
    %v3524 = vunpack.c.l.bf16 %v3356
    %v3525 = vunpack.c.h.bf16 %v3356
    %v3526 = vunpack.c.l.bf16 %v3357
    %v3527 = vunpack.c.h.bf16 %v3357
    %v3528 = vunpack.c.l.bf16 %v3358
    %v3529 = vunpack.c.h.bf16 %v3358
    %v3530 = vunpack.c.l.bf16 %v3359
    %v3531 = vunpack.c.h.bf16 %v3359
    %v3532 = vunpack.c.l.bf16 %v3360
    %v3533 = vunpack.c.h.bf16 %v3360
    %v3534 = vunpack.c.l.bf16 %v3361
    %v3535 = vunpack.c.h.bf16 %v3361
    %v3536 = vunpack.c.l.bf16 %v3362
    %v3537 = vunpack.c.h.bf16 %v3362
    %v3538 = vunpack.c.l.bf16 %v3363
    %v3539 = vunpack.c.h.bf16 %v3363
    %v3540 = vunpack.c.l.bf16 %v3364
    %v3541 = vunpack.c.h.bf16 %v3364
    %v3542 = vunpack.c.l.bf16 %v3365
    %v3543 = vunpack.c.h.bf16 %v3365
    %v3544 = vunpack.c.l.bf16 %v3366
    %v3545 = vunpack.c.h.bf16 %v3366
    %v3546 = vunpack.c.l.bf16 %v3367
    %v3547 = vunpack.c.h.bf16 %v3367
    %v3548 = vunpack.c.l.bf16 %v3368
    %v3549 = vunpack.c.h.bf16 %v3368
    %v3550 = vunpack.c.l.bf16 %v3369
    %v3551 = vunpack.c.h.bf16 %v3369
    %v3552 = vunpack.c.l.bf16 %v3370
    %v3553 = vunpack.c.h.bf16 %v3370
    %v3554 = vunpack.c.l.bf16 %v3371
    %v3555 = vunpack.c.h.bf16 %v3371
    %v3556 = vunpack.c.l.bf16 %v3372
    %v3557 = vunpack.c.h.bf16 %v3372
    %v3558 = vunpack.c.l.bf16 %v3373
    %v3559 = vunpack.c.h.bf16 %v3373
    %v3560 = vunpack.c.l.bf16 %v3374
    %v3561 = vunpack.c.h.bf16 %v3374
    %v3562 = vunpack.c.l.bf16 %v3375
    %v3563 = vunpack.c.h.bf16 %v3375
    %v3564 = vunpack.c.l.bf16 %v3376
    %v3565 = vunpack.c.h.bf16 %v3376
    %v3566 = vunpack.c.l.bf16 %v3377
    %v3567 = vunpack.c.h.bf16 %v3377
    %v3568 = vunpack.c.l.bf16 %v3378
    %v3569 = vunpack.c.h.bf16 %v3378
    %v3570 = vunpack.c.l.bf16 %v3379
    %v3571 = vunpack.c.h.bf16 %v3379
    %v3572 = vunpack.c.l.bf16 %v3380
    %v3573 = vunpack.c.h.bf16 %v3380
    %v3574 = vunpack.c.l.bf16 %v3381
    %v3575 = vunpack.c.h.bf16 %v3381
    %v3576 = vunpack.c.l.bf16 %v3382
    %v3577 = vunpack.c.h.bf16 %v3382
    %v3578 = vunpack.c.l.bf16 %v3383
    %v3579 = vunpack.c.h.bf16 %v3383
    %v3580 = vunpack.c.l.bf16 %v3384
    %v3581 = vunpack.c.h.bf16 %v3384
    %v3582 = vunpack.c.l.bf16 %v3385
    %v3583 = vunpack.c.h.bf16 %v3385
    %v3584 = vunpack.c.l.bf16 %v3386
    %v3585 = vunpack.c.h.bf16 %v3386
    %v3586 = vunpack.c.l.bf16 %v3387
    %v3587 = vunpack.c.h.bf16 %v3387
    %v3588 = vld [vmem:[%s39] sm:$0xf]
    %v3590 = vlaneseq
    %v3591 = vshrl.u32 %v3590, 7
    %v3592 = vsub.s32 0, %v3591
    %v3593 = vrot.slane %v3588, %v3592
    %v3594 = vlaneseq
    %v3595 = vshrl.u32 %v3594, 7
    %v3596 = vsub.s32 1, %v3595
    %v3597 = vrot.slane %v3588, %v3596
    %v3598 = vlaneseq
    %v3599 = vshrl.u32 %v3598, 7
    %v3600 = vsub.s32 2, %v3599
    %v3601 = vrot.slane %v3588, %v3600
    %v3602 = vlaneseq
    %v3603 = vshrl.u32 %v3602, 7
    %v3604 = vsub.s32 3, %v3603
    %v3605 = vrot.slane %v3588, %v3604
    %v3611 = vsel %vm2996, %v3287, 0
    %3613 = vmatprep.subr.mxu0 %v3389
    %3614 = vmatpush1.msra.mxu0 %v3388
    %3615 = vmatprep.subr.mxu0 %v3393
    %3616 = vmatpush1.msra.mxu0 %v3392
    %3617 = vmatprep.subr.mxu0 %v3397
    %3618 = vmatpush1.msra.mxu0 %v3396
    %3619 = vmatprep.subr.mxu0 %v3401
    %3620 = vmatpush1.msra.mxu0 %v3400
    %3621 = vmatprep.subr.mxu0 %v3405
    %3622 = vmatpush1.msra.mxu0 %v3404
    %3623 = vmatprep.subr.mxu0 %v3409
    %3624 = vmatpush1.msra.mxu0 %v3408
    %3625 = vmatprep.subr.mxu0 %v3413
    %3626 = vmatpush1.msra.mxu0 %v3412
    %3627 = vmatprep.subr.mxu0 %v3417
    %3628 = vmatpush1.msra.mxu0 %v3416
    %3629 = vmatprep.subr.mxu0 %v3421
    %3630 = vmatpush1.msra.mxu0 %v3420
    %3631 = vmatprep.subr.mxu0 %v3425
    %3632 = vmatpush1.msra.mxu0 %v3424
    %3633 = vmatprep.subr.mxu0 %v3429
    %3634 = vmatpush1.msra.mxu0 %v3428
    %3635 = vmatprep.subr.mxu0 %v3433
    %3636 = vmatpush1.msra.mxu0 %v3432
    %3637 = vmatprep.subr.mxu0 %v3437
    %3638 = vmatpush1.msra.mxu0 %v3436
    %3639 = vmatprep.subr.mxu0 %v3441
    %3640 = vmatpush1.msra.mxu0 %v3440
    %3641 = vmatprep.subr.mxu0 %v3445
    %3642 = vmatpush1.msra.mxu0 %v3444
    %3643 = vmatprep.subr.mxu0 %v3449
    %3644 = vmatpush1.msra.mxu0 %v3448
    %3645 = vmatprep.subr.mxu0 %v3453
    %3646 = vmatpush1.msra.mxu0 %v3452
    %3647 = vmatprep.subr.mxu0 %v3457
    %3648 = vmatpush1.msra.mxu0 %v3456
    %3649 = vmatprep.subr.mxu0 %v3461
    %3650 = vmatpush1.msra.mxu0 %v3460
    %3651 = vmatprep.subr.mxu0 %v3465
    %3652 = vmatpush1.msra.mxu0 %v3464
    %3653 = vmatprep.subr.mxu0 %v3469
    %3654 = vmatpush1.msra.mxu0 %v3468
    %3655 = vmatprep.subr.mxu0 %v3473
    %3656 = vmatpush1.msra.mxu0 %v3472
    %3657 = vmatprep.subr.mxu0 %v3477
    %3658 = vmatpush1.msra.mxu0 %v3476
    %3659 = vmatprep.subr.mxu0 %v3481
    %3660 = vmatpush1.msra.mxu0 %v3480
    %3661 = vmatprep.subr.mxu0 %v3485
    %3662 = vmatpush1.msra.mxu0 %v3484
    %3663 = vmatprep.subr.mxu0 %v3489
    %3664 = vmatpush1.msra.mxu0 %v3488
    %3665 = vmatprep.subr.mxu0 %v3493
    %3666 = vmatpush1.msra.mxu0 %v3492
    %3667 = vmatprep.subr.mxu0 %v3497
    %3668 = vmatpush1.msra.mxu0 %v3496
    %3669 = vmatprep.subr.mxu0 %v3501
    %3670 = vmatpush1.msra.mxu0 %v3500
    %3671 = vmatprep.subr.mxu0 %v3505
    %3672 = vmatpush1.msra.mxu0 %v3504
    %3673 = vmatprep.subr.mxu0 %v3509
    %3674 = vmatpush1.msra.mxu0 %v3508
    %3675 = vmatprep.subr.mxu0 %v3513
    %3676 = vmatpush1.msra.mxu0 %v3512
    %3677 = vmatprep.mubr.f32.mxu0 %v3285
    %3678 = vmatmul.mubr.f32.gmra.mrb[0].mxu0 %v3284
    %v3679 = vpop.f32.mrb[0].mxu0
    %v3680 = vadd.f32 %v3593, %v3679
    %v3681 = vpop.f32.mrb[0].mxu0
    %v3682 = vadd.f32 %v3597, %v3681
    %3683 = vdwg.mxu0
    %3684 = vmatprep.subr.mxu0 %v3517
    %3685 = vmatpush1.msra.mxu0 %v3516
    %3686 = vmatprep.subr.mxu0 %v3521
    %3687 = vmatpush1.msra.mxu0 %v3520
    %3688 = vmatprep.subr.mxu0 %v3525
    %3689 = vmatpush1.msra.mxu0 %v3524
    %3690 = vmatprep.subr.mxu0 %v3529
    %3691 = vmatpush1.msra.mxu0 %v3528
    %3692 = vmatprep.subr.mxu0 %v3533
    %3693 = vmatpush1.msra.mxu0 %v3532
    %3694 = vmatprep.subr.mxu0 %v3537
    %3695 = vmatpush1.msra.mxu0 %v3536
    %3696 = vmatprep.subr.mxu0 %v3541
    %3697 = vmatpush1.msra.mxu0 %v3540
    %3698 = vmatprep.subr.mxu0 %v3545
    %3699 = vmatpush1.msra.mxu0 %v3544
    %3700 = vmatprep.subr.mxu0 %v3549
    %3701 = vmatpush1.msra.mxu0 %v3548
    %3702 = vmatprep.subr.mxu0 %v3553
    %3703 = vmatpush1.msra.mxu0 %v3552
    %3704 = vmatprep.subr.mxu0 %v3557
    %3705 = vmatpush1.msra.mxu0 %v3556
    %3706 = vmatprep.subr.mxu0 %v3561
    %3707 = vmatpush1.msra.mxu0 %v3560
    %3708 = vmatprep.subr.mxu0 %v3565
    %3709 = vmatpush1.msra.mxu0 %v3564
    %3710 = vmatprep.subr.mxu0 %v3569
    %3711 = vmatpush1.msra.mxu0 %v3568
    %3712 = vmatprep.subr.mxu0 %v3573
    %3713 = vmatpush1.msra.mxu0 %v3572
    %3714 = vmatprep.subr.mxu0 %v3577
    %3715 = vmatpush1.msra.mxu0 %v3576
    %3716 = vmatprep.subr.mxu0 %v3581
    %3717 = vmatpush1.msra.mxu0 %v3580
    %3718 = vmatprep.subr.mxu0 %v3585
    %3719 = vmatpush1.msra.mxu0 %v3584
    %3720 = vmatprep.subr.mxu0 0.0
    %3721 = vmatpush1.msra.mxu0 0.0
    %3722 = vmatprep.subr.mxu0 0.0
    %3723 = vmatpush1.msra.mxu0 0.0
    %3724 = vmatprep.subr.mxu0 0.0
    %3725 = vmatpush1.msra.mxu0 0.0
    %3726 = vmatprep.subr.mxu0 0.0
    %3727 = vmatpush1.msra.mxu0 0.0
    %3728 = vmatprep.subr.mxu0 0.0
    %3729 = vmatpush1.msra.mxu0 0.0
    %3730 = vmatprep.subr.mxu0 0.0
    %3731 = vmatpush1.msra.mxu0 0.0
    %3732 = vmatprep.subr.mxu0 0.0
    %3733 = vmatpush1.msra.mxu0 0.0
    %3734 = vmatprep.subr.mxu0 0.0
    %3735 = vmatpush1.msra.mxu0 0.0
    %3736 = vmatprep.subr.mxu0 0.0
    %3737 = vmatpush1.msra.mxu0 0.0
    %3738 = vmatprep.subr.mxu0 0.0
    %3739 = vmatpush1.msra.mxu0 0.0
    %3740 = vmatprep.subr.mxu0 0.0
    %3741 = vmatpush1.msra.mxu0 0.0
    %3742 = vmatprep.subr.mxu0 0.0
    %3743 = vmatpush1.msra.mxu0 0.0
    %3744 = vmatprep.subr.mxu0 0.0
    %3745 = vmatpush1.msra.mxu0 0.0
    %3746 = vmatprep.subr.mxu0 0.0
    %3747 = vmatpush1.msra.mxu0 0.0
    %3748 = vmatprep.mubr.f32.mxu0 %v3611
    %3749 = vmatmul.mubr.f32.gmra.mrb[0].mxu0 %v3286
    %v3750 = vpop.f32.mrb[0].mxu0
    %v3751 = vadd.f32 %v3680, %v3750
    %v3752 = vpop.f32.mrb[0].mxu0
    %v3753 = vadd.f32 %v3682, %v3752
    %3754 = vdwg.mxu0
    %3755 = vmatprep.subr.mxu0 %v3391
    %3756 = vmatpush1.msra.mxu0 %v3390
    %3757 = vmatprep.subr.mxu0 %v3395
    %3758 = vmatpush1.msra.mxu0 %v3394
    %3759 = vmatprep.subr.mxu0 %v3399
    %3760 = vmatpush1.msra.mxu0 %v3398
    %3761 = vmatprep.subr.mxu0 %v3403
    %3762 = vmatpush1.msra.mxu0 %v3402
    %3763 = vmatprep.subr.mxu0 %v3407
    %3764 = vmatpush1.msra.mxu0 %v3406
    %3765 = vmatprep.subr.mxu0 %v3411
    %3766 = vmatpush1.msra.mxu0 %v3410
    %3767 = vmatprep.subr.mxu0 %v3415
    %3768 = vmatpush1.msra.mxu0 %v3414
    %3769 = vmatprep.subr.mxu0 %v3419
    %3770 = vmatpush1.msra.mxu0 %v3418
    %3771 = vmatprep.subr.mxu0 %v3423
    %3772 = vmatpush1.msra.mxu0 %v3422
    %3773 = vmatprep.subr.mxu0 %v3427
    %3774 = vmatpush1.msra.mxu0 %v3426
    %3775 = vmatprep.subr.mxu0 %v3431
    %3776 = vmatpush1.msra.mxu0 %v3430
    %3777 = vmatprep.subr.mxu0 %v3435
    %3778 = vmatpush1.msra.mxu0 %v3434
    %3779 = vmatprep.subr.mxu0 %v3439
    %3780 = vmatpush1.msra.mxu0 %v3438
    %3781 = vmatprep.subr.mxu0 %v3443
    %3782 = vmatpush1.msra.mxu0 %v3442
    %3783 = vmatprep.subr.mxu0 %v3447
    %3784 = vmatpush1.msra.mxu0 %v3446
    %3785 = vmatprep.subr.mxu0 %v3451
    %3786 = vmatpush1.msra.mxu0 %v3450
    %3787 = vmatprep.subr.mxu0 %v3455
    %3788 = vmatpush1.msra.mxu0 %v3454
    %3789 = vmatprep.subr.mxu0 %v3459
    %3790 = vmatpush1.msra.mxu0 %v3458
    %3791 = vmatprep.subr.mxu0 %v3463
    %3792 = vmatpush1.msra.mxu0 %v3462
    %3793 = vmatprep.subr.mxu0 %v3467
    %3794 = vmatpush1.msra.mxu0 %v3466
    %3795 = vmatprep.subr.mxu0 %v3471
    %3796 = vmatpush1.msra.mxu0 %v3470
    %3797 = vmatprep.subr.mxu0 %v3475
    %3798 = vmatpush1.msra.mxu0 %v3474
    %3799 = vmatprep.subr.mxu0 %v3479
    %3800 = vmatpush1.msra.mxu0 %v3478
    %3801 = vmatprep.subr.mxu0 %v3483
    %3802 = vmatpush1.msra.mxu0 %v3482
    %3803 = vmatprep.subr.mxu0 %v3487
    %3804 = vmatpush1.msra.mxu0 %v3486
    %3805 = vmatprep.subr.mxu0 %v3491
    %3806 = vmatpush1.msra.mxu0 %v3490
    %3807 = vmatprep.subr.mxu0 %v3495
    %3808 = vmatpush1.msra.mxu0 %v3494
    %3809 = vmatprep.subr.mxu0 %v3499
    %3810 = vmatpush1.msra.mxu0 %v3498
    %3811 = vmatprep.subr.mxu0 %v3503
    %3812 = vmatpush1.msra.mxu0 %v3502
    %3813 = vmatprep.subr.mxu0 %v3507
    %3814 = vmatpush1.msra.mxu0 %v3506
    %3815 = vmatprep.subr.mxu0 %v3511
    %3816 = vmatpush1.msra.mxu0 %v3510
    %3817 = vmatprep.subr.mxu0 %v3515
    %3818 = vmatpush1.msra.mxu0 %v3514
    %3819 = vmatprep.mubr.f32.mxu0 %v3285
    %3820 = vmatmul.mubr.f32.gmra.mrb[0].mxu0 %v3284
    %v3821 = vpop.f32.mrb[0].mxu0
    %v3822 = vadd.f32 %v3601, %v3821
    %v3823 = vpop.f32.mrb[0].mxu0
    %v3824 = vadd.f32 %v3605, %v3823
    %3825 = vdwg.mxu0
    %3826 = vmatprep.subr.mxu0 %v3519
    %3827 = vmatpush1.msra.mxu0 %v3518
    %3828 = vmatprep.subr.mxu0 %v3523
    %3829 = vmatpush1.msra.mxu0 %v3522
    %3830 = vmatprep.subr.mxu0 %v3527
    %3831 = vmatpush1.msra.mxu0 %v3526
    %3832 = vmatprep.subr.mxu0 %v3531
    %3833 = vmatpush1.msra.mxu0 %v3530
    %3834 = vmatprep.subr.mxu0 %v3535
    %3835 = vmatpush1.msra.mxu0 %v3534
    %3836 = vmatprep.subr.mxu0 %v3539
    %3837 = vmatpush1.msra.mxu0 %v3538
    %3838 = vmatprep.subr.mxu0 %v3543
    %3839 = vmatpush1.msra.mxu0 %v3542
    %3840 = vmatprep.subr.mxu0 %v3547
    %3841 = vmatpush1.msra.mxu0 %v3546
    %3842 = vmatprep.subr.mxu0 %v3551
    %3843 = vmatpush1.msra.mxu0 %v3550
    %3844 = vmatprep.subr.mxu0 %v3555
    %3845 = vmatpush1.msra.mxu0 %v3554
    %3846 = vmatprep.subr.mxu0 %v3559
    %3847 = vmatpush1.msra.mxu0 %v3558
    %3848 = vmatprep.subr.mxu0 %v3563
    %3849 = vmatpush1.msra.mxu0 %v3562
    %3850 = vmatprep.subr.mxu0 %v3567
    %3851 = vmatpush1.msra.mxu0 %v3566
    %3852 = vmatprep.subr.mxu0 %v3571
    %3853 = vmatpush1.msra.mxu0 %v3570
    %3854 = vmatprep.subr.mxu0 %v3575
    %3855 = vmatpush1.msra.mxu0 %v3574
    %3856 = vmatprep.subr.mxu0 %v3579
    %3857 = vmatpush1.msra.mxu0 %v3578
    %3858 = vmatprep.subr.mxu0 %v3583
    %3859 = vmatpush1.msra.mxu0 %v3582
    %3860 = vmatprep.subr.mxu0 %v3587
    %3861 = vmatpush1.msra.mxu0 %v3586
    %3862 = vmatprep.subr.mxu0 0.0
    %3863 = vmatpush1.msra.mxu0 0.0
    %3864 = vmatprep.subr.mxu0 0.0
    %3865 = vmatpush1.msra.mxu0 0.0
    %3866 = vmatprep.subr.mxu0 0.0
    %3867 = vmatpush1.msra.mxu0 0.0
    %3868 = vmatprep.subr.mxu0 0.0
    %3869 = vmatpush1.msra.mxu0 0.0
    %3870 = vmatprep.subr.mxu0 0.0
    %3871 = vmatpush1.msra.mxu0 0.0
    %3872 = vmatprep.subr.mxu0 0.0
    %3873 = vmatpush1.msra.mxu0 0.0
    %3874 = vmatprep.subr.mxu0 0.0
    %3875 = vmatpush1.msra.mxu0 0.0
    %3876 = vmatprep.subr.mxu0 0.0
    %3877 = vmatpush1.msra.mxu0 0.0
    %3878 = vmatprep.subr.mxu0 0.0
    %3879 = vmatpush1.msra.mxu0 0.0
    %3880 = vmatprep.subr.mxu0 0.0
    %3881 = vmatpush1.msra.mxu0 0.0
    %3882 = vmatprep.subr.mxu0 0.0
    %3883 = vmatpush1.msra.mxu0 0.0
    %3884 = vmatprep.subr.mxu0 0.0
    %3885 = vmatpush1.msra.mxu0 0.0
    %3886 = vmatprep.subr.mxu0 0.0
    %3887 = vmatpush1.msra.mxu0 0.0
    %3888 = vmatprep.subr.mxu0 0.0
    %3889 = vmatpush1.msra.mxu0 0.0
    %3890 = vmatprep.mubr.f32.mxu0 %v3611
    %3891 = vmatmul.mubr.f32.gmra.mrb[0].mxu0 %v3286
    %v3892 = vpop.f32.mrb[0].mxu0
    %v3893 = vadd.f32 %v3822, %v3892
    %v3894 = vpop.f32.mrb[0].mxu0
    %v3895 = vadd.f32 %v3824, %v3894
    %3896 = vdwg.mxu0
    %v3897 = vmax.f32 %v3751, 0.0
    %v3898 = vmax.f32 %v3753, 0.0
    %v3899 = vmax.f32 %v3893, 0.0
    %v3900 = vmax.f32 %v3895, 0.0
    %v3901 = vld [vmem:[%s41] sm:$0xf]
    %v3902 = vld [vmem:[%s41 + $0x4] sm:$0xf]
    %v3903 = vld [vmem:[%s41 + $0x8] sm:$0xf]
    %v3904 = vld [vmem:[%s41 + $0xc] sm:$0xf]
    %v3905 = vld [vmem:[%s41 + $0x10] sm:$0xf]
    %v3906 = vld [vmem:[%s41 + $0x14] sm:$0xf]
    %v3907 = vld [vmem:[%s41 + $0x18] sm:$0xf]
    %v3908 = vld [vmem:[%s41 + $0x1c] sm:$0xf]
    %v3909 = vld [vmem:[%s41 + $0x20] sm:$0xf]
    %v3910 = vld [vmem:[%s41 + $0x24] sm:$0xf]
    %v3911 = vld [vmem:[%s41 + $0x28] sm:$0xf]
    %v3912 = vld [vmem:[%s41 + $0x2c] sm:$0xf]
    %v3913 = vld [vmem:[%s41 + $0x30] sm:$0xf]
    %v3914 = vld [vmem:[%s41 + $0x34] sm:$0xf]
    %v3915 = vld [vmem:[%s41 + $0x38] sm:$0xf]
    %v3916 = vld [vmem:[%s41 + $0x3c] sm:$0xf]
    %v3917 = vld [vmem:[%s41 + $0x40] sm:$0xf]
    %v3918 = vld [vmem:[%s41 + $0x44] sm:$0xf]
    %v3919 = vld [vmem:[%s41 + $0x48] sm:$0xf]
    %v3920 = vld [vmem:[%s41 + $0x4c] sm:$0xf]
    %v3921 = vld [vmem:[%s41 + $0x50] sm:$0xf]
    %v3922 = vld [vmem:[%s41 + $0x54] sm:$0xf]
    %v3923 = vld [vmem:[%s41 + $0x58] sm:$0xf]
    %v3924 = vld [vmem:[%s41 + $0x5c] sm:$0xf]
    %v3925 = vld [vmem:[%s41 + $0x60] sm:$0xf]
    %v3926 = vld [vmem:[%s41 + $0x64] sm:$0xf]
    %v3927 = vld [vmem:[%s41 + $0x68] sm:$0xf]
    %v3928 = vld [vmem:[%s41 + $0x6c] sm:$0xf]
    %v3929 = vld [vmem:[%s41 + $0x70] sm:$0xf]
    %v3930 = vld [vmem:[%s41 + $0x74] sm:$0xf]
    %v3931 = vld [vmem:[%s41 + $0x78] sm:$0xf]
    %v3932 = vld [vmem:[%s41 + $0x7c] sm:$0xf]
    %v3933 = vld [vmem:[%s41 + $0x80] sm:$0xf]
    %v3934 = vld [vmem:[%s41 + $0x84] sm:$0xf]
    %v3935 = vld [vmem:[%s41 + $0x88] sm:$0xf]
    %v3936 = vld [vmem:[%s41 + $0x8c] sm:$0xf]
    %v3937 = vld [vmem:[%s41 + $0x90] sm:$0xf]
    %v3938 = vld [vmem:[%s41 + $0x94] sm:$0xf]
    %v3939 = vld [vmem:[%s41 + $0x98] sm:$0xf]
    %v3940 = vld [vmem:[%s41 + $0x9c] sm:$0xf]
    %v3941 = vld [vmem:[%s41 + $0xa0] sm:$0xf]
    %v3942 = vld [vmem:[%s41 + $0xa4] sm:$0xf]
    %v3943 = vld [vmem:[%s41 + $0xa8] sm:$0xf]
    %v3944 = vld [vmem:[%s41 + $0xac] sm:$0xf]
    %v3945 = vld [vmem:[%s41 + $0xb0] sm:$0xf]
    %v3946 = vld [vmem:[%s41 + $0xb4] sm:$0xf]
    %v3947 = vld [vmem:[%s41 + $0xb8] sm:$0xf]
    %v3948 = vld [vmem:[%s41 + $0xbc] sm:$0xf]
    %v3949 = vld [vmem:[%s41 + $0xc0] sm:$0xf]
    %v3950 = vld [vmem:[%s41 + $0xc4] sm:$0xf]
    %v3951 = vunpack.c.l.bf16 %v3901
    %v3952 = vunpack.c.l.bf16 %v3902
    %v3953 = vunpack.c.l.bf16 %v3903
    %v3954 = vunpack.c.l.bf16 %v3904
    %v3955 = vunpack.c.l.bf16 %v3905
    %v3956 = vunpack.c.l.bf16 %v3906
    %v3957 = vunpack.c.l.bf16 %v3907
    %v3958 = vunpack.c.l.bf16 %v3908
    %v3959 = vunpack.c.l.bf16 %v3909
    %v3960 = vunpack.c.l.bf16 %v3910
    %v3961 = vunpack.c.l.bf16 %v3911
    %v3962 = vunpack.c.l.bf16 %v3912
    %v3963 = vunpack.c.l.bf16 %v3913
    %v3964 = vunpack.c.l.bf16 %v3914
    %v3965 = vunpack.c.l.bf16 %v3915
    %v3966 = vunpack.c.l.bf16 %v3916
    %v3967 = vunpack.c.l.bf16 %v3917
    %v3968 = vunpack.c.l.bf16 %v3918
    %v3969 = vunpack.c.l.bf16 %v3919
    %v3970 = vunpack.c.l.bf16 %v3920
    %v3971 = vunpack.c.l.bf16 %v3921
    %v3972 = vunpack.c.l.bf16 %v3922
    %v3973 = vunpack.c.l.bf16 %v3923
    %v3974 = vunpack.c.l.bf16 %v3924
    %v3975 = vunpack.c.l.bf16 %v3925
    %v3976 = vunpack.c.l.bf16 %v3926
    %v3977 = vunpack.c.l.bf16 %v3927
    %v3978 = vunpack.c.l.bf16 %v3928
    %v3979 = vunpack.c.l.bf16 %v3929
    %v3980 = vunpack.c.l.bf16 %v3930
    %v3981 = vunpack.c.l.bf16 %v3931
    %v3982 = vunpack.c.l.bf16 %v3932
    %v3983 = vunpack.c.l.bf16 %v3933
    %v3984 = vunpack.c.l.bf16 %v3934
    %v3985 = vunpack.c.l.bf16 %v3935
    %v3986 = vunpack.c.l.bf16 %v3936
    %v3987 = vunpack.c.l.bf16 %v3937
    %v3988 = vunpack.c.l.bf16 %v3938
    %v3989 = vunpack.c.l.bf16 %v3939
    %v3990 = vunpack.c.l.bf16 %v3940
    %v3991 = vunpack.c.l.bf16 %v3941
    %v3992 = vunpack.c.l.bf16 %v3942
    %v3993 = vunpack.c.l.bf16 %v3943
    %v3994 = vunpack.c.l.bf16 %v3944
    %v3995 = vunpack.c.l.bf16 %v3945
    %v3996 = vunpack.c.l.bf16 %v3946
    %v3997 = vunpack.c.l.bf16 %v3947
    %v3998 = vunpack.c.l.bf16 %v3948
    %v3999 = vunpack.c.l.bf16 %v3949
    %v4000 = vunpack.c.l.bf16 %v3950
    %v4001 = vld [vmem:[#allocation11] sm:$0x1]
    %v4003 = vlaneseq
    %v4004 = vshrl.u32 %v4003, 7
    %v4005 = vsub.s32 0, %v4004
    %v4006 = vrot.slane %v4001, %v4005
    %v4009 = vsel %vm2996, %v3900, 0
    %4011 = vmatprep.subr.mxu0 0.0
    %4012 = vmatpush1.msra.mxu0 %v3951
    %4013 = vmatprep.subr.mxu0 0.0
    %4014 = vmatpush1.msra.mxu0 %v3952
    %4015 = vmatprep.subr.mxu0 0.0
    %4016 = vmatpush1.msra.mxu0 %v3953
    %4017 = vmatprep.subr.mxu0 0.0
    %4018 = vmatpush1.msra.mxu0 %v3954
    %4019 = vmatprep.subr.mxu0 0.0
    %4020 = vmatpush1.msra.mxu0 %v3955
    %4021 = vmatprep.subr.mxu0 0.0
    %4022 = vmatpush1.msra.mxu0 %v3956
    %4023 = vmatprep.subr.mxu0 0.0
    %4024 = vmatpush1.msra.mxu0 %v3957
    %4025 = vmatprep.subr.mxu0 0.0
    %4026 = vmatpush1.msra.mxu0 %v3958
    %4027 = vmatprep.subr.mxu0 0.0
    %4028 = vmatpush1.msra.mxu0 %v3959
    %4029 = vmatprep.subr.mxu0 0.0
    %4030 = vmatpush1.msra.mxu0 %v3960
    %4031 = vmatprep.subr.mxu0 0.0
    %4032 = vmatpush1.msra.mxu0 %v3961
    %4033 = vmatprep.subr.mxu0 0.0
    %4034 = vmatpush1.msra.mxu0 %v3962
    %4035 = vmatprep.subr.mxu0 0.0
    %4036 = vmatpush1.msra.mxu0 %v3963
    %4037 = vmatprep.subr.mxu0 0.0
    %4038 = vmatpush1.msra.mxu0 %v3964
    %4039 = vmatprep.subr.mxu0 0.0
    %4040 = vmatpush1.msra.mxu0 %v3965
    %4041 = vmatprep.subr.mxu0 0.0
    %4042 = vmatpush1.msra.mxu0 %v3966
    %4043 = vmatprep.subr.mxu0 0.0
    %4044 = vmatpush1.msra.mxu0 %v3967
    %4045 = vmatprep.subr.mxu0 0.0
    %4046 = vmatpush1.msra.mxu0 %v3968
    %4047 = vmatprep.subr.mxu0 0.0
    %4048 = vmatpush1.msra.mxu0 %v3969
    %4049 = vmatprep.subr.mxu0 0.0
    %4050 = vmatpush1.msra.mxu0 %v3970
    %4051 = vmatprep.subr.mxu0 0.0
    %4052 = vmatpush1.msra.mxu0 %v3971
    %4053 = vmatprep.subr.mxu0 0.0
    %4054 = vmatpush1.msra.mxu0 %v3972
    %4055 = vmatprep.subr.mxu0 0.0
    %4056 = vmatpush1.msra.mxu0 %v3973
    %4057 = vmatprep.subr.mxu0 0.0
    %4058 = vmatpush1.msra.mxu0 %v3974
    %4059 = vmatprep.subr.mxu0 0.0
    %4060 = vmatpush1.msra.mxu0 %v3975
    %4061 = vmatprep.subr.mxu0 0.0
    %4062 = vmatpush1.msra.mxu0 %v3976
    %4063 = vmatprep.subr.mxu0 0.0
    %4064 = vmatpush1.msra.mxu0 %v3977
    %4065 = vmatprep.subr.mxu0 0.0
    %4066 = vmatpush1.msra.mxu0 %v3978
    %4067 = vmatprep.subr.mxu0 0.0
    %4068 = vmatpush1.msra.mxu0 %v3979
    %4069 = vmatprep.subr.mxu0 0.0
    %4070 = vmatpush1.msra.mxu0 %v3980
    %4071 = vmatprep.subr.mxu0 0.0
    %4072 = vmatpush1.msra.mxu0 %v3981
    %4073 = vmatprep.subr.mxu0 0.0
    %4074 = vmatpush1.msra.mxu0 %v3982
    %4075 = vmatprep.mubr.f32.mxu0 %v3898
    %4076 = vmatmul.mubr.f32.gmra.mrb[0].mxu0 %v3897
    %v4077 = vpop.f32.mrb[0].mxu0
    %v4078 = vadd.f32 %v4006, %v4077
    %v4079 = vpop.f32.mrb[0].mxu0
    %4080 = vdwg.mxu0
    %4081 = vmatprep.subr.mxu0 0.0
    %4082 = vmatpush1.msra.mxu0 %v3983
    %4083 = vmatprep.subr.mxu0 0.0
    %4084 = vmatpush1.msra.mxu0 %v3984
    %4085 = vmatprep.subr.mxu0 0.0
    %4086 = vmatpush1.msra.mxu0 %v3985
    %4087 = vmatprep.subr.mxu0 0.0
    %4088 = vmatpush1.msra.mxu0 %v3986
    %4089 = vmatprep.subr.mxu0 0.0
    %4090 = vmatpush1.msra.mxu0 %v3987
    %4091 = vmatprep.subr.mxu0 0.0
    %4092 = vmatpush1.msra.mxu0 %v3988
    %4093 = vmatprep.subr.mxu0 0.0
    %4094 = vmatpush1.msra.mxu0 %v3989
    %4095 = vmatprep.subr.mxu0 0.0
    %4096 = vmatpush1.msra.mxu0 %v3990
    %4097 = vmatprep.subr.mxu0 0.0
    %4098 = vmatpush1.msra.mxu0 %v3991
    %4099 = vmatprep.subr.mxu0 0.0
    %4100 = vmatpush1.msra.mxu0 %v3992
    %4101 = vmatprep.subr.mxu0 0.0
    %4102 = vmatpush1.msra.mxu0 %v3993
    %4103 = vmatprep.subr.mxu0 0.0
    %4104 = vmatpush1.msra.mxu0 %v3994
    %4105 = vmatprep.subr.mxu0 0.0
    %4106 = vmatpush1.msra.mxu0 %v3995
    %4107 = vmatprep.subr.mxu0 0.0
    %4108 = vmatpush1.msra.mxu0 %v3996
    %4109 = vmatprep.subr.mxu0 0.0
    %4110 = vmatpush1.msra.mxu0 %v3997
    %4111 = vmatprep.subr.mxu0 0.0
    %4112 = vmatpush1.msra.mxu0 %v3998
    %4113 = vmatprep.subr.mxu0 0.0
    %4114 = vmatpush1.msra.mxu0 %v3999
    %4115 = vmatprep.subr.mxu0 0.0
    %4116 = vmatpush1.msra.mxu0 %v4000
    %4117 = vmatprep.subr.mxu0 0.0
    %4118 = vmatpush1.msra.mxu0 0.0
    %4119 = vmatprep.subr.mxu0 0.0
    %4120 = vmatpush1.msra.mxu0 0.0
    %4121 = vmatprep.subr.mxu0 0.0
    %4122 = vmatpush1.msra.mxu0 0.0
    %4123 = vmatprep.subr.mxu0 0.0
    %4124 = vmatpush1.msra.mxu0 0.0
    %4125 = vmatprep.subr.mxu0 0.0
    %4126 = vmatpush1.msra.mxu0 0.0
    %4127 = vmatprep.subr.mxu0 0.0
    %4128 = vmatpush1.msra.mxu0 0.0
    %4129 = vmatprep.subr.mxu0 0.0
    %4130 = vmatpush1.msra.mxu0 0.0
    %4131 = vmatprep.subr.mxu0 0.0
    %4132 = vmatpush1.msra.mxu0 0.0
    %4133 = vmatprep.subr.mxu0 0.0
    %4134 = vmatpush1.msra.mxu0 0.0
    %4135 = vmatprep.subr.mxu0 0.0
    %4136 = vmatpush1.msra.mxu0 0.0
    %4137 = vmatprep.subr.mxu0 0.0
    %4138 = vmatpush1.msra.mxu0 0.0
    %4139 = vmatprep.subr.mxu0 0.0
    %4140 = vmatpush1.msra.mxu0 0.0
    %4141 = vmatprep.subr.mxu0 0.0
    %4142 = vmatpush1.msra.mxu0 0.0
    %4143 = vmatprep.subr.mxu0 0.0
    %4144 = vmatpush1.msra.mxu0 0.0
    %4145 = vmatprep.mubr.f32.mxu0 %v4009
    %4146 = vmatmul.mubr.f32.gmra.mrb[0].mxu0 %v3899
    %v4147 = vpop.f32.mrb[0].mxu0
    %v4148 = vadd.f32 %v4078, %v4147
    %v4149 = vpop.f32.mrb[0].mxu0
    %4150 = vdwg.mxu0
    %v4151 = vld [vmem:[#allocation13] sm:$0xff]
    %v4152 = vld [vmem:[#allocation13 + $0x8] sm:$0xff]
    %v4153 = vld [vmem:[#allocation13 + $0x10] sm:$0xff]
    %v4154 = vld [vmem:[#allocation13 + $0x18] sm:$0xff]
    %v4155 = vld [vmem:[#allocation13 + $0x20] sm:$0xff]
    %v4156 = vld [vmem:[#allocation13 + $0x28] sm:$0xff]
    %v4157 = vld [vmem:[#allocation13 + $0x30] sm:$0xff]
    %v4158 = vld [vmem:[#allocation13 + $0x38] sm:$0xff]
    %v4159 = vld [vmem:[#allocation13 + $0x40] sm:$0xff]
    %v4160 = vld [vmem:[#allocation13 + $0x48] sm:$0xff]
    %v4161 = vld [vmem:[#allocation13 + $0x50] sm:$0xff]
    %v4162 = vld [vmem:[#allocation13 + $0x58] sm:$0xff]
    %v4163 = vld [vmem:[#allocation13 + $0x60] sm:$0xff]
    %v4164 = vld [vmem:[#allocation13 + $0x68] sm:$0xff]
    %v4165 = vld [vmem:[#allocation13 + $0x70] sm:$0xff]
    %v4166 = vld [vmem:[#allocation13 + $0x78] sm:$0xff]
    %v4167 = vld [vmem:[#allocation13 + $0x80] sm:$0xff]
    %v4168 = vld [vmem:[#allocation13 + $0x88] sm:$0xff]
    %v4169 = vld [vmem:[#allocation13 + $0x90] sm:$0x77]
    %v4170 = vld [vmem:[#allocation13 + $0x98] sm:$0x77]
    %v4171 = vunpack.c.l.bf16 %v4151
    %v4172 = vunpack.c.h.bf16 %v4151
    %v4173 = vunpack.c.l.bf16 %v4152
    %v4174 = vunpack.c.h.bf16 %v4152
    %v4175 = vunpack.c.l.bf16 %v4153
    %v4176 = vunpack.c.h.bf16 %v4153
    %v4177 = vunpack.c.l.bf16 %v4154
    %v4178 = vunpack.c.h.bf16 %v4154
    %v4179 = vunpack.c.l.bf16 %v4155
    %v4180 = vunpack.c.h.bf16 %v4155
    %v4181 = vunpack.c.l.bf16 %v4156
    %v4182 = vunpack.c.h.bf16 %v4156
    %v4183 = vunpack.c.l.bf16 %v4157
    %v4184 = vunpack.c.h.bf16 %v4157
    %v4185 = vunpack.c.l.bf16 %v4158
    %v4186 = vunpack.c.h.bf16 %v4158
    %v4187 = vunpack.c.l.bf16 %v4159
    %v4188 = vunpack.c.h.bf16 %v4159
    %v4189 = vunpack.c.l.bf16 %v4160
    %v4190 = vunpack.c.h.bf16 %v4160
    %v4191 = vunpack.c.l.bf16 %v4161
    %v4192 = vunpack.c.h.bf16 %v4161
    %v4193 = vunpack.c.l.bf16 %v4162
    %v4194 = vunpack.c.h.bf16 %v4162
    %v4195 = vunpack.c.l.bf16 %v4163
    %v4196 = vunpack.c.h.bf16 %v4163
    %v4197 = vunpack.c.l.bf16 %v4164
    %v4198 = vunpack.c.h.bf16 %v4164
    %v4199 = vunpack.c.l.bf16 %v4165
    %v4200 = vunpack.c.h.bf16 %v4165
    %v4201 = vunpack.c.l.bf16 %v4166
    %v4202 = vunpack.c.h.bf16 %v4166
    %v4203 = vunpack.c.l.bf16 %v4167
    %v4204 = vunpack.c.h.bf16 %v4167
    %v4205 = vunpack.c.l.bf16 %v4168
    %v4206 = vunpack.c.h.bf16 %v4168
    %v4207 = vunpack.c.l.bf16 %v4169
    %v4208 = vunpack.c.h.bf16 %v4169
    %v4209 = vunpack.c.l.bf16 %v4170
    %v4210 = vunpack.c.h.bf16 %v4170
    %v4211 = vld [vmem:[#allocation14] sm:$0xff]
    %v4212 = vld [vmem:[#allocation14 + $0x8] sm:$0xff]
    %v4213 = vld [vmem:[#allocation14 + $0x10] sm:$0xff]
    %v4214 = vld [vmem:[#allocation14 + $0x18] sm:$0xff]
    %v4215 = vld [vmem:[#allocation14 + $0x20] sm:$0xff]
    %v4216 = vld [vmem:[#allocation14 + $0x28] sm:$0xff]
    %v4217 = vld [vmem:[#allocation14 + $0x30] sm:$0xff]
    %v4218 = vld [vmem:[#allocation14 + $0x38] sm:$0xff]
    %v4219 = vld [vmem:[#allocation14 + $0x40] sm:$0xff]
    %v4220 = vld [vmem:[#allocation14 + $0x48] sm:$0xff]
    %v4221 = vld [vmem:[#allocation14 + $0x50] sm:$0xff]
    %v4222 = vld [vmem:[#allocation14 + $0x58] sm:$0xff]
    %v4223 = vld [vmem:[#allocation14 + $0x60] sm:$0xff]
    %v4224 = vld [vmem:[#allocation14 + $0x68] sm:$0xff]
    %v4225 = vld [vmem:[#allocation14 + $0x70] sm:$0xff]
    %v4226 = vld [vmem:[#allocation14 + $0x78] sm:$0xff]
    %v4227 = vld [vmem:[#allocation14 + $0x80] sm:$0xff]
    %v4228 = vld [vmem:[#allocation14 + $0x88] sm:$0xff]
    %v4229 = vld [vmem:[#allocation14 + $0x90] sm:$0x77]
    %v4230 = vld [vmem:[#allocation14 + $0x98] sm:$0x77]
    %v4231 = vunpack.c.l.bf16 %v4211
    %v4232 = vunpack.c.h.bf16 %v4211
    %v4233 = vunpack.c.l.bf16 %v4212
    %v4234 = vunpack.c.h.bf16 %v4212
    %v4235 = vunpack.c.l.bf16 %v4213
    %v4236 = vunpack.c.h.bf16 %v4213
    %v4237 = vunpack.c.l.bf16 %v4214
    %v4238 = vunpack.c.h.bf16 %v4214
    %v4239 = vunpack.c.l.bf16 %v4215
    %v4240 = vunpack.c.h.bf16 %v4215
    %v4241 = vunpack.c.l.bf16 %v4216
    %v4242 = vunpack.c.h.bf16 %v4216
    %v4243 = vunpack.c.l.bf16 %v4217
    %v4244 = vunpack.c.h.bf16 %v4217
    %v4245 = vunpack.c.l.bf16 %v4218
    %v4246 = vunpack.c.h.bf16 %v4218
    %v4247 = vunpack.c.l.bf16 %v4219
    %v4248 = vunpack.c.h.bf16 %v4219
    %v4249 = vunpack.c.l.bf16 %v4220
    %v4250 = vunpack.c.h.bf16 %v4220
    %v4251 = vunpack.c.l.bf16 %v4221
    %v4252 = vunpack.c.h.bf16 %v4221
    %v4253 = vunpack.c.l.bf16 %v4222
    %v4254 = vunpack.c.h.bf16 %v4222
    %v4255 = vunpack.c.l.bf16 %v4223
    %v4256 = vunpack.c.h.bf16 %v4223
    %v4257 = vunpack.c.l.bf16 %v4224
    %v4258 = vunpack.c.h.bf16 %v4224
    %v4259 = vunpack.c.l.bf16 %v4225
    %v4260 = vunpack.c.h.bf16 %v4225
    %v4261 = vunpack.c.l.bf16 %v4226
    %v4262 = vunpack.c.h.bf16 %v4226
    %v4263 = vunpack.c.l.bf16 %v4227
    %v4264 = vunpack.c.h.bf16 %v4227
    %v4265 = vunpack.c.l.bf16 %v4228
    %v4266 = vunpack.c.h.bf16 %v4228
    %v4267 = vunpack.c.l.bf16 %v4229
    %v4268 = vunpack.c.h.bf16 %v4229
    %v4269 = vunpack.c.l.bf16 %v4230
    %v4270 = vunpack.c.h.bf16 %v4230
    %vm4271 = vcmask 637952
    %v4273 = vsel %vm4271, %v2671, 0
    %vm4275 = vcmask 1045504
    %v4277 = vsel %vm4275, %v4267, 0
    %v4280 = vsel %vm4275, %v4268, 0
    %v4283 = vsel %vm4275, %v4269, 0
    %v4286 = vsel %vm4275, %v4270, 0
    %4288 = vmatprep.subr.mxu0 %v4232
    %4289 = vmatpush1.msra.mxu0 %v4231
    %4290 = vmatprep.subr.mxu0 %v4236
    %4291 = vmatpush1.msra.mxu0 %v4235
    %4292 = vmatprep.subr.mxu0 %v4240
    %4293 = vmatpush1.msra.mxu0 %v4239
    %4294 = vmatprep.subr.mxu0 %v4244
    %4295 = vmatpush1.msra.mxu0 %v4243
    %4296 = vmatprep.subr.mxu0 %v4248
    %4297 = vmatpush1.msra.mxu0 %v4247
    %4298 = vmatprep.subr.mxu0 %v4252
    %4299 = vmatpush1.msra.mxu0 %v4251
    %4300 = vmatprep.subr.mxu0 %v4256
    %4301 = vmatpush1.msra.mxu0 %v4255
    %4302 = vmatprep.subr.mxu0 %v4260
    %4303 = vmatpush1.msra.mxu0 %v4259
    %4304 = vmatprep.subr.mxu0 %v4264
    %4305 = vmatpush1.msra.mxu0 %v4263
    %4306 = vmatprep.subr.mxu0 %v4280
    %4307 = vmatpush1.msra.mxu0 %v4277
    %4308 = vmatprep.subr.mxu0 0.0
    %4309 = vmatpush1.msra.mxu0 0.0
    %4310 = vmatprep.subr.mxu0 0.0
    %4311 = vmatpush1.msra.mxu0 0.0
    %4312 = vmatprep.subr.mxu0 0.0
    %4313 = vmatpush1.msra.mxu0 0.0
    %4314 = vmatprep.subr.mxu0 0.0
    %4315 = vmatpush1.msra.mxu0 0.0
    %4316 = vmatprep.subr.mxu0 0.0
    %4317 = vmatpush1.msra.mxu0 0.0
    %4318 = vmatprep.subr.mxu0 0.0
    %4319 = vmatpush1.msra.mxu0 0.0
    %4320 = vmatprep.subr.mxu0 0.0
    %4321 = vmatpush1.msra.mxu0 0.0
    %4322 = vmatprep.subr.mxu0 0.0
    %4323 = vmatpush1.msra.mxu0 0.0
    %4324 = vmatprep.subr.mxu0 0.0
    %4325 = vmatpush1.msra.mxu0 0.0
    %4326 = vmatprep.subr.mxu0 0.0
    %4327 = vmatpush1.msra.mxu0 0.0
    %4328 = vmatprep.subr.mxu0 0.0
    %4329 = vmatpush1.msra.mxu0 0.0
    %4330 = vmatprep.subr.mxu0 0.0
    %4331 = vmatpush1.msra.mxu0 0.0
    %4332 = vmatprep.subr.mxu0 0.0
    %4333 = vmatpush1.msra.mxu0 0.0
    %4334 = vmatprep.subr.mxu0 0.0
    %4335 = vmatpush1.msra.mxu0 0.0
    %4336 = vmatprep.subr.mxu0 0.0
    %4337 = vmatpush1.msra.mxu0 0.0
    %4338 = vmatprep.subr.mxu0 0.0
    %4339 = vmatpush1.msra.mxu0 0.0
    %4340 = vmatprep.subr.mxu0 0.0
    %4341 = vmatpush1.msra.mxu0 0.0
    %4342 = vmatprep.subr.mxu0 0.0
    %4343 = vmatpush1.msra.mxu0 0.0
    %4344 = vmatprep.subr.mxu0 0.0
    %4345 = vmatpush1.msra.mxu0 0.0
    %4346 = vmatprep.subr.mxu0 0.0
    %4347 = vmatpush1.msra.mxu0 0.0
    %4348 = vmatprep.subr.mxu0 0.0
    %4349 = vmatpush1.msra.mxu0 0.0
    %4350 = vmatprep.subr.mxu0 0.0
    %4351 = vmatpush1.msra.mxu0 0.0
    %4352 = vmatprep.mubr.f32.mxu0 0.0
    %4353 = vmatmul.mubr.f32.gmra.mrb[0].mxu0 %v4273
    %v4354 = vpop.f32.mrb[0].mxu0
    %v4355 = vadd.f32 0.0, %v4354
    %v4356 = vpop.f32.mrb[0].mxu0
    %v4357 = vadd.f32 0.0, %v4356
    %4358 = vdwg.mxu0
    %4359 = vmatprep.subr.mxu0 %v4234
    %4360 = vmatpush1.msra.mxu0 %v4233
    %4361 = vmatprep.subr.mxu0 %v4238
    %4362 = vmatpush1.msra.mxu0 %v4237
    %4363 = vmatprep.subr.mxu0 %v4242
    %4364 = vmatpush1.msra.mxu0 %v4241
    %4365 = vmatprep.subr.mxu0 %v4246
    %4366 = vmatpush1.msra.mxu0 %v4245
    %4367 = vmatprep.subr.mxu0 %v4250
    %4368 = vmatpush1.msra.mxu0 %v4249
    %4369 = vmatprep.subr.mxu0 %v4254
    %4370 = vmatpush1.msra.mxu0 %v4253
    %4371 = vmatprep.subr.mxu0 %v4258
    %4372 = vmatpush1.msra.mxu0 %v4257
    %4373 = vmatprep.subr.mxu0 %v4262
    %4374 = vmatpush1.msra.mxu0 %v4261
    %4375 = vmatprep.subr.mxu0 %v4266
    %4376 = vmatpush1.msra.mxu0 %v4265
    %4377 = vmatprep.subr.mxu0 %v4286
    %4378 = vmatpush1.msra.mxu0 %v4283
    %4379 = vmatprep.subr.mxu0 0.0
    %4380 = vmatpush1.msra.mxu0 0.0
    %4381 = vmatprep.subr.mxu0 0.0
    %4382 = vmatpush1.msra.mxu0 0.0
    %4383 = vmatprep.subr.mxu0 0.0
    %4384 = vmatpush1.msra.mxu0 0.0
    %4385 = vmatprep.subr.mxu0 0.0
    %4386 = vmatpush1.msra.mxu0 0.0
    %4387 = vmatprep.subr.mxu0 0.0
    %4388 = vmatpush1.msra.mxu0 0.0
    %4389 = vmatprep.subr.mxu0 0.0
    %4390 = vmatpush1.msra.mxu0 0.0
    %4391 = vmatprep.subr.mxu0 0.0
    %4392 = vmatpush1.msra.mxu0 0.0
    %4393 = vmatprep.subr.mxu0 0.0
    %4394 = vmatpush1.msra.mxu0 0.0
    %4395 = vmatprep.subr.mxu0 0.0
    %4396 = vmatpush1.msra.mxu0 0.0
    %4397 = vmatprep.subr.mxu0 0.0
    %4398 = vmatpush1.msra.mxu0 0.0
    %4399 = vmatprep.subr.mxu0 0.0
    %4400 = vmatpush1.msra.mxu0 0.0
    %4401 = vmatprep.subr.mxu0 0.0
    %4402 = vmatpush1.msra.mxu0 0.0
    %4403 = vmatprep.subr.mxu0 0.0
    %4404 = vmatpush1.msra.mxu0 0.0
    %4405 = vmatprep.subr.mxu0 0.0
    %4406 = vmatpush1.msra.mxu0 0.0
    %4407 = vmatprep.subr.mxu0 0.0
    %4408 = vmatpush1.msra.mxu0 0.0
    %4409 = vmatprep.subr.mxu0 0.0
    %4410 = vmatpush1.msra.mxu0 0.0
    %4411 = vmatprep.subr.mxu0 0.0
    %4412 = vmatpush1.msra.mxu0 0.0
    %4413 = vmatprep.subr.mxu0 0.0
    %4414 = vmatpush1.msra.mxu0 0.0
    %4415 = vmatprep.subr.mxu0 0.0
    %4416 = vmatpush1.msra.mxu0 0.0
    %4417 = vmatprep.subr.mxu0 0.0
    %4418 = vmatpush1.msra.mxu0 0.0
    %4419 = vmatprep.subr.mxu0 0.0
    %4420 = vmatpush1.msra.mxu0 0.0
    %4421 = vmatprep.subr.mxu0 0.0
    %4422 = vmatpush1.msra.mxu0 0.0
    %4423 = vmatprep.mubr.f32.mxu0 0.0
    %4424 = vmatmul.mubr.f32.gmra.mrb[0].mxu0 %v4273
    %v4425 = vpop.f32.mrb[0].mxu0
    %v4426 = vadd.f32 0.0, %v4425
    %v4427 = vpop.f32.mrb[0].mxu0
    %v4428 = vadd.f32 0.0, %v4427
    %4429 = vdwg.mxu0
    %v4431 = vsel %vm4271, %v2203, 0
    %v4434 = vsel %vm4275, %v4207, 0
    %v4437 = vsel %vm4275, %v4208, 0
    %v4440 = vsel %vm4275, %v4209, 0
    %v4443 = vsel %vm4275, %v4210, 0
    %4445 = vmatprep.subr.mxu0 %v4172
    %4446 = vmatpush1.msra.mxu0 %v4171
    %4447 = vmatprep.subr.mxu0 %v4176
    %4448 = vmatpush1.msra.mxu0 %v4175
    %4449 = vmatprep.subr.mxu0 %v4180
    %4450 = vmatpush1.msra.mxu0 %v4179
    %4451 = vmatprep.subr.mxu0 %v4184
    %4452 = vmatpush1.msra.mxu0 %v4183
    %4453 = vmatprep.subr.mxu0 %v4188
    %4454 = vmatpush1.msra.mxu0 %v4187
    %4455 = vmatprep.subr.mxu0 %v4192
    %4456 = vmatpush1.msra.mxu0 %v4191
    %4457 = vmatprep.subr.mxu0 %v4196
    %4458 = vmatpush1.msra.mxu0 %v4195
    %4459 = vmatprep.subr.mxu0 %v4200
    %4460 = vmatpush1.msra.mxu0 %v4199
    %4461 = vmatprep.subr.mxu0 %v4204
    %4462 = vmatpush1.msra.mxu0 %v4203
    %4463 = vmatprep.subr.mxu0 %v4437
    %4464 = vmatpush1.msra.mxu0 %v4434
    %4465 = vmatprep.subr.mxu0 0.0
    %4466 = vmatpush1.msra.mxu0 0.0
    %4467 = vmatprep.subr.mxu0 0.0
    %4468 = vmatpush1.msra.mxu0 0.0
    %4469 = vmatprep.subr.mxu0 0.0
    %4470 = vmatpush1.msra.mxu0 0.0
    %4471 = vmatprep.subr.mxu0 0.0
    %4472 = vmatpush1.msra.mxu0 0.0
    %4473 = vmatprep.subr.mxu0 0.0
    %4474 = vmatpush1.msra.mxu0 0.0
    %4475 = vmatprep.subr.mxu0 0.0
    %4476 = vmatpush1.msra.mxu0 0.0
    %4477 = vmatprep.subr.mxu0 0.0
    %4478 = vmatpush1.msra.mxu0 0.0
    %4479 = vmatprep.subr.mxu0 0.0
    %4480 = vmatpush1.msra.mxu0 0.0
    %4481 = vmatprep.subr.mxu0 0.0
    %4482 = vmatpush1.msra.mxu0 0.0
    %4483 = vmatprep.subr.mxu0 0.0
    %4484 = vmatpush1.msra.mxu0 0.0
    %4485 = vmatprep.subr.mxu0 0.0
    %4486 = vmatpush1.msra.mxu0 0.0
    %4487 = vmatprep.subr.mxu0 0.0
    %4488 = vmatpush1.msra.mxu0 0.0
    %4489 = vmatprep.subr.mxu0 0.0
    %4490 = vmatpush1.msra.mxu0 0.0
    %4491 = vmatprep.subr.mxu0 0.0
    %4492 = vmatpush1.msra.mxu0 0.0
    %4493 = vmatprep.subr.mxu0 0.0
    %4494 = vmatpush1.msra.mxu0 0.0
    %4495 = vmatprep.subr.mxu0 0.0
    %4496 = vmatpush1.msra.mxu0 0.0
    %4497 = vmatprep.subr.mxu0 0.0
    %4498 = vmatpush1.msra.mxu0 0.0
    %4499 = vmatprep.subr.mxu0 0.0
    %4500 = vmatpush1.msra.mxu0 0.0
    %4501 = vmatprep.subr.mxu0 0.0
    %4502 = vmatpush1.msra.mxu0 0.0
    %4503 = vmatprep.subr.mxu0 0.0
    %4504 = vmatpush1.msra.mxu0 0.0
    %4505 = vmatprep.subr.mxu0 0.0
    %4506 = vmatpush1.msra.mxu0 0.0
    %4507 = vmatprep.subr.mxu0 0.0
    %4508 = vmatpush1.msra.mxu0 0.0
    %4509 = vmatprep.mubr.f32.mxu0 0.0
    %4510 = vmatmul.mubr.f32.gmra.mrb[0].mxu0 %v4431
    %v4511 = vpop.f32.mrb[0].mxu0
    %v4512 = vadd.f32 %v4355, %v4511
    %v4513 = vpop.f32.mrb[0].mxu0
    %v4514 = vadd.f32 %v4357, %v4513
    %4515 = vdwg.mxu0
    %4516 = vmatprep.subr.mxu0 %v4174
    %4517 = vmatpush1.msra.mxu0 %v4173
    %4518 = vmatprep.subr.mxu0 %v4178
    %4519 = vmatpush1.msra.mxu0 %v4177
    %4520 = vmatprep.subr.mxu0 %v4182
    %4521 = vmatpush1.msra.mxu0 %v4181
    %4522 = vmatprep.subr.mxu0 %v4186
    %4523 = vmatpush1.msra.mxu0 %v4185
    %4524 = vmatprep.subr.mxu0 %v4190
    %4525 = vmatpush1.msra.mxu0 %v4189
    %4526 = vmatprep.subr.mxu0 %v4194
    %4527 = vmatpush1.msra.mxu0 %v4193
    %4528 = vmatprep.subr.mxu0 %v4198
    %4529 = vmatpush1.msra.mxu0 %v4197
    %4530 = vmatprep.subr.mxu0 %v4202
    %4531 = vmatpush1.msra.mxu0 %v4201
    %4532 = vmatprep.subr.mxu0 %v4206
    %4533 = vmatpush1.msra.mxu0 %v4205
    %4534 = vmatprep.subr.mxu0 %v4443
    %4535 = vmatpush1.msra.mxu0 %v4440
    %4536 = vmatprep.subr.mxu0 0.0
    %4537 = vmatpush1.msra.mxu0 0.0
    %4538 = vmatprep.subr.mxu0 0.0
    %4539 = vmatpush1.msra.mxu0 0.0
    %4540 = vmatprep.subr.mxu0 0.0
    %4541 = vmatpush1.msra.mxu0 0.0
    %4542 = vmatprep.subr.mxu0 0.0
    %4543 = vmatpush1.msra.mxu0 0.0
    %4544 = vmatprep.subr.mxu0 0.0
    %4545 = vmatpush1.msra.mxu0 0.0
    %4546 = vmatprep.subr.mxu0 0.0
    %4547 = vmatpush1.msra.mxu0 0.0
    %4548 = vmatprep.subr.mxu0 0.0
    %4549 = vmatpush1.msra.mxu0 0.0
    %4550 = vmatprep.subr.mxu0 0.0
    %4551 = vmatpush1.msra.mxu0 0.0
    %4552 = vmatprep.subr.mxu0 0.0
    %4553 = vmatpush1.msra.mxu0 0.0
    %4554 = vmatprep.subr.mxu0 0.0
    %4555 = vmatpush1.msra.mxu0 0.0
    %4556 = vmatprep.subr.mxu0 0.0
    %4557 = vmatpush1.msra.mxu0 0.0
    %4558 = vmatprep.subr.mxu0 0.0
    %4559 = vmatpush1.msra.mxu0 0.0
    %4560 = vmatprep.subr.mxu0 0.0
    %4561 = vmatpush1.msra.mxu0 0.0
    %4562 = vmatprep.subr.mxu0 0.0
    %4563 = vmatpush1.msra.mxu0 0.0
    %4564 = vmatprep.subr.mxu0 0.0
    %4565 = vmatpush1.msra.mxu0 0.0
    %4566 = vmatprep.subr.mxu0 0.0
    %4567 = vmatpush1.msra.mxu0 0.0
    %4568 = vmatprep.subr.mxu0 0.0
    %4569 = vmatpush1.msra.mxu0 0.0
    %4570 = vmatprep.subr.mxu0 0.0
    %4571 = vmatpush1.msra.mxu0 0.0
    %4572 = vmatprep.subr.mxu0 0.0
    %4573 = vmatpush1.msra.mxu0 0.0
    %4574 = vmatprep.subr.mxu0 0.0
    %4575 = vmatpush1.msra.mxu0 0.0
    %4576 = vmatprep.subr.mxu0 0.0
    %4577 = vmatpush1.msra.mxu0 0.0
    %4578 = vmatprep.subr.mxu0 0.0
    %4579 = vmatpush1.msra.mxu0 0.0
    %4580 = vmatprep.mubr.f32.mxu0 0.0
    %4581 = vmatmul.mubr.f32.gmra.mrb[0].mxu0 %v4431
    %v4582 = vpop.f32.mrb[0].mxu0
    %v4583 = vadd.f32 %v4426, %v4582
    %v4584 = vpop.f32.mrb[0].mxu0
    %v4585 = vadd.f32 %v4428, %v4584
    %4586 = vdwg.mxu0
    %v4587 = vld [vmem:[#allocation16] sm:$0xff]
    %v4588 = vld [vmem:[#allocation16 + $0x8] sm:$0xff]
    %v4589 = vld [vmem:[#allocation16 + $0x10] sm:$0xff]
    %v4590 = vld [vmem:[#allocation16 + $0x18] sm:$0xff]
    %v4591 = vld [vmem:[#allocation16 + $0x20] sm:$0xff]
    %v4592 = vld [vmem:[#allocation16 + $0x28] sm:$0xff]
    %v4593 = vld [vmem:[#allocation16 + $0x30] sm:$0xff]
    %v4594 = vld [vmem:[#allocation16 + $0x38] sm:$0xff]
    %v4595 = vld [vmem:[#allocation16 + $0x40] sm:$0xff]
    %v4596 = vld [vmem:[#allocation16 + $0x48] sm:$0xff]
    %v4597 = vld [vmem:[#allocation16 + $0x50] sm:$0xff]
    %v4598 = vld [vmem:[#allocation16 + $0x58] sm:$0xff]
    %v4599 = vld [vmem:[#allocation16 + $0x60] sm:$0xff]
    %v4600 = vld [vmem:[#allocation16 + $0x68] sm:$0xff]
    %v4601 = vld [vmem:[#allocation16 + $0x70] sm:$0xff]
    %v4602 = vld [vmem:[#allocation16 + $0x78] sm:$0xff]
    %v4603 = vld [vmem:[#allocation16 + $0x80] sm:$0xff]
    %v4604 = vld [vmem:[#allocation16 + $0x88] sm:$0xff]
    %v4605 = vld [vmem:[#allocation16 + $0x90] sm:$0x77]
    %v4606 = vld [vmem:[#allocation16 + $0x98] sm:$0x77]
    %v4607 = vunpack.c.l.bf16 %v4587
    %v4608 = vunpack.c.h.bf16 %v4587
    %v4609 = vunpack.c.l.bf16 %v4588
    %v4610 = vunpack.c.h.bf16 %v4588
    %v4611 = vunpack.c.l.bf16 %v4589
    %v4612 = vunpack.c.h.bf16 %v4589
    %v4613 = vunpack.c.l.bf16 %v4590
    %v4614 = vunpack.c.h.bf16 %v4590
    %v4615 = vunpack.c.l.bf16 %v4591
    %v4616 = vunpack.c.h.bf16 %v4591
    %v4617 = vunpack.c.l.bf16 %v4592
    %v4618 = vunpack.c.h.bf16 %v4592
    %v4619 = vunpack.c.l.bf16 %v4593
    %v4620 = vunpack.c.h.bf16 %v4593
    %v4621 = vunpack.c.l.bf16 %v4594
    %v4622 = vunpack.c.h.bf16 %v4594
    %v4623 = vunpack.c.l.bf16 %v4595
    %v4624 = vunpack.c.h.bf16 %v4595
    %v4625 = vunpack.c.l.bf16 %v4596
    %v4626 = vunpack.c.h.bf16 %v4596
    %v4627 = vunpack.c.l.bf16 %v4597
    %v4628 = vunpack.c.h.bf16 %v4597
    %v4629 = vunpack.c.l.bf16 %v4598
    %v4630 = vunpack.c.h.bf16 %v4598
    %v4631 = vunpack.c.l.bf16 %v4599
    %v4632 = vunpack.c.h.bf16 %v4599
    %v4633 = vunpack.c.l.bf16 %v4600
    %v4634 = vunpack.c.h.bf16 %v4600
    %v4635 = vunpack.c.l.bf16 %v4601
    %v4636 = vunpack.c.h.bf16 %v4601
    %v4637 = vunpack.c.l.bf16 %v4602
    %v4638 = vunpack.c.h.bf16 %v4602
    %v4639 = vunpack.c.l.bf16 %v4603
    %v4640 = vunpack.c.h.bf16 %v4603
    %v4641 = vunpack.c.l.bf16 %v4604
    %v4642 = vunpack.c.h.bf16 %v4604
    %v4643 = vunpack.c.l.bf16 %v4605
    %v4644 = vunpack.c.h.bf16 %v4605
    %v4645 = vunpack.c.l.bf16 %v4606
    %v4646 = vunpack.c.h.bf16 %v4606
    %v4648 = vsel %vm4271, %v4148, 0
    %v4651 = vsel %vm4275, %v4643, 0
    %v4654 = vsel %vm4275, %v4644, 0
    %v4657 = vsel %vm4275, %v4645, 0
    %v4660 = vsel %vm4275, %v4646, 0
    %4662 = vmatprep.subr.mxu0 %v4608
    %4663 = vmatpush1.msra.mxu0 %v4607
    %4664 = vmatprep.subr.mxu0 %v4612
    %4665 = vmatpush1.msra.mxu0 %v4611
    %4666 = vmatprep.subr.mxu0 %v4616
    %4667 = vmatpush1.msra.mxu0 %v4615
    %4668 = vmatprep.subr.mxu0 %v4620
    %4669 = vmatpush1.msra.mxu0 %v4619
    %4670 = vmatprep.subr.mxu0 %v4624
    %4671 = vmatpush1.msra.mxu0 %v4623
    %4672 = vmatprep.subr.mxu0 %v4628
    %4673 = vmatpush1.msra.mxu0 %v4627
    %4674 = vmatprep.subr.mxu0 %v4632
    %4675 = vmatpush1.msra.mxu0 %v4631
    %4676 = vmatprep.subr.mxu0 %v4636
    %4677 = vmatpush1.msra.mxu0 %v4635
    %4678 = vmatprep.subr.mxu0 %v4640
    %4679 = vmatpush1.msra.mxu0 %v4639
    %4680 = vmatprep.subr.mxu0 %v4654
    %4681 = vmatpush1.msra.mxu0 %v4651
    %4682 = vmatprep.subr.mxu0 0.0
    %4683 = vmatpush1.msra.mxu0 0.0
    %4684 = vmatprep.subr.mxu0 0.0
    %4685 = vmatpush1.msra.mxu0 0.0
    %4686 = vmatprep.subr.mxu0 0.0
    %4687 = vmatpush1.msra.mxu0 0.0
    %4688 = vmatprep.subr.mxu0 0.0
    %4689 = vmatpush1.msra.mxu0 0.0
    %4690 = vmatprep.subr.mxu0 0.0
    %4691 = vmatpush1.msra.mxu0 0.0
    %4692 = vmatprep.subr.mxu0 0.0
    %4693 = vmatpush1.msra.mxu0 0.0
    %4694 = vmatprep.subr.mxu0 0.0
    %4695 = vmatpush1.msra.mxu0 0.0
    %4696 = vmatprep.subr.mxu0 0.0
    %4697 = vmatpush1.msra.mxu0 0.0
    %4698 = vmatprep.subr.mxu0 0.0
    %4699 = vmatpush1.msra.mxu0 0.0
    %4700 = vmatprep.subr.mxu0 0.0
    %4701 = vmatpush1.msra.mxu0 0.0
    %4702 = vmatprep.subr.mxu0 0.0
    %4703 = vmatpush1.msra.mxu0 0.0
    %4704 = vmatprep.subr.mxu0 0.0
    %4705 = vmatpush1.msra.mxu0 0.0
    %4706 = vmatprep.subr.mxu0 0.0
    %4707 = vmatpush1.msra.mxu0 0.0
    %4708 = vmatprep.subr.mxu0 0.0
    %4709 = vmatpush1.msra.mxu0 0.0
    %4710 = vmatprep.subr.mxu0 0.0
    %4711 = vmatpush1.msra.mxu0 0.0
    %4712 = vmatprep.subr.mxu0 0.0
    %4713 = vmatpush1.msra.mxu0 0.0
    %4714 = vmatprep.subr.mxu0 0.0
    %4715 = vmatpush1.msra.mxu0 0.0
    %4716 = vmatprep.subr.mxu0 0.0
    %4717 = vmatpush1.msra.mxu0 0.0
    %4718 = vmatprep.subr.mxu0 0.0
    %4719 = vmatpush1.msra.mxu0 0.0
    %4720 = vmatprep.subr.mxu0 0.0
    %4721 = vmatpush1.msra.mxu0 0.0
    %4722 = vmatprep.subr.mxu0 0.0
    %4723 = vmatpush1.msra.mxu0 0.0
    %4724 = vmatprep.subr.mxu0 0.0
    %4725 = vmatpush1.msra.mxu0 0.0
    %4726 = vmatprep.mubr.f32.mxu0 0.0
    %4727 = vmatmul.mubr.f32.gmra.mrb[0].mxu0 %v4648
    %v4728 = vpop.f32.mrb[0].mxu0
    %v4729 = vadd.f32 0.0, %v4728
    %v4730 = vpop.f32.mrb[0].mxu0
    %v4731 = vadd.f32 0.0, %v4730
    %4732 = vdwg.mxu0
    %4733 = vmatprep.subr.mxu0 %v4610
    %4734 = vmatpush1.msra.mxu0 %v4609
    %4735 = vmatprep.subr.mxu0 %v4614
    %4736 = vmatpush1.msra.mxu0 %v4613
    %4737 = vmatprep.subr.mxu0 %v4618
    %4738 = vmatpush1.msra.mxu0 %v4617
    %4739 = vmatprep.subr.mxu0 %v4622
    %4740 = vmatpush1.msra.mxu0 %v4621
    %4741 = vmatprep.subr.mxu0 %v4626
    %4742 = vmatpush1.msra.mxu0 %v4625
    %4743 = vmatprep.subr.mxu0 %v4630
    %4744 = vmatpush1.msra.mxu0 %v4629
    %4745 = vmatprep.subr.mxu0 %v4634
    %4746 = vmatpush1.msra.mxu0 %v4633
    %4747 = vmatprep.subr.mxu0 %v4638
    %4748 = vmatpush1.msra.mxu0 %v4637
    %4749 = vmatprep.subr.mxu0 %v4642
    %4750 = vmatpush1.msra.mxu0 %v4641
    %4751 = vmatprep.subr.mxu0 %v4660
    %4752 = vmatpush1.msra.mxu0 %v4657
    %4753 = vmatprep.subr.mxu0 0.0
    %4754 = vmatpush1.msra.mxu0 0.0
    %4755 = vmatprep.subr.mxu0 0.0
    %4756 = vmatpush1.msra.mxu0 0.0
    %4757 = vmatprep.subr.mxu0 0.0
    %4758 = vmatpush1.msra.mxu0 0.0
    %4759 = vmatprep.subr.mxu0 0.0
    %4760 = vmatpush1.msra.mxu0 0.0
    %4761 = vmatprep.subr.mxu0 0.0
    %4762 = vmatpush1.msra.mxu0 0.0
    %4763 = vmatprep.subr.mxu0 0.0
    %4764 = vmatpush1.msra.mxu0 0.0
    %4765 = vmatprep.subr.mxu0 0.0
    %4766 = vmatpush1.msra.mxu0 0.0
    %4767 = vmatprep.subr.mxu0 0.0
    %4768 = vmatpush1.msra.mxu0 0.0
    %4769 = vmatprep.subr.mxu0 0.0
    %4770 = vmatpush1.msra.mxu0 0.0
    %4771 = vmatprep.subr.mxu0 0.0
    %4772 = vmatpush1.msra.mxu0 0.0
    %4773 = vmatprep.subr.mxu0 0.0
    %4774 = vmatpush1.msra.mxu0 0.0
    %4775 = vmatprep.subr.mxu0 0.0
    %4776 = vmatpush1.msra.mxu0 0.0
    %4777 = vmatprep.subr.mxu0 0.0
    %4778 = vmatpush1.msra.mxu0 0.0
    %4779 = vmatprep.subr.mxu0 0.0
    %4780 = vmatpush1.msra.mxu0 0.0
    %4781 = vmatprep.subr.mxu0 0.0
    %4782 = vmatpush1.msra.mxu0 0.0
    %4783 = vmatprep.subr.mxu0 0.0
    %4784 = vmatpush1.msra.mxu0 0.0
    %4785 = vmatprep.subr.mxu0 0.0
    %4786 = vmatpush1.msra.mxu0 0.0
    %4787 = vmatprep.subr.mxu0 0.0
    %4788 = vmatpush1.msra.mxu0 0.0
    %4789 = vmatprep.subr.mxu0 0.0
    %4790 = vmatpush1.msra.mxu0 0.0
    %4791 = vmatprep.subr.mxu0 0.0
    %4792 = vmatpush1.msra.mxu0 0.0
    %4793 = vmatprep.subr.mxu0 0.0
    %4794 = vmatpush1.msra.mxu0 0.0
    %4795 = vmatprep.subr.mxu0 0.0
    %4796 = vmatpush1.msra.mxu0 0.0
    %4797 = vmatprep.mubr.f32.mxu0 0.0
    %4798 = vmatmul.mubr.f32.gmra.mrb[0].mxu0 %v4648
    %v4799 = vpop.f32.mrb[0].mxu0
    %v4800 = vadd.f32 0.0, %v4799
    %v4801 = vpop.f32.mrb[0].mxu0
    %v4802 = vadd.f32 0.0, %v4801
    %4803 = vdwg.mxu0
    %v4804 = vadd.f32 %v4512, %v4729
    %v4805 = vadd.f32 %v4514, %v4731
    %v4806 = vadd.f32 %v4583, %v4800
    %v4807 = vadd.f32 %v4585, %v4802
    %v4808 = vld [vmem:[#allocation17] sm:$0xff]
    %v4809 = vld [vmem:[#allocation17 + $0x8] sm:$0xff]
    %v4810 = vld [vmem:[#allocation17 + $0x10] sm:$0xff]
    %v4811 = vld [vmem:[#allocation17 + $0x18] sm:$0xff]
    %v4812 = vld [vmem:[#allocation17 + $0x20] sm:$0xff]
    %v4813 = vld [vmem:[#allocation17 + $0x28] sm:$0xff]
    %v4814 = vld [vmem:[#allocation17 + $0x30] sm:$0x33]
    %v4815 = vld [vmem:[#allocation17 + $0x38] sm:$0x33]
    %v4816 = vunpack.c.l.bf16 %v4808
    %v4817 = vunpack.c.h.bf16 %v4808
    %v4818 = vunpack.c.l.bf16 %v4809
    %v4819 = vunpack.c.h.bf16 %v4809
    %v4820 = vunpack.c.l.bf16 %v4810
    %v4821 = vunpack.c.h.bf16 %v4810
    %v4822 = vunpack.c.l.bf16 %v4811
    %v4823 = vunpack.c.h.bf16 %v4811
    %v4824 = vunpack.c.l.bf16 %v4812
    %v4825 = vunpack.c.h.bf16 %v4812
    %v4826 = vunpack.c.l.bf16 %v4813
    %v4827 = vunpack.c.h.bf16 %v4813
    %v4828 = vunpack.c.l.bf16 %v4814
    %v4829 = vunpack.c.h.bf16 %v4814
    %v4830 = vunpack.c.l.bf16 %v4815
    %v4831 = vunpack.c.h.bf16 %v4815
    %vm4832 = vcmask 220160
    %v4834 = vsel %vm4832, %v282, 0
    %vm4836 = vcmask 1042432
    %v4838 = vsel %vm4836, %v4828, 0
    %v4841 = vsel %vm4836, %v4829, 0
    %v4844 = vsel %vm4836, %v4830, 0
    %v4847 = vsel %vm4836, %v4831, 0
    %4849 = vmatprep.subr.mxu0 %v4817
    %4850 = vmatpush1.msra.mxu0 %v4816
    %4851 = vmatprep.subr.mxu0 %v4821
    %4852 = vmatpush1.msra.mxu0 %v4820
    %4853 = vmatprep.subr.mxu0 %v4825
    %4854 = vmatpush1.msra.mxu0 %v4824
    %4855 = vmatprep.subr.mxu0 %v4841
    %4856 = vmatpush1.msra.mxu0 %v4838
    %4857 = vmatprep.subr.mxu0 0.0
    %4858 = vmatpush1.msra.mxu0 0.0
    %4859 = vmatprep.subr.mxu0 0.0
    %4860 = vmatpush1.msra.mxu0 0.0
    %4861 = vmatprep.subr.mxu0 0.0
    %4862 = vmatpush1.msra.mxu0 0.0
    %4863 = vmatprep.subr.mxu0 0.0
    %4864 = vmatpush1.msra.mxu0 0.0
    %4865 = vmatprep.subr.mxu0 0.0
    %4866 = vmatpush1.msra.mxu0 0.0
    %4867 = vmatprep.subr.mxu0 0.0
    %4868 = vmatpush1.msra.mxu0 0.0
    %4869 = vmatprep.subr.mxu0 0.0
    %4870 = vmatpush1.msra.mxu0 0.0
    %4871 = vmatprep.subr.mxu0 0.0
    %4872 = vmatpush1.msra.mxu0 0.0
    %4873 = vmatprep.subr.mxu0 0.0
    %4874 = vmatpush1.msra.mxu0 0.0
    %4875 = vmatprep.subr.mxu0 0.0
    %4876 = vmatpush1.msra.mxu0 0.0
    %4877 = vmatprep.subr.mxu0 0.0
    %4878 = vmatpush1.msra.mxu0 0.0
    %4879 = vmatprep.subr.mxu0 0.0
    %4880 = vmatpush1.msra.mxu0 0.0
    %4881 = vmatprep.subr.mxu0 0.0
    %4882 = vmatpush1.msra.mxu0 0.0
    %4883 = vmatprep.subr.mxu0 0.0
    %4884 = vmatpush1.msra.mxu0 0.0
    %4885 = vmatprep.subr.mxu0 0.0
    %4886 = vmatpush1.msra.mxu0 0.0
    %4887 = vmatprep.subr.mxu0 0.0
    %4888 = vmatpush1.msra.mxu0 0.0
    %4889 = vmatprep.subr.mxu0 0.0
    %4890 = vmatpush1.msra.mxu0 0.0
    %4891 = vmatprep.subr.mxu0 0.0
    %4892 = vmatpush1.msra.mxu0 0.0
    %4893 = vmatprep.subr.mxu0 0.0
    %4894 = vmatpush1.msra.mxu0 0.0
    %4895 = vmatprep.subr.mxu0 0.0
    %4896 = vmatpush1.msra.mxu0 0.0
    %4897 = vmatprep.subr.mxu0 0.0
    %4898 = vmatpush1.msra.mxu0 0.0
    %4899 = vmatprep.subr.mxu0 0.0
    %4900 = vmatpush1.msra.mxu0 0.0
    %4901 = vmatprep.subr.mxu0 0.0
    %4902 = vmatpush1.msra.mxu0 0.0
    %4903 = vmatprep.subr.mxu0 0.0
    %4904 = vmatpush1.msra.mxu0 0.0
    %4905 = vmatprep.subr.mxu0 0.0
    %4906 = vmatpush1.msra.mxu0 0.0
    %4907 = vmatprep.subr.mxu0 0.0
    %4908 = vmatpush1.msra.mxu0 0.0
    %4909 = vmatprep.subr.mxu0 0.0
    %4910 = vmatpush1.msra.mxu0 0.0
    %4911 = vmatprep.subr.mxu0 0.0
    %4912 = vmatpush1.msra.mxu0 0.0
    %4913 = vmatprep.mubr.f32.mxu0 0.0
    %4914 = vmatmul.mubr.f32.gmra.mrb[0].mxu0 %v4834
    %v4915 = vpop.f32.mrb[0].mxu0
    %v4916 = vadd.f32 0.0, %v4915
    %v4917 = vpop.f32.mrb[0].mxu0
    %v4918 = vadd.f32 0.0, %v4917
    %4919 = vdwg.mxu0
    %4920 = vmatprep.subr.mxu0 %v4819
    %4921 = vmatpush1.msra.mxu0 %v4818
    %4922 = vmatprep.subr.mxu0 %v4823
    %4923 = vmatpush1.msra.mxu0 %v4822
    %4924 = vmatprep.subr.mxu0 %v4827
    %4925 = vmatpush1.msra.mxu0 %v4826
    %4926 = vmatprep.subr.mxu0 %v4847
    %4927 = vmatpush1.msra.mxu0 %v4844
    %4928 = vmatprep.subr.mxu0 0.0
    %4929 = vmatpush1.msra.mxu0 0.0
    %4930 = vmatprep.subr.mxu0 0.0
    %4931 = vmatpush1.msra.mxu0 0.0
    %4932 = vmatprep.subr.mxu0 0.0
    %4933 = vmatpush1.msra.mxu0 0.0
    %4934 = vmatprep.subr.mxu0 0.0
    %4935 = vmatpush1.msra.mxu0 0.0
    %4936 = vmatprep.subr.mxu0 0.0
    %4937 = vmatpush1.msra.mxu0 0.0
    %4938 = vmatprep.subr.mxu0 0.0
    %4939 = vmatpush1.msra.mxu0 0.0
    %4940 = vmatprep.subr.mxu0 0.0
    %4941 = vmatpush1.msra.mxu0 0.0
    %4942 = vmatprep.subr.mxu0 0.0
    %4943 = vmatpush1.msra.mxu0 0.0
    %4944 = vmatprep.subr.mxu0 0.0
    %4945 = vmatpush1.msra.mxu0 0.0
    %4946 = vmatprep.subr.mxu0 0.0
    %4947 = vmatpush1.msra.mxu0 0.0
    %4948 = vmatprep.subr.mxu0 0.0
    %4949 = vmatpush1.msra.mxu0 0.0
    %4950 = vmatprep.subr.mxu0 0.0
    %4951 = vmatpush1.msra.mxu0 0.0
    %4952 = vmatprep.subr.mxu0 0.0
    %4953 = vmatpush1.msra.mxu0 0.0
    %4954 = vmatprep.subr.mxu0 0.0
    %4955 = vmatpush1.msra.mxu0 0.0
    %4956 = vmatprep.subr.mxu0 0.0
    %4957 = vmatpush1.msra.mxu0 0.0
    %4958 = vmatprep.subr.mxu0 0.0
    %4959 = vmatpush1.msra.mxu0 0.0
    %4960 = vmatprep.subr.mxu0 0.0
    %4961 = vmatpush1.msra.mxu0 0.0
    %4962 = vmatprep.subr.mxu0 0.0
    %4963 = vmatpush1.msra.mxu0 0.0
    %4964 = vmatprep.subr.mxu0 0.0
    %4965 = vmatpush1.msra.mxu0 0.0
    %4966 = vmatprep.subr.mxu0 0.0
    %4967 = vmatpush1.msra.mxu0 0.0
    %4968 = vmatprep.subr.mxu0 0.0
    %4969 = vmatpush1.msra.mxu0 0.0
    %4970 = vmatprep.subr.mxu0 0.0
    %4971 = vmatpush1.msra.mxu0 0.0
    %4972 = vmatprep.subr.mxu0 0.0
    %4973 = vmatpush1.msra.mxu0 0.0
    %4974 = vmatprep.subr.mxu0 0.0
    %4975 = vmatpush1.msra.mxu0 0.0
    %4976 = vmatprep.subr.mxu0 0.0
    %4977 = vmatpush1.msra.mxu0 0.0
    %4978 = vmatprep.subr.mxu0 0.0
    %4979 = vmatpush1.msra.mxu0 0.0
    %4980 = vmatprep.subr.mxu0 0.0
    %4981 = vmatpush1.msra.mxu0 0.0
    %4982 = vmatprep.subr.mxu0 0.0
    %4983 = vmatpush1.msra.mxu0 0.0
    %4984 = vmatprep.mubr.f32.mxu0 0.0
    %4985 = vmatmul.mubr.f32.gmra.mrb[0].mxu0 %v4834
    %v4986 = vpop.f32.mrb[0].mxu0
    %v4987 = vadd.f32 0.0, %v4986
    %v4988 = vpop.f32.mrb[0].mxu0
    %v4989 = vadd.f32 0.0, %v4988
    %4990 = vdwg.mxu0
    %v4991 = vadd.f32 %v4804, %v4916
    %v4992 = vadd.f32 %v4805, %v4918
    %v4993 = vadd.f32 %v4806, %v4987
    %v4994 = vadd.f32 %v4807, %v4989
    %v4995 = vld [vmem:[%s53] sm:$0xf]
    %v4997 = vlaneseq
    %v4998 = vshrl.u32 %v4997, 7
    %v4999 = vsub.s32 0, %v4998
    %v5000 = vrot.slane %v4995, %v4999
    %v5001 = vlaneseq
    %v5002 = vshrl.u32 %v5001, 7
    %v5003 = vsub.s32 1, %v5002
    %v5004 = vrot.slane %v4995, %v5003
    %v5005 = vlaneseq
    %v5006 = vshrl.u32 %v5005, 7
    %v5007 = vsub.s32 2, %v5006
    %v5008 = vrot.slane %v4995, %v5007
    %v5009 = vlaneseq
    %v5010 = vshrl.u32 %v5009, 7
    %v5011 = vsub.s32 3, %v5010
    %v5012 = vrot.slane %v4995, %v5011
    %v5017 = vadd.f32 %v4991, %v5000
    %v5018 = vadd.f32 %v4992, %v5004
    %v5019 = vadd.f32 %v4993, %v5008
    %v5020 = vadd.f32 %v4994, %v5012
    %v5021 = vmax.f32 %v5017, 0.0
    %v5022 = vmax.f32 %v5018, 0.0
    %v5023 = vmax.f32 %v5019, 0.0
    %v5024 = vmax.f32 %v5020, 0.0
    %v5025 = vld [vmem:[%s55] sm:$0xff]
    %v5026 = vld [vmem:[%s55 + $0x8] sm:$0xff]
    %v5027 = vld [vmem:[%s55 + $0x10] sm:$0xff]
    %v5028 = vld [vmem:[%s55 + $0x18] sm:$0xff]
    %v5029 = vld [vmem:[%s55 + $0x20] sm:$0xff]
    %v5030 = vld [vmem:[%s55 + $0x28] sm:$0xff]
    %v5031 = vld [vmem:[%s55 + $0x30] sm:$0xff]
    %v5032 = vld [vmem:[%s55 + $0x38] sm:$0xff]
    %v5033 = vld [vmem:[%s55 + $0x40] sm:$0xff]
    %v5034 = vld [vmem:[%s55 + $0x48] sm:$0xff]
    %v5035 = vld [vmem:[%s55 + $0x50] sm:$0xff]
    %v5036 = vld [vmem:[%s55 + $0x58] sm:$0xff]
    %v5037 = vld [vmem:[%s55 + $0x60] sm:$0xff]
    %v5038 = vld [vmem:[%s55 + $0x68] sm:$0xff]
    %v5039 = vld [vmem:[%s55 + $0x70] sm:$0xff]
    %v5040 = vld [vmem:[%s55 + $0x78] sm:$0xff]
    %v5041 = vld [vmem:[%s55 + $0x80] sm:$0xff]
    %v5042 = vld [vmem:[%s55 + $0x88] sm:$0xff]
    %v5043 = vld [vmem:[%s55 + $0x90] sm:$0xff]
    %v5044 = vld [vmem:[%s55 + $0x98] sm:$0xff]
    %v5045 = vld [vmem:[%s55 + $0xa0] sm:$0xff]
    %v5046 = vld [vmem:[%s55 + $0xa8] sm:$0xff]
    %v5047 = vld [vmem:[%s55 + $0xb0] sm:$0xff]
    %v5048 = vld [vmem:[%s55 + $0xb8] sm:$0xff]
    %v5049 = vld [vmem:[%s55 + $0xc0] sm:$0xff]
    %v5050 = vld [vmem:[%s55 + $0xc8] sm:$0xff]
    %v5051 = vld [vmem:[%s55 + $0xd0] sm:$0xff]
    %v5052 = vld [vmem:[%s55 + $0xd8] sm:$0xff]
    %v5053 = vld [vmem:[%s55 + $0xe0] sm:$0xff]
    %v5054 = vld [vmem:[%s55 + $0xe8] sm:$0xff]
    %v5055 = vld [vmem:[%s55 + $0xf0] sm:$0xff]
    %v5056 = vld [vmem:[%s55 + $0xf8] sm:$0xff]
    %v5057 = vld [vmem:[%s55 + $0x100] sm:$0xff]
    %v5058 = vld [vmem:[%s55 + $0x108] sm:$0xff]
    %v5059 = vld [vmem:[%s55 + $0x110] sm:$0xff]
    %v5060 = vld [vmem:[%s55 + $0x118] sm:$0xff]
    %v5061 = vld [vmem:[%s55 + $0x120] sm:$0xff]
    %v5062 = vld [vmem:[%s55 + $0x128] sm:$0xff]
    %v5063 = vld [vmem:[%s55 + $0x130] sm:$0xff]
    %v5064 = vld [vmem:[%s55 + $0x138] sm:$0xff]
    %v5065 = vld [vmem:[%s55 + $0x140] sm:$0xff]
    %v5066 = vld [vmem:[%s55 + $0x148] sm:$0xff]
    %v5067 = vld [vmem:[%s55 + $0x150] sm:$0xff]
    %v5068 = vld [vmem:[%s55 + $0x158] sm:$0xff]
    %v5069 = vld [vmem:[%s55 + $0x160] sm:$0xff]
    %v5070 = vld [vmem:[%s55 + $0x168] sm:$0xff]
    %v5071 = vld [vmem:[%s55 + $0x170] sm:$0xff]
    %v5072 = vld [vmem:[%s55 + $0x178] sm:$0xff]
    %v5073 = vld [vmem:[%s55 + $0x180] sm:$0xff]
    %v5074 = vld [vmem:[%s55 + $0x188] sm:$0xff]
    %v5075 = vld [vmem:[%s55 + $0x190] sm:$0xff]
    %v5076 = vld [vmem:[%s55 + $0x198] sm:$0xff]
    %v5077 = vld [vmem:[%s55 + $0x1a0] sm:$0xff]
    %v5078 = vld [vmem:[%s55 + $0x1a8] sm:$0xff]
    %v5079 = vld [vmem:[%s55 + $0x1b0] sm:$0xff]
    %v5080 = vld [vmem:[%s55 + $0x1b8] sm:$0xff]
    %v5081 = vld [vmem:[%s55 + $0x1c0] sm:$0xff]
    %v5082 = vld [vmem:[%s55 + $0x1c8] sm:$0xff]
    %v5083 = vld [vmem:[%s55 + $0x1d0] sm:$0xff]
    %v5084 = vld [vmem:[%s55 + $0x1d8] sm:$0xff]
    %v5085 = vld [vmem:[%s55 + $0x1e0] sm:$0xff]
    %v5086 = vld [vmem:[%s55 + $0x1e8] sm:$0xff]
    %v5087 = vld [vmem:[%s55 + $0x1f0] sm:$0xff]
    %v5088 = vld [vmem:[%s55 + $0x1f8] sm:$0xff]
    %v5089 = vld [vmem:[%s55 + $0x200] sm:$0xff]
    %v5090 = vld [vmem:[%s55 + $0x208] sm:$0xff]
    %v5091 = vld [vmem:[%s55 + $0x210] sm:$0xff]
    %v5092 = vld [vmem:[%s55 + $0x218] sm:$0xff]
    %v5093 = vld [vmem:[%s55 + $0x220] sm:$0xff]
    %v5094 = vld [vmem:[%s55 + $0x228] sm:$0xff]
    %v5095 = vld [vmem:[%s55 + $0x230] sm:$0xff]
    %v5096 = vld [vmem:[%s55 + $0x238] sm:$0xff]
    %v5097 = vld [vmem:[%s55 + $0x240] sm:$0xff]
    %v5098 = vld [vmem:[%s55 + $0x248] sm:$0xff]
    %v5099 = vld [vmem:[%s55 + $0x250] sm:$0xff]
    %v5100 = vld [vmem:[%s55 + $0x258] sm:$0xff]
    %v5101 = vld [vmem:[%s55 + $0x260] sm:$0xff]
    %v5102 = vld [vmem:[%s55 + $0x268] sm:$0xff]
    %v5103 = vld [vmem:[%s55 + $0x270] sm:$0xff]
    %v5104 = vld [vmem:[%s55 + $0x278] sm:$0xff]
    %v5105 = vld [vmem:[%s55 + $0x280] sm:$0xff]
    %v5106 = vld [vmem:[%s55 + $0x288] sm:$0xff]
    %v5107 = vld [vmem:[%s55 + $0x290] sm:$0xff]
    %v5108 = vld [vmem:[%s55 + $0x298] sm:$0xff]
    %v5109 = vld [vmem:[%s55 + $0x2a0] sm:$0xff]
    %v5110 = vld [vmem:[%s55 + $0x2a8] sm:$0xff]
    %v5111 = vld [vmem:[%s55 + $0x2b0] sm:$0xff]
    %v5112 = vld [vmem:[%s55 + $0x2b8] sm:$0xff]
    %v5113 = vld [vmem:[%s55 + $0x2c0] sm:$0xff]
    %v5114 = vld [vmem:[%s55 + $0x2c8] sm:$0xff]
    %v5115 = vld [vmem:[%s55 + $0x2d0] sm:$0xff]
    %v5116 = vld [vmem:[%s55 + $0x2d8] sm:$0xff]
    %v5117 = vld [vmem:[%s55 + $0x2e0] sm:$0xff]
    %v5118 = vld [vmem:[%s55 + $0x2e8] sm:$0xff]
    %v5119 = vld [vmem:[%s55 + $0x2f0] sm:$0xff]
    %v5120 = vld [vmem:[%s55 + $0x2f8] sm:$0xff]
    %v5121 = vld [vmem:[%s55 + $0x300] sm:$0xff]
    %v5122 = vld [vmem:[%s55 + $0x308] sm:$0xff]
    %v5123 = vld [vmem:[%s55 + $0x310] sm:$0xff]
    %v5124 = vld [vmem:[%s55 + $0x318] sm:$0xff]
    %v5125 = vld [vmem:[%s55 + $0x320] sm:$0xff]
    %v5126 = vld [vmem:[%s55 + $0x328] sm:$0xff]
    %v5127 = vld [vmem:[%s55 + $0x330] sm:$0xff]
    %v5128 = vld [vmem:[%s55 + $0x338] sm:$0xff]
    %v5129 = vld [vmem:[%s55 + $0x340] sm:$0xff]
    %v5130 = vld [vmem:[%s55 + $0x348] sm:$0xff]
    %v5131 = vld [vmem:[%s55 + $0x350] sm:$0xff]
    %v5132 = vld [vmem:[%s55 + $0x358] sm:$0xff]
    %v5133 = vld [vmem:[%s55 + $0x360] sm:$0xff]
    %v5134 = vld [vmem:[%s55 + $0x368] sm:$0xff]
    %v5135 = vld [vmem:[%s55 + $0x370] sm:$0xff]
    %v5136 = vld [vmem:[%s55 + $0x378] sm:$0xff]
    %v5137 = vld [vmem:[%s55 + $0x380] sm:$0xff]
    %v5138 = vld [vmem:[%s55 + $0x388] sm:$0xff]
    %v5139 = vld [vmem:[%s55 + $0x390] sm:$0xff]
    %v5140 = vld [vmem:[%s55 + $0x398] sm:$0xff]
    %v5141 = vld [vmem:[%s55 + $0x3a0] sm:$0xff]
    %v5142 = vld [vmem:[%s55 + $0x3a8] sm:$0xff]
    %v5143 = vld [vmem:[%s55 + $0x3b0] sm:$0xff]
    %v5144 = vld [vmem:[%s55 + $0x3b8] sm:$0xff]
    %v5145 = vld [vmem:[%s55 + $0x3c0] sm:$0xff]
    %v5146 = vld [vmem:[%s55 + $0x3c8] sm:$0xff]
    %v5147 = vld [vmem:[%s55 + $0x3d0] sm:$0xff]
    %v5148 = vld [vmem:[%s55 + $0x3d8] sm:$0xff]
    %v5149 = vld [vmem:[%s55 + $0x3e0] sm:$0x33]
    %v5150 = vld [vmem:[%s55 + $0x3e8] sm:$0x33]
    %v5151 = vunpack.c.l.bf16 %v5025
    %v5152 = vunpack.c.h.bf16 %v5025
    %v5153 = vunpack.c.l.bf16 %v5026
    %v5154 = vunpack.c.h.bf16 %v5026
    %v5155 = vunpack.c.l.bf16 %v5027
    %v5156 = vunpack.c.h.bf16 %v5027
    %v5157 = vunpack.c.l.bf16 %v5028
    %v5158 = vunpack.c.h.bf16 %v5028
    %v5159 = vunpack.c.l.bf16 %v5029
    %v5160 = vunpack.c.h.bf16 %v5029
    %v5161 = vunpack.c.l.bf16 %v5030
    %v5162 = vunpack.c.h.bf16 %v5030
    %v5163 = vunpack.c.l.bf16 %v5031
    %v5164 = vunpack.c.h.bf16 %v5031
    %v5165 = vunpack.c.l.bf16 %v5032
    %v5166 = vunpack.c.h.bf16 %v5032
    %v5167 = vunpack.c.l.bf16 %v5033
    %v5168 = vunpack.c.h.bf16 %v5033
    %v5169 = vunpack.c.l.bf16 %v5034
    %v5170 = vunpack.c.h.bf16 %v5034
    %v5171 = vunpack.c.l.bf16 %v5035
    %v5172 = vunpack.c.h.bf16 %v5035
    %v5173 = vunpack.c.l.bf16 %v5036
    %v5174 = vunpack.c.h.bf16 %v5036
    %v5175 = vunpack.c.l.bf16 %v5037
    %v5176 = vunpack.c.h.bf16 %v5037
    %v5177 = vunpack.c.l.bf16 %v5038
    %v5178 = vunpack.c.h.bf16 %v5038
    %v5179 = vunpack.c.l.bf16 %v5039
    %v5180 = vunpack.c.h.bf16 %v5039
    %v5181 = vunpack.c.l.bf16 %v5040
    %v5182 = vunpack.c.h.bf16 %v5040
    %v5183 = vunpack.c.l.bf16 %v5041
    %v5184 = vunpack.c.h.bf16 %v5041
    %v5185 = vunpack.c.l.bf16 %v5042
    %v5186 = vunpack.c.h.bf16 %v5042
    %v5187 = vunpack.c.l.bf16 %v5043
    %v5188 = vunpack.c.h.bf16 %v5043
    %v5189 = vunpack.c.l.bf16 %v5044
    %v5190 = vunpack.c.h.bf16 %v5044
    %v5191 = vunpack.c.l.bf16 %v5045
    %v5192 = vunpack.c.h.bf16 %v5045
    %v5193 = vunpack.c.l.bf16 %v5046
    %v5194 = vunpack.c.h.bf16 %v5046
    %v5195 = vunpack.c.l.bf16 %v5047
    %v5196 = vunpack.c.h.bf16 %v5047
    %v5197 = vunpack.c.l.bf16 %v5048
    %v5198 = vunpack.c.h.bf16 %v5048
    %v5199 = vunpack.c.l.bf16 %v5049
    %v5200 = vunpack.c.h.bf16 %v5049
    %v5201 = vunpack.c.l.bf16 %v5050
    %v5202 = vunpack.c.h.bf16 %v5050
    %v5203 = vunpack.c.l.bf16 %v5051
    %v5204 = vunpack.c.h.bf16 %v5051
    %v5205 = vunpack.c.l.bf16 %v5052
    %v5206 = vunpack.c.h.bf16 %v5052
    %v5207 = vunpack.c.l.bf16 %v5053
    %v5208 = vunpack.c.h.bf16 %v5053
    %v5209 = vunpack.c.l.bf16 %v5054
    %v5210 = vunpack.c.h.bf16 %v5054
    %v5211 = vunpack.c.l.bf16 %v5055
    %v5212 = vunpack.c.h.bf16 %v5055
    %v5213 = vunpack.c.l.bf16 %v5056
    %v5214 = vunpack.c.h.bf16 %v5056
    %v5215 = vunpack.c.l.bf16 %v5057
    %v5216 = vunpack.c.h.bf16 %v5057
    %v5217 = vunpack.c.l.bf16 %v5058
    %v5218 = vunpack.c.h.bf16 %v5058
    %v5219 = vunpack.c.l.bf16 %v5059
    %v5220 = vunpack.c.h.bf16 %v5059
    %v5221 = vunpack.c.l.bf16 %v5060
    %v5222 = vunpack.c.h.bf16 %v5060
    %v5223 = vunpack.c.l.bf16 %v5061
    %v5224 = vunpack.c.h.bf16 %v5061
    %v5225 = vunpack.c.l.bf16 %v5062
    %v5226 = vunpack.c.h.bf16 %v5062
    %v5227 = vunpack.c.l.bf16 %v5063
    %v5228 = vunpack.c.h.bf16 %v5063
    %v5229 = vunpack.c.l.bf16 %v5064
    %v5230 = vunpack.c.h.bf16 %v5064
    %v5231 = vunpack.c.l.bf16 %v5065
    %v5232 = vunpack.c.h.bf16 %v5065
    %v5233 = vunpack.c.l.bf16 %v5066
    %v5234 = vunpack.c.h.bf16 %v5066
    %v5235 = vunpack.c.l.bf16 %v5067
    %v5236 = vunpack.c.h.bf16 %v5067
    %v5237 = vunpack.c.l.bf16 %v5068
    %v5238 = vunpack.c.h.bf16 %v5068
    %v5239 = vunpack.c.l.bf16 %v5069
    %v5240 = vunpack.c.h.bf16 %v5069
    %v5241 = vunpack.c.l.bf16 %v5070
    %v5242 = vunpack.c.h.bf16 %v5070
    %v5243 = vunpack.c.l.bf16 %v5071
    %v5244 = vunpack.c.h.bf16 %v5071
    %v5245 = vunpack.c.l.bf16 %v5072
    %v5246 = vunpack.c.h.bf16 %v5072
    %v5247 = vunpack.c.l.bf16 %v5073
    %v5248 = vunpack.c.h.bf16 %v5073
    %v5249 = vunpack.c.l.bf16 %v5074
    %v5250 = vunpack.c.h.bf16 %v5074
    %v5251 = vunpack.c.l.bf16 %v5075
    %v5252 = vunpack.c.h.bf16 %v5075
    %v5253 = vunpack.c.l.bf16 %v5076
    %v5254 = vunpack.c.h.bf16 %v5076
    %v5255 = vunpack.c.l.bf16 %v5077
    %v5256 = vunpack.c.h.bf16 %v5077
    %v5257 = vunpack.c.l.bf16 %v5078
    %v5258 = vunpack.c.h.bf16 %v5078
    %v5259 = vunpack.c.l.bf16 %v5079
    %v5260 = vunpack.c.h.bf16 %v5079
    %v5261 = vunpack.c.l.bf16 %v5080
    %v5262 = vunpack.c.h.bf16 %v5080
    %v5263 = vunpack.c.l.bf16 %v5081
    %v5264 = vunpack.c.h.bf16 %v5081
    %v5265 = vunpack.c.l.bf16 %v5082
    %v5266 = vunpack.c.h.bf16 %v5082
    %v5267 = vunpack.c.l.bf16 %v5083
    %v5268 = vunpack.c.h.bf16 %v5083
    %v5269 = vunpack.c.l.bf16 %v5084
    %v5270 = vunpack.c.h.bf16 %v5084
    %v5271 = vunpack.c.l.bf16 %v5085
    %v5272 = vunpack.c.h.bf16 %v5085
    %v5273 = vunpack.c.l.bf16 %v5086
    %v5274 = vunpack.c.h.bf16 %v5086
    %v5275 = vunpack.c.l.bf16 %v5087
    %v5276 = vunpack.c.h.bf16 %v5087
    %v5277 = vunpack.c.l.bf16 %v5088
    %v5278 = vunpack.c.h.bf16 %v5088
    %v5279 = vunpack.c.l.bf16 %v5089
    %v5280 = vunpack.c.h.bf16 %v5089
    %v5281 = vunpack.c.l.bf16 %v5090
    %v5282 = vunpack.c.h.bf16 %v5090
    %v5283 = vunpack.c.l.bf16 %v5091
    %v5284 = vunpack.c.h.bf16 %v5091
    %v5285 = vunpack.c.l.bf16 %v5092
    %v5286 = vunpack.c.h.bf16 %v5092
    %v5287 = vunpack.c.l.bf16 %v5093
    %v5288 = vunpack.c.h.bf16 %v5093
    %v5289 = vunpack.c.l.bf16 %v5094
    %v5290 = vunpack.c.h.bf16 %v5094
    %v5291 = vunpack.c.l.bf16 %v5095
    %v5292 = vunpack.c.h.bf16 %v5095
    %v5293 = vunpack.c.l.bf16 %v5096
    %v5294 = vunpack.c.h.bf16 %v5096
    %v5295 = vunpack.c.l.bf16 %v5097
    %v5296 = vunpack.c.h.bf16 %v5097
    %v5297 = vunpack.c.l.bf16 %v5098
    %v5298 = vunpack.c.h.bf16 %v5098
    %v5299 = vunpack.c.l.bf16 %v5099
    %v5300 = vunpack.c.h.bf16 %v5099
    %v5301 = vunpack.c.l.bf16 %v5100
    %v5302 = vunpack.c.h.bf16 %v5100
    %v5303 = vunpack.c.l.bf16 %v5101
    %v5304 = vunpack.c.h.bf16 %v5101
    %v5305 = vunpack.c.l.bf16 %v5102
    %v5306 = vunpack.c.h.bf16 %v5102
    %v5307 = vunpack.c.l.bf16 %v5103
    %v5308 = vunpack.c.h.bf16 %v5103
    %v5309 = vunpack.c.l.bf16 %v5104
    %v5310 = vunpack.c.h.bf16 %v5104
    %v5311 = vunpack.c.l.bf16 %v5105
    %v5312 = vunpack.c.h.bf16 %v5105
    %v5313 = vunpack.c.l.bf16 %v5106
    %v5314 = vunpack.c.h.bf16 %v5106
    %v5315 = vunpack.c.l.bf16 %v5107
    %v5316 = vunpack.c.h.bf16 %v5107
    %v5317 = vunpack.c.l.bf16 %v5108
    %v5318 = vunpack.c.h.bf16 %v5108
    %v5319 = vunpack.c.l.bf16 %v5109
    %v5320 = vunpack.c.h.bf16 %v5109
    %v5321 = vunpack.c.l.bf16 %v5110
    %v5322 = vunpack.c.h.bf16 %v5110
    %v5323 = vunpack.c.l.bf16 %v5111
    %v5324 = vunpack.c.h.bf16 %v5111
    %v5325 = vunpack.c.l.bf16 %v5112
    %v5326 = vunpack.c.h.bf16 %v5112
    %v5327 = vunpack.c.l.bf16 %v5113
    %v5328 = vunpack.c.h.bf16 %v5113
    %v5329 = vunpack.c.l.bf16 %v5114
    %v5330 = vunpack.c.h.bf16 %v5114
    %v5331 = vunpack.c.l.bf16 %v5115
    %v5332 = vunpack.c.h.bf16 %v5115
    %v5333 = vunpack.c.l.bf16 %v5116
    %v5334 = vunpack.c.h.bf16 %v5116
    %v5335 = vunpack.c.l.bf16 %v5117
    %v5336 = vunpack.c.h.bf16 %v5117
    %v5337 = vunpack.c.l.bf16 %v5118
    %v5338 = vunpack.c.h.bf16 %v5118
    %v5339 = vunpack.c.l.bf16 %v5119
    %v5340 = vunpack.c.h.bf16 %v5119
    %v5341 = vunpack.c.l.bf16 %v5120
    %v5342 = vunpack.c.h.bf16 %v5120
    %v5343 = vunpack.c.l.bf16 %v5121
    %v5344 = vunpack.c.h.bf16 %v5121
    %v5345 = vunpack.c.l.bf16 %v5122
    %v5346 = vunpack.c.h.bf16 %v5122
    %v5347 = vunpack.c.l.bf16 %v5123
    %v5348 = vunpack.c.h.bf16 %v5123
    %v5349 = vunpack.c.l.bf16 %v5124
    %v5350 = vunpack.c.h.bf16 %v5124
    %v5351 = vunpack.c.l.bf16 %v5125
    %v5352 = vunpack.c.h.bf16 %v5125
    %v5353 = vunpack.c.l.bf16 %v5126
    %v5354 = vunpack.c.h.bf16 %v5126
    %v5355 = vunpack.c.l.bf16 %v5127
    %v5356 = vunpack.c.h.bf16 %v5127
    %v5357 = vunpack.c.l.bf16 %v5128
    %v5358 = vunpack.c.h.bf16 %v5128
    %v5359 = vunpack.c.l.bf16 %v5129
    %v5360 = vunpack.c.h.bf16 %v5129
    %v5361 = vunpack.c.l.bf16 %v5130
    %v5362 = vunpack.c.h.bf16 %v5130
    %v5363 = vunpack.c.l.bf16 %v5131
    %v5364 = vunpack.c.h.bf16 %v5131
    %v5365 = vunpack.c.l.bf16 %v5132
    %v5366 = vunpack.c.h.bf16 %v5132
    %v5367 = vunpack.c.l.bf16 %v5133
    %v5368 = vunpack.c.h.bf16 %v5133
    %v5369 = vunpack.c.l.bf16 %v5134
    %v5370 = vunpack.c.h.bf16 %v5134
    %v5371 = vunpack.c.l.bf16 %v5135
    %v5372 = vunpack.c.h.bf16 %v5135
    %v5373 = vunpack.c.l.bf16 %v5136
    %v5374 = vunpack.c.h.bf16 %v5136
    %v5375 = vunpack.c.l.bf16 %v5137
    %v5376 = vunpack.c.h.bf16 %v5137
    %v5377 = vunpack.c.l.bf16 %v5138
    %v5378 = vunpack.c.h.bf16 %v5138
    %v5379 = vunpack.c.l.bf16 %v5139
    %v5380 = vunpack.c.h.bf16 %v5139
    %v5381 = vunpack.c.l.bf16 %v5140
    %v5382 = vunpack.c.h.bf16 %v5140
    %v5383 = vunpack.c.l.bf16 %v5141
    %v5384 = vunpack.c.h.bf16 %v5141
    %v5385 = vunpack.c.l.bf16 %v5142
    %v5386 = vunpack.c.h.bf16 %v5142
    %v5387 = vunpack.c.l.bf16 %v5143
    %v5388 = vunpack.c.h.bf16 %v5143
    %v5389 = vunpack.c.l.bf16 %v5144
    %v5390 = vunpack.c.h.bf16 %v5144
    %v5391 = vunpack.c.l.bf16 %v5145
    %v5392 = vunpack.c.h.bf16 %v5145
    %v5393 = vunpack.c.l.bf16 %v5146
    %v5394 = vunpack.c.h.bf16 %v5146
    %v5395 = vunpack.c.l.bf16 %v5147
    %v5396 = vunpack.c.h.bf16 %v5147
    %v5397 = vunpack.c.l.bf16 %v5148
    %v5398 = vunpack.c.h.bf16 %v5148
    %v5399 = vunpack.c.l.bf16 %v5149
    %v5400 = vunpack.c.h.bf16 %v5149
    %v5401 = vunpack.c.l.bf16 %v5150
    %v5402 = vunpack.c.h.bf16 %v5150
    %v5403 = vld [vmem:[%s57] sm:$0xf]
    %v5405 = vlaneseq
    %v5406 = vshrl.u32 %v5405, 7
    %v5407 = vsub.s32 0, %v5406
    %v5408 = vrot.slane %v5403, %v5407
    %v5409 = vlaneseq
    %v5410 = vshrl.u32 %v5409, 7
    %v5411 = vsub.s32 1, %v5410
    %v5412 = vrot.slane %v5403, %v5411
    %v5413 = vlaneseq
    %v5414 = vshrl.u32 %v5413, 7
    %v5415 = vsub.s32 2, %v5414
    %v5416 = vrot.slane %v5403, %v5415
    %v5417 = vlaneseq
    %v5418 = vshrl.u32 %v5417, 7
    %v5419 = vsub.s32 3, %v5418
    %v5420 = vrot.slane %v5403, %v5419
    %vm5425 = vcmask 949248
    %v5427 = vsel %vm5425, %v5024, 0
    %v5430 = vsel %vm1682, %v5399, 0
    %v5433 = vsel %vm1682, %v5400, 0
    %v5436 = vsel %vm1682, %v5401, 0
    %v5439 = vsel %vm1682, %v5402, 0
    %5441 = vmatprep.subr.mxu0 %v5152
    %5442 = vmatpush1.msra.mxu0 %v5151
    %5443 = vmatprep.subr.mxu0 %v5156
    %5444 = vmatpush1.msra.mxu0 %v5155
    %5445 = vmatprep.subr.mxu0 %v5160
    %5446 = vmatpush1.msra.mxu0 %v5159
    %5447 = vmatprep.subr.mxu0 %v5164
    %5448 = vmatpush1.msra.mxu0 %v5163
    %5449 = vmatprep.subr.mxu0 %v5168
    %5450 = vmatpush1.msra.mxu0 %v5167
    %5451 = vmatprep.subr.mxu0 %v5172
    %5452 = vmatpush1.msra.mxu0 %v5171
    %5453 = vmatprep.subr.mxu0 %v5176
    %5454 = vmatpush1.msra.mxu0 %v5175
    %5455 = vmatprep.subr.mxu0 %v5180
    %5456 = vmatpush1.msra.mxu0 %v5179
    %5457 = vmatprep.subr.mxu0 %v5184
    %5458 = vmatpush1.msra.mxu0 %v5183
    %5459 = vmatprep.subr.mxu0 %v5188
    %5460 = vmatpush1.msra.mxu0 %v5187
    %5461 = vmatprep.subr.mxu0 %v5192
    %5462 = vmatpush1.msra.mxu0 %v5191
    %5463 = vmatprep.subr.mxu0 %v5196
    %5464 = vmatpush1.msra.mxu0 %v5195
    %5465 = vmatprep.subr.mxu0 %v5200
    %5466 = vmatpush1.msra.mxu0 %v5199
    %5467 = vmatprep.subr.mxu0 %v5204
    %5468 = vmatpush1.msra.mxu0 %v5203
    %5469 = vmatprep.subr.mxu0 %v5208
    %5470 = vmatpush1.msra.mxu0 %v5207
    %5471 = vmatprep.subr.mxu0 %v5212
    %5472 = vmatpush1.msra.mxu0 %v5211
    %5473 = vmatprep.subr.mxu0 %v5216
    %5474 = vmatpush1.msra.mxu0 %v5215
    %5475 = vmatprep.subr.mxu0 %v5220
    %5476 = vmatpush1.msra.mxu0 %v5219
    %5477 = vmatprep.subr.mxu0 %v5224
    %5478 = vmatpush1.msra.mxu0 %v5223
    %5479 = vmatprep.subr.mxu0 %v5228
    %5480 = vmatpush1.msra.mxu0 %v5227
    %5481 = vmatprep.subr.mxu0 %v5232
    %5482 = vmatpush1.msra.mxu0 %v5231
    %5483 = vmatprep.subr.mxu0 %v5236
    %5484 = vmatpush1.msra.mxu0 %v5235
    %5485 = vmatprep.subr.mxu0 %v5240
    %5486 = vmatpush1.msra.mxu0 %v5239
    %5487 = vmatprep.subr.mxu0 %v5244
    %5488 = vmatpush1.msra.mxu0 %v5243
    %5489 = vmatprep.subr.mxu0 %v5248
    %5490 = vmatpush1.msra.mxu0 %v5247
    %5491 = vmatprep.subr.mxu0 %v5252
    %5492 = vmatpush1.msra.mxu0 %v5251
    %5493 = vmatprep.subr.mxu0 %v5256
    %5494 = vmatpush1.msra.mxu0 %v5255
    %5495 = vmatprep.subr.mxu0 %v5260
    %5496 = vmatpush1.msra.mxu0 %v5259
    %5497 = vmatprep.subr.mxu0 %v5264
    %5498 = vmatpush1.msra.mxu0 %v5263
    %5499 = vmatprep.subr.mxu0 %v5268
    %5500 = vmatpush1.msra.mxu0 %v5267
    %5501 = vmatprep.subr.mxu0 %v5272
    %5502 = vmatpush1.msra.mxu0 %v5271
    %5503 = vmatprep.subr.mxu0 %v5276
    %5504 = vmatpush1.msra.mxu0 %v5275
    %5505 = vmatprep.mubr.f32.mxu0 %v5022
    %5506 = vmatmul.mubr.f32.gmra.mrb[0].mxu0 %v5021
    %v5507 = vpop.f32.mrb[0].mxu0
    %v5508 = vadd.f32 %v5408, %v5507
    %v5509 = vpop.f32.mrb[0].mxu0
    %v5510 = vadd.f32 %v5412, %v5509
    %5511 = vdwg.mxu0
    %5512 = vmatprep.subr.mxu0 %v5280
    %5513 = vmatpush1.msra.mxu0 %v5279
    %5514 = vmatprep.subr.mxu0 %v5284
    %5515 = vmatpush1.msra.mxu0 %v5283
    %5516 = vmatprep.subr.mxu0 %v5288
    %5517 = vmatpush1.msra.mxu0 %v5287
    %5518 = vmatprep.subr.mxu0 %v5292
    %5519 = vmatpush1.msra.mxu0 %v5291
    %5520 = vmatprep.subr.mxu0 %v5296
    %5521 = vmatpush1.msra.mxu0 %v5295
    %5522 = vmatprep.subr.mxu0 %v5300
    %5523 = vmatpush1.msra.mxu0 %v5299
    %5524 = vmatprep.subr.mxu0 %v5304
    %5525 = vmatpush1.msra.mxu0 %v5303
    %5526 = vmatprep.subr.mxu0 %v5308
    %5527 = vmatpush1.msra.mxu0 %v5307
    %5528 = vmatprep.subr.mxu0 %v5312
    %5529 = vmatpush1.msra.mxu0 %v5311
    %5530 = vmatprep.subr.mxu0 %v5316
    %5531 = vmatpush1.msra.mxu0 %v5315
    %5532 = vmatprep.subr.mxu0 %v5320
    %5533 = vmatpush1.msra.mxu0 %v5319
    %5534 = vmatprep.subr.mxu0 %v5324
    %5535 = vmatpush1.msra.mxu0 %v5323
    %5536 = vmatprep.subr.mxu0 %v5328
    %5537 = vmatpush1.msra.mxu0 %v5327
    %5538 = vmatprep.subr.mxu0 %v5332
    %5539 = vmatpush1.msra.mxu0 %v5331
    %5540 = vmatprep.subr.mxu0 %v5336
    %5541 = vmatpush1.msra.mxu0 %v5335
    %5542 = vmatprep.subr.mxu0 %v5340
    %5543 = vmatpush1.msra.mxu0 %v5339
    %5544 = vmatprep.subr.mxu0 %v5344
    %5545 = vmatpush1.msra.mxu0 %v5343
    %5546 = vmatprep.subr.mxu0 %v5348
    %5547 = vmatpush1.msra.mxu0 %v5347
    %5548 = vmatprep.subr.mxu0 %v5352
    %5549 = vmatpush1.msra.mxu0 %v5351
    %5550 = vmatprep.subr.mxu0 %v5356
    %5551 = vmatpush1.msra.mxu0 %v5355
    %5552 = vmatprep.subr.mxu0 %v5360
    %5553 = vmatpush1.msra.mxu0 %v5359
    %5554 = vmatprep.subr.mxu0 %v5364
    %5555 = vmatpush1.msra.mxu0 %v5363
    %5556 = vmatprep.subr.mxu0 %v5368
    %5557 = vmatpush1.msra.mxu0 %v5367
    %5558 = vmatprep.subr.mxu0 %v5372
    %5559 = vmatpush1.msra.mxu0 %v5371
    %5560 = vmatprep.subr.mxu0 %v5376
    %5561 = vmatpush1.msra.mxu0 %v5375
    %5562 = vmatprep.subr.mxu0 %v5380
    %5563 = vmatpush1.msra.mxu0 %v5379
    %5564 = vmatprep.subr.mxu0 %v5384
    %5565 = vmatpush1.msra.mxu0 %v5383
    %5566 = vmatprep.subr.mxu0 %v5388
    %5567 = vmatpush1.msra.mxu0 %v5387
    %5568 = vmatprep.subr.mxu0 %v5392
    %5569 = vmatpush1.msra.mxu0 %v5391
    %5570 = vmatprep.subr.mxu0 %v5396
    %5571 = vmatpush1.msra.mxu0 %v5395
    %5572 = vmatprep.subr.mxu0 %v5433
    %5573 = vmatpush1.msra.mxu0 %v5430
    %5574 = vmatprep.subr.mxu0 0.0
    %5575 = vmatpush1.msra.mxu0 0.0
    %5576 = vmatprep.mubr.f32.mxu0 %v5427
    %5577 = vmatmul.mubr.f32.gmra.mrb[0].mxu0 %v5023
    %v5578 = vpop.f32.mrb[0].mxu0
    %v5579 = vadd.f32 %v5508, %v5578
    %v5580 = vpop.f32.mrb[0].mxu0
    %v5581 = vadd.f32 %v5510, %v5580
    %5582 = vdwg.mxu0
    %5583 = vmatprep.subr.mxu0 %v5154
    %5584 = vmatpush1.msra.mxu0 %v5153
    %5585 = vmatprep.subr.mxu0 %v5158
    %5586 = vmatpush1.msra.mxu0 %v5157
    %5587 = vmatprep.subr.mxu0 %v5162
    %5588 = vmatpush1.msra.mxu0 %v5161
    %5589 = vmatprep.subr.mxu0 %v5166
    %5590 = vmatpush1.msra.mxu0 %v5165
    %5591 = vmatprep.subr.mxu0 %v5170
    %5592 = vmatpush1.msra.mxu0 %v5169
    %5593 = vmatprep.subr.mxu0 %v5174
    %5594 = vmatpush1.msra.mxu0 %v5173
    %5595 = vmatprep.subr.mxu0 %v5178
    %5596 = vmatpush1.msra.mxu0 %v5177
    %5597 = vmatprep.subr.mxu0 %v5182
    %5598 = vmatpush1.msra.mxu0 %v5181
    %5599 = vmatprep.subr.mxu0 %v5186
    %5600 = vmatpush1.msra.mxu0 %v5185
    %5601 = vmatprep.subr.mxu0 %v5190
    %5602 = vmatpush1.msra.mxu0 %v5189
    %5603 = vmatprep.subr.mxu0 %v5194
    %5604 = vmatpush1.msra.mxu0 %v5193
    %5605 = vmatprep.subr.mxu0 %v5198
    %5606 = vmatpush1.msra.mxu0 %v5197
    %5607 = vmatprep.subr.mxu0 %v5202
    %5608 = vmatpush1.msra.mxu0 %v5201
    %5609 = vmatprep.subr.mxu0 %v5206
    %5610 = vmatpush1.msra.mxu0 %v5205
    %5611 = vmatprep.subr.mxu0 %v5210
    %5612 = vmatpush1.msra.mxu0 %v5209
    %5613 = vmatprep.subr.mxu0 %v5214
    %5614 = vmatpush1.msra.mxu0 %v5213
    %5615 = vmatprep.subr.mxu0 %v5218
    %5616 = vmatpush1.msra.mxu0 %v5217
    %5617 = vmatprep.subr.mxu0 %v5222
    %5618 = vmatpush1.msra.mxu0 %v5221
    %5619 = vmatprep.subr.mxu0 %v5226
    %5620 = vmatpush1.msra.mxu0 %v5225
    %5621 = vmatprep.subr.mxu0 %v5230
    %5622 = vmatpush1.msra.mxu0 %v5229
    %5623 = vmatprep.subr.mxu0 %v5234
    %5624 = vmatpush1.msra.mxu0 %v5233
    %5625 = vmatprep.subr.mxu0 %v5238
    %5626 = vmatpush1.msra.mxu0 %v5237
    %5627 = vmatprep.subr.mxu0 %v5242
    %5628 = vmatpush1.msra.mxu0 %v5241
    %5629 = vmatprep.subr.mxu0 %v5246
    %5630 = vmatpush1.msra.mxu0 %v5245
    %5631 = vmatprep.subr.mxu0 %v5250
    %5632 = vmatpush1.msra.mxu0 %v5249
    %5633 = vmatprep.subr.mxu0 %v5254
    %5634 = vmatpush1.msra.mxu0 %v5253
    %5635 = vmatprep.subr.mxu0 %v5258
    %5636 = vmatpush1.msra.mxu0 %v5257
    %5637 = vmatprep.subr.mxu0 %v5262
    %5638 = vmatpush1.msra.mxu0 %v5261
    %5639 = vmatprep.subr.mxu0 %v5266
    %5640 = vmatpush1.msra.mxu0 %v5265
    %5641 = vmatprep.subr.mxu0 %v5270
    %5642 = vmatpush1.msra.mxu0 %v5269
    %5643 = vmatprep.subr.mxu0 %v5274
    %5644 = vmatpush1.msra.mxu0 %v5273
    %5645 = vmatprep.subr.mxu0 %v5278
    %5646 = vmatpush1.msra.mxu0 %v5277
    %5647 = vmatprep.mubr.f32.mxu0 %v5022
    %5648 = vmatmul.mubr.f32.gmra.mrb[0].mxu0 %v5021
    %v5649 = vpop.f32.mrb[0].mxu0
    %v5650 = vadd.f32 %v5416, %v5649
    %v5651 = vpop.f32.mrb[0].mxu0
    %v5652 = vadd.f32 %v5420, %v5651
    %5653 = vdwg.mxu0
    %5654 = vmatprep.subr.mxu0 %v5282
    %5655 = vmatpush1.msra.mxu0 %v5281
    %5656 = vmatprep.subr.mxu0 %v5286
    %5657 = vmatpush1.msra.mxu0 %v5285
    %5658 = vmatprep.subr.mxu0 %v5290
    %5659 = vmatpush1.msra.mxu0 %v5289
    %5660 = vmatprep.subr.mxu0 %v5294
    %5661 = vmatpush1.msra.mxu0 %v5293
    %5662 = vmatprep.subr.mxu0 %v5298
    %5663 = vmatpush1.msra.mxu0 %v5297
    %5664 = vmatprep.subr.mxu0 %v5302
    %5665 = vmatpush1.msra.mxu0 %v5301
    %5666 = vmatprep.subr.mxu0 %v5306
    %5667 = vmatpush1.msra.mxu0 %v5305
    %5668 = vmatprep.subr.mxu0 %v5310
    %5669 = vmatpush1.msra.mxu0 %v5309
    %5670 = vmatprep.subr.mxu0 %v5314
    %5671 = vmatpush1.msra.mxu0 %v5313
    %5672 = vmatprep.subr.mxu0 %v5318
    %5673 = vmatpush1.msra.mxu0 %v5317
    %5674 = vmatprep.subr.mxu0 %v5322
    %5675 = vmatpush1.msra.mxu0 %v5321
    %5676 = vmatprep.subr.mxu0 %v5326
    %5677 = vmatpush1.msra.mxu0 %v5325
    %5678 = vmatprep.subr.mxu0 %v5330
    %5679 = vmatpush1.msra.mxu0 %v5329
    %5680 = vmatprep.subr.mxu0 %v5334
    %5681 = vmatpush1.msra.mxu0 %v5333
    %5682 = vmatprep.subr.mxu0 %v5338
    %5683 = vmatpush1.msra.mxu0 %v5337
    %5684 = vmatprep.subr.mxu0 %v5342
    %5685 = vmatpush1.msra.mxu0 %v5341
    %5686 = vmatprep.subr.mxu0 %v5346
    %5687 = vmatpush1.msra.mxu0 %v5345
    %5688 = vmatprep.subr.mxu0 %v5350
    %5689 = vmatpush1.msra.mxu0 %v5349
    %5690 = vmatprep.subr.mxu0 %v5354
    %5691 = vmatpush1.msra.mxu0 %v5353
    %5692 = vmatprep.subr.mxu0 %v5358
    %5693 = vmatpush1.msra.mxu0 %v5357
    %5694 = vmatprep.subr.mxu0 %v5362
    %5695 = vmatpush1.msra.mxu0 %v5361
    %5696 = vmatprep.subr.mxu0 %v5366
    %5697 = vmatpush1.msra.mxu0 %v5365
    %5698 = vmatprep.subr.mxu0 %v5370
    %5699 = vmatpush1.msra.mxu0 %v5369
    %5700 = vmatprep.subr.mxu0 %v5374
    %5701 = vmatpush1.msra.mxu0 %v5373
    %5702 = vmatprep.subr.mxu0 %v5378
    %5703 = vmatpush1.msra.mxu0 %v5377
    %5704 = vmatprep.subr.mxu0 %v5382
    %5705 = vmatpush1.msra.mxu0 %v5381
    %5706 = vmatprep.subr.mxu0 %v5386
    %5707 = vmatpush1.msra.mxu0 %v5385
    %5708 = vmatprep.subr.mxu0 %v5390
    %5709 = vmatpush1.msra.mxu0 %v5389
    %5710 = vmatprep.subr.mxu0 %v5394
    %5711 = vmatpush1.msra.mxu0 %v5393
    %5712 = vmatprep.subr.mxu0 %v5398
    %5713 = vmatpush1.msra.mxu0 %v5397
    %5714 = vmatprep.subr.mxu0 %v5439
    %5715 = vmatpush1.msra.mxu0 %v5436
    %5716 = vmatprep.subr.mxu0 0.0
    %5717 = vmatpush1.msra.mxu0 0.0
    %5718 = vmatprep.mubr.f32.mxu0 %v5427
    %5719 = vmatmul.mubr.f32.gmra.mrb[0].mxu0 %v5023
    %v5720 = vpop.f32.mrb[0].mxu0
    %v5721 = vadd.f32 %v5650, %v5720
    %v5722 = vpop.f32.mrb[0].mxu0
    %v5723 = vadd.f32 %v5652, %v5722
    %5724 = vdwg.mxu0
    %v5725 = vmax.f32 %v5579, 0.0
    %v5726 = vmax.f32 %v5581, 0.0
    %v5727 = vmax.f32 %v5721, 0.0
    %v5728 = vmax.f32 %v5723, 0.0
    %v5729 = vld [vmem:[%s59] sm:$0xf]
    %v5730 = vld [vmem:[%s59 + $0x4] sm:$0xf]
    %v5731 = vld [vmem:[%s59 + $0x8] sm:$0xf]
    %v5732 = vld [vmem:[%s59 + $0xc] sm:$0xf]
    %v5733 = vld [vmem:[%s59 + $0x10] sm:$0xf]
    %v5734 = vld [vmem:[%s59 + $0x14] sm:$0xf]
    %v5735 = vld [vmem:[%s59 + $0x18] sm:$0xf]
    %v5736 = vld [vmem:[%s59 + $0x1c] sm:$0xf]
    %v5737 = vld [vmem:[%s59 + $0x20] sm:$0xf]
    %v5738 = vld [vmem:[%s59 + $0x24] sm:$0xf]
    %v5739 = vld [vmem:[%s59 + $0x28] sm:$0xf]
    %v5740 = vld [vmem:[%s59 + $0x2c] sm:$0xf]
    %v5741 = vld [vmem:[%s59 + $0x30] sm:$0xf]
    %v5742 = vld [vmem:[%s59 + $0x34] sm:$0xf]
    %v5743 = vld [vmem:[%s59 + $0x38] sm:$0xf]
    %v5744 = vld [vmem:[%s59 + $0x3c] sm:$0xf]
    %v5745 = vld [vmem:[%s59 + $0x40] sm:$0xf]
    %v5746 = vld [vmem:[%s59 + $0x44] sm:$0xf]
    %v5747 = vld [vmem:[%s59 + $0x48] sm:$0xf]
    %v5748 = vld [vmem:[%s59 + $0x4c] sm:$0xf]
    %v5749 = vld [vmem:[%s59 + $0x50] sm:$0xf]
    %v5750 = vld [vmem:[%s59 + $0x54] sm:$0xf]
    %v5751 = vld [vmem:[%s59 + $0x58] sm:$0xf]
    %v5752 = vld [vmem:[%s59 + $0x5c] sm:$0xf]
    %v5753 = vld [vmem:[%s59 + $0x60] sm:$0xf]
    %v5754 = vld [vmem:[%s59 + $0x64] sm:$0xf]
    %v5755 = vld [vmem:[%s59 + $0x68] sm:$0xf]
    %v5756 = vld [vmem:[%s59 + $0x6c] sm:$0xf]
    %v5757 = vld [vmem:[%s59 + $0x70] sm:$0xf]
    %v5758 = vld [vmem:[%s59 + $0x74] sm:$0xf]
    %v5759 = vld [vmem:[%s59 + $0x78] sm:$0xf]
    %v5760 = vld [vmem:[%s59 + $0x7c] sm:$0xf]
    %v5761 = vld [vmem:[%s59 + $0x80] sm:$0xf]
    %v5762 = vld [vmem:[%s59 + $0x84] sm:$0xf]
    %v5763 = vld [vmem:[%s59 + $0x88] sm:$0xf]
    %v5764 = vld [vmem:[%s59 + $0x8c] sm:$0xf]
    %v5765 = vld [vmem:[%s59 + $0x90] sm:$0xf]
    %v5766 = vld [vmem:[%s59 + $0x94] sm:$0xf]
    %v5767 = vld [vmem:[%s59 + $0x98] sm:$0xf]
    %v5768 = vld [vmem:[%s59 + $0x9c] sm:$0xf]
    %v5769 = vld [vmem:[%s59 + $0xa0] sm:$0xf]
    %v5770 = vld [vmem:[%s59 + $0xa4] sm:$0xf]
    %v5771 = vld [vmem:[%s59 + $0xa8] sm:$0xf]
    %v5772 = vld [vmem:[%s59 + $0xac] sm:$0xf]
    %v5773 = vld [vmem:[%s59 + $0xb0] sm:$0xf]
    %v5774 = vld [vmem:[%s59 + $0xb4] sm:$0xf]
    %v5775 = vld [vmem:[%s59 + $0xb8] sm:$0xf]
    %v5776 = vld [vmem:[%s59 + $0xbc] sm:$0xf]
    %v5777 = vld [vmem:[%s59 + $0xc0] sm:$0xf]
    %v5778 = vld [vmem:[%s59 + $0xc4] sm:$0xf]
    %v5779 = vld [vmem:[%s59 + $0xc8] sm:$0xf]
    %v5780 = vld [vmem:[%s59 + $0xcc] sm:$0xf]
    %v5781 = vld [vmem:[%s59 + $0xd0] sm:$0xf]
    %v5782 = vld [vmem:[%s59 + $0xd4] sm:$0xf]
    %v5783 = vld [vmem:[%s59 + $0xd8] sm:$0xf]
    %v5784 = vld [vmem:[%s59 + $0xdc] sm:$0xf]
    %v5785 = vld [vmem:[%s59 + $0xe0] sm:$0xf]
    %v5786 = vld [vmem:[%s59 + $0xe4] sm:$0xf]
    %v5787 = vld [vmem:[%s59 + $0xe8] sm:$0xf]
    %v5788 = vld [vmem:[%s59 + $0xec] sm:$0xf]
    %v5789 = vld [vmem:[%s59 + $0xf0] sm:$0xf]
    %v5790 = vld [vmem:[%s59 + $0xf4] sm:$0xf]
    %v5791 = vld [vmem:[%s59 + $0xf8] sm:$0x3]
    %v5792 = vunpack.c.l.bf16 %v5729
    %v5793 = vunpack.c.l.bf16 %v5730
    %v5794 = vunpack.c.l.bf16 %v5731
    %v5795 = vunpack.c.l.bf16 %v5732
    %v5796 = vunpack.c.l.bf16 %v5733
    %v5797 = vunpack.c.l.bf16 %v5734
    %v5798 = vunpack.c.l.bf16 %v5735
    %v5799 = vunpack.c.l.bf16 %v5736
    %v5800 = vunpack.c.l.bf16 %v5737
    %v5801 = vunpack.c.l.bf16 %v5738
    %v5802 = vunpack.c.l.bf16 %v5739
    %v5803 = vunpack.c.l.bf16 %v5740
    %v5804 = vunpack.c.l.bf16 %v5741
    %v5805 = vunpack.c.l.bf16 %v5742
    %v5806 = vunpack.c.l.bf16 %v5743
    %v5807 = vunpack.c.l.bf16 %v5744
    %v5808 = vunpack.c.l.bf16 %v5745
    %v5809 = vunpack.c.l.bf16 %v5746
    %v5810 = vunpack.c.l.bf16 %v5747
    %v5811 = vunpack.c.l.bf16 %v5748
    %v5812 = vunpack.c.l.bf16 %v5749
    %v5813 = vunpack.c.l.bf16 %v5750
    %v5814 = vunpack.c.l.bf16 %v5751
    %v5815 = vunpack.c.l.bf16 %v5752
    %v5816 = vunpack.c.l.bf16 %v5753
    %v5817 = vunpack.c.l.bf16 %v5754
    %v5818 = vunpack.c.l.bf16 %v5755
    %v5819 = vunpack.c.l.bf16 %v5756
    %v5820 = vunpack.c.l.bf16 %v5757
    %v5821 = vunpack.c.l.bf16 %v5758
    %v5822 = vunpack.c.l.bf16 %v5759
    %v5823 = vunpack.c.l.bf16 %v5760
    %v5824 = vunpack.c.l.bf16 %v5761
    %v5825 = vunpack.c.l.bf16 %v5762
    %v5826 = vunpack.c.l.bf16 %v5763
    %v5827 = vunpack.c.l.bf16 %v5764
    %v5828 = vunpack.c.l.bf16 %v5765
    %v5829 = vunpack.c.l.bf16 %v5766
    %v5830 = vunpack.c.l.bf16 %v5767
    %v5831 = vunpack.c.l.bf16 %v5768
    %v5832 = vunpack.c.l.bf16 %v5769
    %v5833 = vunpack.c.l.bf16 %v5770
    %v5834 = vunpack.c.l.bf16 %v5771
    %v5835 = vunpack.c.l.bf16 %v5772
    %v5836 = vunpack.c.l.bf16 %v5773
    %v5837 = vunpack.c.l.bf16 %v5774
    %v5838 = vunpack.c.l.bf16 %v5775
    %v5839 = vunpack.c.l.bf16 %v5776
    %v5840 = vunpack.c.l.bf16 %v5777
    %v5841 = vunpack.c.l.bf16 %v5778
    %v5842 = vunpack.c.l.bf16 %v5779
    %v5843 = vunpack.c.l.bf16 %v5780
    %v5844 = vunpack.c.l.bf16 %v5781
    %v5845 = vunpack.c.l.bf16 %v5782
    %v5846 = vunpack.c.l.bf16 %v5783
    %v5847 = vunpack.c.l.bf16 %v5784
    %v5848 = vunpack.c.l.bf16 %v5785
    %v5849 = vunpack.c.l.bf16 %v5786
    %v5850 = vunpack.c.l.bf16 %v5787
    %v5851 = vunpack.c.l.bf16 %v5788
    %v5852 = vunpack.c.l.bf16 %v5789
    %v5853 = vunpack.c.l.bf16 %v5790
    %v5854 = vunpack.c.l.bf16 %v5791
    %v5855 = vld [vmem:[#allocation19] sm:$0x1]
    %v5857 = vlaneseq
    %v5858 = vshrl.u32 %v5857, 7
    %v5859 = vsub.s32 0, %v5858
    %v5860 = vrot.slane %v5855, %v5859
    %v5863 = vsel %vm5425, %v5728, 0
    %v5866 = vsel %vm1682, %v5854, 0
    %5868 = vmatprep.subr.mxu0 0.0
    %5869 = vmatpush1.msra.mxu0 %v5792
    %5870 = vmatprep.subr.mxu0 0.0
    %5871 = vmatpush1.msra.mxu0 %v5793
    %5872 = vmatprep.subr.mxu0 0.0
    %5873 = vmatpush1.msra.mxu0 %v5794
    %5874 = vmatprep.subr.mxu0 0.0
    %5875 = vmatpush1.msra.mxu0 %v5795
    %5876 = vmatprep.subr.mxu0 0.0
    %5877 = vmatpush1.msra.mxu0 %v5796
    %5878 = vmatprep.subr.mxu0 0.0
    %5879 = vmatpush1.msra.mxu0 %v5797
    %5880 = vmatprep.subr.mxu0 0.0
    %5881 = vmatpush1.msra.mxu0 %v5798
    %5882 = vmatprep.subr.mxu0 0.0
    %5883 = vmatpush1.msra.mxu0 %v5799
    %5884 = vmatprep.subr.mxu0 0.0
    %5885 = vmatpush1.msra.mxu0 %v5800
    %5886 = vmatprep.subr.mxu0 0.0
    %5887 = vmatpush1.msra.mxu0 %v5801
    %5888 = vmatprep.subr.mxu0 0.0
    %5889 = vmatpush1.msra.mxu0 %v5802
    %5890 = vmatprep.subr.mxu0 0.0
    %5891 = vmatpush1.msra.mxu0 %v5803
    %5892 = vmatprep.subr.mxu0 0.0
    %5893 = vmatpush1.msra.mxu0 %v5804
    %5894 = vmatprep.subr.mxu0 0.0
    %5895 = vmatpush1.msra.mxu0 %v5805
    %5896 = vmatprep.subr.mxu0 0.0
    %5897 = vmatpush1.msra.mxu0 %v5806
    %5898 = vmatprep.subr.mxu0 0.0
    %5899 = vmatpush1.msra.mxu0 %v5807
    %5900 = vmatprep.subr.mxu0 0.0
    %5901 = vmatpush1.msra.mxu0 %v5808
    %5902 = vmatprep.subr.mxu0 0.0
    %5903 = vmatpush1.msra.mxu0 %v5809
    %5904 = vmatprep.subr.mxu0 0.0
    %5905 = vmatpush1.msra.mxu0 %v5810
    %5906 = vmatprep.subr.mxu0 0.0
    %5907 = vmatpush1.msra.mxu0 %v5811
    %5908 = vmatprep.subr.mxu0 0.0
    %5909 = vmatpush1.msra.mxu0 %v5812
    %5910 = vmatprep.subr.mxu0 0.0
    %5911 = vmatpush1.msra.mxu0 %v5813
    %5912 = vmatprep.subr.mxu0 0.0
    %5913 = vmatpush1.msra.mxu0 %v5814
    %5914 = vmatprep.subr.mxu0 0.0
    %5915 = vmatpush1.msra.mxu0 %v5815
    %5916 = vmatprep.subr.mxu0 0.0
    %5917 = vmatpush1.msra.mxu0 %v5816
    %5918 = vmatprep.subr.mxu0 0.0
    %5919 = vmatpush1.msra.mxu0 %v5817
    %5920 = vmatprep.subr.mxu0 0.0
    %5921 = vmatpush1.msra.mxu0 %v5818
    %5922 = vmatprep.subr.mxu0 0.0
    %5923 = vmatpush1.msra.mxu0 %v5819
    %5924 = vmatprep.subr.mxu0 0.0
    %5925 = vmatpush1.msra.mxu0 %v5820
    %5926 = vmatprep.subr.mxu0 0.0
    %5927 = vmatpush1.msra.mxu0 %v5821
    %5928 = vmatprep.subr.mxu0 0.0
    %5929 = vmatpush1.msra.mxu0 %v5822
    %5930 = vmatprep.subr.mxu0 0.0
    %5931 = vmatpush1.msra.mxu0 %v5823
    %5932 = vmatprep.mubr.f32.mxu0 %v5726
    %5933 = vmatmul.mubr.f32.gmra.mrb[0].mxu0 %v5725
    %v5934 = vpop.f32.mrb[0].mxu0
    %v5935 = vadd.f32 %v5860, %v5934
    %v5936 = vpop.f32.mrb[0].mxu0
    %5937 = vdwg.mxu0
    %5938 = vmatprep.subr.mxu0 0.0
    %5939 = vmatpush1.msra.mxu0 %v5824
    %5940 = vmatprep.subr.mxu0 0.0
    %5941 = vmatpush1.msra.mxu0 %v5825
    %5942 = vmatprep.subr.mxu0 0.0
    %5943 = vmatpush1.msra.mxu0 %v5826
    %5944 = vmatprep.subr.mxu0 0.0
    %5945 = vmatpush1.msra.mxu0 %v5827
    %5946 = vmatprep.subr.mxu0 0.0
    %5947 = vmatpush1.msra.mxu0 %v5828
    %5948 = vmatprep.subr.mxu0 0.0
    %5949 = vmatpush1.msra.mxu0 %v5829
    %5950 = vmatprep.subr.mxu0 0.0
    %5951 = vmatpush1.msra.mxu0 %v5830
    %5952 = vmatprep.subr.mxu0 0.0
    %5953 = vmatpush1.msra.mxu0 %v5831
    %5954 = vmatprep.subr.mxu0 0.0
    %5955 = vmatpush1.msra.mxu0 %v5832
    %5956 = vmatprep.subr.mxu0 0.0
    %5957 = vmatpush1.msra.mxu0 %v5833
    %5958 = vmatprep.subr.mxu0 0.0
    %5959 = vmatpush1.msra.mxu0 %v5834
    %5960 = vmatprep.subr.mxu0 0.0
    %5961 = vmatpush1.msra.mxu0 %v5835
    %5962 = vmatprep.subr.mxu0 0.0
    %5963 = vmatpush1.msra.mxu0 %v5836
    %5964 = vmatprep.subr.mxu0 0.0
    %5965 = vmatpush1.msra.mxu0 %v5837
    %5966 = vmatprep.subr.mxu0 0.0
    %5967 = vmatpush1.msra.mxu0 %v5838
    %5968 = vmatprep.subr.mxu0 0.0
    %5969 = vmatpush1.msra.mxu0 %v5839
    %5970 = vmatprep.subr.mxu0 0.0
    %5971 = vmatpush1.msra.mxu0 %v5840
    %5972 = vmatprep.subr.mxu0 0.0
    %5973 = vmatpush1.msra.mxu0 %v5841
    %5974 = vmatprep.subr.mxu0 0.0
    %5975 = vmatpush1.msra.mxu0 %v5842
    %5976 = vmatprep.subr.mxu0 0.0
    %5977 = vmatpush1.msra.mxu0 %v5843
    %5978 = vmatprep.subr.mxu0 0.0
    %5979 = vmatpush1.msra.mxu0 %v5844
    %5980 = vmatprep.subr.mxu0 0.0
    %5981 = vmatpush1.msra.mxu0 %v5845
    %5982 = vmatprep.subr.mxu0 0.0
    %5983 = vmatpush1.msra.mxu0 %v5846
    %5984 = vmatprep.subr.mxu0 0.0
    %5985 = vmatpush1.msra.mxu0 %v5847
    %5986 = vmatprep.subr.mxu0 0.0
    %5987 = vmatpush1.msra.mxu0 %v5848
    %5988 = vmatprep.subr.mxu0 0.0
    %5989 = vmatpush1.msra.mxu0 %v5849
    %5990 = vmatprep.subr.mxu0 0.0
    %5991 = vmatpush1.msra.mxu0 %v5850
    %5992 = vmatprep.subr.mxu0 0.0
    %5993 = vmatpush1.msra.mxu0 %v5851
    %5994 = vmatprep.subr.mxu0 0.0
    %5995 = vmatpush1.msra.mxu0 %v5852
    %5996 = vmatprep.subr.mxu0 0.0
    %5997 = vmatpush1.msra.mxu0 %v5853
    %5998 = vmatprep.subr.mxu0 0.0
    %5999 = vmatpush1.msra.mxu0 %v5866
    %6000 = vmatprep.subr.mxu0 0.0
    %6001 = vmatpush1.msra.mxu0 0.0
    %6002 = vmatprep.mubr.f32.mxu0 %v5863
    %6003 = vmatmul.mubr.f32.gmra.mrb[0].mxu0 %v5727
    %v6004 = vpop.f32.mrb[0].mxu0
    %v6005 = vadd.f32 %v5935, %v6004
    %v6006 = vpop.f32.mrb[0].mxu0
    %6007 = vdwg.mxu0
    %6008 = vst.msk [vmem:[#allocation20] sm:$0xff] %vm4271, %v6005
    // Predicated region
    $region170: #{sherlock_ori_forward.1} parent=1 // pred_check
      _
    $region171: #{sherlock_ori_forward.1} parent=1 // pred_check_branch
      %6010 = sbr.rel (0) target = $region173
    $region172: #{sherlock_ori_forward.1} parent=1 // pred_region
      %s6012 = ssub.s32 128, 128
      %6013 = vsyncadd [#allocation4], %s6012
      %s6015 = sshll.u32 [#allocation20], 4
      %s6016 = int_to_ptr.vmem [resolvable:$true] %s6015
      %6018 = dma.vmem_to_hbm [thread:$0]  %s6016, 128, %s63, [#allocation4]
    $region173: #{sherlock_ori_forward.1} parent=1 // pred_fallthru
      _
    // Predicated region
    $region174: #{sherlock_ori_forward.1} parent=1 // pred_check
      _
    $region175: #{sherlock_ori_forward.1} parent=1 // pred_check_branch
      %6020 = sbr.rel (0) target = $region177
    $region176: #{sherlock_ori_forward.1} parent=1 // pred_region
      %6021 = dma.done [#allocation4], 128
    $region177: #{sherlock_ori_forward.1} parent=1 // pred_fallthru
      _
    %6022 = vsyncpa [#allocation3], 1
    %6023 = vsyncpa [#allocation6], 1
    %6024 = vsyncpa [#allocation9], 1
    %6025 = vsyncpa [#allocation12], 1
    %6026 = vsyncpa [#allocation15], 1
    %6027 = vsyncpa [#allocation18], 1
    %6028 = vsyncpa [#allocation4], 1

</llo_original>
